<compile_context>
chip_gen: v5e
topology: v5e:2x2
jax: 0.10.0
libtpu: 0.0.40
codegen_flags: <defaults>
</compile_context>

<pallas_src>
import functools

import jax
import jax.numpy as jnp
from jax import lax
from jax.experimental import pallas as pl
from jax.experimental.pallas import tpu as pltpu


def _round_up(x, m):
    return (x + m - 1) // m * m


def _make_block_kernel(Hs, Ws, KH, KW, pad, activation, residual, margin):
    """Fused conv->act (x3) (+ residual) kernel for one image in (C, H*W) layout."""
    S = Hs * Ws
    act = (lambda v: jnp.maximum(v, 0.0)) if activation == "relu" else jnp.sin

    def kernel(x_ref, w1_ref, w2_ref, w3_ref, o_ref, xpad_ref, im_ref):
        C = x_ref.shape[1]
        total = xpad_ref.shape[1]

        # Per-lane validity masks for the KW column offsets (depend only on w = s % Ws).
        w_pos = lax.broadcasted_iota(jnp.int32, (1, S), 1) % Ws
        valids = [(w_pos + (kw - pad) >= 0) & (w_pos + (kw - pad) < Ws)
                  for kw in range(KW)]

        # Zero the halo margins (>= pad*Ws + pad on each side, lane-tile aligned),
        # then place the image in the interior of the flat padded buffer.
        xpad_ref[:, :margin] = jnp.zeros((C, margin), jnp.float32)
        xpad_ref[:, margin + S:total] = jnp.zeros((C, total - margin - S), jnp.float32)
        xpad_ref[:, margin:margin + S] = x_ref[0].astype(jnp.float32)

        def conv_act(w_ref):
            acc = jnp.zeros((C, S), jnp.float32)
            for kw in range(KW):
                dw = kw - pad
                # Build the K = KH*C im2col slab for this column offset: row block kh
                # is the activation shifted by (kh - pad) rows and dw columns.
                for kh in range(KH):
                    dh = kh - pad
                    start = margin + dh * Ws + dw
                    im_ref[kh * C:(kh + 1) * C, :] = xpad_ref[:, start:start + S]
                # (Cout, KH*Cin) @ (KH*Cin, S) -> (Cout, S) on the MXU.
                part = jnp.dot(w_ref[kw], im_ref[...],
                               preferred_element_type=jnp.float32)
                if dw == 0:
                    acc = acc + part
                else:
                    # Positions whose source column wrapped to a neighbouring row are
                    # zeroed here (equivalent to reading the zero padding).
                    acc = acc + jnp.where(valids[kw], part, 0.0)
            return act(acc)

        y = conv_act(w1_ref)
        xpad_ref[:, margin:margin + S] = y       # stays VMEM-resident for conv2
        y = conv_act(w2_ref)
        xpad_ref[:, margin:margin + S] = y       # stays VMEM-resident for conv3
        y = conv_act(w3_ref)
        if residual:
            y = y + x_ref[0].astype(jnp.float32)
        o_ref[0] = y.astype(o_ref.dtype)

    return kernel


def block_forward_pallas(x_nchw, w1, w2, w3, activation="relu", residual=True):
    """Full Block forward. x_nchw: (N, C, H, W) float32. Conv weights in HWIO."""
    N, C, Hs, Ws = x_nchw.shape
    KH, KW, Cin, Cout = w1.shape
    assert C == Cin == Cout, "Block uses in_channels == out_channels"
    pad = (KH - 1) // 2
    S = Hs * Ws
    margin = _round_up(pad * Ws + pad, 128)      # zeroed halo, lane-tile aligned

    # (N, C, H, W) -> (N, C, H*W): free reshape, lane-dense last dim (multiple of 128).
    xf = x_nchw.reshape(N, C, S)

    def prep(w):
        # (KH, KW, Cin, Cout) -> (KW, Cout, KH*Cin); A[kw][co, kh*Cin + ci] = w[kh, kw, ci, co]
        return jnp.transpose(w, (1, 3, 0, 2)).reshape(KW, Cout, KH * Cin)

    w1k, w2k, w3k = prep(w1), prep(w2), prep(w3)

    kernel = _make_block_kernel(Hs, Ws, KH, KW, pad, activation, residual, margin)
    wspec = pl.BlockSpec((KW, Cout, KH * Cin), lambda n: (0, 0, 0))

    out = pl.pallas_call(
        kernel,
        out_shape=jax.ShapeDtypeStruct((N, C, S), x_nchw.dtype),
        grid=(N,),
        in_specs=[pl.BlockSpec((1, C, S), lambda n: (n, 0, 0)), wspec, wspec, wspec],
        out_specs=pl.BlockSpec((1, C, S), lambda n: (n, 0, 0)),
        scratch_shapes=[pltpu.VMEM((C, S + 2 * margin), jnp.float32),   # padded activation
                        pltpu.VMEM((KH * C, S), jnp.float32)],          # im2col slab
        compiler_params=pltpu.CompilerParams(dimension_semantics=("parallel",)),
    )(xf, w1k, w2k, w3k)
    return out.reshape(N, C, Hs, Ws)


def block_forward_ref(x_nchw, w1, w2, w3, activation="relu", residual=True):
    """Pure-JAX reference (XLA convs) for correctness checking."""
    act = (lambda v: jnp.maximum(v, 0.0)) if activation == "relu" else jnp.sin
    pad = (w1.shape[0] - 1) // 2
    dn = lax.conv_dimension_numbers(x_nchw.shape, w1.shape, ("NCHW", "HWIO", "NCHW"))

    def conv(x, w):
        return lax.conv_general_dilated(x, w, window_strides=(1, 1),
                                        padding=((pad, pad), (pad, pad)),
                                        dimension_numbers=dn,
                                        precision=lax.Precision.HIGHEST)

    identity = x_nchw
    x = act(conv(x_nchw, w1))
    x = act(conv(x, w2))
    x = act(conv(x, w3))
    if residual:
        x = x + identity
    return x


if __name__ == "__main__":
    # Small shapes consistent with the module defaults (in=out=32, k=5, pad=2).
    N, C, H, W = 2, 32, 16, 16
    K = 5
    activation = "relu"   # PyTorch: nn.ReLU ('Siren'/'SIREN' -> "siren" -> jnp.sin)
    residual = True

    key = jax.random.PRNGKey(0)
    kx, k1, k2, k3 = jax.random.split(key, 4)
    x = jax.random.normal(kx, (N, C, H, W), dtype=jnp.float32)
    # Deterministic kaiming-uniform-like init (no checkpoint loading), HWIO layout.
    fan_in = C * K * K
    bound = (1.0 / fan_in) ** 0.5
    w1 = jax.random.uniform(k1, (K, K, C, C), jnp.float32, -bound, bound)
    w2 = jax.random.uniform(k2, (K, K, C, C), jnp.float32, -bound, bound)
    w3 = jax.random.uniform(k3, (K, K, C, C), jnp.float32, -bound, bound)

    fwd = jax.jit(functools.partial(block_forward_pallas,
                                    activation=activation, residual=residual))
    out = jax.block_until_ready(fwd(x, w1, w2, w3))

    ref = block_forward_ref(x, w1, w2, w3, activation=activation, residual=residual)
    assert out.shape == (N, C, H, W)
    assert jnp.allclose(out, ref, atol=1e-4, rtol=1e-4), \
        float(jnp.max(jnp.abs(out - ref)))

    print("KERNEL_OK")
</pallas_src>

<mosaic_0001>
module attributes {stable_mosaic.version = 11 : i64} {
  func.func @kernel(%arg0: i32, %arg1: memref<1x32x256xf32, #tpu.memory_space<vmem>>, %arg2: memref<5x32x160xf32, #tpu.memory_space<vmem>>, %arg3: memref<5x32x160xf32, #tpu.memory_space<vmem>>, %arg4: memref<5x32x160xf32, #tpu.memory_space<vmem>>, %arg5: memref<1x32x256xf32, #tpu.memory_space<vmem>>, %arg6: memref<32x512xf32, #tpu.memory_space<vmem>>, %arg7: memref<160x256xf32, #tpu.memory_space<vmem>>) attributes {dimension_semantics = [#tpu.dimension_semantics<parallel>], iteration_bounds = array<i64: 2>, scalar_prefetch = 0 : i64, scratch_operands = 2 : i64, tpu.core_type = #tpu.core_type<tc>, window_params = [{transform_indices = @transform_0, window_bounds = array<i64: 1, 32, 256>}, {pipeline_mode = #tpu.pipeline_mode<synchronous>, transform_indices = @transform_1, window_bounds = array<i64: 5, 32, 160>}, {pipeline_mode = #tpu.pipeline_mode<synchronous>, transform_indices = @transform_2, window_bounds = array<i64: 5, 32, 160>}, {pipeline_mode = #tpu.pipeline_mode<synchronous>, transform_indices = @transform_3, window_bounds = array<i64: 5, 32, 160>}, {transform_indices = @transform_4, window_bounds = array<i64: 1, 32, 256>}]} {
    %0 = tpu.iota {dimensions = array<i32: 1>} : vector<1x256xi32>
    %c16_i32 = arith.constant 16 : i32
    %c0_i32 = arith.constant 0 : i32
    %1 = arith.cmpi eq, %c16_i32, %c0_i32 : i32
    %c1_i32 = arith.constant 1 : i32
    %2 = arith.select %1, %c1_i32, %c16_i32 : i32
    %3 = vector.broadcast %2 : i32 to vector<1x256xi32>
    %4 = arith.remsi %0, %3 : vector<1x256xi32>
    %c0_i32_0 = arith.constant 0 : i32
    %5 = vector.broadcast %c0_i32_0 : i32 to vector<1x256xi32>
    %6 = arith.cmpi ne, %4, %5 : vector<1x256xi32>
    %c0_i32_1 = arith.constant 0 : i32
    %7 = vector.broadcast %c0_i32_1 : i32 to vector<1x256xi32>
    %8 = arith.cmpi slt, %4, %7 : vector<1x256xi32>
    %c0_i32_2 = arith.constant 0 : i32
    %9 = arith.cmpi slt, %2, %c0_i32_2 : i32
    %10 = vector.broadcast %9 : i1 to vector<1x256xi1>
    %11 = vector.broadcast %10 : vector<1x256xi1> to vector<1x256xi1>
    %12 = arith.xori %8, %11 : vector<1x256xi1>
    %13 = arith.andi %12, %6 : vector<1x256xi1>
    %14 = vector.broadcast %2 : i32 to vector<1x256xi32>
    %15 = arith.addi %4, %14 : vector<1x256xi32>
    %16 = arith.select %13, %15, %4 : vector<1x256xi1>, vector<1x256xi32>
    %c-2_i32 = arith.constant -2 : i32
    %17 = vector.broadcast %c-2_i32 : i32 to vector<1x256xi32>
    %18 = arith.addi %16, %17 : vector<1x256xi32>
    %c0_i32_3 = arith.constant 0 : i32
    %19 = vector.broadcast %c0_i32_3 : i32 to vector<1x256xi32>
    %20 = arith.cmpi sge, %18, %19 : vector<1x256xi32>
    %c-2_i32_4 = arith.constant -2 : i32
    %21 = vector.broadcast %c-2_i32_4 : i32 to vector<1x256xi32>
    %22 = arith.addi %16, %21 : vector<1x256xi32>
    %c16_i32_5 = arith.constant 16 : i32
    %23 = vector.broadcast %c16_i32_5 : i32 to vector<1x256xi32>
    %24 = arith.cmpi slt, %22, %23 : vector<1x256xi32>
    %25 = arith.andi %20, %24 : vector<1x256xi1>
    %c-1_i32 = arith.constant -1 : i32
    %26 = vector.broadcast %c-1_i32 : i32 to vector<1x256xi32>
    %27 = arith.addi %16, %26 : vector<1x256xi32>
    %c0_i32_6 = arith.constant 0 : i32
    %28 = vector.broadcast %c0_i32_6 : i32 to vector<1x256xi32>
    %29 = arith.cmpi sge, %27, %28 : vector<1x256xi32>
    %c-1_i32_7 = arith.constant -1 : i32
    %30 = vector.broadcast %c-1_i32_7 : i32 to vector<1x256xi32>
    %31 = arith.addi %16, %30 : vector<1x256xi32>
    %c16_i32_8 = arith.constant 16 : i32
    %32 = vector.broadcast %c16_i32_8 : i32 to vector<1x256xi32>
    %33 = arith.cmpi slt, %31, %32 : vector<1x256xi32>
    %34 = arith.andi %29, %33 : vector<1x256xi1>
    %c1_i32_9 = arith.constant 1 : i32
    %35 = vector.broadcast %c1_i32_9 : i32 to vector<1x256xi32>
    %36 = arith.addi %16, %35 : vector<1x256xi32>
    %c0_i32_10 = arith.constant 0 : i32
    %37 = vector.broadcast %c0_i32_10 : i32 to vector<1x256xi32>
    %38 = arith.cmpi sge, %36, %37 : vector<1x256xi32>
    %c1_i32_11 = arith.constant 1 : i32
    %39 = vector.broadcast %c1_i32_11 : i32 to vector<1x256xi32>
    %40 = arith.addi %16, %39 : vector<1x256xi32>
    %c16_i32_12 = arith.constant 16 : i32
    %41 = vector.broadcast %c16_i32_12 : i32 to vector<1x256xi32>
    %42 = arith.cmpi slt, %40, %41 : vector<1x256xi32>
    %43 = arith.andi %38, %42 : vector<1x256xi1>
    %c2_i32 = arith.constant 2 : i32
    %44 = vector.broadcast %c2_i32 : i32 to vector<1x256xi32>
    %45 = arith.addi %16, %44 : vector<1x256xi32>
    %c0_i32_13 = arith.constant 0 : i32
    %46 = vector.broadcast %c0_i32_13 : i32 to vector<1x256xi32>
    %47 = arith.cmpi sge, %45, %46 : vector<1x256xi32>
    %c2_i32_14 = arith.constant 2 : i32
    %48 = vector.broadcast %c2_i32_14 : i32 to vector<1x256xi32>
    %49 = arith.addi %16, %48 : vector<1x256xi32>
    %c16_i32_15 = arith.constant 16 : i32
    %50 = vector.broadcast %c16_i32_15 : i32 to vector<1x256xi32>
    %51 = arith.cmpi slt, %49, %50 : vector<1x256xi32>
    %52 = arith.andi %47, %51 : vector<1x256xi1>
    %cst = arith.constant 0.000000e+00 : f32
    %53 = vector.broadcast %cst : f32 to vector<32x128xf32>
    %c0 = arith.constant 0 : index
    %c0_16 = arith.constant 0 : index
    %54 = vector.load %arg6[%c0, %c0_16] : memref<32x512xf32, #tpu.memory_space<vmem>>, vector<32x128xf32>
    tpu.vector_store %arg6[%c0, %c0_16], %53 {strides = array<i32>} : memref<32x512xf32, #tpu.memory_space<vmem>>, vector<32x128xf32>,
    %cst_17 = arith.constant 0.000000e+00 : f32
    %55 = vector.broadcast %cst_17 : f32 to vector<32x128xf32>
    %c0_18 = arith.constant 0 : index
    %c384 = arith.constant 384 : index
    %56 = vector.load %arg6[%c0_18, %c384] : memref<32x512xf32, #tpu.memory_space<vmem>>, vector<32x128xf32>
    tpu.vector_store %arg6[%c0_18, %c384], %55 {strides = array<i32>} : memref<32x512xf32, #tpu.memory_space<vmem>>, vector<32x128xf32>,
    %c0_19 = arith.constant 0 : index
    %c0_20 = arith.constant 0 : index
    %c0_21 = arith.constant 0 : index
    %57 = vector.load %arg1[%c0_19, %c0_20, %c0_21] : memref<1x32x256xf32, #tpu.memory_space<vmem>>, vector<1x32x256xf32>
    %58 = vector.shape_cast %57 : vector<1x32x256xf32> to vector<32x256xf32>
    %c0_22 = arith.constant 0 : index
    %c128 = arith.constant 128 : index
    %59 = vector.load %arg6[%c0_22, %c128] : memref<32x512xf32, #tpu.memory_space<vmem>>, vector<32x256xf32>
    tpu.vector_store %arg6[%c0_22, %c128], %58 {strides = array<i32>} : memref<32x512xf32, #tpu.memory_space<vmem>>, vector<32x256xf32>,
    %cst_23 = arith.constant 0.000000e+00 : f32
    %60 = vector.broadcast %cst_23 : f32 to vector<32x256xf32>
    %c0_24 = arith.constant 0 : index
    %c94 = arith.constant 94 : index
    %61 = vector.load %arg6[%c0_24, %c94] : memref<32x512xf32, #tpu.memory_space<vmem>>, vector<32x256xf32>
    %c0_25 = arith.constant 0 : index
    %c0_26 = arith.constant 0 : index
    %62 = vector.load %arg7[%c0_25, %c0_26] : memref<160x256xf32, #tpu.memory_space<vmem>>, vector<32x256xf32>
    tpu.vector_store %arg7[%c0_25, %c0_26], %61 {strides = array<i32>} : memref<160x256xf32, #tpu.memory_space<vmem>>, vector<32x256xf32>,
    %c0_27 = arith.constant 0 : index
    %c110 = arith.constant 110 : index
    %63 = vector.load %arg6[%c0_27, %c110] : memref<32x512xf32, #tpu.memory_space<vmem>>, vector<32x256xf32>
    %c32 = arith.constant 32 : index
    %c0_28 = arith.constant 0 : index
    %64 = vector.load %arg7[%c32, %c0_28] : memref<160x256xf32, #tpu.memory_space<vmem>>, vector<32x256xf32>
    tpu.vector_store %arg7[%c32, %c0_28], %63 {strides = array<i32>} : memref<160x256xf32, #tpu.memory_space<vmem>>, vector<32x256xf32>,
    %c0_29 = arith.constant 0 : index
    %c126 = arith.constant 126 : index
    %65 = vector.load %arg6[%c0_29, %c126] : memref<32x512xf32, #tpu.memory_space<vmem>>, vector<32x256xf32>
    %c64 = arith.constant 64 : index
    %c0_30 = arith.constant 0 : index
    %66 = vector.load %arg7[%c64, %c0_30] : memref<160x256xf32, #tpu.memory_space<vmem>>, vector<32x256xf32>
    tpu.vector_store %arg7[%c64, %c0_30], %65 {strides = array<i32>} : memref<160x256xf32, #tpu.memory_space<vmem>>, vector<32x256xf32>,
    %c0_31 = arith.constant 0 : index
    %c142 = arith.constant 142 : index
    %67 = vector.load %arg6[%c0_31, %c142] : memref<32x512xf32, #tpu.memory_space<vmem>>, vector<32x256xf32>
    %c96 = arith.constant 96 : index
    %c0_32 = arith.constant 0 : index
    %68 = vector.load %arg7[%c96, %c0_32] : memref<160x256xf32, #tpu.memory_space<vmem>>, vector<32x256xf32>
    tpu.vector_store %arg7[%c96, %c0_32], %67 {strides = array<i32>} : memref<160x256xf32, #tpu.memory_space<vmem>>, vector<32x256xf32>,
    %c0_33 = arith.constant 0 : index
    %c158 = arith.constant 158 : index
    %69 = vector.load %arg6[%c0_33, %c158] : memref<32x512xf32, #tpu.memory_space<vmem>>, vector<32x256xf32>
    %c128_34 = arith.constant 128 : index
    %c0_35 = arith.constant 0 : index
    %70 = vector.load %arg7[%c128_34, %c0_35] : memref<160x256xf32, #tpu.memory_space<vmem>>, vector<32x256xf32>
    tpu.vector_store %arg7[%c128_34, %c0_35], %69 {strides = array<i32>} : memref<160x256xf32, #tpu.memory_space<vmem>>, vector<32x256xf32>,
    %c0_36 = arith.constant 0 : index
    %c0_37 = arith.constant 0 : index
    %c0_38 = arith.constant 0 : index
    %71 = vector.load %arg2[%c0_36, %c0_37, %c0_38] : memref<5x32x160xf32, #tpu.memory_space<vmem>>, vector<1x32x160xf32>
    %72 = vector.shape_cast %71 : vector<1x32x160xf32> to vector<32x160xf32>
    %c0_39 = arith.constant 0 : index
    %c0_40 = arith.constant 0 : index
    %73 = vector.load %arg7[%c0_39, %c0_40] : memref<160x256xf32, #tpu.memory_space<vmem>>, vector<160x256xf32>
    %cst_41 = arith.constant dense<0.000000e+00> : vector<32x256xf32>
    %74 = tpu.matmul %72, %73, %cst_41 {dimension_numbers = #tpu.dot_dimension_numbers<[1], [0], [0], [1], [0, 0, 1, 1], [], []>} : vector<32x160xf32>, vector<160x256xf32>, vector<32x256xf32> -> vector<32x256xf32>
    %cst_42 = arith.constant 0.000000e+00 : f32
    %75 = vector.shape_cast %25 : vector<1x256xi1> to vector<1x256xi1>
    %76 = vector.broadcast %75 : vector<1x256xi1> to vector<32x256xi1>
    %77 = vector.broadcast %cst_42 : f32 to vector<32x256xf32>
    %78 = arith.select %76, %74, %77 : vector<32x256xi1>, vector<32x256xf32>
    %79 = arith.addf %60, %78 : vector<32x256xf32>
    %c0_43 = arith.constant 0 : index
    %c95 = arith.constant 95 : index
    %80 = vector.load %arg6[%c0_43, %c95] : memref<32x512xf32, #tpu.memory_space<vmem>>, vector<32x256xf32>
    %c0_44 = arith.constant 0 : index
    %c0_45 = arith.constant 0 : index
    %81 = vector.load %arg7[%c0_44, %c0_45] : memref<160x256xf32, #tpu.memory_space<vmem>>, vector<32x256xf32>
    tpu.vector_store %arg7[%c0_44, %c0_45], %80 {strides = array<i32>} : memref<160x256xf32, #tpu.memory_space<vmem>>, vector<32x256xf32>,
    %c0_46 = arith.constant 0 : index
    %c111 = arith.constant 111 : index
    %82 = vector.load %arg6[%c0_46, %c111] : memref<32x512xf32, #tpu.memory_space<vmem>>, vector<32x256xf32>
    %c32_47 = arith.constant 32 : index
    %c0_48 = arith.constant 0 : index
    %83 = vector.load %arg7[%c32_47, %c0_48] : memref<160x256xf32, #tpu.memory_space<vmem>>, vector<32x256xf32>
    tpu.vector_store %arg7[%c32_47, %c0_48], %82 {strides = array<i32>} : memref<160x256xf32, #tpu.memory_space<vmem>>, vector<32x256xf32>,
    %c0_49 = arith.constant 0 : index
    %c127 = arith.constant 127 : index
    %84 = vector.load %arg6[%c0_49, %c127] : memref<32x512xf32, #tpu.memory_space<vmem>>, vector<32x256xf32>
    %c64_50 = arith.constant 64 : index
    %c0_51 = arith.constant 0 : index
    %85 = vector.load %arg7[%c64_50, %c0_51] : memref<160x256xf32, #tpu.memory_space<vmem>>, vector<32x256xf32>
    tpu.vector_store %arg7[%c64_50, %c0_51], %84 {strides = array<i32>} : memref<160x256xf32, #tpu.memory_space<vmem>>, vector<32x256xf32>,
    %c0_52 = arith.constant 0 : index
    %c143 = arith.constant 143 : index
    %86 = vector.load %arg6[%c0_52, %c143] : memref<32x512xf32, #tpu.memory_space<vmem>>, vector<32x256xf32>
    %c96_53 = arith.constant 96 : index
    %c0_54 = arith.constant 0 : index
    %87 = vector.load %arg7[%c96_53, %c0_54] : memref<160x256xf32, #tpu.memory_space<vmem>>, vector<32x256xf32>
    tpu.vector_store %arg7[%c96_53, %c0_54], %86 {strides = array<i32>} : memref<160x256xf32, #tpu.memory_space<vmem>>, vector<32x256xf32>,
    %c0_55 = arith.constant 0 : index
    %c159 = arith.constant 159 : index
    %88 = vector.load %arg6[%c0_55, %c159] : memref<32x512xf32, #tpu.memory_space<vmem>>, vector<32x256xf32>
    %c128_56 = arith.constant 128 : index
    %c0_57 = arith.constant 0 : index
    %89 = vector.load %arg7[%c128_56, %c0_57] : memref<160x256xf32, #tpu.memory_space<vmem>>, vector<32x256xf32>
    tpu.vector_store %arg7[%c128_56, %c0_57], %88 {strides = array<i32>} : memref<160x256xf32, #tpu.memory_space<vmem>>, vector<32x256xf32>,
    %c1 = arith.constant 1 : index
    %c0_58 = arith.constant 0 : index
    %c0_59 = arith.constant 0 : index
    %90 = vector.load %arg2[%c1, %c0_58, %c0_59] : memref<5x32x160xf32, #tpu.memory_space<vmem>>, vector<1x32x160xf32>
    %91 = vector.shape_cast %90 : vector<1x32x160xf32> to vector<32x160xf32>
    %c0_60 = arith.constant 0 : index
    %c0_61 = arith.constant 0 : index
    %92 = vector.load %arg7[%c0_60, %c0_61] : memref<160x256xf32, #tpu.memory_space<vmem>>, vector<160x256xf32>
    %cst_62 = arith.constant dense<0.000000e+00> : vector<32x256xf32>
    %93 = tpu.matmul %91, %92, %cst_62 {dimension_numbers = #tpu.dot_dimension_numbers<[1], [0], [0], [1], [0, 0, 1, 1], [], []>} : vector<32x160xf32>, vector<160x256xf32>, vector<32x256xf32> -> vector<32x256xf32>
    %cst_63 = arith.constant 0.000000e+00 : f32
    %94 = vector.shape_cast %34 : vector<1x256xi1> to vector<1x256xi1>
    %95 = vector.broadcast %94 : vector<1x256xi1> to vector<32x256xi1>
    %96 = vector.broadcast %cst_63 : f32 to vector<32x256xf32>
    %97 = arith.select %95, %93, %96 : vector<32x256xi1>, vector<32x256xf32>
    %98 = arith.addf %79, %97 : vector<32x256xf32>
    %c0_64 = arith.constant 0 : index
    %c96_65 = arith.constant 96 : index
    %99 = vector.load %arg6[%c0_64, %c96_65] : memref<32x512xf32, #tpu.memory_space<vmem>>, vector<32x256xf32>
    %c0_66 = arith.constant 0 : index
    %c0_67 = arith.constant 0 : index
    %100 = vector.load %arg7[%c0_66, %c0_67] : memref<160x256xf32, #tpu.memory_space<vmem>>, vector<32x256xf32>
    tpu.vector_store %arg7[%c0_66, %c0_67], %99 {strides = array<i32>} : memref<160x256xf32, #tpu.memory_space<vmem>>, vector<32x256xf32>,
    %c0_68 = arith.constant 0 : index
    %c112 = arith.constant 112 : index
    %101 = vector.load %arg6[%c0_68, %c112] : memref<32x512xf32, #tpu.memory_space<vmem>>, vector<32x256xf32>
    %c32_69 = arith.constant 32 : index
    %c0_70 = arith.constant 0 : index
    %102 = vector.load %arg7[%c32_69, %c0_70] : memref<160x256xf32, #tpu.memory_space<vmem>>, vector<32x256xf32>
    tpu.vector_store %arg7[%c32_69, %c0_70], %101 {strides = array<i32>} : memref<160x256xf32, #tpu.memory_space<vmem>>, vector<32x256xf32>,
    %c0_71 = arith.constant 0 : index
    %c128_72 = arith.constant 128 : index
    %103 = vector.load %arg6[%c0_71, %c128_72] : memref<32x512xf32, #tpu.memory_space<vmem>>, vector<32x256xf32>
    %c64_73 = arith.constant 64 : index
    %c0_74 = arith.constant 0 : index
    %104 = vector.load %arg7[%c64_73, %c0_74] : memref<160x256xf32, #tpu.memory_space<vmem>>, vector<32x256xf32>
    tpu.vector_store %arg7[%c64_73, %c0_74], %103 {strides = array<i32>} : memref<160x256xf32, #tpu.memory_space<vmem>>, vector<32x256xf32>,
    %c0_75 = arith.constant 0 : index
    %c144 = arith.constant 144 : index
    %105 = vector.load %arg6[%c0_75, %c144] : memref<32x512xf32, #tpu.memory_space<vmem>>, vector<32x256xf32>
    %c96_76 = arith.constant 96 : index
    %c0_77 = arith.constant 0 : index
    %106 = vector.load %arg7[%c96_76, %c0_77] : memref<160x256xf32, #tpu.memory_space<vmem>>, vector<32x256xf32>
    tpu.vector_store %arg7[%c96_76, %c0_77], %105 {strides = array<i32>} : memref<160x256xf32, #tpu.memory_space<vmem>>, vector<32x256xf32>,
    %c0_78 = arith.constant 0 : index
    %c160 = arith.constant 160 : index
    %107 = vector.load %arg6[%c0_78, %c160] : memref<32x512xf32, #tpu.memory_space<vmem>>, vector<32x256xf32>
    %c128_79 = arith.constant 128 : index
    %c0_80 = arith.constant 0 : index
    %108 = vector.load %arg7[%c128_79, %c0_80] : memref<160x256xf32, #tpu.memory_space<vmem>>, vector<32x256xf32>
    tpu.vector_store %arg7[%c128_79, %c0_80], %107 {strides = array<i32>} : memref<160x256xf32, #tpu.memory_space<vmem>>, vector<32x256xf32>,
    %c2 = arith.constant 2 : index
    %c0_81 = arith.constant 0 : index
    %c0_82 = arith.constant 0 : index
    %109 = vector.load %arg2[%c2, %c0_81, %c0_82] : memref<5x32x160xf32, #tpu.memory_space<vmem>>, vector<1x32x160xf32>
    %110 = vector.shape_cast %109 : vector<1x32x160xf32> to vector<32x160xf32>
    %c0_83 = arith.constant 0 : index
    %c0_84 = arith.constant 0 : index
    %111 = vector.load %arg7[%c0_83, %c0_84] : memref<160x256xf32, #tpu.memory_space<vmem>>, vector<160x256xf32>
    %cst_85 = arith.constant dense<0.000000e+00> : vector<32x256xf32>
    %112 = tpu.matmul %110, %111, %cst_85 {dimension_numbers = #tpu.dot_dimension_numbers<[1], [0], [0], [1], [0, 0, 1, 1], [], []>} : vector<32x160xf32>, vector<160x256xf32>, vector<32x256xf32> -> vector<32x256xf32>
    %113 = arith.addf %98, %112 : vector<32x256xf32>
    %c0_86 = arith.constant 0 : index
    %c97 = arith.constant 97 : index
    %114 = vector.load %arg6[%c0_86, %c97] : memref<32x512xf32, #tpu.memory_space<vmem>>, vector<32x256xf32>
    %c0_87 = arith.constant 0 : index
    %c0_88 = arith.constant 0 : index
    %115 = vector.load %arg7[%c0_87, %c0_88] : memref<160x256xf32, #tpu.memory_space<vmem>>, vector<32x256xf32>
    tpu.vector_store %arg7[%c0_87, %c0_88], %114 {strides = array<i32>} : memref<160x256xf32, #tpu.memory_space<vmem>>, vector<32x256xf32>,
    %c0_89 = arith.constant 0 : index
    %c113 = arith.constant 113 : index
    %116 = vector.load %arg6[%c0_89, %c113] : memref<32x512xf32, #tpu.memory_space<vmem>>, vector<32x256xf32>
    %c32_90 = arith.constant 32 : index
    %c0_91 = arith.constant 0 : index
    %117 = vector.load %arg7[%c32_90, %c0_91] : memref<160x256xf32, #tpu.memory_space<vmem>>, vector<32x256xf32>
    tpu.vector_store %arg7[%c32_90, %c0_91], %116 {strides = array<i32>} : memref<160x256xf32, #tpu.memory_space<vmem>>, vector<32x256xf32>,
    %c0_92 = arith.constant 0 : index
    %c129 = arith.constant 129 : index
    %118 = vector.load %arg6[%c0_92, %c129] : memref<32x512xf32, #tpu.memory_space<vmem>>, vector<32x256xf32>
    %c64_93 = arith.constant 64 : index
    %c0_94 = arith.constant 0 : index
    %119 = vector.load %arg7[%c64_93, %c0_94] : memref<160x256xf32, #tpu.memory_space<vmem>>, vector<32x256xf32>
    tpu.vector_store %arg7[%c64_93, %c0_94], %118 {strides = array<i32>} : memref<160x256xf32, #tpu.memory_space<vmem>>, vector<32x256xf32>,
    %c0_95 = arith.constant 0 : index
    %c145 = arith.constant 145 : index
    %120 = vector.load %arg6[%c0_95, %c145] : memref<32x512xf32, #tpu.memory_space<vmem>>, vector<32x256xf32>
    %c96_96 = arith.constant 96 : index
    %c0_97 = arith.constant 0 : index
    %121 = vector.load %arg7[%c96_96, %c0_97] : memref<160x256xf32, #tpu.memory_space<vmem>>, vector<32x256xf32>
    tpu.vector_store %arg7[%c96_96, %c0_97], %120 {strides = array<i32>} : memref<160x256xf32, #tpu.memory_space<vmem>>, vector<32x256xf32>,
    %c0_98 = arith.constant 0 : index
    %c161 = arith.constant 161 : index
    %122 = vector.load %arg6[%c0_98, %c161] : memref<32x512xf32, #tpu.memory_space<vmem>>, vector<32x256xf32>
    %c128_99 = arith.constant 128 : index
    %c0_100 = arith.constant 0 : index
    %123 = vector.load %arg7[%c128_99, %c0_100] : memref<160x256xf32, #tpu.memory_space<vmem>>, vector<32x256xf32>
    tpu.vector_store %arg7[%c128_99, %c0_100], %122 {strides = array<i32>} : memref<160x256xf32, #tpu.memory_space<vmem>>, vector<32x256xf32>,
    %c3 = arith.constant 3 : index
    %c0_101 = arith.constant 0 : index
    %c0_102 = arith.constant 0 : index
    %124 = vector.load %arg2[%c3, %c0_101, %c0_102] : memref<5x32x160xf32, #tpu.memory_space<vmem>>, vector<1x32x160xf32>
    %125 = vector.shape_cast %124 : vector<1x32x160xf32> to vector<32x160xf32>
    %c0_103 = arith.constant 0 : index
    %c0_104 = arith.constant 0 : index
    %126 = vector.load %arg7[%c0_103, %c0_104] : memref<160x256xf32, #tpu.memory_space<vmem>>, vector<160x256xf32>
    %cst_105 = arith.constant dense<0.000000e+00> : vector<32x256xf32>
    %127 = tpu.matmul %125, %126, %cst_105 {dimension_numbers = #tpu.dot_dimension_numbers<[1], [0], [0], [1], [0, 0, 1, 1], [], []>} : vector<32x160xf32>, vector<160x256xf32>, vector<32x256xf32> -> vector<32x256xf32>
    %cst_106 = arith.constant 0.000000e+00 : f32
    %128 = vector.shape_cast %43 : vector<1x256xi1> to vector<1x256xi1>
    %129 = vector.broadcast %128 : vector<1x256xi1> to vector<32x256xi1>
    %130 = vector.broadcast %cst_106 : f32 to vector<32x256xf32>
    %131 = arith.select %129, %127, %130 : vector<32x256xi1>, vector<32x256xf32>
    %132 = arith.addf %113, %131 : vector<32x256xf32>
    %c0_107 = arith.constant 0 : index
    %c98 = arith.constant 98 : index
    %133 = vector.load %arg6[%c0_107, %c98] : memref<32x512xf32, #tpu.memory_space<vmem>>, vector<32x256xf32>
    %c0_108 = arith.constant 0 : index
    %c0_109 = arith.constant 0 : index
    %134 = vector.load %arg7[%c0_108, %c0_109] : memref<160x256xf32, #tpu.memory_space<vmem>>, vector<32x256xf32>
    tpu.vector_store %arg7[%c0_108, %c0_109], %133 {strides = array<i32>} : memref<160x256xf32, #tpu.memory_space<vmem>>, vector<32x256xf32>,
    %c0_110 = arith.constant 0 : index
    %c114 = arith.constant 114 : index
    %135 = vector.load %arg6[%c0_110, %c114] : memref<32x512xf32, #tpu.memory_space<vmem>>, vector<32x256xf32>
    %c32_111 = arith.constant 32 : index
    %c0_112 = arith.constant 0 : index
    %136 = vector.load %arg7[%c32_111, %c0_112] : memref<160x256xf32, #tpu.memory_space<vmem>>, vector<32x256xf32>
    tpu.vector_store %arg7[%c32_111, %c0_112], %135 {strides = array<i32>} : memref<160x256xf32, #tpu.memory_space<vmem>>, vector<32x256xf32>,
    %c0_113 = arith.constant 0 : index
    %c130 = arith.constant 130 : index
    %137 = vector.load %arg6[%c0_113, %c130] : memref<32x512xf32, #tpu.memory_space<vmem>>, vector<32x256xf32>
    %c64_114 = arith.constant 64 : index
    %c0_115 = arith.constant 0 : index
    %138 = vector.load %arg7[%c64_114, %c0_115] : memref<160x256xf32, #tpu.memory_space<vmem>>, vector<32x256xf32>
    tpu.vector_store %arg7[%c64_114, %c0_115], %137 {strides = array<i32>} : memref<160x256xf32, #tpu.memory_space<vmem>>, vector<32x256xf32>,
    %c0_116 = arith.constant 0 : index
    %c146 = arith.constant 146 : index
    %139 = vector.load %arg6[%c0_116, %c146] : memref<32x512xf32, #tpu.memory_space<vmem>>, vector<32x256xf32>
    %c96_117 = arith.constant 96 : index
    %c0_118 = arith.constant 0 : index
    %140 = vector.load %arg7[%c96_117, %c0_118] : memref<160x256xf32, #tpu.memory_space<vmem>>, vector<32x256xf32>
    tpu.vector_store %arg7[%c96_117, %c0_118], %139 {strides = array<i32>} : memref<160x256xf32, #tpu.memory_space<vmem>>, vector<32x256xf32>,
    %c0_119 = arith.constant 0 : index
    %c162 = arith.constant 162 : index
    %141 = vector.load %arg6[%c0_119, %c162] : memref<32x512xf32, #tpu.memory_space<vmem>>, vector<32x256xf32>
    %c128_120 = arith.constant 128 : index
    %c0_121 = arith.constant 0 : index
    %142 = vector.load %arg7[%c128_120, %c0_121] : memref<160x256xf32, #tpu.memory_space<vmem>>, vector<32x256xf32>
    tpu.vector_store %arg7[%c128_120, %c0_121], %141 {strides = array<i32>} : memref<160x256xf32, #tpu.memory_space<vmem>>, vector<32x256xf32>,
    %c4 = arith.constant 4 : index
    %c0_122 = arith.constant 0 : index
    %c0_123 = arith.constant 0 : index
    %143 = vector.load %arg2[%c4, %c0_122, %c0_123] : memref<5x32x160xf32, #tpu.memory_space<vmem>>, vector<1x32x160xf32>
    %144 = vector.shape_cast %143 : vector<1x32x160xf32> to vector<32x160xf32>
    %c0_124 = arith.constant 0 : index
    %c0_125 = arith.constant 0 : index
    %145 = vector.load %arg7[%c0_124, %c0_125] : memref<160x256xf32, #tpu.memory_space<vmem>>, vector<160x256xf32>
    %cst_126 = arith.constant dense<0.000000e+00> : vector<32x256xf32>
    %146 = tpu.matmul %144, %145, %cst_126 {dimension_numbers = #tpu.dot_dimension_numbers<[1], [0], [0], [1], [0, 0, 1, 1], [], []>} : vector<32x160xf32>, vector<160x256xf32>, vector<32x256xf32> -> vector<32x256xf32>
    %cst_127 = arith.constant 0.000000e+00 : f32
    %147 = vector.shape_cast %52 : vector<1x256xi1> to vector<1x256xi1>
    %148 = vector.broadcast %147 : vector<1x256xi1> to vector<32x256xi1>
    %149 = vector.broadcast %cst_127 : f32 to vector<32x256xf32>
    %150 = arith.select %148, %146, %149 : vector<32x256xi1>, vector<32x256xf32>
    %151 = arith.addf %132, %150 : vector<32x256xf32>
    %cst_128 = arith.constant 0.000000e+00 : f32
    %152 = vector.broadcast %cst_128 : f32 to vector<32x256xf32>
    %153 = arith.maximumf %151, %152 : vector<32x256xf32>
    %c0_129 = arith.constant 0 : index
    %c128_130 = arith.constant 128 : index
    %154 = vector.load %arg6[%c0_129, %c128_130] : memref<32x512xf32, #tpu.memory_space<vmem>>, vector<32x256xf32>
    tpu.vector_store %arg6[%c0_129, %c128_130], %153 {strides = array<i32>} : memref<32x512xf32, #tpu.memory_space<vmem>>, vector<32x256xf32>,
    %cst_131 = arith.constant 0.000000e+00 : f32
    %155 = vector.broadcast %cst_131 : f32 to vector<32x256xf32>
    %c0_132 = arith.constant 0 : index
    %c94_133 = arith.constant 94 : index
    %156 = vector.load %arg6[%c0_132, %c94_133] : memref<32x512xf32, #tpu.memory_space<vmem>>, vector<32x256xf32>
    %c0_134 = arith.constant 0 : index
    %c0_135 = arith.constant 0 : index
    %157 = vector.load %arg7[%c0_134, %c0_135] : memref<160x256xf32, #tpu.memory_space<vmem>>, vector<32x256xf32>
    tpu.vector_store %arg7[%c0_134, %c0_135], %156 {strides = array<i32>} : memref<160x256xf32, #tpu.memory_space<vmem>>, vector<32x256xf32>,
    %c0_136 = arith.constant 0 : index
    %c110_137 = arith.constant 110 : index
    %158 = vector.load %arg6[%c0_136, %c110_137] : memref<32x512xf32, #tpu.memory_space<vmem>>, vector<32x256xf32>
    %c32_138 = arith.constant 32 : index
    %c0_139 = arith.constant 0 : index
    %159 = vector.load %arg7[%c32_138, %c0_139] : memref<160x256xf32, #tpu.memory_space<vmem>>, vector<32x256xf32>
    tpu.vector_store %arg7[%c32_138, %c0_139], %158 {strides = array<i32>} : memref<160x256xf32, #tpu.memory_space<vmem>>, vector<32x256xf32>,
    %c0_140 = arith.constant 0 : index
    %c126_141 = arith.constant 126 : index
    %160 = vector.load %arg6[%c0_140, %c126_141] : memref<32x512xf32, #tpu.memory_space<vmem>>, vector<32x256xf32>
    %c64_142 = arith.constant 64 : index
    %c0_143 = arith.constant 0 : index
    %161 = vector.load %arg7[%c64_142, %c0_143] : memref<160x256xf32, #tpu.memory_space<vmem>>, vector<32x256xf32>
    tpu.vector_store %arg7[%c64_142, %c0_143], %160 {strides = array<i32>} : memref<160x256xf32, #tpu.memory_space<vmem>>, vector<32x256xf32>,
    %c0_144 = arith.constant 0 : index
    %c142_145 = arith.constant 142 : index
    %162 = vector.load %arg6[%c0_144, %c142_145] : memref<32x512xf32, #tpu.memory_space<vmem>>, vector<32x256xf32>
    %c96_146 = arith.constant 96 : index
    %c0_147 = arith.constant 0 : index
    %163 = vector.load %arg7[%c96_146, %c0_147] : memref<160x256xf32, #tpu.memory_space<vmem>>, vector<32x256xf32>
    tpu.vector_store %arg7[%c96_146, %c0_147], %162 {strides = array<i32>} : memref<160x256xf32, #tpu.memory_space<vmem>>, vector<32x256xf32>,
    %c0_148 = arith.constant 0 : index
    %c158_149 = arith.constant 158 : index
    %164 = vector.load %arg6[%c0_148, %c158_149] : memref<32x512xf32, #tpu.memory_space<vmem>>, vector<32x256xf32>
    %c128_150 = arith.constant 128 : index
    %c0_151 = arith.constant 0 : index
    %165 = vector.load %arg7[%c128_150, %c0_151] : memref<160x256xf32, #tpu.memory_space<vmem>>, vector<32x256xf32>
    tpu.vector_store %arg7[%c128_150, %c0_151], %164 {strides = array<i32>} : memref<160x256xf32, #tpu.memory_space<vmem>>, vector<32x256xf32>,
    %c0_152 = arith.constant 0 : index
    %c0_153 = arith.constant 0 : index
    %c0_154 = arith.constant 0 : index
    %166 = vector.load %arg3[%c0_152, %c0_153, %c0_154] : memref<5x32x160xf32, #tpu.memory_space<vmem>>, vector<1x32x160xf32>
    %167 = vector.shape_cast %166 : vector<1x32x160xf32> to vector<32x160xf32>
    %c0_155 = arith.constant 0 : index
    %c0_156 = arith.constant 0 : index
    %168 = vector.load %arg7[%c0_155, %c0_156] : memref<160x256xf32, #tpu.memory_space<vmem>>, vector<160x256xf32>
    %cst_157 = arith.constant dense<0.000000e+00> : vector<32x256xf32>
    %169 = tpu.matmul %167, %168, %cst_157 {dimension_numbers = #tpu.dot_dimension_numbers<[1], [0], [0], [1], [0, 0, 1, 1], [], []>} : vector<32x160xf32>, vector<160x256xf32>, vector<32x256xf32> -> vector<32x256xf32>
    %cst_158 = arith.constant 0.000000e+00 : f32
    %170 = vector.shape_cast %25 : vector<1x256xi1> to vector<1x256xi1>
    %171 = vector.broadcast %170 : vector<1x256xi1> to vector<32x256xi1>
    %172 = vector.broadcast %cst_158 : f32 to vector<32x256xf32>
    %173 = arith.select %171, %169, %172 : vector<32x256xi1>, vector<32x256xf32>
    %174 = arith.addf %155, %173 : vector<32x256xf32>
    %c0_159 = arith.constant 0 : index
    %c95_160 = arith.constant 95 : index
    %175 = vector.load %arg6[%c0_159, %c95_160] : memref<32x512xf32, #tpu.memory_space<vmem>>, vector<32x256xf32>
    %c0_161 = arith.constant 0 : index
    %c0_162 = arith.constant 0 : index
    %176 = vector.load %arg7[%c0_161, %c0_162] : memref<160x256xf32, #tpu.memory_space<vmem>>, vector<32x256xf32>
    tpu.vector_store %arg7[%c0_161, %c0_162], %175 {strides = array<i32>} : memref<160x256xf32, #tpu.memory_space<vmem>>, vector<32x256xf32>,
    %c0_163 = arith.constant 0 : index
    %c111_164 = arith.constant 111 : index
    %177 = vector.load %arg6[%c0_163, %c111_164] : memref<32x512xf32, #tpu.memory_space<vmem>>, vector<32x256xf32>
    %c32_165 = arith.constant 32 : index
    %c0_166 = arith.constant 0 : index
    %178 = vector.load %arg7[%c32_165, %c0_166] : memref<160x256xf32, #tpu.memory_space<vmem>>, vector<32x256xf32>
    tpu.vector_store %arg7[%c32_165, %c0_166], %177 {strides = array<i32>} : memref<160x256xf32, #tpu.memory_space<vmem>>, vector<32x256xf32>,
    %c0_167 = arith.constant 0 : index
    %c127_168 = arith.constant 127 : index
    %179 = vector.load %arg6[%c0_167, %c127_168] : memref<32x512xf32, #tpu.memory_space<vmem>>, vector<32x256xf32>
    %c64_169 = arith.constant 64 : index
    %c0_170 = arith.constant 0 : index
    %180 = vector.load %arg7[%c64_169, %c0_170] : memref<160x256xf32, #tpu.memory_space<vmem>>, vector<32x256xf32>
    tpu.vector_store %arg7[%c64_169, %c0_170], %179 {strides = array<i32>} : memref<160x256xf32, #tpu.memory_space<vmem>>, vector<32x256xf32>,
    %c0_171 = arith.constant 0 : index
    %c143_172 = arith.constant 143 : index
    %181 = vector.load %arg6[%c0_171, %c143_172] : memref<32x512xf32, #tpu.memory_space<vmem>>, vector<32x256xf32>
    %c96_173 = arith.constant 96 : index
    %c0_174 = arith.constant 0 : index
    %182 = vector.load %arg7[%c96_173, %c0_174] : memref<160x256xf32, #tpu.memory_space<vmem>>, vector<32x256xf32>
    tpu.vector_store %arg7[%c96_173, %c0_174], %181 {strides = array<i32>} : memref<160x256xf32, #tpu.memory_space<vmem>>, vector<32x256xf32>,
    %c0_175 = arith.constant 0 : index
    %c159_176 = arith.constant 159 : index
    %183 = vector.load %arg6[%c0_175, %c159_176] : memref<32x512xf32, #tpu.memory_space<vmem>>, vector<32x256xf32>
    %c128_177 = arith.constant 128 : index
    %c0_178 = arith.constant 0 : index
    %184 = vector.load %arg7[%c128_177, %c0_178] : memref<160x256xf32, #tpu.memory_space<vmem>>, vector<32x256xf32>
    tpu.vector_store %arg7[%c128_177, %c0_178], %183 {strides = array<i32>} : memref<160x256xf32, #tpu.memory_space<vmem>>, vector<32x256xf32>,
    %c1_179 = arith.constant 1 : index
    %c0_180 = arith.constant 0 : index
    %c0_181 = arith.constant 0 : index
    %185 = vector.load %arg3[%c1_179, %c0_180, %c0_181] : memref<5x32x160xf32, #tpu.memory_space<vmem>>, vector<1x32x160xf32>
    %186 = vector.shape_cast %185 : vector<1x32x160xf32> to vector<32x160xf32>
    %c0_182 = arith.constant 0 : index
    %c0_183 = arith.constant 0 : index
    %187 = vector.load %arg7[%c0_182, %c0_183] : memref<160x256xf32, #tpu.memory_space<vmem>>, vector<160x256xf32>
    %cst_184 = arith.constant dense<0.000000e+00> : vector<32x256xf32>
    %188 = tpu.matmul %186, %187, %cst_184 {dimension_numbers = #tpu.dot_dimension_numbers<[1], [0], [0], [1], [0, 0, 1, 1], [], []>} : vector<32x160xf32>, vector<160x256xf32>, vector<32x256xf32> -> vector<32x256xf32>
    %cst_185 = arith.constant 0.000000e+00 : f32
    %189 = vector.shape_cast %34 : vector<1x256xi1> to vector<1x256xi1>
    %190 = vector.broadcast %189 : vector<1x256xi1> to vector<32x256xi1>
    %191 = vector.broadcast %cst_185 : f32 to vector<32x256xf32>
    %192 = arith.select %190, %188, %191 : vector<32x256xi1>, vector<32x256xf32>
    %193 = arith.addf %174, %192 : vector<32x256xf32>
    %c0_186 = arith.constant 0 : index
    %c96_187 = arith.constant 96 : index
    %194 = vector.load %arg6[%c0_186, %c96_187] : memref<32x512xf32, #tpu.memory_space<vmem>>, vector<32x256xf32>
    %c0_188 = arith.constant 0 : index
    %c0_189 = arith.constant 0 : index
    %195 = vector.load %arg7[%c0_188, %c0_189] : memref<160x256xf32, #tpu.memory_space<vmem>>, vector<32x256xf32>
    tpu.vector_store %arg7[%c0_188, %c0_189], %194 {strides = array<i32>} : memref<160x256xf32, #tpu.memory_space<vmem>>, vector<32x256xf32>,
    %c0_190 = arith.constant 0 : index
    %c112_191 = arith.constant 112 : index
    %196 = vector.load %arg6[%c0_190, %c112_191] : memref<32x512xf32, #tpu.memory_space<vmem>>, vector<32x256xf32>
    %c32_192 = arith.constant 32 : index
    %c0_193 = arith.constant 0 : index
    %197 = vector.load %arg7[%c32_192, %c0_193] : memref<160x256xf32, #tpu.memory_space<vmem>>, vector<32x256xf32>
    tpu.vector_store %arg7[%c32_192, %c0_193], %196 {strides = array<i32>} : memref<160x256xf32, #tpu.memory_space<vmem>>, vector<32x256xf32>,
    %c0_194 = arith.constant 0 : index
    %c128_195 = arith.constant 128 : index
    %198 = vector.load %arg6[%c0_194, %c128_195] : memref<32x512xf32, #tpu.memory_space<vmem>>, vector<32x256xf32>
    %c64_196 = arith.constant 64 : index
    %c0_197 = arith.constant 0 : index
    %199 = vector.load %arg7[%c64_196, %c0_197] : memref<160x256xf32, #tpu.memory_space<vmem>>, vector<32x256xf32>
    tpu.vector_store %arg7[%c64_196, %c0_197], %198 {strides = array<i32>} : memref<160x256xf32, #tpu.memory_space<vmem>>, vector<32x256xf32>,
    %c0_198 = arith.constant 0 : index
    %c144_199 = arith.constant 144 : index
    %200 = vector.load %arg6[%c0_198, %c144_199] : memref<32x512xf32, #tpu.memory_space<vmem>>, vector<32x256xf32>
    %c96_200 = arith.constant 96 : index
    %c0_201 = arith.constant 0 : index
    %201 = vector.load %arg7[%c96_200, %c0_201] : memref<160x256xf32, #tpu.memory_space<vmem>>, vector<32x256xf32>
    tpu.vector_store %arg7[%c96_200, %c0_201], %200 {strides = array<i32>} : memref<160x256xf32, #tpu.memory_space<vmem>>, vector<32x256xf32>,
    %c0_202 = arith.constant 0 : index
    %c160_203 = arith.constant 160 : index
    %202 = vector.load %arg6[%c0_202, %c160_203] : memref<32x512xf32, #tpu.memory_space<vmem>>, vector<32x256xf32>
    %c128_204 = arith.constant 128 : index
    %c0_205 = arith.constant 0 : index
    %203 = vector.load %arg7[%c128_204, %c0_205] : memref<160x256xf32, #tpu.memory_space<vmem>>, vector<32x256xf32>
    tpu.vector_store %arg7[%c128_204, %c0_205], %202 {strides = array<i32>} : memref<160x256xf32, #tpu.memory_space<vmem>>, vector<32x256xf32>,
    %c2_206 = arith.constant 2 : index
    %c0_207 = arith.constant 0 : index
    %c0_208 = arith.constant 0 : index
    %204 = vector.load %arg3[%c2_206, %c0_207, %c0_208] : memref<5x32x160xf32, #tpu.memory_space<vmem>>, vector<1x32x160xf32>
    %205 = vector.shape_cast %204 : vector<1x32x160xf32> to vector<32x160xf32>
    %c0_209 = arith.constant 0 : index
    %c0_210 = arith.constant 0 : index
    %206 = vector.load %arg7[%c0_209, %c0_210] : memref<160x256xf32, #tpu.memory_space<vmem>>, vector<160x256xf32>
    %cst_211 = arith.constant dense<0.000000e+00> : vector<32x256xf32>
    %207 = tpu.matmul %205, %206, %cst_211 {dimension_numbers = #tpu.dot_dimension_numbers<[1], [0], [0], [1], [0, 0, 1, 1], [], []>} : vector<32x160xf32>, vector<160x256xf32>, vector<32x256xf32> -> vector<32x256xf32>
    %208 = arith.addf %193, %207 : vector<32x256xf32>
    %c0_212 = arith.constant 0 : index
    %c97_213 = arith.constant 97 : index
    %209 = vector.load %arg6[%c0_212, %c97_213] : memref<32x512xf32, #tpu.memory_space<vmem>>, vector<32x256xf32>
    %c0_214 = arith.constant 0 : index
    %c0_215 = arith.constant 0 : index
    %210 = vector.load %arg7[%c0_214, %c0_215] : memref<160x256xf32, #tpu.memory_space<vmem>>, vector<32x256xf32>
    tpu.vector_store %arg7[%c0_214, %c0_215], %209 {strides = array<i32>} : memref<160x256xf32, #tpu.memory_space<vmem>>, vector<32x256xf32>,
    %c0_216 = arith.constant 0 : index
    %c113_217 = arith.constant 113 : index
    %211 = vector.load %arg6[%c0_216, %c113_217] : memref<32x512xf32, #tpu.memory_space<vmem>>, vector<32x256xf32>
    %c32_218 = arith.constant 32 : index
    %c0_219 = arith.constant 0 : index
    %212 = vector.load %arg7[%c32_218, %c0_219] : memref<160x256xf32, #tpu.memory_space<vmem>>, vector<32x256xf32>
    tpu.vector_store %arg7[%c32_218, %c0_219], %211 {strides = array<i32>} : memref<160x256xf32, #tpu.memory_space<vmem>>, vector<32x256xf32>,
    %c0_220 = arith.constant 0 : index
    %c129_221 = arith.constant 129 : index
    %213 = vector.load %arg6[%c0_220, %c129_221] : memref<32x512xf32, #tpu.memory_space<vmem>>, vector<32x256xf32>
    %c64_222 = arith.constant 64 : index
    %c0_223 = arith.constant 0 : index
    %214 = vector.load %arg7[%c64_222, %c0_223] : memref<160x256xf32, #tpu.memory_space<vmem>>, vector<32x256xf32>
    tpu.vector_store %arg7[%c64_222, %c0_223], %213 {strides = array<i32>} : memref<160x256xf32, #tpu.memory_space<vmem>>, vector<32x256xf32>,
    %c0_224 = arith.constant 0 : index
    %c145_225 = arith.constant 145 : index
    %215 = vector.load %arg6[%c0_224, %c145_225] : memref<32x512xf32, #tpu.memory_space<vmem>>, vector<32x256xf32>
    %c96_226 = arith.constant 96 : index
    %c0_227 = arith.constant 0 : index
    %216 = vector.load %arg7[%c96_226, %c0_227] : memref<160x256xf32, #tpu.memory_space<vmem>>, vector<32x256xf32>
    tpu.vector_store %arg7[%c96_226, %c0_227], %215 {strides = array<i32>} : memref<160x256xf32, #tpu.memory_space<vmem>>, vector<32x256xf32>,
    %c0_228 = arith.constant 0 : index
    %c161_229 = arith.constant 161 : index
    %217 = vector.load %arg6[%c0_228, %c161_229] : memref<32x512xf32, #tpu.memory_space<vmem>>, vector<32x256xf32>
    %c128_230 = arith.constant 128 : index
    %c0_231 = arith.constant 0 : index
    %218 = vector.load %arg7[%c128_230, %c0_231] : memref<160x256xf32, #tpu.memory_space<vmem>>, vector<32x256xf32>
    tpu.vector_store %arg7[%c128_230, %c0_231], %217 {strides = array<i32>} : memref<160x256xf32, #tpu.memory_space<vmem>>, vector<32x256xf32>,
    %c3_232 = arith.constant 3 : index
    %c0_233 = arith.constant 0 : index
    %c0_234 = arith.constant 0 : index
    %219 = vector.load %arg3[%c3_232, %c0_233, %c0_234] : memref<5x32x160xf32, #tpu.memory_space<vmem>>, vector<1x32x160xf32>
    %220 = vector.shape_cast %219 : vector<1x32x160xf32> to vector<32x160xf32>
    %c0_235 = arith.constant 0 : index
    %c0_236 = arith.constant 0 : index
    %221 = vector.load %arg7[%c0_235, %c0_236] : memref<160x256xf32, #tpu.memory_space<vmem>>, vector<160x256xf32>
    %cst_237 = arith.constant dense<0.000000e+00> : vector<32x256xf32>
    %222 = tpu.matmul %220, %221, %cst_237 {dimension_numbers = #tpu.dot_dimension_numbers<[1], [0], [0], [1], [0, 0, 1, 1], [], []>} : vector<32x160xf32>, vector<160x256xf32>, vector<32x256xf32> -> vector<32x256xf32>
    %cst_238 = arith.constant 0.000000e+00 : f32
    %223 = vector.shape_cast %43 : vector<1x256xi1> to vector<1x256xi1>
    %224 = vector.broadcast %223 : vector<1x256xi1> to vector<32x256xi1>
    %225 = vector.broadcast %cst_238 : f32 to vector<32x256xf32>
    %226 = arith.select %224, %222, %225 : vector<32x256xi1>, vector<32x256xf32>
    %227 = arith.addf %208, %226 : vector<32x256xf32>
    %c0_239 = arith.constant 0 : index
    %c98_240 = arith.constant 98 : index
    %228 = vector.load %arg6[%c0_239, %c98_240] : memref<32x512xf32, #tpu.memory_space<vmem>>, vector<32x256xf32>
    %c0_241 = arith.constant 0 : index
    %c0_242 = arith.constant 0 : index
    %229 = vector.load %arg7[%c0_241, %c0_242] : memref<160x256xf32, #tpu.memory_space<vmem>>, vector<32x256xf32>
    tpu.vector_store %arg7[%c0_241, %c0_242], %228 {strides = array<i32>} : memref<160x256xf32, #tpu.memory_space<vmem>>, vector<32x256xf32>,
    %c0_243 = arith.constant 0 : index
    %c114_244 = arith.constant 114 : index
    %230 = vector.load %arg6[%c0_243, %c114_244] : memref<32x512xf32, #tpu.memory_space<vmem>>, vector<32x256xf32>
    %c32_245 = arith.constant 32 : index
    %c0_246 = arith.constant 0 : index
    %231 = vector.load %arg7[%c32_245, %c0_246] : memref<160x256xf32, #tpu.memory_space<vmem>>, vector<32x256xf32>
    tpu.vector_store %arg7[%c32_245, %c0_246], %230 {strides = array<i32>} : memref<160x256xf32, #tpu.memory_space<vmem>>, vector<32x256xf32>,
    %c0_247 = arith.constant 0 : index
    %c130_248 = arith.constant 130 : index
    %232 = vector.load %arg6[%c0_247, %c130_248] : memref<32x512xf32, #tpu.memory_space<vmem>>, vector<32x256xf32>
    %c64_249 = arith.constant 64 : index
    %c0_250 = arith.constant 0 : index
    %233 = vector.load %arg7[%c64_249, %c0_250] : memref<160x256xf32, #tpu.memory_space<vmem>>, vector<32x256xf32>
    tpu.vector_store %arg7[%c64_249, %c0_250], %232 {strides = array<i32>} : memref<160x256xf32, #tpu.memory_space<vmem>>, vector<32x256xf32>,
    %c0_251 = arith.constant 0 : index
    %c146_252 = arith.constant 146 : index
    %234 = vector.load %arg6[%c0_251, %c146_252] : memref<32x512xf32, #tpu.memory_space<vmem>>, vector<32x256xf32>
    %c96_253 = arith.constant 96 : index
    %c0_254 = arith.constant 0 : index
    %235 = vector.load %arg7[%c96_253, %c0_254] : memref<160x256xf32, #tpu.memory_space<vmem>>, vector<32x256xf32>
    tpu.vector_store %arg7[%c96_253, %c0_254], %234 {strides = array<i32>} : memref<160x256xf32, #tpu.memory_space<vmem>>, vector<32x256xf32>,
    %c0_255 = arith.constant 0 : index
    %c162_256 = arith.constant 162 : index
    %236 = vector.load %arg6[%c0_255, %c162_256] : memref<32x512xf32, #tpu.memory_space<vmem>>, vector<32x256xf32>
    %c128_257 = arith.constant 128 : index
    %c0_258 = arith.constant 0 : index
    %237 = vector.load %arg7[%c128_257, %c0_258] : memref<160x256xf32, #tpu.memory_space<vmem>>, vector<32x256xf32>
    tpu.vector_store %arg7[%c128_257, %c0_258], %236 {strides = array<i32>} : memref<160x256xf32, #tpu.memory_space<vmem>>, vector<32x256xf32>,
    %c4_259 = arith.constant 4 : index
    %c0_260 = arith.constant 0 : index
    %c0_261 = arith.constant 0 : index
    %238 = vector.load %arg3[%c4_259, %c0_260, %c0_261] : memref<5x32x160xf32, #tpu.memory_space<vmem>>, vector<1x32x160xf32>
    %239 = vector.shape_cast %238 : vector<1x32x160xf32> to vector<32x160xf32>
    %c0_262 = arith.constant 0 : index
    %c0_263 = arith.constant 0 : index
    %240 = vector.load %arg7[%c0_262, %c0_263] : memref<160x256xf32, #tpu.memory_space<vmem>>, vector<160x256xf32>
    %cst_264 = arith.constant dense<0.000000e+00> : vector<32x256xf32>
    %241 = tpu.matmul %239, %240, %cst_264 {dimension_numbers = #tpu.dot_dimension_numbers<[1], [0], [0], [1], [0, 0, 1, 1], [], []>} : vector<32x160xf32>, vector<160x256xf32>, vector<32x256xf32> -> vector<32x256xf32>
    %cst_265 = arith.constant 0.000000e+00 : f32
    %242 = vector.shape_cast %52 : vector<1x256xi1> to vector<1x256xi1>
    %243 = vector.broadcast %242 : vector<1x256xi1> to vector<32x256xi1>
    %244 = vector.broadcast %cst_265 : f32 to vector<32x256xf32>
    %245 = arith.select %243, %241, %244 : vector<32x256xi1>, vector<32x256xf32>
    %246 = arith.addf %227, %245 : vector<32x256xf32>
    %cst_266 = arith.constant 0.000000e+00 : f32
    %247 = vector.broadcast %cst_266 : f32 to vector<32x256xf32>
    %248 = arith.maximumf %246, %247 : vector<32x256xf32>
    %c0_267 = arith.constant 0 : index
    %c128_268 = arith.constant 128 : index
    %249 = vector.load %arg6[%c0_267, %c128_268] : memref<32x512xf32, #tpu.memory_space<vmem>>, vector<32x256xf32>
    tpu.vector_store %arg6[%c0_267, %c128_268], %248 {strides = array<i32>} : memref<32x512xf32, #tpu.memory_space<vmem>>, vector<32x256xf32>,
    %cst_269 = arith.constant 0.000000e+00 : f32
    %250 = vector.broadcast %cst_269 : f32 to vector<32x256xf32>
    %c0_270 = arith.constant 0 : index
    %c94_271 = arith.constant 94 : index
    %251 = vector.load %arg6[%c0_270, %c94_271] : memref<32x512xf32, #tpu.memory_space<vmem>>, vector<32x256xf32>
    %c0_272 = arith.constant 0 : index
    %c0_273 = arith.constant 0 : index
    %252 = vector.load %arg7[%c0_272, %c0_273] : memref<160x256xf32, #tpu.memory_space<vmem>>, vector<32x256xf32>
    tpu.vector_store %arg7[%c0_272, %c0_273], %251 {strides = array<i32>} : memref<160x256xf32, #tpu.memory_space<vmem>>, vector<32x256xf32>,
    %c0_274 = arith.constant 0 : index
    %c110_275 = arith.constant 110 : index
    %253 = vector.load %arg6[%c0_274, %c110_275] : memref<32x512xf32, #tpu.memory_space<vmem>>, vector<32x256xf32>
    %c32_276 = arith.constant 32 : index
    %c0_277 = arith.constant 0 : index
    %254 = vector.load %arg7[%c32_276, %c0_277] : memref<160x256xf32, #tpu.memory_space<vmem>>, vector<32x256xf32>
    tpu.vector_store %arg7[%c32_276, %c0_277], %253 {strides = array<i32>} : memref<160x256xf32, #tpu.memory_space<vmem>>, vector<32x256xf32>,
    %c0_278 = arith.constant 0 : index
    %c126_279 = arith.constant 126 : index
    %255 = vector.load %arg6[%c0_278, %c126_279] : memref<32x512xf32, #tpu.memory_space<vmem>>, vector<32x256xf32>
    %c64_280 = arith.constant 64 : index
    %c0_281 = arith.constant 0 : index
    %256 = vector.load %arg7[%c64_280, %c0_281] : memref<160x256xf32, #tpu.memory_space<vmem>>, vector<32x256xf32>
    tpu.vector_store %arg7[%c64_280, %c0_281], %255 {strides = array<i32>} : memref<160x256xf32, #tpu.memory_space<vmem>>, vector<32x256xf32>,
    %c0_282 = arith.constant 0 : index
    %c142_283 = arith.constant 142 : index
    %257 = vector.load %arg6[%c0_282, %c142_283] : memref<32x512xf32, #tpu.memory_space<vmem>>, vector<32x256xf32>
    %c96_284 = arith.constant 96 : index
    %c0_285 = arith.constant 0 : index
    %258 = vector.load %arg7[%c96_284, %c0_285] : memref<160x256xf32, #tpu.memory_space<vmem>>, vector<32x256xf32>
    tpu.vector_store %arg7[%c96_284, %c0_285], %257 {strides = array<i32>} : memref<160x256xf32, #tpu.memory_space<vmem>>, vector<32x256xf32>,
    %c0_286 = arith.constant 0 : index
    %c158_287 = arith.constant 158 : index
    %259 = vector.load %arg6[%c0_286, %c158_287] : memref<32x512xf32, #tpu.memory_space<vmem>>, vector<32x256xf32>
    %c128_288 = arith.constant 128 : index
    %c0_289 = arith.constant 0 : index
    %260 = vector.load %arg7[%c128_288, %c0_289] : memref<160x256xf32, #tpu.memory_space<vmem>>, vector<32x256xf32>
    tpu.vector_store %arg7[%c128_288, %c0_289], %259 {strides = array<i32>} : memref<160x256xf32, #tpu.memory_space<vmem>>, vector<32x256xf32>,
    %c0_290 = arith.constant 0 : index
    %c0_291 = arith.constant 0 : index
    %c0_292 = arith.constant 0 : index
    %261 = vector.load %arg4[%c0_290, %c0_291, %c0_292] : memref<5x32x160xf32, #tpu.memory_space<vmem>>, vector<1x32x160xf32>
    %262 = vector.shape_cast %261 : vector<1x32x160xf32> to vector<32x160xf32>
    %c0_293 = arith.constant 0 : index
    %c0_294 = arith.constant 0 : index
    %263 = vector.load %arg7[%c0_293, %c0_294] : memref<160x256xf32, #tpu.memory_space<vmem>>, vector<160x256xf32>
    %cst_295 = arith.constant dense<0.000000e+00> : vector<32x256xf32>
    %264 = tpu.matmul %262, %263, %cst_295 {dimension_numbers = #tpu.dot_dimension_numbers<[1], [0], [0], [1], [0, 0, 1, 1], [], []>} : vector<32x160xf32>, vector<160x256xf32>, vector<32x256xf32> -> vector<32x256xf32>
    %cst_296 = arith.constant 0.000000e+00 : f32
    %265 = vector.shape_cast %25 : vector<1x256xi1> to vector<1x256xi1>
    %266 = vector.broadcast %265 : vector<1x256xi1> to vector<32x256xi1>
    %267 = vector.broadcast %cst_296 : f32 to vector<32x256xf32>
    %268 = arith.select %266, %264, %267 : vector<32x256xi1>, vector<32x256xf32>
    %269 = arith.addf %250, %268 : vector<32x256xf32>
    %c0_297 = arith.constant 0 : index
    %c95_298 = arith.constant 95 : index
    %270 = vector.load %arg6[%c0_297, %c95_298] : memref<32x512xf32, #tpu.memory_space<vmem>>, vector<32x256xf32>
    %c0_299 = arith.constant 0 : index
    %c0_300 = arith.constant 0 : index
    %271 = vector.load %arg7[%c0_299, %c0_300] : memref<160x256xf32, #tpu.memory_space<vmem>>, vector<32x256xf32>
    tpu.vector_store %arg7[%c0_299, %c0_300], %270 {strides = array<i32>} : memref<160x256xf32, #tpu.memory_space<vmem>>, vector<32x256xf32>,
    %c0_301 = arith.constant 0 : index
    %c111_302 = arith.constant 111 : index
    %272 = vector.load %arg6[%c0_301, %c111_302] : memref<32x512xf32, #tpu.memory_space<vmem>>, vector<32x256xf32>
    %c32_303 = arith.constant 32 : index
    %c0_304 = arith.constant 0 : index
    %273 = vector.load %arg7[%c32_303, %c0_304] : memref<160x256xf32, #tpu.memory_space<vmem>>, vector<32x256xf32>
    tpu.vector_store %arg7[%c32_303, %c0_304], %272 {strides = array<i32>} : memref<160x256xf32, #tpu.memory_space<vmem>>, vector<32x256xf32>,
    %c0_305 = arith.constant 0 : index
    %c127_306 = arith.constant 127 : index
    %274 = vector.load %arg6[%c0_305, %c127_306] : memref<32x512xf32, #tpu.memory_space<vmem>>, vector<32x256xf32>
    %c64_307 = arith.constant 64 : index
    %c0_308 = arith.constant 0 : index
    %275 = vector.load %arg7[%c64_307, %c0_308] : memref<160x256xf32, #tpu.memory_space<vmem>>, vector<32x256xf32>
    tpu.vector_store %arg7[%c64_307, %c0_308], %274 {strides = array<i32>} : memref<160x256xf32, #tpu.memory_space<vmem>>, vector<32x256xf32>,
    %c0_309 = arith.constant 0 : index
    %c143_310 = arith.constant 143 : index
    %276 = vector.load %arg6[%c0_309, %c143_310] : memref<32x512xf32, #tpu.memory_space<vmem>>, vector<32x256xf32>
    %c96_311 = arith.constant 96 : index
    %c0_312 = arith.constant 0 : index
    %277 = vector.load %arg7[%c96_311, %c0_312] : memref<160x256xf32, #tpu.memory_space<vmem>>, vector<32x256xf32>
    tpu.vector_store %arg7[%c96_311, %c0_312], %276 {strides = array<i32>} : memref<160x256xf32, #tpu.memory_space<vmem>>, vector<32x256xf32>,
    %c0_313 = arith.constant 0 : index
    %c159_314 = arith.constant 159 : index
    %278 = vector.load %arg6[%c0_313, %c159_314] : memref<32x512xf32, #tpu.memory_space<vmem>>, vector<32x256xf32>
    %c128_315 = arith.constant 128 : index
    %c0_316 = arith.constant 0 : index
    %279 = vector.load %arg7[%c128_315, %c0_316] : memref<160x256xf32, #tpu.memory_space<vmem>>, vector<32x256xf32>
    tpu.vector_store %arg7[%c128_315, %c0_316], %278 {strides = array<i32>} : memref<160x256xf32, #tpu.memory_space<vmem>>, vector<32x256xf32>,
    %c1_317 = arith.constant 1 : index
    %c0_318 = arith.constant 0 : index
    %c0_319 = arith.constant 0 : index
    %280 = vector.load %arg4[%c1_317, %c0_318, %c0_319] : memref<5x32x160xf32, #tpu.memory_space<vmem>>, vector<1x32x160xf32>
    %281 = vector.shape_cast %280 : vector<1x32x160xf32> to vector<32x160xf32>
    %c0_320 = arith.constant 0 : index
    %c0_321 = arith.constant 0 : index
    %282 = vector.load %arg7[%c0_320, %c0_321] : memref<160x256xf32, #tpu.memory_space<vmem>>, vector<160x256xf32>
    %cst_322 = arith.constant dense<0.000000e+00> : vector<32x256xf32>
    %283 = tpu.matmul %281, %282, %cst_322 {dimension_numbers = #tpu.dot_dimension_numbers<[1], [0], [0], [1], [0, 0, 1, 1], [], []>} : vector<32x160xf32>, vector<160x256xf32>, vector<32x256xf32> -> vector<32x256xf32>
    %cst_323 = arith.constant 0.000000e+00 : f32
    %284 = vector.shape_cast %34 : vector<1x256xi1> to vector<1x256xi1>
    %285 = vector.broadcast %284 : vector<1x256xi1> to vector<32x256xi1>
    %286 = vector.broadcast %cst_323 : f32 to vector<32x256xf32>
    %287 = arith.select %285, %283, %286 : vector<32x256xi1>, vector<32x256xf32>
    %288 = arith.addf %269, %287 : vector<32x256xf32>
    %c0_324 = arith.constant 0 : index
    %c96_325 = arith.constant 96 : index
    %289 = vector.load %arg6[%c0_324, %c96_325] : memref<32x512xf32, #tpu.memory_space<vmem>>, vector<32x256xf32>
    %c0_326 = arith.constant 0 : index
    %c0_327 = arith.constant 0 : index
    %290 = vector.load %arg7[%c0_326, %c0_327] : memref<160x256xf32, #tpu.memory_space<vmem>>, vector<32x256xf32>
    tpu.vector_store %arg7[%c0_326, %c0_327], %289 {strides = array<i32>} : memref<160x256xf32, #tpu.memory_space<vmem>>, vector<32x256xf32>,
    %c0_328 = arith.constant 0 : index
    %c112_329 = arith.constant 112 : index
    %291 = vector.load %arg6[%c0_328, %c112_329] : memref<32x512xf32, #tpu.memory_space<vmem>>, vector<32x256xf32>
    %c32_330 = arith.constant 32 : index
    %c0_331 = arith.constant 0 : index
    %292 = vector.load %arg7[%c32_330, %c0_331] : memref<160x256xf32, #tpu.memory_space<vmem>>, vector<32x256xf32>
    tpu.vector_store %arg7[%c32_330, %c0_331], %291 {strides = array<i32>} : memref<160x256xf32, #tpu.memory_space<vmem>>, vector<32x256xf32>,
    %c0_332 = arith.constant 0 : index
    %c128_333 = arith.constant 128 : index
    %293 = vector.load %arg6[%c0_332, %c128_333] : memref<32x512xf32, #tpu.memory_space<vmem>>, vector<32x256xf32>
    %c64_334 = arith.constant 64 : index
    %c0_335 = arith.constant 0 : index
    %294 = vector.load %arg7[%c64_334, %c0_335] : memref<160x256xf32, #tpu.memory_space<vmem>>, vector<32x256xf32>
    tpu.vector_store %arg7[%c64_334, %c0_335], %293 {strides = array<i32>} : memref<160x256xf32, #tpu.memory_space<vmem>>, vector<32x256xf32>,
    %c0_336 = arith.constant 0 : index
    %c144_337 = arith.constant 144 : index
    %295 = vector.load %arg6[%c0_336, %c144_337] : memref<32x512xf32, #tpu.memory_space<vmem>>, vector<32x256xf32>
    %c96_338 = arith.constant 96 : index
    %c0_339 = arith.constant 0 : index
    %296 = vector.load %arg7[%c96_338, %c0_339] : memref<160x256xf32, #tpu.memory_space<vmem>>, vector<32x256xf32>
    tpu.vector_store %arg7[%c96_338, %c0_339], %295 {strides = array<i32>} : memref<160x256xf32, #tpu.memory_space<vmem>>, vector<32x256xf32>,
    %c0_340 = arith.constant 0 : index
    %c160_341 = arith.constant 160 : index
    %297 = vector.load %arg6[%c0_340, %c160_341] : memref<32x512xf32, #tpu.memory_space<vmem>>, vector<32x256xf32>
    %c128_342 = arith.constant 128 : index
    %c0_343 = arith.constant 0 : index
    %298 = vector.load %arg7[%c128_342, %c0_343] : memref<160x256xf32, #tpu.memory_space<vmem>>, vector<32x256xf32>
    tpu.vector_store %arg7[%c128_342, %c0_343], %297 {strides = array<i32>} : memref<160x256xf32, #tpu.memory_space<vmem>>, vector<32x256xf32>,
    %c2_344 = arith.constant 2 : index
    %c0_345 = arith.constant 0 : index
    %c0_346 = arith.constant 0 : index
    %299 = vector.load %arg4[%c2_344, %c0_345, %c0_346] : memref<5x32x160xf32, #tpu.memory_space<vmem>>, vector<1x32x160xf32>
    %300 = vector.shape_cast %299 : vector<1x32x160xf32> to vector<32x160xf32>
    %c0_347 = arith.constant 0 : index
    %c0_348 = arith.constant 0 : index
    %301 = vector.load %arg7[%c0_347, %c0_348] : memref<160x256xf32, #tpu.memory_space<vmem>>, vector<160x256xf32>
    %cst_349 = arith.constant dense<0.000000e+00> : vector<32x256xf32>
    %302 = tpu.matmul %300, %301, %cst_349 {dimension_numbers = #tpu.dot_dimension_numbers<[1], [0], [0], [1], [0, 0, 1, 1], [], []>} : vector<32x160xf32>, vector<160x256xf32>, vector<32x256xf32> -> vector<32x256xf32>
    %303 = arith.addf %288, %302 : vector<32x256xf32>
    %c0_350 = arith.constant 0 : index
    %c97_351 = arith.constant 97 : index
    %304 = vector.load %arg6[%c0_350, %c97_351] : memref<32x512xf32, #tpu.memory_space<vmem>>, vector<32x256xf32>
    %c0_352 = arith.constant 0 : index
    %c0_353 = arith.constant 0 : index
    %305 = vector.load %arg7[%c0_352, %c0_353] : memref<160x256xf32, #tpu.memory_space<vmem>>, vector<32x256xf32>
    tpu.vector_store %arg7[%c0_352, %c0_353], %304 {strides = array<i32>} : memref<160x256xf32, #tpu.memory_space<vmem>>, vector<32x256xf32>,
    %c0_354 = arith.constant 0 : index
    %c113_355 = arith.constant 113 : index
    %306 = vector.load %arg6[%c0_354, %c113_355] : memref<32x512xf32, #tpu.memory_space<vmem>>, vector<32x256xf32>
    %c32_356 = arith.constant 32 : index
    %c0_357 = arith.constant 0 : index
    %307 = vector.load %arg7[%c32_356, %c0_357] : memref<160x256xf32, #tpu.memory_space<vmem>>, vector<32x256xf32>
    tpu.vector_store %arg7[%c32_356, %c0_357], %306 {strides = array<i32>} : memref<160x256xf32, #tpu.memory_space<vmem>>, vector<32x256xf32>,
    %c0_358 = arith.constant 0 : index
    %c129_359 = arith.constant 129 : index
    %308 = vector.load %arg6[%c0_358, %c129_359] : memref<32x512xf32, #tpu.memory_space<vmem>>, vector<32x256xf32>
    %c64_360 = arith.constant 64 : index
    %c0_361 = arith.constant 0 : index
    %309 = vector.load %arg7[%c64_360, %c0_361] : memref<160x256xf32, #tpu.memory_space<vmem>>, vector<32x256xf32>
    tpu.vector_store %arg7[%c64_360, %c0_361], %308 {strides = array<i32>} : memref<160x256xf32, #tpu.memory_space<vmem>>, vector<32x256xf32>,
    %c0_362 = arith.constant 0 : index
    %c145_363 = arith.constant 145 : index
    %310 = vector.load %arg6[%c0_362, %c145_363] : memref<32x512xf32, #tpu.memory_space<vmem>>, vector<32x256xf32>
    %c96_364 = arith.constant 96 : index
    %c0_365 = arith.constant 0 : index
    %311 = vector.load %arg7[%c96_364, %c0_365] : memref<160x256xf32, #tpu.memory_space<vmem>>, vector<32x256xf32>
    tpu.vector_store %arg7[%c96_364, %c0_365], %310 {strides = array<i32>} : memref<160x256xf32, #tpu.memory_space<vmem>>, vector<32x256xf32>,
    %c0_366 = arith.constant 0 : index
    %c161_367 = arith.constant 161 : index
    %312 = vector.load %arg6[%c0_366, %c161_367] : memref<32x512xf32, #tpu.memory_space<vmem>>, vector<32x256xf32>
    %c128_368 = arith.constant 128 : index
    %c0_369 = arith.constant 0 : index
    %313 = vector.load %arg7[%c128_368, %c0_369] : memref<160x256xf32, #tpu.memory_space<vmem>>, vector<32x256xf32>
    tpu.vector_store %arg7[%c128_368, %c0_369], %312 {strides = array<i32>} : memref<160x256xf32, #tpu.memory_space<vmem>>, vector<32x256xf32>,
    %c3_370 = arith.constant 3 : index
    %c0_371 = arith.constant 0 : index
    %c0_372 = arith.constant 0 : index
    %314 = vector.load %arg4[%c3_370, %c0_371, %c0_372] : memref<5x32x160xf32, #tpu.memory_space<vmem>>, vector<1x32x160xf32>
    %315 = vector.shape_cast %314 : vector<1x32x160xf32> to vector<32x160xf32>
    %c0_373 = arith.constant 0 : index
    %c0_374 = arith.constant 0 : index
    %316 = vector.load %arg7[%c0_373, %c0_374] : memref<160x256xf32, #tpu.memory_space<vmem>>, vector<160x256xf32>
    %cst_375 = arith.constant dense<0.000000e+00> : vector<32x256xf32>
    %317 = tpu.matmul %315, %316, %cst_375 {dimension_numbers = #tpu.dot_dimension_numbers<[1], [0], [0], [1], [0, 0, 1, 1], [], []>} : vector<32x160xf32>, vector<160x256xf32>, vector<32x256xf32> -> vector<32x256xf32>
    %cst_376 = arith.constant 0.000000e+00 : f32
    %318 = vector.shape_cast %43 : vector<1x256xi1> to vector<1x256xi1>
    %319 = vector.broadcast %318 : vector<1x256xi1> to vector<32x256xi1>
    %320 = vector.broadcast %cst_376 : f32 to vector<32x256xf32>
    %321 = arith.select %319, %317, %320 : vector<32x256xi1>, vector<32x256xf32>
    %322 = arith.addf %303, %321 : vector<32x256xf32>
    %c0_377 = arith.constant 0 : index
    %c98_378 = arith.constant 98 : index
    %323 = vector.load %arg6[%c0_377, %c98_378] : memref<32x512xf32, #tpu.memory_space<vmem>>, vector<32x256xf32>
    %c0_379 = arith.constant 0 : index
    %c0_380 = arith.constant 0 : index
    %324 = vector.load %arg7[%c0_379, %c0_380] : memref<160x256xf32, #tpu.memory_space<vmem>>, vector<32x256xf32>
    tpu.vector_store %arg7[%c0_379, %c0_380], %323 {strides = array<i32>} : memref<160x256xf32, #tpu.memory_space<vmem>>, vector<32x256xf32>,
    %c0_381 = arith.constant 0 : index
    %c114_382 = arith.constant 114 : index
    %325 = vector.load %arg6[%c0_381, %c114_382] : memref<32x512xf32, #tpu.memory_space<vmem>>, vector<32x256xf32>
    %c32_383 = arith.constant 32 : index
    %c0_384 = arith.constant 0 : index
    %326 = vector.load %arg7[%c32_383, %c0_384] : memref<160x256xf32, #tpu.memory_space<vmem>>, vector<32x256xf32>
    tpu.vector_store %arg7[%c32_383, %c0_384], %325 {strides = array<i32>} : memref<160x256xf32, #tpu.memory_space<vmem>>, vector<32x256xf32>,
    %c0_385 = arith.constant 0 : index
    %c130_386 = arith.constant 130 : index
    %327 = vector.load %arg6[%c0_385, %c130_386] : memref<32x512xf32, #tpu.memory_space<vmem>>, vector<32x256xf32>
    %c64_387 = arith.constant 64 : index
    %c0_388 = arith.constant 0 : index
    %328 = vector.load %arg7[%c64_387, %c0_388] : memref<160x256xf32, #tpu.memory_space<vmem>>, vector<32x256xf32>
    tpu.vector_store %arg7[%c64_387, %c0_388], %327 {strides = array<i32>} : memref<160x256xf32, #tpu.memory_space<vmem>>, vector<32x256xf32>,
    %c0_389 = arith.constant 0 : index
    %c146_390 = arith.constant 146 : index
    %329 = vector.load %arg6[%c0_389, %c146_390] : memref<32x512xf32, #tpu.memory_space<vmem>>, vector<32x256xf32>
    %c96_391 = arith.constant 96 : index
    %c0_392 = arith.constant 0 : index
    %330 = vector.load %arg7[%c96_391, %c0_392] : memref<160x256xf32, #tpu.memory_space<vmem>>, vector<32x256xf32>
    tpu.vector_store %arg7[%c96_391, %c0_392], %329 {strides = array<i32>} : memref<160x256xf32, #tpu.memory_space<vmem>>, vector<32x256xf32>,
    %c0_393 = arith.constant 0 : index
    %c162_394 = arith.constant 162 : index
    %331 = vector.load %arg6[%c0_393, %c162_394] : memref<32x512xf32, #tpu.memory_space<vmem>>, vector<32x256xf32>
    %c128_395 = arith.constant 128 : index
    %c0_396 = arith.constant 0 : index
    %332 = vector.load %arg7[%c128_395, %c0_396] : memref<160x256xf32, #tpu.memory_space<vmem>>, vector<32x256xf32>
    tpu.vector_store %arg7[%c128_395, %c0_396], %331 {strides = array<i32>} : memref<160x256xf32, #tpu.memory_space<vmem>>, vector<32x256xf32>,
    %c4_397 = arith.constant 4 : index
    %c0_398 = arith.constant 0 : index
    %c0_399 = arith.constant 0 : index
    %333 = vector.load %arg4[%c4_397, %c0_398, %c0_399] : memref<5x32x160xf32, #tpu.memory_space<vmem>>, vector<1x32x160xf32>
    %334 = vector.shape_cast %333 : vector<1x32x160xf32> to vector<32x160xf32>
    %c0_400 = arith.constant 0 : index
    %c0_401 = arith.constant 0 : index
    %335 = vector.load %arg7[%c0_400, %c0_401] : memref<160x256xf32, #tpu.memory_space<vmem>>, vector<160x256xf32>
    %cst_402 = arith.constant dense<0.000000e+00> : vector<32x256xf32>
    %336 = tpu.matmul %334, %335, %cst_402 {dimension_numbers = #tpu.dot_dimension_numbers<[1], [0], [0], [1], [0, 0, 1, 1], [], []>} : vector<32x160xf32>, vector<160x256xf32>, vector<32x256xf32> -> vector<32x256xf32>
    %cst_403 = arith.constant 0.000000e+00 : f32
    %337 = vector.shape_cast %52 : vector<1x256xi1> to vector<1x256xi1>
    %338 = vector.broadcast %337 : vector<1x256xi1> to vector<32x256xi1>
    %339 = vector.broadcast %cst_403 : f32 to vector<32x256xf32>
    %340 = arith.select %338, %336, %339 : vector<32x256xi1>, vector<32x256xf32>
    %341 = arith.addf %322, %340 : vector<32x256xf32>
    %cst_404 = arith.constant 0.000000e+00 : f32
    %342 = vector.broadcast %cst_404 : f32 to vector<32x256xf32>
    %343 = arith.maximumf %341, %342 : vector<32x256xf32>
    %c0_405 = arith.constant 0 : index
    %c0_406 = arith.constant 0 : index
    %c0_407 = arith.constant 0 : index
    %344 = vector.load %arg1[%c0_405, %c0_406, %c0_407] : memref<1x32x256xf32, #tpu.memory_space<vmem>>, vector<1x32x256xf32>
    %345 = vector.shape_cast %344 : vector<1x32x256xf32> to vector<32x256xf32>
    %346 = arith.addf %343, %345 : vector<32x256xf32>
    %c0_408 = arith.constant 0 : index
    %c0_409 = arith.constant 0 : index
    %c0_410 = arith.constant 0 : index
    %347 = vector.load %arg5[%c0_408, %c0_409, %c0_410] : memref<1x32x256xf32, #tpu.memory_space<vmem>>, vector<1x32x256xf32>
    %348 = vector.shape_cast %347 : vector<1x32x256xf32> to vector<32x256xf32>
    %349 = vector.shape_cast %346 : vector<32x256xf32> to vector<1x32x256xf32>
    tpu.vector_store %arg5[%c0_408, %c0_409, %c0_410], %349 {strides = array<i32>} : memref<1x32x256xf32, #tpu.memory_space<vmem>>, vector<1x32x256xf32>,
    return
  }
  func.func @transform_0(%arg0: i32) -> (i32, i32, i32) {
    %c0_i32 = arith.constant 0 : i32
    %c0_i32_0 = arith.constant 0 : i32
    %c0_i32_1 = arith.constant 0 : i32
    return %arg0, %c0_i32, %c0_i32_0 : i32, i32, i32
  }
  func.func @transform_1(%arg0: i32) -> (i32, i32, i32) {
    %c0_i32 = arith.constant 0 : i32
    %c0_i32_0 = arith.constant 0 : i32
    %c0_i32_1 = arith.constant 0 : i32
    %c0_i32_2 = arith.constant 0 : i32
    return %c0_i32, %c0_i32_0, %c0_i32_1 : i32, i32, i32
  }
  func.func @transform_2(%arg0: i32) -> (i32, i32, i32) {
    %c0_i32 = arith.constant 0 : i32
    %c0_i32_0 = arith.constant 0 : i32
    %c0_i32_1 = arith.constant 0 : i32
    %c0_i32_2 = arith.constant 0 : i32
    return %c0_i32, %c0_i32_0, %c0_i32_1 : i32, i32, i32
  }
  func.func @transform_3(%arg0: i32) -> (i32, i32, i32) {
    %c0_i32 = arith.constant 0 : i32
    %c0_i32_0 = arith.constant 0 : i32
    %c0_i32_1 = arith.constant 0 : i32
    %c0_i32_2 = arith.constant 0 : i32
    return %c0_i32, %c0_i32_0, %c0_i32_1 : i32, i32, i32
  }
  func.func @transform_4(%arg0: i32) -> (i32, i32, i32) {
    %c0_i32 = arith.constant 0 : i32
    %c0_i32_0 = arith.constant 0 : i32
    %c0_i32_1 = arith.constant 0 : i32
    return %arg0, %c0_i32, %c0_i32_0 : i32, i32, i32
  }
}

</mosaic_0001>

<llo_original>
// kernel: block_forward_pallas.1
$region0: #{block_forward_pallas.1}
  #allocation0 [shape = 'u32[]', space=smem, size = 0x4, offset = 0x4, fixed_abs, tag = 'smem constant byte address 0x4 - core index']
  #allocation1 [shape = 'u32[72,128]{1,0:T(1,128)}', space=vmem, size = 0x9000, scoped, tag = 'internal scratch']
  #allocation2 [shape = 'f32[32,512]{1,0:T(8,128)}', space=vmem, size = 0x10000, scoped, tag = 'scratch operand']
  #allocation3 [shape = 'f32[160,256]{1,0:T(8,128)}', space=vmem, size = 0x28000, scoped, tag = 'scratch operand']
  %s0 = inlined_call_operand.vmem [shape: f32[2,32,256], index: 0, kind: input, shape index: {}]
  %s1 = inlined_call_operand.vmem [shape: f32[5,32,160], index: 1, kind: input, shape index: {}]
  %s2 = inlined_call_operand.vmem [shape: f32[5,32,160], index: 2, kind: input, shape index: {}]
  %s3 = inlined_call_operand.vmem [shape: f32[5,32,160], index: 3, kind: input, shape index: {}]
  %s4 = inlined_call_operand.vmem [shape: f32[2,32,256], index: 4, kind: output, shape index: {}]
  %s5 = sld [smem:[#allocation0]]
  $region49: #{block_forward_pallas.1} parent=0
    _
  %s7 = ssub.s32 1, %s5
  %s8 = scalar_select 0, %s7, %s5
  loop: start=0, step=1, limit=4
  $region2: #{block_forward_pallas.1} parent=0 // loop_pre_header
    _
  $region3: #{block_forward_pallas.1} parent=0 // loop_header
    %s10 = sphi 0, %s14
    %p11 = scmp.ge.s32.totalorder %s10, 4
    %s20 = sphi 0, %s22
    %s23 = sphi 0, %s20
    %s24 = sphi 0, %s23
    %s40 = sphi 0, %s24
    %s44 = sphi 0, %s44
    %s46 = sphi 0, %s44
    %s47 = sphi 0, %s46
    %s61 = sphi 0, %s47
    %s65 = sphi 0, %s65
    %s67 = sphi 0, %s65
    %s68 = sphi 0, %s67
    %s82 = sphi 0, %s68
    %s86 = sphi 0, %s86
    %s88 = sphi 0, %s86
    %s89 = sphi 0, %s88
    %s103 = sphi 0, %s89
    %s109 = sphi 0, %s111
    %s112 = sphi 0, %s109
    %s113 = sphi 0, %s112
    %s129 = sphi 0, %s113
  $region4: #{block_forward_pallas.1} parent=0 // loop_header_branch
    %13 = sbr.rel (%p11) target = $region8
  $region5: #{block_forward_pallas.1} parent=0 // loop_body
    %s15 = ssub.s32 %s10, 1
    %s16 = ssub.s32 %s10, 2
    %s17 = sadd.s32 %s10, 1
    %s18 = ssub.s32 %s10, %s17
    %p19 = scmp.eq.s32.totalorder %s18, 0
    %s21 = sadd.s32 %s20, 1
    %s22 = scalar_select %p19, %s20, %s21
    %p25 = pneg %p19
    %p26 = scmp.eq.s32.totalorder %s10, 1
    %p27 = por %p25, %p26
    %p28 = scmp.ne.s32.totalorder %s20, %s23
    %p29 = scmp.eq.s32.totalorder %s10, 0
    %p30 = por %p28, %p29
    %p31 = scmp.ne.s32.totalorder %s20, %s23
    %p32 = scmp.eq.s32.totalorder %s15, 1
    %p33 = por %p31, %p32
    %p34 = scmp.ne.s32.totalorder %s23, %s24
    %p35 = scmp.eq.s32.totalorder %s15, 0
    %p36 = por %p34, %p35
    %p37 = scmp.ne.s32.totalorder %s23, %s24
    %p38 = scmp.eq.s32.totalorder %s16, 1
    %p39 = por %p37, %p38
    %p41 = scmp.ne.s32.totalorder %s24, %s40
    %p42 = scmp.eq.s32.totalorder %s16, 0
    %p43 = por %p41, %p42
    %s45 = sadd.s32 %s44, 1
    %p48 = scmp.eq.s32.totalorder %s10, 1
    %p49 = scmp.ne.s32.totalorder %s44, %s46
    %p50 = scmp.eq.s32.totalorder %s10, 0
    %p51 = por %p49, %p50
    %p52 = scmp.ne.s32.totalorder %s44, %s46
    %p53 = scmp.eq.s32.totalorder %s15, 1
    %p54 = por %p52, %p53
    %p55 = scmp.ne.s32.totalorder %s46, %s47
    %p56 = scmp.eq.s32.totalorder %s15, 0
    %p57 = por %p55, %p56
    %p58 = scmp.ne.s32.totalorder %s46, %s47
    %p59 = scmp.eq.s32.totalorder %s16, 1
    %p60 = por %p58, %p59
    %p62 = scmp.ne.s32.totalorder %s47, %s61
    %p63 = scmp.eq.s32.totalorder %s16, 0
    %p64 = por %p62, %p63
    %s66 = sadd.s32 %s65, 1
    %p69 = scmp.eq.s32.totalorder %s10, 1
    %p70 = scmp.ne.s32.totalorder %s65, %s67
    %p71 = scmp.eq.s32.totalorder %s10, 0
    %p72 = por %p70, %p71
    %p73 = scmp.ne.s32.totalorder %s65, %s67
    %p74 = scmp.eq.s32.totalorder %s15, 1
    %p75 = por %p73, %p74
    %p76 = scmp.ne.s32.totalorder %s67, %s68
    %p77 = scmp.eq.s32.totalorder %s15, 0
    %p78 = por %p76, %p77
    %p79 = scmp.ne.s32.totalorder %s67, %s68
    %p80 = scmp.eq.s32.totalorder %s16, 1
    %p81 = por %p79, %p80
    %p83 = scmp.ne.s32.totalorder %s68, %s82
    %p84 = scmp.eq.s32.totalorder %s16, 0
    %p85 = por %p83, %p84
    %s87 = sadd.s32 %s86, 1
    %p90 = scmp.eq.s32.totalorder %s10, 1
    %p91 = scmp.ne.s32.totalorder %s86, %s88
    %p92 = scmp.eq.s32.totalorder %s10, 0
    %p93 = por %p91, %p92
    %p94 = scmp.ne.s32.totalorder %s86, %s88
    %p95 = scmp.eq.s32.totalorder %s15, 1
    %p96 = por %p94, %p95
    %p97 = scmp.ne.s32.totalorder %s88, %s89
    %p98 = scmp.eq.s32.totalorder %s15, 0
    %p99 = por %p97, %p98
    %p100 = scmp.ne.s32.totalorder %s88, %s89
    %p101 = scmp.eq.s32.totalorder %s16, 1
    %p102 = por %p100, %p101
    %p104 = scmp.ne.s32.totalorder %s89, %s103
    %p105 = scmp.eq.s32.totalorder %s16, 0
    %p106 = por %p104, %p105
    %s107 = ssub.s32 %s10, %s17
    %p108 = scmp.eq.s32.totalorder %s107, 0
    %s110 = sadd.s32 %s109, 1
    %s111 = scalar_select %p108, %s109, %s110
    %p114 = pneg %p108
    %p115 = scmp.eq.s32.totalorder %s10, 1
    %p116 = por %p114, %p115
    %p117 = scmp.ne.s32.totalorder %s109, %s112
    %p118 = scmp.eq.s32.totalorder %s10, 0
    %p119 = por %p117, %p118
    %p120 = scmp.ne.s32.totalorder %s109, %s112
    %p121 = scmp.eq.s32.totalorder %s15, 1
    %p122 = por %p120, %p121
    %p123 = scmp.ne.s32.totalorder %s112, %s113
    %p124 = scmp.eq.s32.totalorder %s15, 0
    %p125 = por %p123, %p124
    %p126 = scmp.ne.s32.totalorder %s112, %s113
    %p127 = scmp.eq.s32.totalorder %s16, 1
    %p128 = por %p126, %p127
    %p130 = scmp.ne.s32.totalorder %s113, %s129
    %p131 = scmp.eq.s32.totalorder %s16, 0
    %p132 = por %p130, %p131
    %p133 = scmp.le.s32.totalorder 1, %s10
    %p134 = scmp.lt.s32.totalorder %s10, 3
    %p135 = pnand %p133, %p134
    %p136 = pneg %p135
    // Predicated region
    $region9: #{block_forward_pallas.1} parent=5 // pred_check
      _
    $region10: #{block_forward_pallas.1} parent=5 // pred_check_branch
      %138 = sbr.rel (%p135) target = $region12
    $region11: #{block_forward_pallas.1} parent=5 // pred_region
      %s139 = ssub.s32 %s10, 1
      // Predicated region
      $region13: #{block_forward_pallas.1} parent=11 // pred_check
        %p140 = pneg %p57
      $region14: #{block_forward_pallas.1} parent=11 // pred_check_branch
        %142 = sbr.rel (%p140) target = $region16
      $region15: #{block_forward_pallas.1} parent=11 // pred_region
        _
      $region16: #{block_forward_pallas.1} parent=11 // pred_fallthru
        _
      // Predicated region
      $region17: #{block_forward_pallas.1} parent=11 // pred_check
        %p143 = pneg %p78
      $region18: #{block_forward_pallas.1} parent=11 // pred_check_branch
        %145 = sbr.rel (%p143) target = $region20
      $region19: #{block_forward_pallas.1} parent=11 // pred_region
        _
      $region20: #{block_forward_pallas.1} parent=11 // pred_fallthru
        _
      // Predicated region
      $region21: #{block_forward_pallas.1} parent=11 // pred_check
        %p146 = pneg %p99
      $region22: #{block_forward_pallas.1} parent=11 // pred_check_branch
        %148 = sbr.rel (%p146) target = $region24
      $region23: #{block_forward_pallas.1} parent=11 // pred_region
        _
      $region24: #{block_forward_pallas.1} parent=11 // pred_fallthru
        _
    $region12: #{block_forward_pallas.1} parent=5 // pred_fallthru
      _
    %p149 = scmp.lt.s32.totalorder %s10, 2
    // Predicated region
    $region25: #{block_forward_pallas.1} parent=5 // pred_check
      %p150 = pneg %p149
    $region26: #{block_forward_pallas.1} parent=5 // pred_check_branch
      %152 = sbr.rel (%p150) target = $region28
    $region27: #{block_forward_pallas.1} parent=5 // pred_region
      // Predicated region
      $region29: #{block_forward_pallas.1} parent=27 // pred_check
        %p153 = pneg %p30
      $region30: #{block_forward_pallas.1} parent=27 // pred_check_branch
        %155 = sbr.rel (%p153) target = $region32
      $region31: #{block_forward_pallas.1} parent=27 // pred_region
        %p156 = scmp.lt.s32.totalorder %s10, 1
        %s157 = scalar_select %p156, %s10, 1
        %s158 = smul.addr %s157, 8
        %s159 = smul.addr %s158, 8
        %s160 = scalar_lea.vmem %s0, %s159
      $region32: #{block_forward_pallas.1} parent=27 // pred_fallthru
        _
    $region28: #{block_forward_pallas.1} parent=5 // pred_fallthru
      _
    %p161 = scmp.le.s32.totalorder 1, %s10
    %p162 = scmp.lt.s32.totalorder %s10, 3
    %p163 = pnand %p161, %p162
    %p164 = pneg %p163
    // Predicated region
    $region33: #{block_forward_pallas.1} parent=5 // pred_check
      _
    $region34: #{block_forward_pallas.1} parent=5 // pred_check_branch
      %166 = sbr.rel (%p163) target = $region36
    $region35: #{block_forward_pallas.1} parent=5 // pred_region
      %s167 = ssub.s32 %s10, 1
      %p168 = scmp.lt.s32.totalorder %s15, 1
      %s169 = scalar_select %p168, %s15, 1
      %s170 = smul.addr %s169, 8
      %s171 = smul.addr %s170, 8
      %s172 = scalar_lea.vmem %s0, %s171
      %p173 = pneg %p36
      %p174 = pneg %p33
      %p175 = pneg %p57
      %p176 = pneg %p54
      %p177 = pneg %p78
      %p178 = pneg %p75
      %p179 = pneg %p99
      %p180 = pneg %p96
      %p181 = pneg %p125
      %p182 = pneg %p122
      %p183 = scmp.lt.s32.totalorder %s15, 1
      %s184 = scalar_select %p183, %s15, 1
      %s185 = smul.addr %s184, 8
      %s186 = smul.addr %s185, 8
      %s187 = scalar_lea.vmem %s4, %s186
      %p188 = scmp.lt.s32.totalorder %s15, 1
      %s189 = scalar_select %p188, %s15, 1
      %s190 = smul.addr %s189, 8
      %s191 = smul.addr %s190, 8
      %s192 = scalar_lea.vmem %s0, %s191
      %p193 = scmp.lt.s32.totalorder %s15, 1
      %s194 = scalar_select %p193, %s15, 1
      %s195 = smul.addr %s194, 8
      %s196 = smul.addr %s195, 8
      %s197 = scalar_lea.vmem %s4, %s196
      %v198 = vlaneseq
      %v199 = vand.u32 %v198, 127
      %v200 = vadd.s32 %v199, 128
      %vm201 = vcmp.lt.s32.totalorder %v199, 0
      %v202 = vsub.s32 0, %v199
      %v203 = vsel %vm201, %v202, %v199
      %v204 = vshrl.u32 %v203, 4
      %v205 = vand.u32 %v203, 15
      %v206 = vsub.s32 0, %v205
      %v207 = vsel %vm201, %v206, %v205
      %vm208 = vcmp.lt.s32.totalorder %v200, 0
      %v209 = vsub.s32 0, %v200
      %v210 = vsel %vm208, %v209, %v200
      %v211 = vshrl.u32 %v210, 4
      %v212 = vand.u32 %v210, 15
      %v213 = vsub.s32 0, %v212
      %v214 = vsel %vm208, %v213, %v212
      %vm215 = vcmp.ne.s32.totalorder %v207, 0
      %vm216 = vcmp.ne.s32.totalorder %v214, 0
      %vm217 = vcmp.lt.s32.totalorder %v207, 0
      %vm218 = vcmp.lt.s32.totalorder %v214, 0
      %vm219 = vmand %vm217, %vm215
      %vm220 = vmand %vm218, %vm216
      %v221 = vadd.s32 %v207, 16
      %v222 = vadd.s32 %v214, 16
      %v223 = vsel %vm219, %v221, %v207
      %v224 = vsel %vm220, %v222, %v214
      %v225 = vadd.s32 %v223, 4294967294
      %v226 = vadd.s32 %v224, 4294967294
      %vm227 = vcmp.ge.s32.totalorder %v225, 0
      %vm228 = vcmp.ge.s32.totalorder %v226, 0
      %vm229 = vcmp.lt.s32.totalorder %v225, 16
      %vm230 = vcmp.lt.s32.totalorder %v226, 16
      %vm231 = vmand %vm227, %vm229
      %vm232 = vmand %vm228, %vm230
      %v233 = vadd.s32 %v223, 4294967295
      %v234 = vadd.s32 %v224, 4294967295
      %vm235 = vcmp.ge.s32.totalorder %v233, 0
      %vm236 = vcmp.ge.s32.totalorder %v234, 0
      %vm237 = vcmp.lt.s32.totalorder %v233, 16
      %vm238 = vcmp.lt.s32.totalorder %v234, 16
      %vm239 = vmand %vm235, %vm237
      %vm240 = vmand %vm236, %vm238
      %v241 = vadd.s32 %v223, 1
      %v242 = vadd.s32 %v224, 1
      %vm243 = vcmp.ge.s32.totalorder %v241, 0
      %vm244 = vcmp.ge.s32.totalorder %v242, 0
      %vm245 = vcmp.lt.s32.totalorder %v241, 16
      %vm246 = vcmp.lt.s32.totalorder %v242, 16
      %vm247 = vmand %vm243, %vm245
      %vm248 = vmand %vm244, %vm246
      %v249 = vadd.s32 %v223, 2
      %v250 = vadd.s32 %v224, 2
      %vm251 = vcmp.ge.s32.totalorder %v249, 0
      %vm252 = vcmp.ge.s32.totalorder %v250, 0
      %vm253 = vcmp.lt.s32.totalorder %v249, 16
      %vm254 = vcmp.lt.s32.totalorder %v250, 16
      %vm255 = vmand %vm251, %vm253
      %vm256 = vmand %vm252, %vm254
      %257 = vst [vmem:[#allocation2] sm:$0xff] 0.0
      %258 = vst [vmem:[#allocation2 + $0x20] sm:$0xff] 0.0
      %259 = vst [vmem:[#allocation2 + $0x40] sm:$0xff] 0.0
      %260 = vst [vmem:[#allocation2 + $0x60] sm:$0xff] 0.0
      %261 = vst [vmem:[#allocation2 + $0x18] sm:$0xff] 0.0
      %262 = vst [vmem:[#allocation2 + $0x38] sm:$0xff] 0.0
      %263 = vst [vmem:[#allocation2 + $0x58] sm:$0xff] 0.0
      %264 = vst [vmem:[#allocation2 + $0x78] sm:$0xff] 0.0
      %v265 = vld [vmem:[%s192] sm:$0xff]
      %v266 = vld [vmem:[%s192 + $0x8] sm:$0xff]
      %v267 = vld [vmem:[%s192 + $0x10] sm:$0xff]
      %v268 = vld [vmem:[%s192 + $0x18] sm:$0xff]
      %v269 = vld [vmem:[%s192 + $0x20] sm:$0xff]
      %v270 = vld [vmem:[%s192 + $0x28] sm:$0xff]
      %v271 = vld [vmem:[%s192 + $0x30] sm:$0xff]
      %v272 = vld [vmem:[%s192 + $0x38] sm:$0xff]
      %273 = vst [vmem:[#allocation2 + $0x8] sm:$0xff] %v265
      %274 = vst [vmem:[#allocation2 + $0x10] sm:$0xff] %v266
      %275 = vst [vmem:[#allocation2 + $0x28] sm:$0xff] %v267
      %276 = vst [vmem:[#allocation2 + $0x30] sm:$0xff] %v268
      %277 = vst [vmem:[#allocation2 + $0x48] sm:$0xff] %v269
      %278 = vst [vmem:[#allocation2 + $0x50] sm:$0xff] %v270
      %279 = vst [vmem:[#allocation2 + $0x68] sm:$0xff] %v271
      %280 = vst [vmem:[#allocation2 + $0x70] sm:$0xff] %v272
      %v281 = vld [vmem:[#allocation2] sm:$0xff]
      %v282 = vld [vmem:[#allocation2 + $0x8] sm:$0xff]
      %v283 = vld [vmem:[#allocation2 + $0x10] sm:$0xff]
      %v284 = vld [vmem:[#allocation2 + $0x20] sm:$0xff]
      %v285 = vld [vmem:[#allocation2 + $0x28] sm:$0xff]
      %v286 = vld [vmem:[#allocation2 + $0x30] sm:$0xff]
      %v287 = vld [vmem:[#allocation2 + $0x40] sm:$0xff]
      %v288 = vld [vmem:[#allocation2 + $0x48] sm:$0xff]
      %v289 = vld [vmem:[#allocation2 + $0x50] sm:$0xff]
      %v290 = vld [vmem:[#allocation2 + $0x60] sm:$0xff]
      %v291 = vld [vmem:[#allocation2 + $0x68] sm:$0xff]
      %v292 = vld [vmem:[#allocation2 + $0x70] sm:$0xff]
      %305 = vrot.lane.b32.xlu0 %v281, 34
      %v306 = vpop.permute.xlu0 %305
      %307 = vrot.lane.b32.xlu0 %v282, 34
      %v308 = vpop.permute.xlu0 %307
      %309 = vrot.lane.b32.xlu0 %v283, 34
      %v310 = vpop.permute.xlu0 %309
      %311 = vrot.lane.b32.xlu0 %v284, 34
      %v312 = vpop.permute.xlu0 %311
      %313 = vrot.lane.b32.xlu0 %v285, 34
      %v314 = vpop.permute.xlu0 %313
      %315 = vrot.lane.b32.xlu0 %v286, 34
      %v316 = vpop.permute.xlu0 %315
      %317 = vrot.lane.b32.xlu0 %v287, 34
      %v318 = vpop.permute.xlu0 %317
      %319 = vrot.lane.b32.xlu0 %v288, 34
      %v320 = vpop.permute.xlu0 %319
      %321 = vrot.lane.b32.xlu0 %v289, 34
      %v322 = vpop.permute.xlu0 %321
      %323 = vrot.lane.b32.xlu0 %v290, 34
      %v324 = vpop.permute.xlu0 %323
      %325 = vrot.lane.b32.xlu0 %v291, 34
      %v326 = vpop.permute.xlu0 %325
      %327 = vrot.lane.b32.xlu0 %v292, 34
      %v328 = vpop.permute.xlu0 %327
      %vm329 = vcmask 277504
      %v330 = vsel %vm329, %v306, %v308
      %v331 = vsel %vm329, %v308, %v310
      %v332 = vsel %vm329, %v312, %v314
      %v333 = vsel %vm329, %v314, %v316
      %v334 = vsel %vm329, %v318, %v320
      %v335 = vsel %vm329, %v320, %v322
      %v336 = vsel %vm329, %v324, %v326
      %v337 = vsel %vm329, %v326, %v328
      %346 = vst [vmem:[#allocation3] sm:$0xff] %v330
      %347 = vst [vmem:[#allocation3 + $0x8] sm:$0xff] %v331
      %348 = vst [vmem:[#allocation3 + $0x10] sm:$0xff] %v332
      %349 = vst [vmem:[#allocation3 + $0x18] sm:$0xff] %v333
      %350 = vst [vmem:[#allocation3 + $0x20] sm:$0xff] %v334
      %351 = vst [vmem:[#allocation3 + $0x28] sm:$0xff] %v335
      %352 = vst [vmem:[#allocation3 + $0x30] sm:$0xff] %v336
      %353 = vst [vmem:[#allocation3 + $0x38] sm:$0xff] %v337
      %v354 = vld [vmem:[#allocation2] sm:$0xff]
      %v355 = vld [vmem:[#allocation2 + $0x8] sm:$0xff]
      %v356 = vld [vmem:[#allocation2 + $0x10] sm:$0xff]
      %v357 = vld [vmem:[#allocation2 + $0x20] sm:$0xff]
      %v358 = vld [vmem:[#allocation2 + $0x28] sm:$0xff]
      %v359 = vld [vmem:[#allocation2 + $0x30] sm:$0xff]
      %v360 = vld [vmem:[#allocation2 + $0x40] sm:$0xff]
      %v361 = vld [vmem:[#allocation2 + $0x48] sm:$0xff]
      %v362 = vld [vmem:[#allocation2 + $0x50] sm:$0xff]
      %v363 = vld [vmem:[#allocation2 + $0x60] sm:$0xff]
      %v364 = vld [vmem:[#allocation2 + $0x68] sm:$0xff]
      %v365 = vld [vmem:[#allocation2 + $0x70] sm:$0xff]
      %378 = vrot.lane.b32.xlu0 %v354, 18
      %v379 = vpop.permute.xlu0 %378
      %380 = vrot.lane.b32.xlu0 %v355, 18
      %v381 = vpop.permute.xlu0 %380
      %382 = vrot.lane.b32.xlu0 %v356, 18
      %v383 = vpop.permute.xlu0 %382
      %384 = vrot.lane.b32.xlu0 %v357, 18
      %v385 = vpop.permute.xlu0 %384
      %386 = vrot.lane.b32.xlu0 %v358, 18
      %v387 = vpop.permute.xlu0 %386
      %388 = vrot.lane.b32.xlu0 %v359, 18
      %v389 = vpop.permute.xlu0 %388
      %390 = vrot.lane.b32.xlu0 %v360, 18
      %v391 = vpop.permute.xlu0 %390
      %392 = vrot.lane.b32.xlu0 %v361, 18
      %v393 = vpop.permute.xlu0 %392
      %394 = vrot.lane.b32.xlu0 %v362, 18
      %v395 = vpop.permute.xlu0 %394
      %396 = vrot.lane.b32.xlu0 %v363, 18
      %v397 = vpop.permute.xlu0 %396
      %398 = vrot.lane.b32.xlu0 %v364, 18
      %v399 = vpop.permute.xlu0 %398
      %400 = vrot.lane.b32.xlu0 %v365, 18
      %v401 = vpop.permute.xlu0 %400
      %vm402 = vcmask 146432
      %v403 = vsel %vm402, %v379, %v381
      %v404 = vsel %vm402, %v381, %v383
      %v405 = vsel %vm402, %v385, %v387
      %v406 = vsel %vm402, %v387, %v389
      %v407 = vsel %vm402, %v391, %v393
      %v408 = vsel %vm402, %v393, %v395
      %v409 = vsel %vm402, %v397, %v399
      %v410 = vsel %vm402, %v399, %v401
      %419 = vst [vmem:[#allocation3 + $0x40] sm:$0xff] %v403
      %420 = vst [vmem:[#allocation3 + $0x48] sm:$0xff] %v404
      %421 = vst [vmem:[#allocation3 + $0x50] sm:$0xff] %v405
      %422 = vst [vmem:[#allocation3 + $0x58] sm:$0xff] %v406
      %423 = vst [vmem:[#allocation3 + $0x60] sm:$0xff] %v407
      %424 = vst [vmem:[#allocation3 + $0x68] sm:$0xff] %v408
      %425 = vst [vmem:[#allocation3 + $0x70] sm:$0xff] %v409
      %426 = vst [vmem:[#allocation3 + $0x78] sm:$0xff] %v410
      %v427 = vld [vmem:[#allocation2] sm:$0xff]
      %v428 = vld [vmem:[#allocation2 + $0x8] sm:$0xff]
      %v429 = vld [vmem:[#allocation2 + $0x10] sm:$0xff]
      %v430 = vld [vmem:[#allocation2 + $0x20] sm:$0xff]
      %v431 = vld [vmem:[#allocation2 + $0x28] sm:$0xff]
      %v432 = vld [vmem:[#allocation2 + $0x30] sm:$0xff]
      %v433 = vld [vmem:[#allocation2 + $0x40] sm:$0xff]
      %v434 = vld [vmem:[#allocation2 + $0x48] sm:$0xff]
      %v435 = vld [vmem:[#allocation2 + $0x50] sm:$0xff]
      %v436 = vld [vmem:[#allocation2 + $0x60] sm:$0xff]
      %v437 = vld [vmem:[#allocation2 + $0x68] sm:$0xff]
      %v438 = vld [vmem:[#allocation2 + $0x70] sm:$0xff]
      %451 = vrot.lane.b32.xlu0 %v427, 2
      %v452 = vpop.permute.xlu0 %451
      %453 = vrot.lane.b32.xlu0 %v428, 2
      %v454 = vpop.permute.xlu0 %453
      %455 = vrot.lane.b32.xlu0 %v429, 2
      %v456 = vpop.permute.xlu0 %455
      %457 = vrot.lane.b32.xlu0 %v430, 2
      %v458 = vpop.permute.xlu0 %457
      %459 = vrot.lane.b32.xlu0 %v431, 2
      %v460 = vpop.permute.xlu0 %459
      %461 = vrot.lane.b32.xlu0 %v432, 2
      %v462 = vpop.permute.xlu0 %461
      %463 = vrot.lane.b32.xlu0 %v433, 2
      %v464 = vpop.permute.xlu0 %463
      %465 = vrot.lane.b32.xlu0 %v434, 2
      %v466 = vpop.permute.xlu0 %465
      %467 = vrot.lane.b32.xlu0 %v435, 2
      %v468 = vpop.permute.xlu0 %467
      %469 = vrot.lane.b32.xlu0 %v436, 2
      %v470 = vpop.permute.xlu0 %469
      %471 = vrot.lane.b32.xlu0 %v437, 2
      %v472 = vpop.permute.xlu0 %471
      %473 = vrot.lane.b32.xlu0 %v438, 2
      %v474 = vpop.permute.xlu0 %473
      %vm475 = vcmask 15360
      %v476 = vsel %vm475, %v452, %v454
      %v477 = vsel %vm475, %v454, %v456
      %v478 = vsel %vm475, %v458, %v460
      %v479 = vsel %vm475, %v460, %v462
      %v480 = vsel %vm475, %v464, %v466
      %v481 = vsel %vm475, %v466, %v468
      %v482 = vsel %vm475, %v470, %v472
      %v483 = vsel %vm475, %v472, %v474
      %492 = vst [vmem:[#allocation3 + $0x80] sm:$0xff] %v476
      %493 = vst [vmem:[#allocation3 + $0x88] sm:$0xff] %v477
      %494 = vst [vmem:[#allocation3 + $0x90] sm:$0xff] %v478
      %495 = vst [vmem:[#allocation3 + $0x98] sm:$0xff] %v479
      %496 = vst [vmem:[#allocation3 + $0xa0] sm:$0xff] %v480
      %497 = vst [vmem:[#allocation3 + $0xa8] sm:$0xff] %v481
      %498 = vst [vmem:[#allocation3 + $0xb0] sm:$0xff] %v482
      %499 = vst [vmem:[#allocation3 + $0xb8] sm:$0xff] %v483
      %v500 = vld [vmem:[#allocation2 + $0x8] sm:$0xff]
      %v501 = vld [vmem:[#allocation2 + $0x10] sm:$0xff]
      %v502 = vld [vmem:[#allocation2 + $0x18] sm:$0xff]
      %v503 = vld [vmem:[#allocation2 + $0x28] sm:$0xff]
      %v504 = vld [vmem:[#allocation2 + $0x30] sm:$0xff]
      %v505 = vld [vmem:[#allocation2 + $0x38] sm:$0xff]
      %v506 = vld [vmem:[#allocation2 + $0x48] sm:$0xff]
      %v507 = vld [vmem:[#allocation2 + $0x50] sm:$0xff]
      %v508 = vld [vmem:[#allocation2 + $0x58] sm:$0xff]
      %v509 = vld [vmem:[#allocation2 + $0x68] sm:$0xff]
      %v510 = vld [vmem:[#allocation2 + $0x70] sm:$0xff]
      %v511 = vld [vmem:[#allocation2 + $0x78] sm:$0xff]
      %524 = vrot.lane.b32.xlu0 %v500, 114
      %v525 = vpop.permute.xlu0 %524
      %526 = vrot.lane.b32.xlu0 %v501, 114
      %v527 = vpop.permute.xlu0 %526
      %528 = vrot.lane.b32.xlu0 %v502, 114
      %v529 = vpop.permute.xlu0 %528
      %530 = vrot.lane.b32.xlu0 %v503, 114
      %v531 = vpop.permute.xlu0 %530
      %532 = vrot.lane.b32.xlu0 %v504, 114
      %v533 = vpop.permute.xlu0 %532
      %534 = vrot.lane.b32.xlu0 %v505, 114
      %v535 = vpop.permute.xlu0 %534
      %536 = vrot.lane.b32.xlu0 %v506, 114
      %v537 = vpop.permute.xlu0 %536
      %538 = vrot.lane.b32.xlu0 %v507, 114
      %v539 = vpop.permute.xlu0 %538
      %540 = vrot.lane.b32.xlu0 %v508, 114
      %v541 = vpop.permute.xlu0 %540
      %542 = vrot.lane.b32.xlu0 %v509, 114
      %v543 = vpop.permute.xlu0 %542
      %544 = vrot.lane.b32.xlu0 %v510, 114
      %v545 = vpop.permute.xlu0 %544
      %546 = vrot.lane.b32.xlu0 %v511, 114
      %v547 = vpop.permute.xlu0 %546
      %vm548 = vcmask 932864
      %v549 = vsel %vm548, %v525, %v527
      %v550 = vsel %vm548, %v527, %v529
      %v551 = vsel %vm548, %v531, %v533
      %v552 = vsel %vm548, %v533, %v535
      %v553 = vsel %vm548, %v537, %v539
      %v554 = vsel %vm548, %v539, %v541
      %v555 = vsel %vm548, %v543, %v545
      %v556 = vsel %vm548, %v545, %v547
      %565 = vst [vmem:[#allocation3 + $0xc0] sm:$0xff] %v549
      %566 = vst [vmem:[#allocation3 + $0xc8] sm:$0xff] %v550
      %567 = vst [vmem:[#allocation3 + $0xd0] sm:$0xff] %v551
      %568 = vst [vmem:[#allocation3 + $0xd8] sm:$0xff] %v552
      %569 = vst [vmem:[#allocation3 + $0xe0] sm:$0xff] %v553
      %570 = vst [vmem:[#allocation3 + $0xe8] sm:$0xff] %v554
      %571 = vst [vmem:[#allocation3 + $0xf0] sm:$0xff] %v555
      %572 = vst [vmem:[#allocation3 + $0xf8] sm:$0xff] %v556
      %v573 = vld [vmem:[#allocation2 + $0x8] sm:$0xff]
      %v574 = vld [vmem:[#allocation2 + $0x10] sm:$0xff]
      %v575 = vld [vmem:[#allocation2 + $0x18] sm:$0xff]
      %v576 = vld [vmem:[#allocation2 + $0x28] sm:$0xff]
      %v577 = vld [vmem:[#allocation2 + $0x30] sm:$0xff]
      %v578 = vld [vmem:[#allocation2 + $0x38] sm:$0xff]
      %v579 = vld [vmem:[#allocation2 + $0x48] sm:$0xff]
      %v580 = vld [vmem:[#allocation2 + $0x50] sm:$0xff]
      %v581 = vld [vmem:[#allocation2 + $0x58] sm:$0xff]
      %v582 = vld [vmem:[#allocation2 + $0x68] sm:$0xff]
      %v583 = vld [vmem:[#allocation2 + $0x70] sm:$0xff]
      %v584 = vld [vmem:[#allocation2 + $0x78] sm:$0xff]
      %597 = vrot.lane.b32.xlu0 %v573, 98
      %v598 = vpop.permute.xlu0 %597
      %599 = vrot.lane.b32.xlu0 %v574, 98
      %v600 = vpop.permute.xlu0 %599
      %601 = vrot.lane.b32.xlu0 %v575, 98
      %v602 = vpop.permute.xlu0 %601
      %603 = vrot.lane.b32.xlu0 %v576, 98
      %v604 = vpop.permute.xlu0 %603
      %605 = vrot.lane.b32.xlu0 %v577, 98
      %v606 = vpop.permute.xlu0 %605
      %607 = vrot.lane.b32.xlu0 %v578, 98
      %v608 = vpop.permute.xlu0 %607
      %609 = vrot.lane.b32.xlu0 %v579, 98
      %v610 = vpop.permute.xlu0 %609
      %611 = vrot.lane.b32.xlu0 %v580, 98
      %v612 = vpop.permute.xlu0 %611
      %613 = vrot.lane.b32.xlu0 %v581, 98
      %v614 = vpop.permute.xlu0 %613
      %615 = vrot.lane.b32.xlu0 %v582, 98
      %v616 = vpop.permute.xlu0 %615
      %617 = vrot.lane.b32.xlu0 %v583, 98
      %v618 = vpop.permute.xlu0 %617
      %619 = vrot.lane.b32.xlu0 %v584, 98
      %v620 = vpop.permute.xlu0 %619
      %vm621 = vcmask 801792
      %v622 = vsel %vm621, %v598, %v600
      %v623 = vsel %vm621, %v600, %v602
      %v624 = vsel %vm621, %v604, %v606
      %v625 = vsel %vm621, %v606, %v608
      %v626 = vsel %vm621, %v610, %v612
      %v627 = vsel %vm621, %v612, %v614
      %v628 = vsel %vm621, %v616, %v618
      %v629 = vsel %vm621, %v618, %v620
      %638 = vst [vmem:[#allocation3 + $0x100] sm:$0xff] %v622
      %639 = vst [vmem:[#allocation3 + $0x108] sm:$0xff] %v623
      %640 = vst [vmem:[#allocation3 + $0x110] sm:$0xff] %v624
      %641 = vst [vmem:[#allocation3 + $0x118] sm:$0xff] %v625
      %642 = vst [vmem:[#allocation3 + $0x120] sm:$0xff] %v626
      %643 = vst [vmem:[#allocation3 + $0x128] sm:$0xff] %v627
      %644 = vst [vmem:[#allocation3 + $0x130] sm:$0xff] %v628
      %645 = vst [vmem:[#allocation3 + $0x138] sm:$0xff] %v629
      %v646 = vld [vmem:[%s1] sm:$0xff]
      %v647 = vld [vmem:[%s1 + $0x8] sm:$0xff]
      %v648 = vld [vmem:[%s1 + $0x10] sm:$0xff]
      %v649 = vld [vmem:[%s1 + $0x18] sm:$0xff]
      %v650 = vld [vmem:[%s1 + $0x20] sm:$0xff]
      %v651 = vld [vmem:[%s1 + $0x28] sm:$0xff]
      %v652 = vld [vmem:[%s1 + $0x30] sm:$0xff]
      %v653 = vld [vmem:[%s1 + $0x38] sm:$0xff]
      %v654 = vld [vmem:[#allocation3] sm:$0xff]
      %v655 = vld [vmem:[#allocation3 + $0x8] sm:$0xff]
      %v656 = vld [vmem:[#allocation3 + $0x10] sm:$0xff]
      %v657 = vld [vmem:[#allocation3 + $0x18] sm:$0xff]
      %v658 = vld [vmem:[#allocation3 + $0x20] sm:$0xff]
      %v659 = vld [vmem:[#allocation3 + $0x28] sm:$0xff]
      %v660 = vld [vmem:[#allocation3 + $0x30] sm:$0xff]
      %v661 = vld [vmem:[#allocation3 + $0x38] sm:$0xff]
      %v662 = vld [vmem:[#allocation3 + $0x40] sm:$0xff]
      %v663 = vld [vmem:[#allocation3 + $0x48] sm:$0xff]
      %v664 = vld [vmem:[#allocation3 + $0x50] sm:$0xff]
      %v665 = vld [vmem:[#allocation3 + $0x58] sm:$0xff]
      %v666 = vld [vmem:[#allocation3 + $0x60] sm:$0xff]
      %v667 = vld [vmem:[#allocation3 + $0x68] sm:$0xff]
      %v668 = vld [vmem:[#allocation3 + $0x70] sm:$0xff]
      %v669 = vld [vmem:[#allocation3 + $0x78] sm:$0xff]
      %v670 = vld [vmem:[#allocation3 + $0x80] sm:$0xff]
      %v671 = vld [vmem:[#allocation3 + $0x88] sm:$0xff]
      %v672 = vld [vmem:[#allocation3 + $0x90] sm:$0xff]
      %v673 = vld [vmem:[#allocation3 + $0x98] sm:$0xff]
      %v674 = vld [vmem:[#allocation3 + $0xa0] sm:$0xff]
      %v675 = vld [vmem:[#allocation3 + $0xa8] sm:$0xff]
      %v676 = vld [vmem:[#allocation3 + $0xb0] sm:$0xff]
      %v677 = vld [vmem:[#allocation3 + $0xb8] sm:$0xff]
      %v678 = vld [vmem:[#allocation3 + $0xc0] sm:$0xff]
      %v679 = vld [vmem:[#allocation3 + $0xc8] sm:$0xff]
      %v680 = vld [vmem:[#allocation3 + $0xd0] sm:$0xff]
      %v681 = vld [vmem:[#allocation3 + $0xd8] sm:$0xff]
      %v682 = vld [vmem:[#allocation3 + $0xe0] sm:$0xff]
      %v683 = vld [vmem:[#allocation3 + $0xe8] sm:$0xff]
      %v684 = vld [vmem:[#allocation3 + $0xf0] sm:$0xff]
      %v685 = vld [vmem:[#allocation3 + $0xf8] sm:$0xff]
      %v686 = vld [vmem:[#allocation3 + $0x100] sm:$0xff]
      %v687 = vld [vmem:[#allocation3 + $0x108] sm:$0xff]
      %v688 = vld [vmem:[#allocation3 + $0x110] sm:$0xff]
      %v689 = vld [vmem:[#allocation3 + $0x118] sm:$0xff]
      %v690 = vld [vmem:[#allocation3 + $0x120] sm:$0xff]
      %v691 = vld [vmem:[#allocation3 + $0x128] sm:$0xff]
      %v692 = vld [vmem:[#allocation3 + $0x130] sm:$0xff]
      %v693 = vld [vmem:[#allocation3 + $0x138] sm:$0xff]
      %vm694 = vcmask 261120
      %v696 = vsel %vm694, %v647, 0
      %v699 = vsel %vm694, %v649, 0
      %v702 = vsel %vm694, %v651, 0
      %v705 = vsel %vm694, %v653, 0
      %707 = vmatpush.msra.mxu0 %v684
      %708 = vmatpush.msra.mxu0 %v682
      %709 = vmatpush.msra.mxu0 %v680
      %710 = vmatpush.msra.mxu0 %v678
      %711 = vmatpush.msra.mxu0 %v676
      %712 = vmatpush.msra.mxu0 %v674
      %713 = vmatpush.msra.mxu0 %v672
      %714 = vmatpush.msra.mxu0 %v670
      %715 = vmatpush.msra.mxu0 %v668
      %716 = vmatpush.msra.mxu0 %v666
      %717 = vmatpush.msra.mxu0 %v664
      %718 = vmatpush.msra.mxu0 %v662
      %719 = vmatpush.msra.mxu0 %v660
      %720 = vmatpush.msra.mxu0 %v658
      %721 = vmatpush.msra.mxu0 %v656
      %722 = vmatpush.msra.mxu0 %v654
      %723 = vmatmul.f32.gmra.mxu0 %v646
      %v724 = vpop.f32.mrf.mxu0
      %v725 = vadd.f32 0.0, %v724
      %726 = vmatmul.f32.gmra.mxu0 %v648
      %v727 = vpop.f32.mrf.mxu0
      %v728 = vadd.f32 0.0, %v727
      %729 = vmatmul.f32.gmra.mxu0 %v650
      %v730 = vpop.f32.mrf.mxu0
      %v731 = vadd.f32 0.0, %v730
      %732 = vmatmul.f32.gmra.mxu0 %v652
      %v733 = vpop.f32.mrf.mxu0
      %v734 = vadd.f32 0.0, %v733
      %735 = vdwg.mxu0
      %736 = vmatpush.msra.mxu0 0.0
      %737 = vmatpush.msra.mxu0 0.0
      %738 = vmatpush.msra.mxu0 0.0
      %739 = vmatpush.msra.mxu0 0.0
      %740 = vmatpush.msra.mxu0 0.0
      %741 = vmatpush.msra.mxu0 0.0
      %742 = vmatpush.msra.mxu0 0.0
      %743 = vmatpush.msra.mxu0 0.0
      %744 = vmatpush.msra.mxu0 0.0
      %745 = vmatpush.msra.mxu0 0.0
      %746 = vmatpush.msra.mxu0 0.0
      %747 = vmatpush.msra.mxu0 0.0
      %748 = vmatpush.msra.mxu0 %v692
      %749 = vmatpush.msra.mxu0 %v690
      %750 = vmatpush.msra.mxu0 %v688
      %751 = vmatpush.msra.mxu0 %v686
      %752 = vmatmul.f32.gmra.mxu0 %v696
      %v753 = vpop.f32.mrf.mxu0
      %v754 = vadd.f32 %v725, %v753
      %755 = vmatmul.f32.gmra.mxu0 %v699
      %v756 = vpop.f32.mrf.mxu0
      %v757 = vadd.f32 %v728, %v756
      %758 = vmatmul.f32.gmra.mxu0 %v702
      %v759 = vpop.f32.mrf.mxu0
      %v760 = vadd.f32 %v731, %v759
      %761 = vmatmul.f32.gmra.mxu0 %v705
      %v762 = vpop.f32.mrf.mxu0
      %v763 = vadd.f32 %v734, %v762
      %764 = vdwg.mxu0
      %765 = vmatpush.msra.mxu0 %v685
      %766 = vmatpush.msra.mxu0 %v683
      %767 = vmatpush.msra.mxu0 %v681
      %768 = vmatpush.msra.mxu0 %v679
      %769 = vmatpush.msra.mxu0 %v677
      %770 = vmatpush.msra.mxu0 %v675
      %771 = vmatpush.msra.mxu0 %v673
      %772 = vmatpush.msra.mxu0 %v671
      %773 = vmatpush.msra.mxu0 %v669
      %774 = vmatpush.msra.mxu0 %v667
      %775 = vmatpush.msra.mxu0 %v665
      %776 = vmatpush.msra.mxu0 %v663
      %777 = vmatpush.msra.mxu0 %v661
      %778 = vmatpush.msra.mxu0 %v659
      %779 = vmatpush.msra.mxu0 %v657
      %780 = vmatpush.msra.mxu0 %v655
      %781 = vmatmul.f32.gmra.mxu0 %v646
      %v782 = vpop.f32.mrf.mxu0
      %v783 = vadd.f32 0.0, %v782
      %784 = vmatmul.f32.gmra.mxu0 %v648
      %v785 = vpop.f32.mrf.mxu0
      %v786 = vadd.f32 0.0, %v785
      %787 = vmatmul.f32.gmra.mxu0 %v650
      %v788 = vpop.f32.mrf.mxu0
      %v789 = vadd.f32 0.0, %v788
      %790 = vmatmul.f32.gmra.mxu0 %v652
      %v791 = vpop.f32.mrf.mxu0
      %v792 = vadd.f32 0.0, %v791
      %793 = vdwg.mxu0
      %794 = vmatpush.msra.mxu0 0.0
      %795 = vmatpush.msra.mxu0 0.0
      %796 = vmatpush.msra.mxu0 0.0
      %797 = vmatpush.msra.mxu0 0.0
      %798 = vmatpush.msra.mxu0 0.0
      %799 = vmatpush.msra.mxu0 0.0
      %800 = vmatpush.msra.mxu0 0.0
      %801 = vmatpush.msra.mxu0 0.0
      %802 = vmatpush.msra.mxu0 0.0
      %803 = vmatpush.msra.mxu0 0.0
      %804 = vmatpush.msra.mxu0 0.0
      %805 = vmatpush.msra.mxu0 0.0
      %806 = vmatpush.msra.mxu0 %v693
      %807 = vmatpush.msra.mxu0 %v691
      %808 = vmatpush.msra.mxu0 %v689
      %809 = vmatpush.msra.mxu0 %v687
      %810 = vmatmul.f32.gmra.mxu0 %v696
      %v811 = vpop.f32.mrf.mxu0
      %v812 = vadd.f32 %v783, %v811
      %813 = vmatmul.f32.gmra.mxu0 %v699
      %v814 = vpop.f32.mrf.mxu0
      %v815 = vadd.f32 %v786, %v814
      %816 = vmatmul.f32.gmra.mxu0 %v702
      %v817 = vpop.f32.mrf.mxu0
      %v818 = vadd.f32 %v789, %v817
      %819 = vmatmul.f32.gmra.mxu0 %v705
      %v820 = vpop.f32.mrf.mxu0
      %v821 = vadd.f32 %v792, %v820
      %822 = vdwg.mxu0
      %v823 = vsel %vm231, 1, 0
      %v824 = vsel %vm232, 1, 0
      %vm825 = vcmp.eq.s32.totalorder %v823, 1
      %vm826 = vcmp.eq.s32.totalorder %v824, 1
      %v827 = vsel %vm825, %v754, 0.0
      %v828 = vsel %vm826, %v812, 0.0
      %v829 = vsel %vm825, %v757, 0.0
      %v830 = vsel %vm826, %v815, 0.0
      %v831 = vsel %vm825, %v760, 0.0
      %v832 = vsel %vm826, %v818, 0.0
      %v833 = vsel %vm825, %v763, 0.0
      %v834 = vsel %vm826, %v821, 0.0
      %v835 = vadd.f32 %v827, 0.0
      %v836 = vadd.f32 %v828, 0.0
      %v837 = vadd.f32 %v829, 0.0
      %v838 = vadd.f32 %v830, 0.0
      %v839 = vadd.f32 %v831, 0.0
      %v840 = vadd.f32 %v832, 0.0
      %v841 = vadd.f32 %v833, 0.0
      %v842 = vadd.f32 %v834, 0.0
      %v843 = vld [vmem:[#allocation2] sm:$0xff]
      %v844 = vld [vmem:[#allocation2 + $0x8] sm:$0xff]
      %v845 = vld [vmem:[#allocation2 + $0x10] sm:$0xff]
      %v846 = vld [vmem:[#allocation2 + $0x20] sm:$0xff]
      %v847 = vld [vmem:[#allocation2 + $0x28] sm:$0xff]
      %v848 = vld [vmem:[#allocation2 + $0x30] sm:$0xff]
      %v849 = vld [vmem:[#allocation2 + $0x40] sm:$0xff]
      %v850 = vld [vmem:[#allocation2 + $0x48] sm:$0xff]
      %v851 = vld [vmem:[#allocation2 + $0x50] sm:$0xff]
      %v852 = vld [vmem:[#allocation2 + $0x60] sm:$0xff]
      %v853 = vld [vmem:[#allocation2 + $0x68] sm:$0xff]
      %v854 = vld [vmem:[#allocation2 + $0x70] sm:$0xff]
      %867 = vrot.lane.b32.xlu0 %v843, 33
      %v868 = vpop.permute.xlu0 %867
      %869 = vrot.lane.b32.xlu0 %v844, 33
      %v870 = vpop.permute.xlu0 %869
      %871 = vrot.lane.b32.xlu0 %v845, 33
      %v872 = vpop.permute.xlu0 %871
      %873 = vrot.lane.b32.xlu0 %v846, 33
      %v874 = vpop.permute.xlu0 %873
      %875 = vrot.lane.b32.xlu0 %v847, 33
      %v876 = vpop.permute.xlu0 %875
      %877 = vrot.lane.b32.xlu0 %v848, 33
      %v878 = vpop.permute.xlu0 %877
      %879 = vrot.lane.b32.xlu0 %v849, 33
      %v880 = vpop.permute.xlu0 %879
      %881 = vrot.lane.b32.xlu0 %v850, 33
      %v882 = vpop.permute.xlu0 %881
      %883 = vrot.lane.b32.xlu0 %v851, 33
      %v884 = vpop.permute.xlu0 %883
      %885 = vrot.lane.b32.xlu0 %v852, 33
      %v886 = vpop.permute.xlu0 %885
      %887 = vrot.lane.b32.xlu0 %v853, 33
      %v888 = vpop.permute.xlu0 %887
      %889 = vrot.lane.b32.xlu0 %v854, 33
      %v890 = vpop.permute.xlu0 %889
      %vm891 = vcmask 269312
      %v892 = vsel %vm891, %v868, %v870
      %v893 = vsel %vm891, %v870, %v872
      %v894 = vsel %vm891, %v874, %v876
      %v895 = vsel %vm891, %v876, %v878
      %v896 = vsel %vm891, %v880, %v882
      %v897 = vsel %vm891, %v882, %v884
      %v898 = vsel %vm891, %v886, %v888
      %v899 = vsel %vm891, %v888, %v890
      %908 = vst [vmem:[#allocation3] sm:$0xff] %v892
      %909 = vst [vmem:[#allocation3 + $0x8] sm:$0xff] %v893
      %910 = vst [vmem:[#allocation3 + $0x10] sm:$0xff] %v894
      %911 = vst [vmem:[#allocation3 + $0x18] sm:$0xff] %v895
      %912 = vst [vmem:[#allocation3 + $0x20] sm:$0xff] %v896
      %913 = vst [vmem:[#allocation3 + $0x28] sm:$0xff] %v897
      %914 = vst [vmem:[#allocation3 + $0x30] sm:$0xff] %v898
      %915 = vst [vmem:[#allocation3 + $0x38] sm:$0xff] %v899
      %v916 = vld [vmem:[#allocation2] sm:$0xff]
      %v917 = vld [vmem:[#allocation2 + $0x8] sm:$0xff]
      %v918 = vld [vmem:[#allocation2 + $0x10] sm:$0xff]
      %v919 = vld [vmem:[#allocation2 + $0x20] sm:$0xff]
      %v920 = vld [vmem:[#allocation2 + $0x28] sm:$0xff]
      %v921 = vld [vmem:[#allocation2 + $0x30] sm:$0xff]
      %v922 = vld [vmem:[#allocation2 + $0x40] sm:$0xff]
      %v923 = vld [vmem:[#allocation2 + $0x48] sm:$0xff]
      %v924 = vld [vmem:[#allocation2 + $0x50] sm:$0xff]
      %v925 = vld [vmem:[#allocation2 + $0x60] sm:$0xff]
      %v926 = vld [vmem:[#allocation2 + $0x68] sm:$0xff]
      %v927 = vld [vmem:[#allocation2 + $0x70] sm:$0xff]
      %940 = vrot.lane.b32.xlu0 %v916, 17
      %v941 = vpop.permute.xlu0 %940
      %942 = vrot.lane.b32.xlu0 %v917, 17
      %v943 = vpop.permute.xlu0 %942
      %944 = vrot.lane.b32.xlu0 %v918, 17
      %v945 = vpop.permute.xlu0 %944
      %946 = vrot.lane.b32.xlu0 %v919, 17
      %v947 = vpop.permute.xlu0 %946
      %948 = vrot.lane.b32.xlu0 %v920, 17
      %v949 = vpop.permute.xlu0 %948
      %950 = vrot.lane.b32.xlu0 %v921, 17
      %v951 = vpop.permute.xlu0 %950
      %952 = vrot.lane.b32.xlu0 %v922, 17
      %v953 = vpop.permute.xlu0 %952
      %954 = vrot.lane.b32.xlu0 %v923, 17
      %v955 = vpop.permute.xlu0 %954
      %956 = vrot.lane.b32.xlu0 %v924, 17
      %v957 = vpop.permute.xlu0 %956
      %958 = vrot.lane.b32.xlu0 %v925, 17
      %v959 = vpop.permute.xlu0 %958
      %960 = vrot.lane.b32.xlu0 %v926, 17
      %v961 = vpop.permute.xlu0 %960
      %962 = vrot.lane.b32.xlu0 %v927, 17
      %v963 = vpop.permute.xlu0 %962
      %vm964 = vcmask 138240
      %v965 = vsel %vm964, %v941, %v943
      %v966 = vsel %vm964, %v943, %v945
      %v967 = vsel %vm964, %v947, %v949
      %v968 = vsel %vm964, %v949, %v951
      %v969 = vsel %vm964, %v953, %v955
      %v970 = vsel %vm964, %v955, %v957
      %v971 = vsel %vm964, %v959, %v961
      %v972 = vsel %vm964, %v961, %v963
      %981 = vst [vmem:[#allocation3 + $0x40] sm:$0xff] %v965
      %982 = vst [vmem:[#allocation3 + $0x48] sm:$0xff] %v966
      %983 = vst [vmem:[#allocation3 + $0x50] sm:$0xff] %v967
      %984 = vst [vmem:[#allocation3 + $0x58] sm:$0xff] %v968
      %985 = vst [vmem:[#allocation3 + $0x60] sm:$0xff] %v969
      %986 = vst [vmem:[#allocation3 + $0x68] sm:$0xff] %v970
      %987 = vst [vmem:[#allocation3 + $0x70] sm:$0xff] %v971
      %988 = vst [vmem:[#allocation3 + $0x78] sm:$0xff] %v972
      %v989 = vld [vmem:[#allocation2] sm:$0xff]
      %v990 = vld [vmem:[#allocation2 + $0x8] sm:$0xff]
      %v991 = vld [vmem:[#allocation2 + $0x10] sm:$0xff]
      %v992 = vld [vmem:[#allocation2 + $0x20] sm:$0xff]
      %v993 = vld [vmem:[#allocation2 + $0x28] sm:$0xff]
      %v994 = vld [vmem:[#allocation2 + $0x30] sm:$0xff]
      %v995 = vld [vmem:[#allocation2 + $0x40] sm:$0xff]
      %v996 = vld [vmem:[#allocation2 + $0x48] sm:$0xff]
      %v997 = vld [vmem:[#allocation2 + $0x50] sm:$0xff]
      %v998 = vld [vmem:[#allocation2 + $0x60] sm:$0xff]
      %v999 = vld [vmem:[#allocation2 + $0x68] sm:$0xff]
      %v1000 = vld [vmem:[#allocation2 + $0x70] sm:$0xff]
      %1013 = vrot.lane.b32.xlu0 %v989, 1
      %v1014 = vpop.permute.xlu0 %1013
      %1015 = vrot.lane.b32.xlu0 %v990, 1
      %v1016 = vpop.permute.xlu0 %1015
      %1017 = vrot.lane.b32.xlu0 %v991, 1
      %v1018 = vpop.permute.xlu0 %1017
      %1019 = vrot.lane.b32.xlu0 %v992, 1
      %v1020 = vpop.permute.xlu0 %1019
      %1021 = vrot.lane.b32.xlu0 %v993, 1
      %v1022 = vpop.permute.xlu0 %1021
      %1023 = vrot.lane.b32.xlu0 %v994, 1
      %v1024 = vpop.permute.xlu0 %1023
      %1025 = vrot.lane.b32.xlu0 %v995, 1
      %v1026 = vpop.permute.xlu0 %1025
      %1027 = vrot.lane.b32.xlu0 %v996, 1
      %v1028 = vpop.permute.xlu0 %1027
      %1029 = vrot.lane.b32.xlu0 %v997, 1
      %v1030 = vpop.permute.xlu0 %1029
      %1031 = vrot.lane.b32.xlu0 %v998, 1
      %v1032 = vpop.permute.xlu0 %1031
      %1033 = vrot.lane.b32.xlu0 %v999, 1
      %v1034 = vpop.permute.xlu0 %1033
      %1035 = vrot.lane.b32.xlu0 %v1000, 1
      %v1036 = vpop.permute.xlu0 %1035
      %vm1037 = vcmask 7168
      %v1038 = vsel %vm1037, %v1014, %v1016
      %v1039 = vsel %vm1037, %v1016, %v1018
      %v1040 = vsel %vm1037, %v1020, %v1022
      %v1041 = vsel %vm1037, %v1022, %v1024
      %v1042 = vsel %vm1037, %v1026, %v1028
      %v1043 = vsel %vm1037, %v1028, %v1030
      %v1044 = vsel %vm1037, %v1032, %v1034
      %v1045 = vsel %vm1037, %v1034, %v1036
      %1054 = vst [vmem:[#allocation3 + $0x80] sm:$0xff] %v1038
      %1055 = vst [vmem:[#allocation3 + $0x88] sm:$0xff] %v1039
      %1056 = vst [vmem:[#allocation3 + $0x90] sm:$0xff] %v1040
      %1057 = vst [vmem:[#allocation3 + $0x98] sm:$0xff] %v1041
      %1058 = vst [vmem:[#allocation3 + $0xa0] sm:$0xff] %v1042
      %1059 = vst [vmem:[#allocation3 + $0xa8] sm:$0xff] %v1043
      %1060 = vst [vmem:[#allocation3 + $0xb0] sm:$0xff] %v1044
      %1061 = vst [vmem:[#allocation3 + $0xb8] sm:$0xff] %v1045
      %v1062 = vld [vmem:[#allocation2 + $0x8] sm:$0xff]
      %v1063 = vld [vmem:[#allocation2 + $0x10] sm:$0xff]
      %v1064 = vld [vmem:[#allocation2 + $0x18] sm:$0xff]
      %v1065 = vld [vmem:[#allocation2 + $0x28] sm:$0xff]
      %v1066 = vld [vmem:[#allocation2 + $0x30] sm:$0xff]
      %v1067 = vld [vmem:[#allocation2 + $0x38] sm:$0xff]
      %v1068 = vld [vmem:[#allocation2 + $0x48] sm:$0xff]
      %v1069 = vld [vmem:[#allocation2 + $0x50] sm:$0xff]
      %v1070 = vld [vmem:[#allocation2 + $0x58] sm:$0xff]
      %v1071 = vld [vmem:[#allocation2 + $0x68] sm:$0xff]
      %v1072 = vld [vmem:[#allocation2 + $0x70] sm:$0xff]
      %v1073 = vld [vmem:[#allocation2 + $0x78] sm:$0xff]
      %1086 = vrot.lane.b32.xlu0 %v1062, 113
      %v1087 = vpop.permute.xlu0 %1086
      %1088 = vrot.lane.b32.xlu0 %v1063, 113
      %v1089 = vpop.permute.xlu0 %1088
      %1090 = vrot.lane.b32.xlu0 %v1064, 113
      %v1091 = vpop.permute.xlu0 %1090
      %1092 = vrot.lane.b32.xlu0 %v1065, 113
      %v1093 = vpop.permute.xlu0 %1092
      %1094 = vrot.lane.b32.xlu0 %v1066, 113
      %v1095 = vpop.permute.xlu0 %1094
      %1096 = vrot.lane.b32.xlu0 %v1067, 113
      %v1097 = vpop.permute.xlu0 %1096
      %1098 = vrot.lane.b32.xlu0 %v1068, 113
      %v1099 = vpop.permute.xlu0 %1098
      %1100 = vrot.lane.b32.xlu0 %v1069, 113
      %v1101 = vpop.permute.xlu0 %1100
      %1102 = vrot.lane.b32.xlu0 %v1070, 113
      %v1103 = vpop.permute.xlu0 %1102
      %1104 = vrot.lane.b32.xlu0 %v1071, 113
      %v1105 = vpop.permute.xlu0 %1104
      %1106 = vrot.lane.b32.xlu0 %v1072, 113
      %v1107 = vpop.permute.xlu0 %1106
      %1108 = vrot.lane.b32.xlu0 %v1073, 113
      %v1109 = vpop.permute.xlu0 %1108
      %vm1110 = vcmask 924672
      %v1111 = vsel %vm1110, %v1087, %v1089
      %v1112 = vsel %vm1110, %v1089, %v1091
      %v1113 = vsel %vm1110, %v1093, %v1095
      %v1114 = vsel %vm1110, %v1095, %v1097
      %v1115 = vsel %vm1110, %v1099, %v1101
      %v1116 = vsel %vm1110, %v1101, %v1103
      %v1117 = vsel %vm1110, %v1105, %v1107
      %v1118 = vsel %vm1110, %v1107, %v1109
      %1127 = vst [vmem:[#allocation3 + $0xc0] sm:$0xff] %v1111
      %1128 = vst [vmem:[#allocation3 + $0xc8] sm:$0xff] %v1112
      %1129 = vst [vmem:[#allocation3 + $0xd0] sm:$0xff] %v1113
      %1130 = vst [vmem:[#allocation3 + $0xd8] sm:$0xff] %v1114
      %1131 = vst [vmem:[#allocation3 + $0xe0] sm:$0xff] %v1115
      %1132 = vst [vmem:[#allocation3 + $0xe8] sm:$0xff] %v1116
      %1133 = vst [vmem:[#allocation3 + $0xf0] sm:$0xff] %v1117
      %1134 = vst [vmem:[#allocation3 + $0xf8] sm:$0xff] %v1118
      %v1135 = vld [vmem:[#allocation2 + $0x8] sm:$0xff]
      %v1136 = vld [vmem:[#allocation2 + $0x10] sm:$0xff]
      %v1137 = vld [vmem:[#allocation2 + $0x18] sm:$0xff]
      %v1138 = vld [vmem:[#allocation2 + $0x28] sm:$0xff]
      %v1139 = vld [vmem:[#allocation2 + $0x30] sm:$0xff]
      %v1140 = vld [vmem:[#allocation2 + $0x38] sm:$0xff]
      %v1141 = vld [vmem:[#allocation2 + $0x48] sm:$0xff]
      %v1142 = vld [vmem:[#allocation2 + $0x50] sm:$0xff]
      %v1143 = vld [vmem:[#allocation2 + $0x58] sm:$0xff]
      %v1144 = vld [vmem:[#allocation2 + $0x68] sm:$0xff]
      %v1145 = vld [vmem:[#allocation2 + $0x70] sm:$0xff]
      %v1146 = vld [vmem:[#allocation2 + $0x78] sm:$0xff]
      %1159 = vrot.lane.b32.xlu0 %v1135, 97
      %v1160 = vpop.permute.xlu0 %1159
      %1161 = vrot.lane.b32.xlu0 %v1136, 97
      %v1162 = vpop.permute.xlu0 %1161
      %1163 = vrot.lane.b32.xlu0 %v1137, 97
      %v1164 = vpop.permute.xlu0 %1163
      %1165 = vrot.lane.b32.xlu0 %v1138, 97
      %v1166 = vpop.permute.xlu0 %1165
      %1167 = vrot.lane.b32.xlu0 %v1139, 97
      %v1168 = vpop.permute.xlu0 %1167
      %1169 = vrot.lane.b32.xlu0 %v1140, 97
      %v1170 = vpop.permute.xlu0 %1169
      %1171 = vrot.lane.b32.xlu0 %v1141, 97
      %v1172 = vpop.permute.xlu0 %1171
      %1173 = vrot.lane.b32.xlu0 %v1142, 97
      %v1174 = vpop.permute.xlu0 %1173
      %1175 = vrot.lane.b32.xlu0 %v1143, 97
      %v1176 = vpop.permute.xlu0 %1175
      %1177 = vrot.lane.b32.xlu0 %v1144, 97
      %v1178 = vpop.permute.xlu0 %1177
      %1179 = vrot.lane.b32.xlu0 %v1145, 97
      %v1180 = vpop.permute.xlu0 %1179
      %1181 = vrot.lane.b32.xlu0 %v1146, 97
      %v1182 = vpop.permute.xlu0 %1181
      %vm1183 = vcmask 793600
      %v1184 = vsel %vm1183, %v1160, %v1162
      %v1185 = vsel %vm1183, %v1162, %v1164
      %v1186 = vsel %vm1183, %v1166, %v1168
      %v1187 = vsel %vm1183, %v1168, %v1170
      %v1188 = vsel %vm1183, %v1172, %v1174
      %v1189 = vsel %vm1183, %v1174, %v1176
      %v1190 = vsel %vm1183, %v1178, %v1180
      %v1191 = vsel %vm1183, %v1180, %v1182
      %1200 = vst [vmem:[#allocation3 + $0x100] sm:$0xff] %v1184
      %1201 = vst [vmem:[#allocation3 + $0x108] sm:$0xff] %v1185
      %1202 = vst [vmem:[#allocation3 + $0x110] sm:$0xff] %v1186
      %1203 = vst [vmem:[#allocation3 + $0x118] sm:$0xff] %v1187
      %1204 = vst [vmem:[#allocation3 + $0x120] sm:$0xff] %v1188
      %1205 = vst [vmem:[#allocation3 + $0x128] sm:$0xff] %v1189
      %1206 = vst [vmem:[#allocation3 + $0x130] sm:$0xff] %v1190
      %1207 = vst [vmem:[#allocation3 + $0x138] sm:$0xff] %v1191
      %s1208 = scalar_lea.vmem %s1, 64
      %v1209 = vld [vmem:[%s1208] sm:$0xff]
      %v1210 = vld [vmem:[%s1208 + $0x8] sm:$0xff]
      %v1211 = vld [vmem:[%s1208 + $0x10] sm:$0xff]
      %v1212 = vld [vmem:[%s1208 + $0x18] sm:$0xff]
      %v1213 = vld [vmem:[%s1208 + $0x20] sm:$0xff]
      %v1214 = vld [vmem:[%s1208 + $0x28] sm:$0xff]
      %v1215 = vld [vmem:[%s1208 + $0x30] sm:$0xff]
      %v1216 = vld [vmem:[%s1208 + $0x38] sm:$0xff]
      %v1217 = vld [vmem:[#allocation3] sm:$0xff]
      %v1218 = vld [vmem:[#allocation3 + $0x8] sm:$0xff]
      %v1219 = vld [vmem:[#allocation3 + $0x10] sm:$0xff]
      %v1220 = vld [vmem:[#allocation3 + $0x18] sm:$0xff]
      %v1221 = vld [vmem:[#allocation3 + $0x20] sm:$0xff]
      %v1222 = vld [vmem:[#allocation3 + $0x28] sm:$0xff]
      %v1223 = vld [vmem:[#allocation3 + $0x30] sm:$0xff]
      %v1224 = vld [vmem:[#allocation3 + $0x38] sm:$0xff]
      %v1225 = vld [vmem:[#allocation3 + $0x40] sm:$0xff]
      %v1226 = vld [vmem:[#allocation3 + $0x48] sm:$0xff]
      %v1227 = vld [vmem:[#allocation3 + $0x50] sm:$0xff]
      %v1228 = vld [vmem:[#allocation3 + $0x58] sm:$0xff]
      %v1229 = vld [vmem:[#allocation3 + $0x60] sm:$0xff]
      %v1230 = vld [vmem:[#allocation3 + $0x68] sm:$0xff]
      %v1231 = vld [vmem:[#allocation3 + $0x70] sm:$0xff]
      %v1232 = vld [vmem:[#allocation3 + $0x78] sm:$0xff]
      %v1233 = vld [vmem:[#allocation3 + $0x80] sm:$0xff]
      %v1234 = vld [vmem:[#allocation3 + $0x88] sm:$0xff]
      %v1235 = vld [vmem:[#allocation3 + $0x90] sm:$0xff]
      %v1236 = vld [vmem:[#allocation3 + $0x98] sm:$0xff]
      %v1237 = vld [vmem:[#allocation3 + $0xa0] sm:$0xff]
      %v1238 = vld [vmem:[#allocation3 + $0xa8] sm:$0xff]
      %v1239 = vld [vmem:[#allocation3 + $0xb0] sm:$0xff]
      %v1240 = vld [vmem:[#allocation3 + $0xb8] sm:$0xff]
      %v1241 = vld [vmem:[#allocation3 + $0xc0] sm:$0xff]
      %v1242 = vld [vmem:[#allocation3 + $0xc8] sm:$0xff]
      %v1243 = vld [vmem:[#allocation3 + $0xd0] sm:$0xff]
      %v1244 = vld [vmem:[#allocation3 + $0xd8] sm:$0xff]
      %v1245 = vld [vmem:[#allocation3 + $0xe0] sm:$0xff]
      %v1246 = vld [vmem:[#allocation3 + $0xe8] sm:$0xff]
      %v1247 = vld [vmem:[#allocation3 + $0xf0] sm:$0xff]
      %v1248 = vld [vmem:[#allocation3 + $0xf8] sm:$0xff]
      %v1249 = vld [vmem:[#allocation3 + $0x100] sm:$0xff]
      %v1250 = vld [vmem:[#allocation3 + $0x108] sm:$0xff]
      %v1251 = vld [vmem:[#allocation3 + $0x110] sm:$0xff]
      %v1252 = vld [vmem:[#allocation3 + $0x118] sm:$0xff]
      %v1253 = vld [vmem:[#allocation3 + $0x120] sm:$0xff]
      %v1254 = vld [vmem:[#allocation3 + $0x128] sm:$0xff]
      %v1255 = vld [vmem:[#allocation3 + $0x130] sm:$0xff]
      %v1256 = vld [vmem:[#allocation3 + $0x138] sm:$0xff]
      %v1258 = vsel %vm694, %v1210, 0
      %v1261 = vsel %vm694, %v1212, 0
      %v1264 = vsel %vm694, %v1214, 0
      %v1267 = vsel %vm694, %v1216, 0
      %1269 = vmatpush.msra.mxu0 %v1247
      %1270 = vmatpush.msra.mxu0 %v1245
      %1271 = vmatpush.msra.mxu0 %v1243
      %1272 = vmatpush.msra.mxu0 %v1241
      %1273 = vmatpush.msra.mxu0 %v1239
      %1274 = vmatpush.msra.mxu0 %v1237
      %1275 = vmatpush.msra.mxu0 %v1235
      %1276 = vmatpush.msra.mxu0 %v1233
      %1277 = vmatpush.msra.mxu0 %v1231
      %1278 = vmatpush.msra.mxu0 %v1229
      %1279 = vmatpush.msra.mxu0 %v1227
      %1280 = vmatpush.msra.mxu0 %v1225
      %1281 = vmatpush.msra.mxu0 %v1223
      %1282 = vmatpush.msra.mxu0 %v1221
      %1283 = vmatpush.msra.mxu0 %v1219
      %1284 = vmatpush.msra.mxu0 %v1217
      %1285 = vmatmul.f32.gmra.mxu0 %v1209
      %v1286 = vpop.f32.mrf.mxu0
      %v1287 = vadd.f32 0.0, %v1286
      %1288 = vmatmul.f32.gmra.mxu0 %v1211
      %v1289 = vpop.f32.mrf.mxu0
      %v1290 = vadd.f32 0.0, %v1289
      %1291 = vmatmul.f32.gmra.mxu0 %v1213
      %v1292 = vpop.f32.mrf.mxu0
      %v1293 = vadd.f32 0.0, %v1292
      %1294 = vmatmul.f32.gmra.mxu0 %v1215
      %v1295 = vpop.f32.mrf.mxu0
      %v1296 = vadd.f32 0.0, %v1295
      %1297 = vdwg.mxu0
      %1298 = vmatpush.msra.mxu0 0.0
      %1299 = vmatpush.msra.mxu0 0.0
      %1300 = vmatpush.msra.mxu0 0.0
      %1301 = vmatpush.msra.mxu0 0.0
      %1302 = vmatpush.msra.mxu0 0.0
      %1303 = vmatpush.msra.mxu0 0.0
      %1304 = vmatpush.msra.mxu0 0.0
      %1305 = vmatpush.msra.mxu0 0.0
      %1306 = vmatpush.msra.mxu0 0.0
      %1307 = vmatpush.msra.mxu0 0.0
      %1308 = vmatpush.msra.mxu0 0.0
      %1309 = vmatpush.msra.mxu0 0.0
      %1310 = vmatpush.msra.mxu0 %v1255
      %1311 = vmatpush.msra.mxu0 %v1253
      %1312 = vmatpush.msra.mxu0 %v1251
      %1313 = vmatpush.msra.mxu0 %v1249
      %1314 = vmatmul.f32.gmra.mxu0 %v1258
      %v1315 = vpop.f32.mrf.mxu0
      %v1316 = vadd.f32 %v1287, %v1315
      %1317 = vmatmul.f32.gmra.mxu0 %v1261
      %v1318 = vpop.f32.mrf.mxu0
      %v1319 = vadd.f32 %v1290, %v1318
      %1320 = vmatmul.f32.gmra.mxu0 %v1264
      %v1321 = vpop.f32.mrf.mxu0
      %v1322 = vadd.f32 %v1293, %v1321
      %1323 = vmatmul.f32.gmra.mxu0 %v1267
      %v1324 = vpop.f32.mrf.mxu0
      %v1325 = vadd.f32 %v1296, %v1324
      %1326 = vdwg.mxu0
      %1327 = vmatpush.msra.mxu0 %v1248
      %1328 = vmatpush.msra.mxu0 %v1246
      %1329 = vmatpush.msra.mxu0 %v1244
      %1330 = vmatpush.msra.mxu0 %v1242
      %1331 = vmatpush.msra.mxu0 %v1240
      %1332 = vmatpush.msra.mxu0 %v1238
      %1333 = vmatpush.msra.mxu0 %v1236
      %1334 = vmatpush.msra.mxu0 %v1234
      %1335 = vmatpush.msra.mxu0 %v1232
      %1336 = vmatpush.msra.mxu0 %v1230
      %1337 = vmatpush.msra.mxu0 %v1228
      %1338 = vmatpush.msra.mxu0 %v1226
      %1339 = vmatpush.msra.mxu0 %v1224
      %1340 = vmatpush.msra.mxu0 %v1222
      %1341 = vmatpush.msra.mxu0 %v1220
      %1342 = vmatpush.msra.mxu0 %v1218
      %1343 = vmatmul.f32.gmra.mxu0 %v1209
      %v1344 = vpop.f32.mrf.mxu0
      %v1345 = vadd.f32 0.0, %v1344
      %1346 = vmatmul.f32.gmra.mxu0 %v1211
      %v1347 = vpop.f32.mrf.mxu0
      %v1348 = vadd.f32 0.0, %v1347
      %1349 = vmatmul.f32.gmra.mxu0 %v1213
      %v1350 = vpop.f32.mrf.mxu0
      %v1351 = vadd.f32 0.0, %v1350
      %1352 = vmatmul.f32.gmra.mxu0 %v1215
      %v1353 = vpop.f32.mrf.mxu0
      %v1354 = vadd.f32 0.0, %v1353
      %1355 = vdwg.mxu0
      %1356 = vmatpush.msra.mxu0 0.0
      %1357 = vmatpush.msra.mxu0 0.0
      %1358 = vmatpush.msra.mxu0 0.0
      %1359 = vmatpush.msra.mxu0 0.0
      %1360 = vmatpush.msra.mxu0 0.0
      %1361 = vmatpush.msra.mxu0 0.0
      %1362 = vmatpush.msra.mxu0 0.0
      %1363 = vmatpush.msra.mxu0 0.0
      %1364 = vmatpush.msra.mxu0 0.0
      %1365 = vmatpush.msra.mxu0 0.0
      %1366 = vmatpush.msra.mxu0 0.0
      %1367 = vmatpush.msra.mxu0 0.0
      %1368 = vmatpush.msra.mxu0 %v1256
      %1369 = vmatpush.msra.mxu0 %v1254
      %1370 = vmatpush.msra.mxu0 %v1252
      %1371 = vmatpush.msra.mxu0 %v1250
      %1372 = vmatmul.f32.gmra.mxu0 %v1258
      %v1373 = vpop.f32.mrf.mxu0
      %v1374 = vadd.f32 %v1345, %v1373
      %1375 = vmatmul.f32.gmra.mxu0 %v1261
      %v1376 = vpop.f32.mrf.mxu0
      %v1377 = vadd.f32 %v1348, %v1376
      %1378 = vmatmul.f32.gmra.mxu0 %v1264
      %v1379 = vpop.f32.mrf.mxu0
      %v1380 = vadd.f32 %v1351, %v1379
      %1381 = vmatmul.f32.gmra.mxu0 %v1267
      %v1382 = vpop.f32.mrf.mxu0
      %v1383 = vadd.f32 %v1354, %v1382
      %1384 = vdwg.mxu0
      %v1385 = vsel %vm239, 1, 0
      %v1386 = vsel %vm240, 1, 0
      %vm1387 = vcmp.eq.s32.totalorder %v1385, 1
      %vm1388 = vcmp.eq.s32.totalorder %v1386, 1
      %v1389 = vsel %vm1387, %v1316, 0.0
      %v1390 = vsel %vm1388, %v1374, 0.0
      %v1391 = vsel %vm1387, %v1319, 0.0
      %v1392 = vsel %vm1388, %v1377, 0.0
      %v1393 = vsel %vm1387, %v1322, 0.0
      %v1394 = vsel %vm1388, %v1380, 0.0
      %v1395 = vsel %vm1387, %v1325, 0.0
      %v1396 = vsel %vm1388, %v1383, 0.0
      %v1397 = vadd.f32 %v835, %v1389
      %v1398 = vadd.f32 %v836, %v1390
      %v1399 = vadd.f32 %v837, %v1391
      %v1400 = vadd.f32 %v838, %v1392
      %v1401 = vadd.f32 %v839, %v1393
      %v1402 = vadd.f32 %v840, %v1394
      %v1403 = vadd.f32 %v841, %v1395
      %v1404 = vadd.f32 %v842, %v1396
      %v1405 = vld [vmem:[#allocation2] sm:$0xff]
      %v1406 = vld [vmem:[#allocation2 + $0x8] sm:$0xff]
      %v1407 = vld [vmem:[#allocation2 + $0x10] sm:$0xff]
      %v1408 = vld [vmem:[#allocation2 + $0x20] sm:$0xff]
      %v1409 = vld [vmem:[#allocation2 + $0x28] sm:$0xff]
      %v1410 = vld [vmem:[#allocation2 + $0x30] sm:$0xff]
      %v1411 = vld [vmem:[#allocation2 + $0x40] sm:$0xff]
      %v1412 = vld [vmem:[#allocation2 + $0x48] sm:$0xff]
      %v1413 = vld [vmem:[#allocation2 + $0x50] sm:$0xff]
      %v1414 = vld [vmem:[#allocation2 + $0x60] sm:$0xff]
      %v1415 = vld [vmem:[#allocation2 + $0x68] sm:$0xff]
      %v1416 = vld [vmem:[#allocation2 + $0x70] sm:$0xff]
      %1429 = vrot.lane.b32.xlu0 %v1405, 32
      %v1430 = vpop.permute.xlu0 %1429
      %1431 = vrot.lane.b32.xlu0 %v1406, 32
      %v1432 = vpop.permute.xlu0 %1431
      %1433 = vrot.lane.b32.xlu0 %v1407, 32
      %v1434 = vpop.permute.xlu0 %1433
      %1435 = vrot.lane.b32.xlu0 %v1408, 32
      %v1436 = vpop.permute.xlu0 %1435
      %1437 = vrot.lane.b32.xlu0 %v1409, 32
      %v1438 = vpop.permute.xlu0 %1437
      %1439 = vrot.lane.b32.xlu0 %v1410, 32
      %v1440 = vpop.permute.xlu0 %1439
      %1441 = vrot.lane.b32.xlu0 %v1411, 32
      %v1442 = vpop.permute.xlu0 %1441
      %1443 = vrot.lane.b32.xlu0 %v1412, 32
      %v1444 = vpop.permute.xlu0 %1443
      %1445 = vrot.lane.b32.xlu0 %v1413, 32
      %v1446 = vpop.permute.xlu0 %1445
      %1447 = vrot.lane.b32.xlu0 %v1414, 32
      %v1448 = vpop.permute.xlu0 %1447
      %1449 = vrot.lane.b32.xlu0 %v1415, 32
      %v1450 = vpop.permute.xlu0 %1449
      %1451 = vrot.lane.b32.xlu0 %v1416, 32
      %v1452 = vpop.permute.xlu0 %1451
      %v1453 = vsel %vm694, %v1430, %v1432
      %v1454 = vsel %vm694, %v1432, %v1434
      %v1455 = vsel %vm694, %v1436, %v1438
      %v1456 = vsel %vm694, %v1438, %v1440
      %v1457 = vsel %vm694, %v1442, %v1444
      %v1458 = vsel %vm694, %v1444, %v1446
      %v1459 = vsel %vm694, %v1448, %v1450
      %v1460 = vsel %vm694, %v1450, %v1452
      %1469 = vst [vmem:[#allocation3] sm:$0xff] %v1453
      %1470 = vst [vmem:[#allocation3 + $0x8] sm:$0xff] %v1454
      %1471 = vst [vmem:[#allocation3 + $0x10] sm:$0xff] %v1455
      %1472 = vst [vmem:[#allocation3 + $0x18] sm:$0xff] %v1456
      %1473 = vst [vmem:[#allocation3 + $0x20] sm:$0xff] %v1457
      %1474 = vst [vmem:[#allocation3 + $0x28] sm:$0xff] %v1458
      %1475 = vst [vmem:[#allocation3 + $0x30] sm:$0xff] %v1459
      %1476 = vst [vmem:[#allocation3 + $0x38] sm:$0xff] %v1460
      %v1477 = vld [vmem:[#allocation2] sm:$0xff]
      %v1478 = vld [vmem:[#allocation2 + $0x8] sm:$0xff]
      %v1479 = vld [vmem:[#allocation2 + $0x10] sm:$0xff]
      %v1480 = vld [vmem:[#allocation2 + $0x20] sm:$0xff]
      %v1481 = vld [vmem:[#allocation2 + $0x28] sm:$0xff]
      %v1482 = vld [vmem:[#allocation2 + $0x30] sm:$0xff]
      %v1483 = vld [vmem:[#allocation2 + $0x40] sm:$0xff]
      %v1484 = vld [vmem:[#allocation2 + $0x48] sm:$0xff]
      %v1485 = vld [vmem:[#allocation2 + $0x50] sm:$0xff]
      %v1486 = vld [vmem:[#allocation2 + $0x60] sm:$0xff]
      %v1487 = vld [vmem:[#allocation2 + $0x68] sm:$0xff]
      %v1488 = vld [vmem:[#allocation2 + $0x70] sm:$0xff]
      %1501 = vrot.lane.b32.xlu0 %v1477, 16
      %v1502 = vpop.permute.xlu0 %1501
      %1503 = vrot.lane.b32.xlu0 %v1478, 16
      %v1504 = vpop.permute.xlu0 %1503
      %1505 = vrot.lane.b32.xlu0 %v1479, 16
      %v1506 = vpop.permute.xlu0 %1505
      %1507 = vrot.lane.b32.xlu0 %v1480, 16
      %v1508 = vpop.permute.xlu0 %1507
      %1509 = vrot.lane.b32.xlu0 %v1481, 16
      %v1510 = vpop.permute.xlu0 %1509
      %1511 = vrot.lane.b32.xlu0 %v1482, 16
      %v1512 = vpop.permute.xlu0 %1511
      %1513 = vrot.lane.b32.xlu0 %v1483, 16
      %v1514 = vpop.permute.xlu0 %1513
      %1515 = vrot.lane.b32.xlu0 %v1484, 16
      %v1516 = vpop.permute.xlu0 %1515
      %1517 = vrot.lane.b32.xlu0 %v1485, 16
      %v1518 = vpop.permute.xlu0 %1517
      %1519 = vrot.lane.b32.xlu0 %v1486, 16
      %v1520 = vpop.permute.xlu0 %1519
      %1521 = vrot.lane.b32.xlu0 %v1487, 16
      %v1522 = vpop.permute.xlu0 %1521
      %1523 = vrot.lane.b32.xlu0 %v1488, 16
      %v1524 = vpop.permute.xlu0 %1523
      %vm1525 = vcmask 130048
      %v1526 = vsel %vm1525, %v1502, %v1504
      %v1527 = vsel %vm1525, %v1504, %v1506
      %v1528 = vsel %vm1525, %v1508, %v1510
      %v1529 = vsel %vm1525, %v1510, %v1512
      %v1530 = vsel %vm1525, %v1514, %v1516
      %v1531 = vsel %vm1525, %v1516, %v1518
      %v1532 = vsel %vm1525, %v1520, %v1522
      %v1533 = vsel %vm1525, %v1522, %v1524
      %1542 = vst [vmem:[#allocation3 + $0x40] sm:$0xff] %v1526
      %1543 = vst [vmem:[#allocation3 + $0x48] sm:$0xff] %v1527
      %1544 = vst [vmem:[#allocation3 + $0x50] sm:$0xff] %v1528
      %1545 = vst [vmem:[#allocation3 + $0x58] sm:$0xff] %v1529
      %1546 = vst [vmem:[#allocation3 + $0x60] sm:$0xff] %v1530
      %1547 = vst [vmem:[#allocation3 + $0x68] sm:$0xff] %v1531
      %1548 = vst [vmem:[#allocation3 + $0x70] sm:$0xff] %v1532
      %1549 = vst [vmem:[#allocation3 + $0x78] sm:$0xff] %v1533
      %v1550 = vld [vmem:[#allocation2 + $0x8] sm:$0xff]
      %v1551 = vld [vmem:[#allocation2 + $0x10] sm:$0xff]
      %v1552 = vld [vmem:[#allocation2 + $0x28] sm:$0xff]
      %v1553 = vld [vmem:[#allocation2 + $0x30] sm:$0xff]
      %v1554 = vld [vmem:[#allocation2 + $0x48] sm:$0xff]
      %v1555 = vld [vmem:[#allocation2 + $0x50] sm:$0xff]
      %v1556 = vld [vmem:[#allocation2 + $0x68] sm:$0xff]
      %v1557 = vld [vmem:[#allocation2 + $0x70] sm:$0xff]
      %1558 = vst [vmem:[#allocation3 + $0x80] sm:$0xff] %v1550
      %1559 = vst [vmem:[#allocation3 + $0x88] sm:$0xff] %v1551
      %1560 = vst [vmem:[#allocation3 + $0x90] sm:$0xff] %v1552
      %1561 = vst [vmem:[#allocation3 + $0x98] sm:$0xff] %v1553
      %1562 = vst [vmem:[#allocation3 + $0xa0] sm:$0xff] %v1554
      %1563 = vst [vmem:[#allocation3 + $0xa8] sm:$0xff] %v1555
      %1564 = vst [vmem:[#allocation3 + $0xb0] sm:$0xff] %v1556
      %1565 = vst [vmem:[#allocation3 + $0xb8] sm:$0xff] %v1557
      %v1566 = vld [vmem:[#allocation2 + $0x8] sm:$0xff]
      %v1567 = vld [vmem:[#allocation2 + $0x10] sm:$0xff]
      %v1568 = vld [vmem:[#allocation2 + $0x18] sm:$0xff]
      %v1569 = vld [vmem:[#allocation2 + $0x28] sm:$0xff]
      %v1570 = vld [vmem:[#allocation2 + $0x30] sm:$0xff]
      %v1571 = vld [vmem:[#allocation2 + $0x38] sm:$0xff]
      %v1572 = vld [vmem:[#allocation2 + $0x48] sm:$0xff]
      %v1573 = vld [vmem:[#allocation2 + $0x50] sm:$0xff]
      %v1574 = vld [vmem:[#allocation2 + $0x58] sm:$0xff]
      %v1575 = vld [vmem:[#allocation2 + $0x68] sm:$0xff]
      %v1576 = vld [vmem:[#allocation2 + $0x70] sm:$0xff]
      %v1577 = vld [vmem:[#allocation2 + $0x78] sm:$0xff]
      %1590 = vrot.lane.b32.xlu0 %v1566, 112
      %v1591 = vpop.permute.xlu0 %1590
      %1592 = vrot.lane.b32.xlu0 %v1567, 112
      %v1593 = vpop.permute.xlu0 %1592
      %1594 = vrot.lane.b32.xlu0 %v1568, 112
      %v1595 = vpop.permute.xlu0 %1594
      %1596 = vrot.lane.b32.xlu0 %v1569, 112
      %v1597 = vpop.permute.xlu0 %1596
      %1598 = vrot.lane.b32.xlu0 %v1570, 112
      %v1599 = vpop.permute.xlu0 %1598
      %1600 = vrot.lane.b32.xlu0 %v1571, 112
      %v1601 = vpop.permute.xlu0 %1600
      %1602 = vrot.lane.b32.xlu0 %v1572, 112
      %v1603 = vpop.permute.xlu0 %1602
      %1604 = vrot.lane.b32.xlu0 %v1573, 112
      %v1605 = vpop.permute.xlu0 %1604
      %1606 = vrot.lane.b32.xlu0 %v1574, 112
      %v1607 = vpop.permute.xlu0 %1606
      %1608 = vrot.lane.b32.xlu0 %v1575, 112
      %v1609 = vpop.permute.xlu0 %1608
      %1610 = vrot.lane.b32.xlu0 %v1576, 112
      %v1611 = vpop.permute.xlu0 %1610
      %1612 = vrot.lane.b32.xlu0 %v1577, 112
      %v1613 = vpop.permute.xlu0 %1612
      %vm1614 = vcmask 916480
      %v1615 = vsel %vm1614, %v1591, %v1593
      %v1616 = vsel %vm1614, %v1593, %v1595
      %v1617 = vsel %vm1614, %v1597, %v1599
      %v1618 = vsel %vm1614, %v1599, %v1601
      %v1619 = vsel %vm1614, %v1603, %v1605
      %v1620 = vsel %vm1614, %v1605, %v1607
      %v1621 = vsel %vm1614, %v1609, %v1611
      %v1622 = vsel %vm1614, %v1611, %v1613
      %1631 = vst [vmem:[#allocation3 + $0xc0] sm:$0xff] %v1615
      %1632 = vst [vmem:[#allocation3 + $0xc8] sm:$0xff] %v1616
      %1633 = vst [vmem:[#allocation3 + $0xd0] sm:$0xff] %v1617
      %1634 = vst [vmem:[#allocation3 + $0xd8] sm:$0xff] %v1618
      %1635 = vst [vmem:[#allocation3 + $0xe0] sm:$0xff] %v1619
      %1636 = vst [vmem:[#allocation3 + $0xe8] sm:$0xff] %v1620
      %1637 = vst [vmem:[#allocation3 + $0xf0] sm:$0xff] %v1621
      %1638 = vst [vmem:[#allocation3 + $0xf8] sm:$0xff] %v1622
      %v1639 = vld [vmem:[#allocation2 + $0x8] sm:$0xff]
      %v1640 = vld [vmem:[#allocation2 + $0x10] sm:$0xff]
      %v1641 = vld [vmem:[#allocation2 + $0x18] sm:$0xff]
      %v1642 = vld [vmem:[#allocation2 + $0x28] sm:$0xff]
      %v1643 = vld [vmem:[#allocation2 + $0x30] sm:$0xff]
      %v1644 = vld [vmem:[#allocation2 + $0x38] sm:$0xff]
      %v1645 = vld [vmem:[#allocation2 + $0x48] sm:$0xff]
      %v1646 = vld [vmem:[#allocation2 + $0x50] sm:$0xff]
      %v1647 = vld [vmem:[#allocation2 + $0x58] sm:$0xff]
      %v1648 = vld [vmem:[#allocation2 + $0x68] sm:$0xff]
      %v1649 = vld [vmem:[#allocation2 + $0x70] sm:$0xff]
      %v1650 = vld [vmem:[#allocation2 + $0x78] sm:$0xff]
      %1663 = vrot.lane.b32.xlu0 %v1639, 96
      %v1664 = vpop.permute.xlu0 %1663
      %1665 = vrot.lane.b32.xlu0 %v1640, 96
      %v1666 = vpop.permute.xlu0 %1665
      %1667 = vrot.lane.b32.xlu0 %v1641, 96
      %v1668 = vpop.permute.xlu0 %1667
      %1669 = vrot.lane.b32.xlu0 %v1642, 96
      %v1670 = vpop.permute.xlu0 %1669
      %1671 = vrot.lane.b32.xlu0 %v1643, 96
      %v1672 = vpop.permute.xlu0 %1671
      %1673 = vrot.lane.b32.xlu0 %v1644, 96
      %v1674 = vpop.permute.xlu0 %1673
      %1675 = vrot.lane.b32.xlu0 %v1645, 96
      %v1676 = vpop.permute.xlu0 %1675
      %1677 = vrot.lane.b32.xlu0 %v1646, 96
      %v1678 = vpop.permute.xlu0 %1677
      %1679 = vrot.lane.b32.xlu0 %v1647, 96
      %v1680 = vpop.permute.xlu0 %1679
      %1681 = vrot.lane.b32.xlu0 %v1648, 96
      %v1682 = vpop.permute.xlu0 %1681
      %1683 = vrot.lane.b32.xlu0 %v1649, 96
      %v1684 = vpop.permute.xlu0 %1683
      %1685 = vrot.lane.b32.xlu0 %v1650, 96
      %v1686 = vpop.permute.xlu0 %1685
      %vm1687 = vcmask 785408
      %v1688 = vsel %vm1687, %v1664, %v1666
      %v1689 = vsel %vm1687, %v1666, %v1668
      %v1690 = vsel %vm1687, %v1670, %v1672
      %v1691 = vsel %vm1687, %v1672, %v1674
      %v1692 = vsel %vm1687, %v1676, %v1678
      %v1693 = vsel %vm1687, %v1678, %v1680
      %v1694 = vsel %vm1687, %v1682, %v1684
      %v1695 = vsel %vm1687, %v1684, %v1686
      %1704 = vst [vmem:[#allocation3 + $0x100] sm:$0xff] %v1688
      %1705 = vst [vmem:[#allocation3 + $0x108] sm:$0xff] %v1689
      %1706 = vst [vmem:[#allocation3 + $0x110] sm:$0xff] %v1690
      %1707 = vst [vmem:[#allocation3 + $0x118] sm:$0xff] %v1691
      %1708 = vst [vmem:[#allocation3 + $0x120] sm:$0xff] %v1692
      %1709 = vst [vmem:[#allocation3 + $0x128] sm:$0xff] %v1693
      %1710 = vst [vmem:[#allocation3 + $0x130] sm:$0xff] %v1694
      %1711 = vst [vmem:[#allocation3 + $0x138] sm:$0xff] %v1695
      %s1712 = scalar_lea.vmem %s1, 128
      %v1713 = vld [vmem:[%s1712] sm:$0xff]
      %v1714 = vld [vmem:[%s1712 + $0x8] sm:$0xff]
      %v1715 = vld [vmem:[%s1712 + $0x10] sm:$0xff]
      %v1716 = vld [vmem:[%s1712 + $0x18] sm:$0xff]
      %v1717 = vld [vmem:[%s1712 + $0x20] sm:$0xff]
      %v1718 = vld [vmem:[%s1712 + $0x28] sm:$0xff]
      %v1719 = vld [vmem:[%s1712 + $0x30] sm:$0xff]
      %v1720 = vld [vmem:[%s1712 + $0x38] sm:$0xff]
      %v1721 = vld [vmem:[#allocation3] sm:$0xff]
      %v1722 = vld [vmem:[#allocation3 + $0x8] sm:$0xff]
      %v1723 = vld [vmem:[#allocation3 + $0x10] sm:$0xff]
      %v1724 = vld [vmem:[#allocation3 + $0x18] sm:$0xff]
      %v1725 = vld [vmem:[#allocation3 + $0x20] sm:$0xff]
      %v1726 = vld [vmem:[#allocation3 + $0x28] sm:$0xff]
      %v1727 = vld [vmem:[#allocation3 + $0x30] sm:$0xff]
      %v1728 = vld [vmem:[#allocation3 + $0x38] sm:$0xff]
      %v1729 = vld [vmem:[#allocation3 + $0x40] sm:$0xff]
      %v1730 = vld [vmem:[#allocation3 + $0x48] sm:$0xff]
      %v1731 = vld [vmem:[#allocation3 + $0x50] sm:$0xff]
      %v1732 = vld [vmem:[#allocation3 + $0x58] sm:$0xff]
      %v1733 = vld [vmem:[#allocation3 + $0x60] sm:$0xff]
      %v1734 = vld [vmem:[#allocation3 + $0x68] sm:$0xff]
      %v1735 = vld [vmem:[#allocation3 + $0x70] sm:$0xff]
      %v1736 = vld [vmem:[#allocation3 + $0x78] sm:$0xff]
      %v1737 = vld [vmem:[#allocation3 + $0x80] sm:$0xff]
      %v1738 = vld [vmem:[#allocation3 + $0x88] sm:$0xff]
      %v1739 = vld [vmem:[#allocation3 + $0x90] sm:$0xff]
      %v1740 = vld [vmem:[#allocation3 + $0x98] sm:$0xff]
      %v1741 = vld [vmem:[#allocation3 + $0xa0] sm:$0xff]
      %v1742 = vld [vmem:[#allocation3 + $0xa8] sm:$0xff]
      %v1743 = vld [vmem:[#allocation3 + $0xb0] sm:$0xff]
      %v1744 = vld [vmem:[#allocation3 + $0xb8] sm:$0xff]
      %v1745 = vld [vmem:[#allocation3 + $0xc0] sm:$0xff]
      %v1746 = vld [vmem:[#allocation3 + $0xc8] sm:$0xff]
      %v1747 = vld [vmem:[#allocation3 + $0xd0] sm:$0xff]
      %v1748 = vld [vmem:[#allocation3 + $0xd8] sm:$0xff]
      %v1749 = vld [vmem:[#allocation3 + $0xe0] sm:$0xff]
      %v1750 = vld [vmem:[#allocation3 + $0xe8] sm:$0xff]
      %v1751 = vld [vmem:[#allocation3 + $0xf0] sm:$0xff]
      %v1752 = vld [vmem:[#allocation3 + $0xf8] sm:$0xff]
      %v1753 = vld [vmem:[#allocation3 + $0x100] sm:$0xff]
      %v1754 = vld [vmem:[#allocation3 + $0x108] sm:$0xff]
      %v1755 = vld [vmem:[#allocation3 + $0x110] sm:$0xff]
      %v1756 = vld [vmem:[#allocation3 + $0x118] sm:$0xff]
      %v1757 = vld [vmem:[#allocation3 + $0x120] sm:$0xff]
      %v1758 = vld [vmem:[#allocation3 + $0x128] sm:$0xff]
      %v1759 = vld [vmem:[#allocation3 + $0x130] sm:$0xff]
      %v1760 = vld [vmem:[#allocation3 + $0x138] sm:$0xff]
      %v1762 = vsel %vm694, %v1714, 0
      %v1765 = vsel %vm694, %v1716, 0
      %v1768 = vsel %vm694, %v1718, 0
      %v1771 = vsel %vm694, %v1720, 0
      %1773 = vmatpush.msra.mxu0 %v1751
      %1774 = vmatpush.msra.mxu0 %v1749
      %1775 = vmatpush.msra.mxu0 %v1747
      %1776 = vmatpush.msra.mxu0 %v1745
      %1777 = vmatpush.msra.mxu0 %v1743
      %1778 = vmatpush.msra.mxu0 %v1741
      %1779 = vmatpush.msra.mxu0 %v1739
      %1780 = vmatpush.msra.mxu0 %v1737
      %1781 = vmatpush.msra.mxu0 %v1735
      %1782 = vmatpush.msra.mxu0 %v1733
      %1783 = vmatpush.msra.mxu0 %v1731
      %1784 = vmatpush.msra.mxu0 %v1729
      %1785 = vmatpush.msra.mxu0 %v1727
      %1786 = vmatpush.msra.mxu0 %v1725
      %1787 = vmatpush.msra.mxu0 %v1723
      %1788 = vmatpush.msra.mxu0 %v1721
      %1789 = vmatmul.f32.gmra.mxu0 %v1713
      %v1790 = vpop.f32.mrf.mxu0
      %v1791 = vadd.f32 0.0, %v1790
      %1792 = vmatmul.f32.gmra.mxu0 %v1715
      %v1793 = vpop.f32.mrf.mxu0
      %v1794 = vadd.f32 0.0, %v1793
      %1795 = vmatmul.f32.gmra.mxu0 %v1717
      %v1796 = vpop.f32.mrf.mxu0
      %v1797 = vadd.f32 0.0, %v1796
      %1798 = vmatmul.f32.gmra.mxu0 %v1719
      %v1799 = vpop.f32.mrf.mxu0
      %v1800 = vadd.f32 0.0, %v1799
      %1801 = vdwg.mxu0
      %1802 = vmatpush.msra.mxu0 0.0
      %1803 = vmatpush.msra.mxu0 0.0
      %1804 = vmatpush.msra.mxu0 0.0
      %1805 = vmatpush.msra.mxu0 0.0
      %1806 = vmatpush.msra.mxu0 0.0
      %1807 = vmatpush.msra.mxu0 0.0
      %1808 = vmatpush.msra.mxu0 0.0
      %1809 = vmatpush.msra.mxu0 0.0
      %1810 = vmatpush.msra.mxu0 0.0
      %1811 = vmatpush.msra.mxu0 0.0
      %1812 = vmatpush.msra.mxu0 0.0
      %1813 = vmatpush.msra.mxu0 0.0
      %1814 = vmatpush.msra.mxu0 %v1759
      %1815 = vmatpush.msra.mxu0 %v1757
      %1816 = vmatpush.msra.mxu0 %v1755
      %1817 = vmatpush.msra.mxu0 %v1753
      %1818 = vmatmul.f32.gmra.mxu0 %v1762
      %v1819 = vpop.f32.mrf.mxu0
      %v1820 = vadd.f32 %v1791, %v1819
      %1821 = vmatmul.f32.gmra.mxu0 %v1765
      %v1822 = vpop.f32.mrf.mxu0
      %v1823 = vadd.f32 %v1794, %v1822
      %1824 = vmatmul.f32.gmra.mxu0 %v1768
      %v1825 = vpop.f32.mrf.mxu0
      %v1826 = vadd.f32 %v1797, %v1825
      %1827 = vmatmul.f32.gmra.mxu0 %v1771
      %v1828 = vpop.f32.mrf.mxu0
      %v1829 = vadd.f32 %v1800, %v1828
      %1830 = vdwg.mxu0
      %1831 = vmatpush.msra.mxu0 %v1752
      %1832 = vmatpush.msra.mxu0 %v1750
      %1833 = vmatpush.msra.mxu0 %v1748
      %1834 = vmatpush.msra.mxu0 %v1746
      %1835 = vmatpush.msra.mxu0 %v1744
      %1836 = vmatpush.msra.mxu0 %v1742
      %1837 = vmatpush.msra.mxu0 %v1740
      %1838 = vmatpush.msra.mxu0 %v1738
      %1839 = vmatpush.msra.mxu0 %v1736
      %1840 = vmatpush.msra.mxu0 %v1734
      %1841 = vmatpush.msra.mxu0 %v1732
      %1842 = vmatpush.msra.mxu0 %v1730
      %1843 = vmatpush.msra.mxu0 %v1728
      %1844 = vmatpush.msra.mxu0 %v1726
      %1845 = vmatpush.msra.mxu0 %v1724
      %1846 = vmatpush.msra.mxu0 %v1722
      %1847 = vmatmul.f32.gmra.mxu0 %v1713
      %v1848 = vpop.f32.mrf.mxu0
      %v1849 = vadd.f32 0.0, %v1848
      %1850 = vmatmul.f32.gmra.mxu0 %v1715
      %v1851 = vpop.f32.mrf.mxu0
      %v1852 = vadd.f32 0.0, %v1851
      %1853 = vmatmul.f32.gmra.mxu0 %v1717
      %v1854 = vpop.f32.mrf.mxu0
      %v1855 = vadd.f32 0.0, %v1854
      %1856 = vmatmul.f32.gmra.mxu0 %v1719
      %v1857 = vpop.f32.mrf.mxu0
      %v1858 = vadd.f32 0.0, %v1857
      %1859 = vdwg.mxu0
      %1860 = vmatpush.msra.mxu0 0.0
      %1861 = vmatpush.msra.mxu0 0.0
      %1862 = vmatpush.msra.mxu0 0.0
      %1863 = vmatpush.msra.mxu0 0.0
      %1864 = vmatpush.msra.mxu0 0.0
      %1865 = vmatpush.msra.mxu0 0.0
      %1866 = vmatpush.msra.mxu0 0.0
      %1867 = vmatpush.msra.mxu0 0.0
      %1868 = vmatpush.msra.mxu0 0.0
      %1869 = vmatpush.msra.mxu0 0.0
      %1870 = vmatpush.msra.mxu0 0.0
      %1871 = vmatpush.msra.mxu0 0.0
      %1872 = vmatpush.msra.mxu0 %v1760
      %1873 = vmatpush.msra.mxu0 %v1758
      %1874 = vmatpush.msra.mxu0 %v1756
      %1875 = vmatpush.msra.mxu0 %v1754
      %1876 = vmatmul.f32.gmra.mxu0 %v1762
      %v1877 = vpop.f32.mrf.mxu0
      %v1878 = vadd.f32 %v1849, %v1877
      %1879 = vmatmul.f32.gmra.mxu0 %v1765
      %v1880 = vpop.f32.mrf.mxu0
      %v1881 = vadd.f32 %v1852, %v1880
      %1882 = vmatmul.f32.gmra.mxu0 %v1768
      %v1883 = vpop.f32.mrf.mxu0
      %v1884 = vadd.f32 %v1855, %v1883
      %1885 = vmatmul.f32.gmra.mxu0 %v1771
      %v1886 = vpop.f32.mrf.mxu0
      %v1887 = vadd.f32 %v1858, %v1886
      %1888 = vdwg.mxu0
      %v1889 = vadd.f32 %v1397, %v1820
      %v1890 = vadd.f32 %v1398, %v1878
      %v1891 = vadd.f32 %v1399, %v1823
      %v1892 = vadd.f32 %v1400, %v1881
      %v1893 = vadd.f32 %v1401, %v1826
      %v1894 = vadd.f32 %v1402, %v1884
      %v1895 = vadd.f32 %v1403, %v1829
      %v1896 = vadd.f32 %v1404, %v1887
      %v1897 = vld [vmem:[#allocation2] sm:$0xff]
      %v1898 = vld [vmem:[#allocation2 + $0x8] sm:$0xff]
      %v1899 = vld [vmem:[#allocation2 + $0x10] sm:$0xff]
      %v1900 = vld [vmem:[#allocation2 + $0x20] sm:$0xff]
      %v1901 = vld [vmem:[#allocation2 + $0x28] sm:$0xff]
      %v1902 = vld [vmem:[#allocation2 + $0x30] sm:$0xff]
      %v1903 = vld [vmem:[#allocation2 + $0x40] sm:$0xff]
      %v1904 = vld [vmem:[#allocation2 + $0x48] sm:$0xff]
      %v1905 = vld [vmem:[#allocation2 + $0x50] sm:$0xff]
      %v1906 = vld [vmem:[#allocation2 + $0x60] sm:$0xff]
      %v1907 = vld [vmem:[#allocation2 + $0x68] sm:$0xff]
      %v1908 = vld [vmem:[#allocation2 + $0x70] sm:$0xff]
      %1921 = vrot.lane.b32.xlu0 %v1897, 31
      %v1922 = vpop.permute.xlu0 %1921
      %1923 = vrot.lane.b32.xlu0 %v1898, 31
      %v1924 = vpop.permute.xlu0 %1923
      %1925 = vrot.lane.b32.xlu0 %v1899, 31
      %v1926 = vpop.permute.xlu0 %1925
      %1927 = vrot.lane.b32.xlu0 %v1900, 31
      %v1928 = vpop.permute.xlu0 %1927
      %1929 = vrot.lane.b32.xlu0 %v1901, 31
      %v1930 = vpop.permute.xlu0 %1929
      %1931 = vrot.lane.b32.xlu0 %v1902, 31
      %v1932 = vpop.permute.xlu0 %1931
      %1933 = vrot.lane.b32.xlu0 %v1903, 31
      %v1934 = vpop.permute.xlu0 %1933
      %1935 = vrot.lane.b32.xlu0 %v1904, 31
      %v1936 = vpop.permute.xlu0 %1935
      %1937 = vrot.lane.b32.xlu0 %v1905, 31
      %v1938 = vpop.permute.xlu0 %1937
      %1939 = vrot.lane.b32.xlu0 %v1906, 31
      %v1940 = vpop.permute.xlu0 %1939
      %1941 = vrot.lane.b32.xlu0 %v1907, 31
      %v1942 = vpop.permute.xlu0 %1941
      %1943 = vrot.lane.b32.xlu0 %v1908, 31
      %v1944 = vpop.permute.xlu0 %1943
      %vm1945 = vcmask 252928
      %v1946 = vsel %vm1945, %v1922, %v1924
      %v1947 = vsel %vm1945, %v1924, %v1926
      %v1948 = vsel %vm1945, %v1928, %v1930
      %v1949 = vsel %vm1945, %v1930, %v1932
      %v1950 = vsel %vm1945, %v1934, %v1936
      %v1951 = vsel %vm1945, %v1936, %v1938
      %v1952 = vsel %vm1945, %v1940, %v1942
      %v1953 = vsel %vm1945, %v1942, %v1944
      %1962 = vst [vmem:[#allocation3] sm:$0xff] %v1946
      %1963 = vst [vmem:[#allocation3 + $0x8] sm:$0xff] %v1947
      %1964 = vst [vmem:[#allocation3 + $0x10] sm:$0xff] %v1948
      %1965 = vst [vmem:[#allocation3 + $0x18] sm:$0xff] %v1949
      %1966 = vst [vmem:[#allocation3 + $0x20] sm:$0xff] %v1950
      %1967 = vst [vmem:[#allocation3 + $0x28] sm:$0xff] %v1951
      %1968 = vst [vmem:[#allocation3 + $0x30] sm:$0xff] %v1952
      %1969 = vst [vmem:[#allocation3 + $0x38] sm:$0xff] %v1953
      %v1970 = vld [vmem:[#allocation2] sm:$0xff]
      %v1971 = vld [vmem:[#allocation2 + $0x8] sm:$0xff]
      %v1972 = vld [vmem:[#allocation2 + $0x10] sm:$0xff]
      %v1973 = vld [vmem:[#allocation2 + $0x20] sm:$0xff]
      %v1974 = vld [vmem:[#allocation2 + $0x28] sm:$0xff]
      %v1975 = vld [vmem:[#allocation2 + $0x30] sm:$0xff]
      %v1976 = vld [vmem:[#allocation2 + $0x40] sm:$0xff]
      %v1977 = vld [vmem:[#allocation2 + $0x48] sm:$0xff]
      %v1978 = vld [vmem:[#allocation2 + $0x50] sm:$0xff]
      %v1979 = vld [vmem:[#allocation2 + $0x60] sm:$0xff]
      %v1980 = vld [vmem:[#allocation2 + $0x68] sm:$0xff]
      %v1981 = vld [vmem:[#allocation2 + $0x70] sm:$0xff]
      %1994 = vrot.lane.b32.xlu0 %v1970, 15
      %v1995 = vpop.permute.xlu0 %1994
      %1996 = vrot.lane.b32.xlu0 %v1971, 15
      %v1997 = vpop.permute.xlu0 %1996
      %1998 = vrot.lane.b32.xlu0 %v1972, 15
      %v1999 = vpop.permute.xlu0 %1998
      %2000 = vrot.lane.b32.xlu0 %v1973, 15
      %v2001 = vpop.permute.xlu0 %2000
      %2002 = vrot.lane.b32.xlu0 %v1974, 15
      %v2003 = vpop.permute.xlu0 %2002
      %2004 = vrot.lane.b32.xlu0 %v1975, 15
      %v2005 = vpop.permute.xlu0 %2004
      %2006 = vrot.lane.b32.xlu0 %v1976, 15
      %v2007 = vpop.permute.xlu0 %2006
      %2008 = vrot.lane.b32.xlu0 %v1977, 15
      %v2009 = vpop.permute.xlu0 %2008
      %2010 = vrot.lane.b32.xlu0 %v1978, 15
      %v2011 = vpop.permute.xlu0 %2010
      %2012 = vrot.lane.b32.xlu0 %v1979, 15
      %v2013 = vpop.permute.xlu0 %2012
      %2014 = vrot.lane.b32.xlu0 %v1980, 15
      %v2015 = vpop.permute.xlu0 %2014
      %2016 = vrot.lane.b32.xlu0 %v1981, 15
      %v2017 = vpop.permute.xlu0 %2016
      %vm2018 = vcmask 121856
      %v2019 = vsel %vm2018, %v1995, %v1997
      %v2020 = vsel %vm2018, %v1997, %v1999
      %v2021 = vsel %vm2018, %v2001, %v2003
      %v2022 = vsel %vm2018, %v2003, %v2005
      %v2023 = vsel %vm2018, %v2007, %v2009
      %v2024 = vsel %vm2018, %v2009, %v2011
      %v2025 = vsel %vm2018, %v2013, %v2015
      %v2026 = vsel %vm2018, %v2015, %v2017
      %2035 = vst [vmem:[#allocation3 + $0x40] sm:$0xff] %v2019
      %2036 = vst [vmem:[#allocation3 + $0x48] sm:$0xff] %v2020
      %2037 = vst [vmem:[#allocation3 + $0x50] sm:$0xff] %v2021
      %2038 = vst [vmem:[#allocation3 + $0x58] sm:$0xff] %v2022
      %2039 = vst [vmem:[#allocation3 + $0x60] sm:$0xff] %v2023
      %2040 = vst [vmem:[#allocation3 + $0x68] sm:$0xff] %v2024
      %2041 = vst [vmem:[#allocation3 + $0x70] sm:$0xff] %v2025
      %2042 = vst [vmem:[#allocation3 + $0x78] sm:$0xff] %v2026
      %v2043 = vld [vmem:[#allocation2 + $0x8] sm:$0xff]
      %v2044 = vld [vmem:[#allocation2 + $0x10] sm:$0xff]
      %v2045 = vld [vmem:[#allocation2 + $0x18] sm:$0xff]
      %v2046 = vld [vmem:[#allocation2 + $0x28] sm:$0xff]
      %v2047 = vld [vmem:[#allocation2 + $0x30] sm:$0xff]
      %v2048 = vld [vmem:[#allocation2 + $0x38] sm:$0xff]
      %v2049 = vld [vmem:[#allocation2 + $0x48] sm:$0xff]
      %v2050 = vld [vmem:[#allocation2 + $0x50] sm:$0xff]
      %v2051 = vld [vmem:[#allocation2 + $0x58] sm:$0xff]
      %v2052 = vld [vmem:[#allocation2 + $0x68] sm:$0xff]
      %v2053 = vld [vmem:[#allocation2 + $0x70] sm:$0xff]
      %v2054 = vld [vmem:[#allocation2 + $0x78] sm:$0xff]
      %2067 = vrot.lane.b32.xlu0 %v2043, 127
      %v2068 = vpop.permute.xlu0 %2067
      %2069 = vrot.lane.b32.xlu0 %v2044, 127
      %v2070 = vpop.permute.xlu0 %2069
      %2071 = vrot.lane.b32.xlu0 %v2045, 127
      %v2072 = vpop.permute.xlu0 %2071
      %2073 = vrot.lane.b32.xlu0 %v2046, 127
      %v2074 = vpop.permute.xlu0 %2073
      %2075 = vrot.lane.b32.xlu0 %v2047, 127
      %v2076 = vpop.permute.xlu0 %2075
      %2077 = vrot.lane.b32.xlu0 %v2048, 127
      %v2078 = vpop.permute.xlu0 %2077
      %2079 = vrot.lane.b32.xlu0 %v2049, 127
      %v2080 = vpop.permute.xlu0 %2079
      %2081 = vrot.lane.b32.xlu0 %v2050, 127
      %v2082 = vpop.permute.xlu0 %2081
      %2083 = vrot.lane.b32.xlu0 %v2051, 127
      %v2084 = vpop.permute.xlu0 %2083
      %2085 = vrot.lane.b32.xlu0 %v2052, 127
      %v2086 = vpop.permute.xlu0 %2085
      %2087 = vrot.lane.b32.xlu0 %v2053, 127
      %v2088 = vpop.permute.xlu0 %2087
      %2089 = vrot.lane.b32.xlu0 %v2054, 127
      %v2090 = vpop.permute.xlu0 %2089
      %vm2091 = vcmask 1039360
      %v2092 = vsel %vm2091, %v2068, %v2070
      %v2093 = vsel %vm2091, %v2070, %v2072
      %v2094 = vsel %vm2091, %v2074, %v2076
      %v2095 = vsel %vm2091, %v2076, %v2078
      %v2096 = vsel %vm2091, %v2080, %v2082
      %v2097 = vsel %vm2091, %v2082, %v2084
      %v2098 = vsel %vm2091, %v2086, %v2088
      %v2099 = vsel %vm2091, %v2088, %v2090
      %2108 = vst [vmem:[#allocation3 + $0x80] sm:$0xff] %v2092
      %2109 = vst [vmem:[#allocation3 + $0x88] sm:$0xff] %v2093
      %2110 = vst [vmem:[#allocation3 + $0x90] sm:$0xff] %v2094
      %2111 = vst [vmem:[#allocation3 + $0x98] sm:$0xff] %v2095
      %2112 = vst [vmem:[#allocation3 + $0xa0] sm:$0xff] %v2096
      %2113 = vst [vmem:[#allocation3 + $0xa8] sm:$0xff] %v2097
      %2114 = vst [vmem:[#allocation3 + $0xb0] sm:$0xff] %v2098
      %2115 = vst [vmem:[#allocation3 + $0xb8] sm:$0xff] %v2099
      %v2116 = vld [vmem:[#allocation2 + $0x8] sm:$0xff]
      %v2117 = vld [vmem:[#allocation2 + $0x10] sm:$0xff]
      %v2118 = vld [vmem:[#allocation2 + $0x18] sm:$0xff]
      %v2119 = vld [vmem:[#allocation2 + $0x28] sm:$0xff]
      %v2120 = vld [vmem:[#allocation2 + $0x30] sm:$0xff]
      %v2121 = vld [vmem:[#allocation2 + $0x38] sm:$0xff]
      %v2122 = vld [vmem:[#allocation2 + $0x48] sm:$0xff]
      %v2123 = vld [vmem:[#allocation2 + $0x50] sm:$0xff]
      %v2124 = vld [vmem:[#allocation2 + $0x58] sm:$0xff]
      %v2125 = vld [vmem:[#allocation2 + $0x68] sm:$0xff]
      %v2126 = vld [vmem:[#allocation2 + $0x70] sm:$0xff]
      %v2127 = vld [vmem:[#allocation2 + $0x78] sm:$0xff]
      %2140 = vrot.lane.b32.xlu0 %v2116, 111
      %v2141 = vpop.permute.xlu0 %2140
      %2142 = vrot.lane.b32.xlu0 %v2117, 111
      %v2143 = vpop.permute.xlu0 %2142
      %2144 = vrot.lane.b32.xlu0 %v2118, 111
      %v2145 = vpop.permute.xlu0 %2144
      %2146 = vrot.lane.b32.xlu0 %v2119, 111
      %v2147 = vpop.permute.xlu0 %2146
      %2148 = vrot.lane.b32.xlu0 %v2120, 111
      %v2149 = vpop.permute.xlu0 %2148
      %2150 = vrot.lane.b32.xlu0 %v2121, 111
      %v2151 = vpop.permute.xlu0 %2150
      %2152 = vrot.lane.b32.xlu0 %v2122, 111
      %v2153 = vpop.permute.xlu0 %2152
      %2154 = vrot.lane.b32.xlu0 %v2123, 111
      %v2155 = vpop.permute.xlu0 %2154
      %2156 = vrot.lane.b32.xlu0 %v2124, 111
      %v2157 = vpop.permute.xlu0 %2156
      %2158 = vrot.lane.b32.xlu0 %v2125, 111
      %v2159 = vpop.permute.xlu0 %2158
      %2160 = vrot.lane.b32.xlu0 %v2126, 111
      %v2161 = vpop.permute.xlu0 %2160
      %2162 = vrot.lane.b32.xlu0 %v2127, 111
      %v2163 = vpop.permute.xlu0 %2162
      %vm2164 = vcmask 908288
      %v2165 = vsel %vm2164, %v2141, %v2143
      %v2166 = vsel %vm2164, %v2143, %v2145
      %v2167 = vsel %vm2164, %v2147, %v2149
      %v2168 = vsel %vm2164, %v2149, %v2151
      %v2169 = vsel %vm2164, %v2153, %v2155
      %v2170 = vsel %vm2164, %v2155, %v2157
      %v2171 = vsel %vm2164, %v2159, %v2161
      %v2172 = vsel %vm2164, %v2161, %v2163
      %2181 = vst [vmem:[#allocation3 + $0xc0] sm:$0xff] %v2165
      %2182 = vst [vmem:[#allocation3 + $0xc8] sm:$0xff] %v2166
      %2183 = vst [vmem:[#allocation3 + $0xd0] sm:$0xff] %v2167
      %2184 = vst [vmem:[#allocation3 + $0xd8] sm:$0xff] %v2168
      %2185 = vst [vmem:[#allocation3 + $0xe0] sm:$0xff] %v2169
      %2186 = vst [vmem:[#allocation3 + $0xe8] sm:$0xff] %v2170
      %2187 = vst [vmem:[#allocation3 + $0xf0] sm:$0xff] %v2171
      %2188 = vst [vmem:[#allocation3 + $0xf8] sm:$0xff] %v2172
      %v2189 = vld [vmem:[#allocation2 + $0x8] sm:$0xff]
      %v2190 = vld [vmem:[#allocation2 + $0x10] sm:$0xff]
      %v2191 = vld [vmem:[#allocation2 + $0x18] sm:$0xff]
      %v2192 = vld [vmem:[#allocation2 + $0x28] sm:$0xff]
      %v2193 = vld [vmem:[#allocation2 + $0x30] sm:$0xff]
      %v2194 = vld [vmem:[#allocation2 + $0x38] sm:$0xff]
      %v2195 = vld [vmem:[#allocation2 + $0x48] sm:$0xff]
      %v2196 = vld [vmem:[#allocation2 + $0x50] sm:$0xff]
      %v2197 = vld [vmem:[#allocation2 + $0x58] sm:$0xff]
      %v2198 = vld [vmem:[#allocation2 + $0x68] sm:$0xff]
      %v2199 = vld [vmem:[#allocation2 + $0x70] sm:$0xff]
      %v2200 = vld [vmem:[#allocation2 + $0x78] sm:$0xff]
      %2213 = vrot.lane.b32.xlu0 %v2189, 95
      %v2214 = vpop.permute.xlu0 %2213
      %2215 = vrot.lane.b32.xlu0 %v2190, 95
      %v2216 = vpop.permute.xlu0 %2215
      %2217 = vrot.lane.b32.xlu0 %v2191, 95
      %v2218 = vpop.permute.xlu0 %2217
      %2219 = vrot.lane.b32.xlu0 %v2192, 95
      %v2220 = vpop.permute.xlu0 %2219
      %2221 = vrot.lane.b32.xlu0 %v2193, 95
      %v2222 = vpop.permute.xlu0 %2221
      %2223 = vrot.lane.b32.xlu0 %v2194, 95
      %v2224 = vpop.permute.xlu0 %2223
      %2225 = vrot.lane.b32.xlu0 %v2195, 95
      %v2226 = vpop.permute.xlu0 %2225
      %2227 = vrot.lane.b32.xlu0 %v2196, 95
      %v2228 = vpop.permute.xlu0 %2227
      %2229 = vrot.lane.b32.xlu0 %v2197, 95
      %v2230 = vpop.permute.xlu0 %2229
      %2231 = vrot.lane.b32.xlu0 %v2198, 95
      %v2232 = vpop.permute.xlu0 %2231
      %2233 = vrot.lane.b32.xlu0 %v2199, 95
      %v2234 = vpop.permute.xlu0 %2233
      %2235 = vrot.lane.b32.xlu0 %v2200, 95
      %v2236 = vpop.permute.xlu0 %2235
      %vm2237 = vcmask 777216
      %v2238 = vsel %vm2237, %v2214, %v2216
      %v2239 = vsel %vm2237, %v2216, %v2218
      %v2240 = vsel %vm2237, %v2220, %v2222
      %v2241 = vsel %vm2237, %v2222, %v2224
      %v2242 = vsel %vm2237, %v2226, %v2228
      %v2243 = vsel %vm2237, %v2228, %v2230
      %v2244 = vsel %vm2237, %v2232, %v2234
      %v2245 = vsel %vm2237, %v2234, %v2236
      %2254 = vst [vmem:[#allocation3 + $0x100] sm:$0xff] %v2238
      %2255 = vst [vmem:[#allocation3 + $0x108] sm:$0xff] %v2239
      %2256 = vst [vmem:[#allocation3 + $0x110] sm:$0xff] %v2240
      %2257 = vst [vmem:[#allocation3 + $0x118] sm:$0xff] %v2241
      %2258 = vst [vmem:[#allocation3 + $0x120] sm:$0xff] %v2242
      %2259 = vst [vmem:[#allocation3 + $0x128] sm:$0xff] %v2243
      %2260 = vst [vmem:[#allocation3 + $0x130] sm:$0xff] %v2244
      %2261 = vst [vmem:[#allocation3 + $0x138] sm:$0xff] %v2245
      %s2262 = scalar_lea.vmem %s1, 192
      %v2263 = vld [vmem:[%s2262] sm:$0xff]
      %v2264 = vld [vmem:[%s2262 + $0x8] sm:$0xff]
      %v2265 = vld [vmem:[%s2262 + $0x10] sm:$0xff]
      %v2266 = vld [vmem:[%s2262 + $0x18] sm:$0xff]
      %v2267 = vld [vmem:[%s2262 + $0x20] sm:$0xff]
      %v2268 = vld [vmem:[%s2262 + $0x28] sm:$0xff]
      %v2269 = vld [vmem:[%s2262 + $0x30] sm:$0xff]
      %v2270 = vld [vmem:[%s2262 + $0x38] sm:$0xff]
      %v2271 = vld [vmem:[#allocation3] sm:$0xff]
      %v2272 = vld [vmem:[#allocation3 + $0x8] sm:$0xff]
      %v2273 = vld [vmem:[#allocation3 + $0x10] sm:$0xff]
      %v2274 = vld [vmem:[#allocation3 + $0x18] sm:$0xff]
      %v2275 = vld [vmem:[#allocation3 + $0x20] sm:$0xff]
      %v2276 = vld [vmem:[#allocation3 + $0x28] sm:$0xff]
      %v2277 = vld [vmem:[#allocation3 + $0x30] sm:$0xff]
      %v2278 = vld [vmem:[#allocation3 + $0x38] sm:$0xff]
      %v2279 = vld [vmem:[#allocation3 + $0x40] sm:$0xff]
      %v2280 = vld [vmem:[#allocation3 + $0x48] sm:$0xff]
      %v2281 = vld [vmem:[#allocation3 + $0x50] sm:$0xff]
      %v2282 = vld [vmem:[#allocation3 + $0x58] sm:$0xff]
      %v2283 = vld [vmem:[#allocation3 + $0x60] sm:$0xff]
      %v2284 = vld [vmem:[#allocation3 + $0x68] sm:$0xff]
      %v2285 = vld [vmem:[#allocation3 + $0x70] sm:$0xff]
      %v2286 = vld [vmem:[#allocation3 + $0x78] sm:$0xff]
      %v2287 = vld [vmem:[#allocation3 + $0x80] sm:$0xff]
      %v2288 = vld [vmem:[#allocation3 + $0x88] sm:$0xff]
      %v2289 = vld [vmem:[#allocation3 + $0x90] sm:$0xff]
      %v2290 = vld [vmem:[#allocation3 + $0x98] sm:$0xff]
      %v2291 = vld [vmem:[#allocation3 + $0xa0] sm:$0xff]
      %v2292 = vld [vmem:[#allocation3 + $0xa8] sm:$0xff]
      %v2293 = vld [vmem:[#allocation3 + $0xb0] sm:$0xff]
      %v2294 = vld [vmem:[#allocation3 + $0xb8] sm:$0xff]
      %v2295 = vld [vmem:[#allocation3 + $0xc0] sm:$0xff]
      %v2296 = vld [vmem:[#allocation3 + $0xc8] sm:$0xff]
      %v2297 = vld [vmem:[#allocation3 + $0xd0] sm:$0xff]
      %v2298 = vld [vmem:[#allocation3 + $0xd8] sm:$0xff]
      %v2299 = vld [vmem:[#allocation3 + $0xe0] sm:$0xff]
      %v2300 = vld [vmem:[#allocation3 + $0xe8] sm:$0xff]
      %v2301 = vld [vmem:[#allocation3 + $0xf0] sm:$0xff]
      %v2302 = vld [vmem:[#allocation3 + $0xf8] sm:$0xff]
      %v2303 = vld [vmem:[#allocation3 + $0x100] sm:$0xff]
      %v2304 = vld [vmem:[#allocation3 + $0x108] sm:$0xff]
      %v2305 = vld [vmem:[#allocation3 + $0x110] sm:$0xff]
      %v2306 = vld [vmem:[#allocation3 + $0x118] sm:$0xff]
      %v2307 = vld [vmem:[#allocation3 + $0x120] sm:$0xff]
      %v2308 = vld [vmem:[#allocation3 + $0x128] sm:$0xff]
      %v2309 = vld [vmem:[#allocation3 + $0x130] sm:$0xff]
      %v2310 = vld [vmem:[#allocation3 + $0x138] sm:$0xff]
      %v2312 = vsel %vm694, %v2264, 0
      %v2315 = vsel %vm694, %v2266, 0
      %v2318 = vsel %vm694, %v2268, 0
      %v2321 = vsel %vm694, %v2270, 0
      %2323 = vmatpush.msra.mxu0 %v2301
      %2324 = vmatpush.msra.mxu0 %v2299
      %2325 = vmatpush.msra.mxu0 %v2297
      %2326 = vmatpush.msra.mxu0 %v2295
      %2327 = vmatpush.msra.mxu0 %v2293
      %2328 = vmatpush.msra.mxu0 %v2291
      %2329 = vmatpush.msra.mxu0 %v2289
      %2330 = vmatpush.msra.mxu0 %v2287
      %2331 = vmatpush.msra.mxu0 %v2285
      %2332 = vmatpush.msra.mxu0 %v2283
      %2333 = vmatpush.msra.mxu0 %v2281
      %2334 = vmatpush.msra.mxu0 %v2279
      %2335 = vmatpush.msra.mxu0 %v2277
      %2336 = vmatpush.msra.mxu0 %v2275
      %2337 = vmatpush.msra.mxu0 %v2273
      %2338 = vmatpush.msra.mxu0 %v2271
      %2339 = vmatmul.f32.gmra.mxu0 %v2263
      %v2340 = vpop.f32.mrf.mxu0
      %v2341 = vadd.f32 0.0, %v2340
      %2342 = vmatmul.f32.gmra.mxu0 %v2265
      %v2343 = vpop.f32.mrf.mxu0
      %v2344 = vadd.f32 0.0, %v2343
      %2345 = vmatmul.f32.gmra.mxu0 %v2267
      %v2346 = vpop.f32.mrf.mxu0
      %v2347 = vadd.f32 0.0, %v2346
      %2348 = vmatmul.f32.gmra.mxu0 %v2269
      %v2349 = vpop.f32.mrf.mxu0
      %v2350 = vadd.f32 0.0, %v2349
      %2351 = vdwg.mxu0
      %2352 = vmatpush.msra.mxu0 0.0
      %2353 = vmatpush.msra.mxu0 0.0
      %2354 = vmatpush.msra.mxu0 0.0
      %2355 = vmatpush.msra.mxu0 0.0
      %2356 = vmatpush.msra.mxu0 0.0
      %2357 = vmatpush.msra.mxu0 0.0
      %2358 = vmatpush.msra.mxu0 0.0
      %2359 = vmatpush.msra.mxu0 0.0
      %2360 = vmatpush.msra.mxu0 0.0
      %2361 = vmatpush.msra.mxu0 0.0
      %2362 = vmatpush.msra.mxu0 0.0
      %2363 = vmatpush.msra.mxu0 0.0
      %2364 = vmatpush.msra.mxu0 %v2309
      %2365 = vmatpush.msra.mxu0 %v2307
      %2366 = vmatpush.msra.mxu0 %v2305
      %2367 = vmatpush.msra.mxu0 %v2303
      %2368 = vmatmul.f32.gmra.mxu0 %v2312
      %v2369 = vpop.f32.mrf.mxu0
      %v2370 = vadd.f32 %v2341, %v2369
      %2371 = vmatmul.f32.gmra.mxu0 %v2315
      %v2372 = vpop.f32.mrf.mxu0
      %v2373 = vadd.f32 %v2344, %v2372
      %2374 = vmatmul.f32.gmra.mxu0 %v2318
      %v2375 = vpop.f32.mrf.mxu0
      %v2376 = vadd.f32 %v2347, %v2375
      %2377 = vmatmul.f32.gmra.mxu0 %v2321
      %v2378 = vpop.f32.mrf.mxu0
      %v2379 = vadd.f32 %v2350, %v2378
      %2380 = vdwg.mxu0
      %2381 = vmatpush.msra.mxu0 %v2302
      %2382 = vmatpush.msra.mxu0 %v2300
      %2383 = vmatpush.msra.mxu0 %v2298
      %2384 = vmatpush.msra.mxu0 %v2296
      %2385 = vmatpush.msra.mxu0 %v2294
      %2386 = vmatpush.msra.mxu0 %v2292
      %2387 = vmatpush.msra.mxu0 %v2290
      %2388 = vmatpush.msra.mxu0 %v2288
      %2389 = vmatpush.msra.mxu0 %v2286
      %2390 = vmatpush.msra.mxu0 %v2284
      %2391 = vmatpush.msra.mxu0 %v2282
      %2392 = vmatpush.msra.mxu0 %v2280
      %2393 = vmatpush.msra.mxu0 %v2278
      %2394 = vmatpush.msra.mxu0 %v2276
      %2395 = vmatpush.msra.mxu0 %v2274
      %2396 = vmatpush.msra.mxu0 %v2272
      %2397 = vmatmul.f32.gmra.mxu0 %v2263
      %v2398 = vpop.f32.mrf.mxu0
      %v2399 = vadd.f32 0.0, %v2398
      %2400 = vmatmul.f32.gmra.mxu0 %v2265
      %v2401 = vpop.f32.mrf.mxu0
      %v2402 = vadd.f32 0.0, %v2401
      %2403 = vmatmul.f32.gmra.mxu0 %v2267
      %v2404 = vpop.f32.mrf.mxu0
      %v2405 = vadd.f32 0.0, %v2404
      %2406 = vmatmul.f32.gmra.mxu0 %v2269
      %v2407 = vpop.f32.mrf.mxu0
      %v2408 = vadd.f32 0.0, %v2407
      %2409 = vdwg.mxu0
      %2410 = vmatpush.msra.mxu0 0.0
      %2411 = vmatpush.msra.mxu0 0.0
      %2412 = vmatpush.msra.mxu0 0.0
      %2413 = vmatpush.msra.mxu0 0.0
      %2414 = vmatpush.msra.mxu0 0.0
      %2415 = vmatpush.msra.mxu0 0.0
      %2416 = vmatpush.msra.mxu0 0.0
      %2417 = vmatpush.msra.mxu0 0.0
      %2418 = vmatpush.msra.mxu0 0.0
      %2419 = vmatpush.msra.mxu0 0.0
      %2420 = vmatpush.msra.mxu0 0.0
      %2421 = vmatpush.msra.mxu0 0.0
      %2422 = vmatpush.msra.mxu0 %v2310
      %2423 = vmatpush.msra.mxu0 %v2308
      %2424 = vmatpush.msra.mxu0 %v2306
      %2425 = vmatpush.msra.mxu0 %v2304
      %2426 = vmatmul.f32.gmra.mxu0 %v2312
      %v2427 = vpop.f32.mrf.mxu0
      %v2428 = vadd.f32 %v2399, %v2427
      %2429 = vmatmul.f32.gmra.mxu0 %v2315
      %v2430 = vpop.f32.mrf.mxu0
      %v2431 = vadd.f32 %v2402, %v2430
      %2432 = vmatmul.f32.gmra.mxu0 %v2318
      %v2433 = vpop.f32.mrf.mxu0
      %v2434 = vadd.f32 %v2405, %v2433
      %2435 = vmatmul.f32.gmra.mxu0 %v2321
      %v2436 = vpop.f32.mrf.mxu0
      %v2437 = vadd.f32 %v2408, %v2436
      %2438 = vdwg.mxu0
      %v2439 = vsel %vm247, 1, 0
      %v2440 = vsel %vm248, 1, 0
      %vm2441 = vcmp.eq.s32.totalorder %v2439, 1
      %vm2442 = vcmp.eq.s32.totalorder %v2440, 1
      %v2443 = vsel %vm2441, %v2370, 0.0
      %v2444 = vsel %vm2442, %v2428, 0.0
      %v2445 = vsel %vm2441, %v2373, 0.0
      %v2446 = vsel %vm2442, %v2431, 0.0
      %v2447 = vsel %vm2441, %v2376, 0.0
      %v2448 = vsel %vm2442, %v2434, 0.0
      %v2449 = vsel %vm2441, %v2379, 0.0
      %v2450 = vsel %vm2442, %v2437, 0.0
      %v2451 = vadd.f32 %v1889, %v2443
      %v2452 = vadd.f32 %v1890, %v2444
      %v2453 = vadd.f32 %v1891, %v2445
      %v2454 = vadd.f32 %v1892, %v2446
      %v2455 = vadd.f32 %v1893, %v2447
      %v2456 = vadd.f32 %v1894, %v2448
      %v2457 = vadd.f32 %v1895, %v2449
      %v2458 = vadd.f32 %v1896, %v2450
      %v2459 = vld [vmem:[#allocation2] sm:$0xff]
      %v2460 = vld [vmem:[#allocation2 + $0x8] sm:$0xff]
      %v2461 = vld [vmem:[#allocation2 + $0x10] sm:$0xff]
      %v2462 = vld [vmem:[#allocation2 + $0x20] sm:$0xff]
      %v2463 = vld [vmem:[#allocation2 + $0x28] sm:$0xff]
      %v2464 = vld [vmem:[#allocation2 + $0x30] sm:$0xff]
      %v2465 = vld [vmem:[#allocation2 + $0x40] sm:$0xff]
      %v2466 = vld [vmem:[#allocation2 + $0x48] sm:$0xff]
      %v2467 = vld [vmem:[#allocation2 + $0x50] sm:$0xff]
      %v2468 = vld [vmem:[#allocation2 + $0x60] sm:$0xff]
      %v2469 = vld [vmem:[#allocation2 + $0x68] sm:$0xff]
      %v2470 = vld [vmem:[#allocation2 + $0x70] sm:$0xff]
      %2483 = vrot.lane.b32.xlu0 %v2459, 30
      %v2484 = vpop.permute.xlu0 %2483
      %2485 = vrot.lane.b32.xlu0 %v2460, 30
      %v2486 = vpop.permute.xlu0 %2485
      %2487 = vrot.lane.b32.xlu0 %v2461, 30
      %v2488 = vpop.permute.xlu0 %2487
      %2489 = vrot.lane.b32.xlu0 %v2462, 30
      %v2490 = vpop.permute.xlu0 %2489
      %2491 = vrot.lane.b32.xlu0 %v2463, 30
      %v2492 = vpop.permute.xlu0 %2491
      %2493 = vrot.lane.b32.xlu0 %v2464, 30
      %v2494 = vpop.permute.xlu0 %2493
      %2495 = vrot.lane.b32.xlu0 %v2465, 30
      %v2496 = vpop.permute.xlu0 %2495
      %2497 = vrot.lane.b32.xlu0 %v2466, 30
      %v2498 = vpop.permute.xlu0 %2497
      %2499 = vrot.lane.b32.xlu0 %v2467, 30
      %v2500 = vpop.permute.xlu0 %2499
      %2501 = vrot.lane.b32.xlu0 %v2468, 30
      %v2502 = vpop.permute.xlu0 %2501
      %2503 = vrot.lane.b32.xlu0 %v2469, 30
      %v2504 = vpop.permute.xlu0 %2503
      %2505 = vrot.lane.b32.xlu0 %v2470, 30
      %v2506 = vpop.permute.xlu0 %2505
      %vm2507 = vcmask 244736
      %v2508 = vsel %vm2507, %v2484, %v2486
      %v2509 = vsel %vm2507, %v2486, %v2488
      %v2510 = vsel %vm2507, %v2490, %v2492
      %v2511 = vsel %vm2507, %v2492, %v2494
      %v2512 = vsel %vm2507, %v2496, %v2498
      %v2513 = vsel %vm2507, %v2498, %v2500
      %v2514 = vsel %vm2507, %v2502, %v2504
      %v2515 = vsel %vm2507, %v2504, %v2506
      %2524 = vst [vmem:[#allocation3] sm:$0xff] %v2508
      %2525 = vst [vmem:[#allocation3 + $0x8] sm:$0xff] %v2509
      %2526 = vst [vmem:[#allocation3 + $0x10] sm:$0xff] %v2510
      %2527 = vst [vmem:[#allocation3 + $0x18] sm:$0xff] %v2511
      %2528 = vst [vmem:[#allocation3 + $0x20] sm:$0xff] %v2512
      %2529 = vst [vmem:[#allocation3 + $0x28] sm:$0xff] %v2513
      %2530 = vst [vmem:[#allocation3 + $0x30] sm:$0xff] %v2514
      %2531 = vst [vmem:[#allocation3 + $0x38] sm:$0xff] %v2515
      %v2532 = vld [vmem:[#allocation2] sm:$0xff]
      %v2533 = vld [vmem:[#allocation2 + $0x8] sm:$0xff]
      %v2534 = vld [vmem:[#allocation2 + $0x10] sm:$0xff]
      %v2535 = vld [vmem:[#allocation2 + $0x20] sm:$0xff]
      %v2536 = vld [vmem:[#allocation2 + $0x28] sm:$0xff]
      %v2537 = vld [vmem:[#allocation2 + $0x30] sm:$0xff]
      %v2538 = vld [vmem:[#allocation2 + $0x40] sm:$0xff]
      %v2539 = vld [vmem:[#allocation2 + $0x48] sm:$0xff]
      %v2540 = vld [vmem:[#allocation2 + $0x50] sm:$0xff]
      %v2541 = vld [vmem:[#allocation2 + $0x60] sm:$0xff]
      %v2542 = vld [vmem:[#allocation2 + $0x68] sm:$0xff]
      %v2543 = vld [vmem:[#allocation2 + $0x70] sm:$0xff]
      %2556 = vrot.lane.b32.xlu0 %v2532, 14
      %v2557 = vpop.permute.xlu0 %2556
      %2558 = vrot.lane.b32.xlu0 %v2533, 14
      %v2559 = vpop.permute.xlu0 %2558
      %2560 = vrot.lane.b32.xlu0 %v2534, 14
      %v2561 = vpop.permute.xlu0 %2560
      %2562 = vrot.lane.b32.xlu0 %v2535, 14
      %v2563 = vpop.permute.xlu0 %2562
      %2564 = vrot.lane.b32.xlu0 %v2536, 14
      %v2565 = vpop.permute.xlu0 %2564
      %2566 = vrot.lane.b32.xlu0 %v2537, 14
      %v2567 = vpop.permute.xlu0 %2566
      %2568 = vrot.lane.b32.xlu0 %v2538, 14
      %v2569 = vpop.permute.xlu0 %2568
      %2570 = vrot.lane.b32.xlu0 %v2539, 14
      %v2571 = vpop.permute.xlu0 %2570
      %2572 = vrot.lane.b32.xlu0 %v2540, 14
      %v2573 = vpop.permute.xlu0 %2572
      %2574 = vrot.lane.b32.xlu0 %v2541, 14
      %v2575 = vpop.permute.xlu0 %2574
      %2576 = vrot.lane.b32.xlu0 %v2542, 14
      %v2577 = vpop.permute.xlu0 %2576
      %2578 = vrot.lane.b32.xlu0 %v2543, 14
      %v2579 = vpop.permute.xlu0 %2578
      %vm2580 = vcmask 113664
      %v2581 = vsel %vm2580, %v2557, %v2559
      %v2582 = vsel %vm2580, %v2559, %v2561
      %v2583 = vsel %vm2580, %v2563, %v2565
      %v2584 = vsel %vm2580, %v2565, %v2567
      %v2585 = vsel %vm2580, %v2569, %v2571
      %v2586 = vsel %vm2580, %v2571, %v2573
      %v2587 = vsel %vm2580, %v2575, %v2577
      %v2588 = vsel %vm2580, %v2577, %v2579
      %2597 = vst [vmem:[#allocation3 + $0x40] sm:$0xff] %v2581
      %2598 = vst [vmem:[#allocation3 + $0x48] sm:$0xff] %v2582
      %2599 = vst [vmem:[#allocation3 + $0x50] sm:$0xff] %v2583
      %2600 = vst [vmem:[#allocation3 + $0x58] sm:$0xff] %v2584
      %2601 = vst [vmem:[#allocation3 + $0x60] sm:$0xff] %v2585
      %2602 = vst [vmem:[#allocation3 + $0x68] sm:$0xff] %v2586
      %2603 = vst [vmem:[#allocation3 + $0x70] sm:$0xff] %v2587
      %2604 = vst [vmem:[#allocation3 + $0x78] sm:$0xff] %v2588
      %v2605 = vld [vmem:[#allocation2 + $0x8] sm:$0xff]
      %v2606 = vld [vmem:[#allocation2 + $0x10] sm:$0xff]
      %v2607 = vld [vmem:[#allocation2 + $0x18] sm:$0xff]
      %v2608 = vld [vmem:[#allocation2 + $0x28] sm:$0xff]
      %v2609 = vld [vmem:[#allocation2 + $0x30] sm:$0xff]
      %v2610 = vld [vmem:[#allocation2 + $0x38] sm:$0xff]
      %v2611 = vld [vmem:[#allocation2 + $0x48] sm:$0xff]
      %v2612 = vld [vmem:[#allocation2 + $0x50] sm:$0xff]
      %v2613 = vld [vmem:[#allocation2 + $0x58] sm:$0xff]
      %v2614 = vld [vmem:[#allocation2 + $0x68] sm:$0xff]
      %v2615 = vld [vmem:[#allocation2 + $0x70] sm:$0xff]
      %v2616 = vld [vmem:[#allocation2 + $0x78] sm:$0xff]
      %2629 = vrot.lane.b32.xlu0 %v2605, 126
      %v2630 = vpop.permute.xlu0 %2629
      %2631 = vrot.lane.b32.xlu0 %v2606, 126
      %v2632 = vpop.permute.xlu0 %2631
      %2633 = vrot.lane.b32.xlu0 %v2607, 126
      %v2634 = vpop.permute.xlu0 %2633
      %2635 = vrot.lane.b32.xlu0 %v2608, 126
      %v2636 = vpop.permute.xlu0 %2635
      %2637 = vrot.lane.b32.xlu0 %v2609, 126
      %v2638 = vpop.permute.xlu0 %2637
      %2639 = vrot.lane.b32.xlu0 %v2610, 126
      %v2640 = vpop.permute.xlu0 %2639
      %2641 = vrot.lane.b32.xlu0 %v2611, 126
      %v2642 = vpop.permute.xlu0 %2641
      %2643 = vrot.lane.b32.xlu0 %v2612, 126
      %v2644 = vpop.permute.xlu0 %2643
      %2645 = vrot.lane.b32.xlu0 %v2613, 126
      %v2646 = vpop.permute.xlu0 %2645
      %2647 = vrot.lane.b32.xlu0 %v2614, 126
      %v2648 = vpop.permute.xlu0 %2647
      %2649 = vrot.lane.b32.xlu0 %v2615, 126
      %v2650 = vpop.permute.xlu0 %2649
      %2651 = vrot.lane.b32.xlu0 %v2616, 126
      %v2652 = vpop.permute.xlu0 %2651
      %vm2653 = vcmask 1031168
      %v2654 = vsel %vm2653, %v2630, %v2632
      %v2655 = vsel %vm2653, %v2632, %v2634
      %v2656 = vsel %vm2653, %v2636, %v2638
      %v2657 = vsel %vm2653, %v2638, %v2640
      %v2658 = vsel %vm2653, %v2642, %v2644
      %v2659 = vsel %vm2653, %v2644, %v2646
      %v2660 = vsel %vm2653, %v2648, %v2650
      %v2661 = vsel %vm2653, %v2650, %v2652
      %2670 = vst [vmem:[#allocation3 + $0x80] sm:$0xff] %v2654
      %2671 = vst [vmem:[#allocation3 + $0x88] sm:$0xff] %v2655
      %2672 = vst [vmem:[#allocation3 + $0x90] sm:$0xff] %v2656
      %2673 = vst [vmem:[#allocation3 + $0x98] sm:$0xff] %v2657
      %2674 = vst [vmem:[#allocation3 + $0xa0] sm:$0xff] %v2658
      %2675 = vst [vmem:[#allocation3 + $0xa8] sm:$0xff] %v2659
      %2676 = vst [vmem:[#allocation3 + $0xb0] sm:$0xff] %v2660
      %2677 = vst [vmem:[#allocation3 + $0xb8] sm:$0xff] %v2661
      %v2678 = vld [vmem:[#allocation2 + $0x8] sm:$0xff]
      %v2679 = vld [vmem:[#allocation2 + $0x10] sm:$0xff]
      %v2680 = vld [vmem:[#allocation2 + $0x18] sm:$0xff]
      %v2681 = vld [vmem:[#allocation2 + $0x28] sm:$0xff]
      %v2682 = vld [vmem:[#allocation2 + $0x30] sm:$0xff]
      %v2683 = vld [vmem:[#allocation2 + $0x38] sm:$0xff]
      %v2684 = vld [vmem:[#allocation2 + $0x48] sm:$0xff]
      %v2685 = vld [vmem:[#allocation2 + $0x50] sm:$0xff]
      %v2686 = vld [vmem:[#allocation2 + $0x58] sm:$0xff]
      %v2687 = vld [vmem:[#allocation2 + $0x68] sm:$0xff]
      %v2688 = vld [vmem:[#allocation2 + $0x70] sm:$0xff]
      %v2689 = vld [vmem:[#allocation2 + $0x78] sm:$0xff]
      %2702 = vrot.lane.b32.xlu0 %v2678, 110
      %v2703 = vpop.permute.xlu0 %2702
      %2704 = vrot.lane.b32.xlu0 %v2679, 110
      %v2705 = vpop.permute.xlu0 %2704
      %2706 = vrot.lane.b32.xlu0 %v2680, 110
      %v2707 = vpop.permute.xlu0 %2706
      %2708 = vrot.lane.b32.xlu0 %v2681, 110
      %v2709 = vpop.permute.xlu0 %2708
      %2710 = vrot.lane.b32.xlu0 %v2682, 110
      %v2711 = vpop.permute.xlu0 %2710
      %2712 = vrot.lane.b32.xlu0 %v2683, 110
      %v2713 = vpop.permute.xlu0 %2712
      %2714 = vrot.lane.b32.xlu0 %v2684, 110
      %v2715 = vpop.permute.xlu0 %2714
      %2716 = vrot.lane.b32.xlu0 %v2685, 110
      %v2717 = vpop.permute.xlu0 %2716
      %2718 = vrot.lane.b32.xlu0 %v2686, 110
      %v2719 = vpop.permute.xlu0 %2718
      %2720 = vrot.lane.b32.xlu0 %v2687, 110
      %v2721 = vpop.permute.xlu0 %2720
      %2722 = vrot.lane.b32.xlu0 %v2688, 110
      %v2723 = vpop.permute.xlu0 %2722
      %2724 = vrot.lane.b32.xlu0 %v2689, 110
      %v2725 = vpop.permute.xlu0 %2724
      %vm2726 = vcmask 900096
      %v2727 = vsel %vm2726, %v2703, %v2705
      %v2728 = vsel %vm2726, %v2705, %v2707
      %v2729 = vsel %vm2726, %v2709, %v2711
      %v2730 = vsel %vm2726, %v2711, %v2713
      %v2731 = vsel %vm2726, %v2715, %v2717
      %v2732 = vsel %vm2726, %v2717, %v2719
      %v2733 = vsel %vm2726, %v2721, %v2723
      %v2734 = vsel %vm2726, %v2723, %v2725
      %2743 = vst [vmem:[#allocation3 + $0xc0] sm:$0xff] %v2727
      %2744 = vst [vmem:[#allocation3 + $0xc8] sm:$0xff] %v2728
      %2745 = vst [vmem:[#allocation3 + $0xd0] sm:$0xff] %v2729
      %2746 = vst [vmem:[#allocation3 + $0xd8] sm:$0xff] %v2730
      %2747 = vst [vmem:[#allocation3 + $0xe0] sm:$0xff] %v2731
      %2748 = vst [vmem:[#allocation3 + $0xe8] sm:$0xff] %v2732
      %2749 = vst [vmem:[#allocation3 + $0xf0] sm:$0xff] %v2733
      %2750 = vst [vmem:[#allocation3 + $0xf8] sm:$0xff] %v2734
      %v2751 = vld [vmem:[#allocation2 + $0x8] sm:$0xff]
      %v2752 = vld [vmem:[#allocation2 + $0x10] sm:$0xff]
      %v2753 = vld [vmem:[#allocation2 + $0x18] sm:$0xff]
      %v2754 = vld [vmem:[#allocation2 + $0x28] sm:$0xff]
      %v2755 = vld [vmem:[#allocation2 + $0x30] sm:$0xff]
      %v2756 = vld [vmem:[#allocation2 + $0x38] sm:$0xff]
      %v2757 = vld [vmem:[#allocation2 + $0x48] sm:$0xff]
      %v2758 = vld [vmem:[#allocation2 + $0x50] sm:$0xff]
      %v2759 = vld [vmem:[#allocation2 + $0x58] sm:$0xff]
      %v2760 = vld [vmem:[#allocation2 + $0x68] sm:$0xff]
      %v2761 = vld [vmem:[#allocation2 + $0x70] sm:$0xff]
      %v2762 = vld [vmem:[#allocation2 + $0x78] sm:$0xff]
      %2775 = vrot.lane.b32.xlu0 %v2751, 94
      %v2776 = vpop.permute.xlu0 %2775
      %2777 = vrot.lane.b32.xlu0 %v2752, 94
      %v2778 = vpop.permute.xlu0 %2777
      %2779 = vrot.lane.b32.xlu0 %v2753, 94
      %v2780 = vpop.permute.xlu0 %2779
      %2781 = vrot.lane.b32.xlu0 %v2754, 94
      %v2782 = vpop.permute.xlu0 %2781
      %2783 = vrot.lane.b32.xlu0 %v2755, 94
      %v2784 = vpop.permute.xlu0 %2783
      %2785 = vrot.lane.b32.xlu0 %v2756, 94
      %v2786 = vpop.permute.xlu0 %2785
      %2787 = vrot.lane.b32.xlu0 %v2757, 94
      %v2788 = vpop.permute.xlu0 %2787
      %2789 = vrot.lane.b32.xlu0 %v2758, 94
      %v2790 = vpop.permute.xlu0 %2789
      %2791 = vrot.lane.b32.xlu0 %v2759, 94
      %v2792 = vpop.permute.xlu0 %2791
      %2793 = vrot.lane.b32.xlu0 %v2760, 94
      %v2794 = vpop.permute.xlu0 %2793
      %2795 = vrot.lane.b32.xlu0 %v2761, 94
      %v2796 = vpop.permute.xlu0 %2795
      %2797 = vrot.lane.b32.xlu0 %v2762, 94
      %v2798 = vpop.permute.xlu0 %2797
      %vm2799 = vcmask 769024
      %v2800 = vsel %vm2799, %v2776, %v2778
      %v2801 = vsel %vm2799, %v2778, %v2780
      %v2802 = vsel %vm2799, %v2782, %v2784
      %v2803 = vsel %vm2799, %v2784, %v2786
      %v2804 = vsel %vm2799, %v2788, %v2790
      %v2805 = vsel %vm2799, %v2790, %v2792
      %v2806 = vsel %vm2799, %v2794, %v2796
      %v2807 = vsel %vm2799, %v2796, %v2798
      %2816 = vst [vmem:[#allocation3 + $0x100] sm:$0xff] %v2800
      %2817 = vst [vmem:[#allocation3 + $0x108] sm:$0xff] %v2801
      %2818 = vst [vmem:[#allocation3 + $0x110] sm:$0xff] %v2802
      %2819 = vst [vmem:[#allocation3 + $0x118] sm:$0xff] %v2803
      %2820 = vst [vmem:[#allocation3 + $0x120] sm:$0xff] %v2804
      %2821 = vst [vmem:[#allocation3 + $0x128] sm:$0xff] %v2805
      %2822 = vst [vmem:[#allocation3 + $0x130] sm:$0xff] %v2806
      %2823 = vst [vmem:[#allocation3 + $0x138] sm:$0xff] %v2807
      %s2824 = scalar_lea.vmem %s1, 256
      %v2825 = vld [vmem:[%s2824] sm:$0xff]
      %v2826 = vld [vmem:[%s2824 + $0x8] sm:$0xff]
      %v2827 = vld [vmem:[%s2824 + $0x10] sm:$0xff]
      %v2828 = vld [vmem:[%s2824 + $0x18] sm:$0xff]
      %v2829 = vld [vmem:[%s2824 + $0x20] sm:$0xff]
      %v2830 = vld [vmem:[%s2824 + $0x28] sm:$0xff]
      %v2831 = vld [vmem:[%s2824 + $0x30] sm:$0xff]
      %v2832 = vld [vmem:[%s2824 + $0x38] sm:$0xff]
      %v2833 = vld [vmem:[#allocation3] sm:$0xff]
      %v2834 = vld [vmem:[#allocation3 + $0x8] sm:$0xff]
      %v2835 = vld [vmem:[#allocation3 + $0x10] sm:$0xff]
      %v2836 = vld [vmem:[#allocation3 + $0x18] sm:$0xff]
      %v2837 = vld [vmem:[#allocation3 + $0x20] sm:$0xff]
      %v2838 = vld [vmem:[#allocation3 + $0x28] sm:$0xff]
      %v2839 = vld [vmem:[#allocation3 + $0x30] sm:$0xff]
      %v2840 = vld [vmem:[#allocation3 + $0x38] sm:$0xff]
      %v2841 = vld [vmem:[#allocation3 + $0x40] sm:$0xff]
      %v2842 = vld [vmem:[#allocation3 + $0x48] sm:$0xff]
      %v2843 = vld [vmem:[#allocation3 + $0x50] sm:$0xff]
      %v2844 = vld [vmem:[#allocation3 + $0x58] sm:$0xff]
      %v2845 = vld [vmem:[#allocation3 + $0x60] sm:$0xff]
      %v2846 = vld [vmem:[#allocation3 + $0x68] sm:$0xff]
      %v2847 = vld [vmem:[#allocation3 + $0x70] sm:$0xff]
      %v2848 = vld [vmem:[#allocation3 + $0x78] sm:$0xff]
      %v2849 = vld [vmem:[#allocation3 + $0x80] sm:$0xff]
      %v2850 = vld [vmem:[#allocation3 + $0x88] sm:$0xff]
      %v2851 = vld [vmem:[#allocation3 + $0x90] sm:$0xff]
      %v2852 = vld [vmem:[#allocation3 + $0x98] sm:$0xff]
      %v2853 = vld [vmem:[#allocation3 + $0xa0] sm:$0xff]
      %v2854 = vld [vmem:[#allocation3 + $0xa8] sm:$0xff]
      %v2855 = vld [vmem:[#allocation3 + $0xb0] sm:$0xff]
      %v2856 = vld [vmem:[#allocation3 + $0xb8] sm:$0xff]
      %v2857 = vld [vmem:[#allocation3 + $0xc0] sm:$0xff]
      %v2858 = vld [vmem:[#allocation3 + $0xc8] sm:$0xff]
      %v2859 = vld [vmem:[#allocation3 + $0xd0] sm:$0xff]
      %v2860 = vld [vmem:[#allocation3 + $0xd8] sm:$0xff]
      %v2861 = vld [vmem:[#allocation3 + $0xe0] sm:$0xff]
      %v2862 = vld [vmem:[#allocation3 + $0xe8] sm:$0xff]
      %v2863 = vld [vmem:[#allocation3 + $0xf0] sm:$0xff]
      %v2864 = vld [vmem:[#allocation3 + $0xf8] sm:$0xff]
      %v2865 = vld [vmem:[#allocation3 + $0x100] sm:$0xff]
      %v2866 = vld [vmem:[#allocation3 + $0x108] sm:$0xff]
      %v2867 = vld [vmem:[#allocation3 + $0x110] sm:$0xff]
      %v2868 = vld [vmem:[#allocation3 + $0x118] sm:$0xff]
      %v2869 = vld [vmem:[#allocation3 + $0x120] sm:$0xff]
      %v2870 = vld [vmem:[#allocation3 + $0x128] sm:$0xff]
      %v2871 = vld [vmem:[#allocation3 + $0x130] sm:$0xff]
      %v2872 = vld [vmem:[#allocation3 + $0x138] sm:$0xff]
      %v2874 = vsel %vm694, %v2826, 0
      %v2877 = vsel %vm694, %v2828, 0
      %v2880 = vsel %vm694, %v2830, 0
      %v2883 = vsel %vm694, %v2832, 0
      %2885 = vmatpush.msra.mxu0 %v2863
      %2886 = vmatpush.msra.mxu0 %v2861
      %2887 = vmatpush.msra.mxu0 %v2859
      %2888 = vmatpush.msra.mxu0 %v2857
      %2889 = vmatpush.msra.mxu0 %v2855
      %2890 = vmatpush.msra.mxu0 %v2853
      %2891 = vmatpush.msra.mxu0 %v2851
      %2892 = vmatpush.msra.mxu0 %v2849
      %2893 = vmatpush.msra.mxu0 %v2847
      %2894 = vmatpush.msra.mxu0 %v2845
      %2895 = vmatpush.msra.mxu0 %v2843
      %2896 = vmatpush.msra.mxu0 %v2841
      %2897 = vmatpush.msra.mxu0 %v2839
      %2898 = vmatpush.msra.mxu0 %v2837
      %2899 = vmatpush.msra.mxu0 %v2835
      %2900 = vmatpush.msra.mxu0 %v2833
      %2901 = vmatmul.f32.gmra.mxu0 %v2825
      %v2902 = vpop.f32.mrf.mxu0
      %v2903 = vadd.f32 0.0, %v2902
      %2904 = vmatmul.f32.gmra.mxu0 %v2827
      %v2905 = vpop.f32.mrf.mxu0
      %v2906 = vadd.f32 0.0, %v2905
      %2907 = vmatmul.f32.gmra.mxu0 %v2829
      %v2908 = vpop.f32.mrf.mxu0
      %v2909 = vadd.f32 0.0, %v2908
      %2910 = vmatmul.f32.gmra.mxu0 %v2831
      %v2911 = vpop.f32.mrf.mxu0
      %v2912 = vadd.f32 0.0, %v2911
      %2913 = vdwg.mxu0
      %2914 = vmatpush.msra.mxu0 0.0
      %2915 = vmatpush.msra.mxu0 0.0
      %2916 = vmatpush.msra.mxu0 0.0
      %2917 = vmatpush.msra.mxu0 0.0
      %2918 = vmatpush.msra.mxu0 0.0
      %2919 = vmatpush.msra.mxu0 0.0
      %2920 = vmatpush.msra.mxu0 0.0
      %2921 = vmatpush.msra.mxu0 0.0
      %2922 = vmatpush.msra.mxu0 0.0
      %2923 = vmatpush.msra.mxu0 0.0
      %2924 = vmatpush.msra.mxu0 0.0
      %2925 = vmatpush.msra.mxu0 0.0
      %2926 = vmatpush.msra.mxu0 %v2871
      %2927 = vmatpush.msra.mxu0 %v2869
      %2928 = vmatpush.msra.mxu0 %v2867
      %2929 = vmatpush.msra.mxu0 %v2865
      %2930 = vmatmul.f32.gmra.mxu0 %v2874
      %v2931 = vpop.f32.mrf.mxu0
      %v2932 = vadd.f32 %v2903, %v2931
      %2933 = vmatmul.f32.gmra.mxu0 %v2877
      %v2934 = vpop.f32.mrf.mxu0
      %v2935 = vadd.f32 %v2906, %v2934
      %2936 = vmatmul.f32.gmra.mxu0 %v2880
      %v2937 = vpop.f32.mrf.mxu0
      %v2938 = vadd.f32 %v2909, %v2937
      %2939 = vmatmul.f32.gmra.mxu0 %v2883
      %v2940 = vpop.f32.mrf.mxu0
      %v2941 = vadd.f32 %v2912, %v2940
      %2942 = vdwg.mxu0
      %2943 = vmatpush.msra.mxu0 %v2864
      %2944 = vmatpush.msra.mxu0 %v2862
      %2945 = vmatpush.msra.mxu0 %v2860
      %2946 = vmatpush.msra.mxu0 %v2858
      %2947 = vmatpush.msra.mxu0 %v2856
      %2948 = vmatpush.msra.mxu0 %v2854
      %2949 = vmatpush.msra.mxu0 %v2852
      %2950 = vmatpush.msra.mxu0 %v2850
      %2951 = vmatpush.msra.mxu0 %v2848
      %2952 = vmatpush.msra.mxu0 %v2846
      %2953 = vmatpush.msra.mxu0 %v2844
      %2954 = vmatpush.msra.mxu0 %v2842
      %2955 = vmatpush.msra.mxu0 %v2840
      %2956 = vmatpush.msra.mxu0 %v2838
      %2957 = vmatpush.msra.mxu0 %v2836
      %2958 = vmatpush.msra.mxu0 %v2834
      %2959 = vmatmul.f32.gmra.mxu0 %v2825
      %v2960 = vpop.f32.mrf.mxu0
      %v2961 = vadd.f32 0.0, %v2960
      %2962 = vmatmul.f32.gmra.mxu0 %v2827
      %v2963 = vpop.f32.mrf.mxu0
      %v2964 = vadd.f32 0.0, %v2963
      %2965 = vmatmul.f32.gmra.mxu0 %v2829
      %v2966 = vpop.f32.mrf.mxu0
      %v2967 = vadd.f32 0.0, %v2966
      %2968 = vmatmul.f32.gmra.mxu0 %v2831
      %v2969 = vpop.f32.mrf.mxu0
      %v2970 = vadd.f32 0.0, %v2969
      %2971 = vdwg.mxu0
      %2972 = vmatpush.msra.mxu0 0.0
      %2973 = vmatpush.msra.mxu0 0.0
      %2974 = vmatpush.msra.mxu0 0.0
      %2975 = vmatpush.msra.mxu0 0.0
      %2976 = vmatpush.msra.mxu0 0.0
      %2977 = vmatpush.msra.mxu0 0.0
      %2978 = vmatpush.msra.mxu0 0.0
      %2979 = vmatpush.msra.mxu0 0.0
      %2980 = vmatpush.msra.mxu0 0.0
      %2981 = vmatpush.msra.mxu0 0.0
      %2982 = vmatpush.msra.mxu0 0.0
      %2983 = vmatpush.msra.mxu0 0.0
      %2984 = vmatpush.msra.mxu0 %v2872
      %2985 = vmatpush.msra.mxu0 %v2870
      %2986 = vmatpush.msra.mxu0 %v2868
      %2987 = vmatpush.msra.mxu0 %v2866
      %2988 = vmatmul.f32.gmra.mxu0 %v2874
      %v2989 = vpop.f32.mrf.mxu0
      %v2990 = vadd.f32 %v2961, %v2989
      %2991 = vmatmul.f32.gmra.mxu0 %v2877
      %v2992 = vpop.f32.mrf.mxu0
      %v2993 = vadd.f32 %v2964, %v2992
      %2994 = vmatmul.f32.gmra.mxu0 %v2880
      %v2995 = vpop.f32.mrf.mxu0
      %v2996 = vadd.f32 %v2967, %v2995
      %2997 = vmatmul.f32.gmra.mxu0 %v2883
      %v2998 = vpop.f32.mrf.mxu0
      %v2999 = vadd.f32 %v2970, %v2998
      %3000 = vdwg.mxu0
      %v3001 = vsel %vm255, 1, 0
      %v3002 = vsel %vm256, 1, 0
      %vm3003 = vcmp.eq.s32.totalorder %v3001, 1
      %vm3004 = vcmp.eq.s32.totalorder %v3002, 1
      %v3005 = vsel %vm3003, %v2932, 0.0
      %v3006 = vsel %vm3004, %v2990, 0.0
      %v3007 = vsel %vm3003, %v2935, 0.0
      %v3008 = vsel %vm3004, %v2993, 0.0
      %v3009 = vsel %vm3003, %v2938, 0.0
      %v3010 = vsel %vm3004, %v2996, 0.0
      %v3011 = vsel %vm3003, %v2941, 0.0
      %v3012 = vsel %vm3004, %v2999, 0.0
      %v3013 = vadd.f32 %v2451, %v3005
      %v3014 = vadd.f32 %v2452, %v3006
      %v3015 = vadd.f32 %v2453, %v3007
      %v3016 = vadd.f32 %v2454, %v3008
      %v3017 = vadd.f32 %v2455, %v3009
      %v3018 = vadd.f32 %v2456, %v3010
      %v3019 = vadd.f32 %v2457, %v3011
      %v3020 = vadd.f32 %v2458, %v3012
      %v3021 = vmax.f32 %v3013, 0.0
      %v3022 = vmax.f32 %v3014, 0.0
      %v3023 = vmax.f32 %v3015, 0.0
      %v3024 = vmax.f32 %v3016, 0.0
      %v3025 = vmax.f32 %v3017, 0.0
      %v3026 = vmax.f32 %v3018, 0.0
      %v3027 = vmax.f32 %v3019, 0.0
      %v3028 = vmax.f32 %v3020, 0.0
      %3029 = vst [vmem:[#allocation2 + $0x8] sm:$0xff] %v3021
      %3030 = vst [vmem:[#allocation2 + $0x10] sm:$0xff] %v3022
      %3031 = vst [vmem:[#allocation2 + $0x28] sm:$0xff] %v3023
      %3032 = vst [vmem:[#allocation2 + $0x30] sm:$0xff] %v3024
      %3033 = vst [vmem:[#allocation2 + $0x48] sm:$0xff] %v3025
      %3034 = vst [vmem:[#allocation2 + $0x50] sm:$0xff] %v3026
      %3035 = vst [vmem:[#allocation2 + $0x68] sm:$0xff] %v3027
      %3036 = vst [vmem:[#allocation2 + $0x70] sm:$0xff] %v3028
      %v3037 = vld [vmem:[#allocation2] sm:$0xff]
      %v3038 = vld [vmem:[#allocation2 + $0x8] sm:$0xff]
      %v3039 = vld [vmem:[#allocation2 + $0x10] sm:$0xff]
      %v3040 = vld [vmem:[#allocation2 + $0x20] sm:$0xff]
      %v3041 = vld [vmem:[#allocation2 + $0x28] sm:$0xff]
      %v3042 = vld [vmem:[#allocation2 + $0x30] sm:$0xff]
      %v3043 = vld [vmem:[#allocation2 + $0x40] sm:$0xff]
      %v3044 = vld [vmem:[#allocation2 + $0x48] sm:$0xff]
      %v3045 = vld [vmem:[#allocation2 + $0x50] sm:$0xff]
      %v3046 = vld [vmem:[#allocation2 + $0x60] sm:$0xff]
      %v3047 = vld [vmem:[#allocation2 + $0x68] sm:$0xff]
      %v3048 = vld [vmem:[#allocation2 + $0x70] sm:$0xff]
      %3061 = vrot.lane.b32.xlu0 %v3037, 34
      %v3062 = vpop.permute.xlu0 %3061
      %3063 = vrot.lane.b32.xlu0 %v3038, 34
      %v3064 = vpop.permute.xlu0 %3063
      %3065 = vrot.lane.b32.xlu0 %v3039, 34
      %v3066 = vpop.permute.xlu0 %3065
      %3067 = vrot.lane.b32.xlu0 %v3040, 34
      %v3068 = vpop.permute.xlu0 %3067
      %3069 = vrot.lane.b32.xlu0 %v3041, 34
      %v3070 = vpop.permute.xlu0 %3069
      %3071 = vrot.lane.b32.xlu0 %v3042, 34
      %v3072 = vpop.permute.xlu0 %3071
      %3073 = vrot.lane.b32.xlu0 %v3043, 34
      %v3074 = vpop.permute.xlu0 %3073
      %3075 = vrot.lane.b32.xlu0 %v3044, 34
      %v3076 = vpop.permute.xlu0 %3075
      %3077 = vrot.lane.b32.xlu0 %v3045, 34
      %v3078 = vpop.permute.xlu0 %3077
      %3079 = vrot.lane.b32.xlu0 %v3046, 34
      %v3080 = vpop.permute.xlu0 %3079
      %3081 = vrot.lane.b32.xlu0 %v3047, 34
      %v3082 = vpop.permute.xlu0 %3081
      %3083 = vrot.lane.b32.xlu0 %v3048, 34
      %v3084 = vpop.permute.xlu0 %3083
      %v3085 = vsel %vm329, %v3062, %v3064
      %v3086 = vsel %vm329, %v3064, %v3066
      %v3087 = vsel %vm329, %v3068, %v3070
      %v3088 = vsel %vm329, %v3070, %v3072
      %v3089 = vsel %vm329, %v3074, %v3076
      %v3090 = vsel %vm329, %v3076, %v3078
      %v3091 = vsel %vm329, %v3080, %v3082
      %v3092 = vsel %vm329, %v3082, %v3084
      %3101 = vst [vmem:[#allocation3] sm:$0xff] %v3085
      %3102 = vst [vmem:[#allocation3 + $0x8] sm:$0xff] %v3086
      %3103 = vst [vmem:[#allocation3 + $0x10] sm:$0xff] %v3087
      %3104 = vst [vmem:[#allocation3 + $0x18] sm:$0xff] %v3088
      %3105 = vst [vmem:[#allocation3 + $0x20] sm:$0xff] %v3089
      %3106 = vst [vmem:[#allocation3 + $0x28] sm:$0xff] %v3090
      %3107 = vst [vmem:[#allocation3 + $0x30] sm:$0xff] %v3091
      %3108 = vst [vmem:[#allocation3 + $0x38] sm:$0xff] %v3092
      %v3109 = vld [vmem:[#allocation2] sm:$0xff]
      %v3110 = vld [vmem:[#allocation2 + $0x8] sm:$0xff]
      %v3111 = vld [vmem:[#allocation2 + $0x10] sm:$0xff]
      %v3112 = vld [vmem:[#allocation2 + $0x20] sm:$0xff]
      %v3113 = vld [vmem:[#allocation2 + $0x28] sm:$0xff]
      %v3114 = vld [vmem:[#allocation2 + $0x30] sm:$0xff]
      %v3115 = vld [vmem:[#allocation2 + $0x40] sm:$0xff]
      %v3116 = vld [vmem:[#allocation2 + $0x48] sm:$0xff]
      %v3117 = vld [vmem:[#allocation2 + $0x50] sm:$0xff]
      %v3118 = vld [vmem:[#allocation2 + $0x60] sm:$0xff]
      %v3119 = vld [vmem:[#allocation2 + $0x68] sm:$0xff]
      %v3120 = vld [vmem:[#allocation2 + $0x70] sm:$0xff]
      %3133 = vrot.lane.b32.xlu0 %v3109, 18
      %v3134 = vpop.permute.xlu0 %3133
      %3135 = vrot.lane.b32.xlu0 %v3110, 18
      %v3136 = vpop.permute.xlu0 %3135
      %3137 = vrot.lane.b32.xlu0 %v3111, 18
      %v3138 = vpop.permute.xlu0 %3137
      %3139 = vrot.lane.b32.xlu0 %v3112, 18
      %v3140 = vpop.permute.xlu0 %3139
      %3141 = vrot.lane.b32.xlu0 %v3113, 18
      %v3142 = vpop.permute.xlu0 %3141
      %3143 = vrot.lane.b32.xlu0 %v3114, 18
      %v3144 = vpop.permute.xlu0 %3143
      %3145 = vrot.lane.b32.xlu0 %v3115, 18
      %v3146 = vpop.permute.xlu0 %3145
      %3147 = vrot.lane.b32.xlu0 %v3116, 18
      %v3148 = vpop.permute.xlu0 %3147
      %3149 = vrot.lane.b32.xlu0 %v3117, 18
      %v3150 = vpop.permute.xlu0 %3149
      %3151 = vrot.lane.b32.xlu0 %v3118, 18
      %v3152 = vpop.permute.xlu0 %3151
      %3153 = vrot.lane.b32.xlu0 %v3119, 18
      %v3154 = vpop.permute.xlu0 %3153
      %3155 = vrot.lane.b32.xlu0 %v3120, 18
      %v3156 = vpop.permute.xlu0 %3155
      %v3157 = vsel %vm402, %v3134, %v3136
      %v3158 = vsel %vm402, %v3136, %v3138
      %v3159 = vsel %vm402, %v3140, %v3142
      %v3160 = vsel %vm402, %v3142, %v3144
      %v3161 = vsel %vm402, %v3146, %v3148
      %v3162 = vsel %vm402, %v3148, %v3150
      %v3163 = vsel %vm402, %v3152, %v3154
      %v3164 = vsel %vm402, %v3154, %v3156
      %3173 = vst [vmem:[#allocation3 + $0x40] sm:$0xff] %v3157
      %3174 = vst [vmem:[#allocation3 + $0x48] sm:$0xff] %v3158
      %3175 = vst [vmem:[#allocation3 + $0x50] sm:$0xff] %v3159
      %3176 = vst [vmem:[#allocation3 + $0x58] sm:$0xff] %v3160
      %3177 = vst [vmem:[#allocation3 + $0x60] sm:$0xff] %v3161
      %3178 = vst [vmem:[#allocation3 + $0x68] sm:$0xff] %v3162
      %3179 = vst [vmem:[#allocation3 + $0x70] sm:$0xff] %v3163
      %3180 = vst [vmem:[#allocation3 + $0x78] sm:$0xff] %v3164
      %v3181 = vld [vmem:[#allocation2] sm:$0xff]
      %v3182 = vld [vmem:[#allocation2 + $0x8] sm:$0xff]
      %v3183 = vld [vmem:[#allocation2 + $0x10] sm:$0xff]
      %v3184 = vld [vmem:[#allocation2 + $0x20] sm:$0xff]
      %v3185 = vld [vmem:[#allocation2 + $0x28] sm:$0xff]
      %v3186 = vld [vmem:[#allocation2 + $0x30] sm:$0xff]
      %v3187 = vld [vmem:[#allocation2 + $0x40] sm:$0xff]
      %v3188 = vld [vmem:[#allocation2 + $0x48] sm:$0xff]
      %v3189 = vld [vmem:[#allocation2 + $0x50] sm:$0xff]
      %v3190 = vld [vmem:[#allocation2 + $0x60] sm:$0xff]
      %v3191 = vld [vmem:[#allocation2 + $0x68] sm:$0xff]
      %v3192 = vld [vmem:[#allocation2 + $0x70] sm:$0xff]
      %3205 = vrot.lane.b32.xlu0 %v3181, 2
      %v3206 = vpop.permute.xlu0 %3205
      %3207 = vrot.lane.b32.xlu0 %v3182, 2
      %v3208 = vpop.permute.xlu0 %3207
      %3209 = vrot.lane.b32.xlu0 %v3183, 2
      %v3210 = vpop.permute.xlu0 %3209
      %3211 = vrot.lane.b32.xlu0 %v3184, 2
      %v3212 = vpop.permute.xlu0 %3211
      %3213 = vrot.lane.b32.xlu0 %v3185, 2
      %v3214 = vpop.permute.xlu0 %3213
      %3215 = vrot.lane.b32.xlu0 %v3186, 2
      %v3216 = vpop.permute.xlu0 %3215
      %3217 = vrot.lane.b32.xlu0 %v3187, 2
      %v3218 = vpop.permute.xlu0 %3217
      %3219 = vrot.lane.b32.xlu0 %v3188, 2
      %v3220 = vpop.permute.xlu0 %3219
      %3221 = vrot.lane.b32.xlu0 %v3189, 2
      %v3222 = vpop.permute.xlu0 %3221
      %3223 = vrot.lane.b32.xlu0 %v3190, 2
      %v3224 = vpop.permute.xlu0 %3223
      %3225 = vrot.lane.b32.xlu0 %v3191, 2
      %v3226 = vpop.permute.xlu0 %3225
      %3227 = vrot.lane.b32.xlu0 %v3192, 2
      %v3228 = vpop.permute.xlu0 %3227
      %v3229 = vsel %vm475, %v3206, %v3208
      %v3230 = vsel %vm475, %v3208, %v3210
      %v3231 = vsel %vm475, %v3212, %v3214
      %v3232 = vsel %vm475, %v3214, %v3216
      %v3233 = vsel %vm475, %v3218, %v3220
      %v3234 = vsel %vm475, %v3220, %v3222
      %v3235 = vsel %vm475, %v3224, %v3226
      %v3236 = vsel %vm475, %v3226, %v3228
      %3245 = vst [vmem:[#allocation3 + $0x80] sm:$0xff] %v3229
      %3246 = vst [vmem:[#allocation3 + $0x88] sm:$0xff] %v3230
      %3247 = vst [vmem:[#allocation3 + $0x90] sm:$0xff] %v3231
      %3248 = vst [vmem:[#allocation3 + $0x98] sm:$0xff] %v3232
      %3249 = vst [vmem:[#allocation3 + $0xa0] sm:$0xff] %v3233
      %3250 = vst [vmem:[#allocation3 + $0xa8] sm:$0xff] %v3234
      %3251 = vst [vmem:[#allocation3 + $0xb0] sm:$0xff] %v3235
      %3252 = vst [vmem:[#allocation3 + $0xb8] sm:$0xff] %v3236
      %v3253 = vld [vmem:[#allocation2 + $0x8] sm:$0xff]
      %v3254 = vld [vmem:[#allocation2 + $0x10] sm:$0xff]
      %v3255 = vld [vmem:[#allocation2 + $0x18] sm:$0xff]
      %v3256 = vld [vmem:[#allocation2 + $0x28] sm:$0xff]
      %v3257 = vld [vmem:[#allocation2 + $0x30] sm:$0xff]
      %v3258 = vld [vmem:[#allocation2 + $0x38] sm:$0xff]
      %v3259 = vld [vmem:[#allocation2 + $0x48] sm:$0xff]
      %v3260 = vld [vmem:[#allocation2 + $0x50] sm:$0xff]
      %v3261 = vld [vmem:[#allocation2 + $0x58] sm:$0xff]
      %v3262 = vld [vmem:[#allocation2 + $0x68] sm:$0xff]
      %v3263 = vld [vmem:[#allocation2 + $0x70] sm:$0xff]
      %v3264 = vld [vmem:[#allocation2 + $0x78] sm:$0xff]
      %3277 = vrot.lane.b32.xlu0 %v3253, 114
      %v3278 = vpop.permute.xlu0 %3277
      %3279 = vrot.lane.b32.xlu0 %v3254, 114
      %v3280 = vpop.permute.xlu0 %3279
      %3281 = vrot.lane.b32.xlu0 %v3255, 114
      %v3282 = vpop.permute.xlu0 %3281
      %3283 = vrot.lane.b32.xlu0 %v3256, 114
      %v3284 = vpop.permute.xlu0 %3283
      %3285 = vrot.lane.b32.xlu0 %v3257, 114
      %v3286 = vpop.permute.xlu0 %3285
      %3287 = vrot.lane.b32.xlu0 %v3258, 114
      %v3288 = vpop.permute.xlu0 %3287
      %3289 = vrot.lane.b32.xlu0 %v3259, 114
      %v3290 = vpop.permute.xlu0 %3289
      %3291 = vrot.lane.b32.xlu0 %v3260, 114
      %v3292 = vpop.permute.xlu0 %3291
      %3293 = vrot.lane.b32.xlu0 %v3261, 114
      %v3294 = vpop.permute.xlu0 %3293
      %3295 = vrot.lane.b32.xlu0 %v3262, 114
      %v3296 = vpop.permute.xlu0 %3295
      %3297 = vrot.lane.b32.xlu0 %v3263, 114
      %v3298 = vpop.permute.xlu0 %3297
      %3299 = vrot.lane.b32.xlu0 %v3264, 114
      %v3300 = vpop.permute.xlu0 %3299
      %v3301 = vsel %vm548, %v3278, %v3280
      %v3302 = vsel %vm548, %v3280, %v3282
      %v3303 = vsel %vm548, %v3284, %v3286
      %v3304 = vsel %vm548, %v3286, %v3288
      %v3305 = vsel %vm548, %v3290, %v3292
      %v3306 = vsel %vm548, %v3292, %v3294
      %v3307 = vsel %vm548, %v3296, %v3298
      %v3308 = vsel %vm548, %v3298, %v3300
      %3317 = vst [vmem:[#allocation3 + $0xc0] sm:$0xff] %v3301
      %3318 = vst [vmem:[#allocation3 + $0xc8] sm:$0xff] %v3302
      %3319 = vst [vmem:[#allocation3 + $0xd0] sm:$0xff] %v3303
      %3320 = vst [vmem:[#allocation3 + $0xd8] sm:$0xff] %v3304
      %3321 = vst [vmem:[#allocation3 + $0xe0] sm:$0xff] %v3305
      %3322 = vst [vmem:[#allocation3 + $0xe8] sm:$0xff] %v3306
      %3323 = vst [vmem:[#allocation3 + $0xf0] sm:$0xff] %v3307
      %3324 = vst [vmem:[#allocation3 + $0xf8] sm:$0xff] %v3308
      %v3325 = vld [vmem:[#allocation2 + $0x8] sm:$0xff]
      %v3326 = vld [vmem:[#allocation2 + $0x10] sm:$0xff]
      %v3327 = vld [vmem:[#allocation2 + $0x18] sm:$0xff]
      %v3328 = vld [vmem:[#allocation2 + $0x28] sm:$0xff]
      %v3329 = vld [vmem:[#allocation2 + $0x30] sm:$0xff]
      %v3330 = vld [vmem:[#allocation2 + $0x38] sm:$0xff]
      %v3331 = vld [vmem:[#allocation2 + $0x48] sm:$0xff]
      %v3332 = vld [vmem:[#allocation2 + $0x50] sm:$0xff]
      %v3333 = vld [vmem:[#allocation2 + $0x58] sm:$0xff]
      %v3334 = vld [vmem:[#allocation2 + $0x68] sm:$0xff]
      %v3335 = vld [vmem:[#allocation2 + $0x70] sm:$0xff]
      %v3336 = vld [vmem:[#allocation2 + $0x78] sm:$0xff]
      %3349 = vrot.lane.b32.xlu0 %v3325, 98
      %v3350 = vpop.permute.xlu0 %3349
      %3351 = vrot.lane.b32.xlu0 %v3326, 98
      %v3352 = vpop.permute.xlu0 %3351
      %3353 = vrot.lane.b32.xlu0 %v3327, 98
      %v3354 = vpop.permute.xlu0 %3353
      %3355 = vrot.lane.b32.xlu0 %v3328, 98
      %v3356 = vpop.permute.xlu0 %3355
      %3357 = vrot.lane.b32.xlu0 %v3329, 98
      %v3358 = vpop.permute.xlu0 %3357
      %3359 = vrot.lane.b32.xlu0 %v3330, 98
      %v3360 = vpop.permute.xlu0 %3359
      %3361 = vrot.lane.b32.xlu0 %v3331, 98
      %v3362 = vpop.permute.xlu0 %3361
      %3363 = vrot.lane.b32.xlu0 %v3332, 98
      %v3364 = vpop.permute.xlu0 %3363
      %3365 = vrot.lane.b32.xlu0 %v3333, 98
      %v3366 = vpop.permute.xlu0 %3365
      %3367 = vrot.lane.b32.xlu0 %v3334, 98
      %v3368 = vpop.permute.xlu0 %3367
      %3369 = vrot.lane.b32.xlu0 %v3335, 98
      %v3370 = vpop.permute.xlu0 %3369
      %3371 = vrot.lane.b32.xlu0 %v3336, 98
      %v3372 = vpop.permute.xlu0 %3371
      %v3373 = vsel %vm621, %v3350, %v3352
      %v3374 = vsel %vm621, %v3352, %v3354
      %v3375 = vsel %vm621, %v3356, %v3358
      %v3376 = vsel %vm621, %v3358, %v3360
      %v3377 = vsel %vm621, %v3362, %v3364
      %v3378 = vsel %vm621, %v3364, %v3366
      %v3379 = vsel %vm621, %v3368, %v3370
      %v3380 = vsel %vm621, %v3370, %v3372
      %3389 = vst [vmem:[#allocation3 + $0x100] sm:$0xff] %v3373
      %3390 = vst [vmem:[#allocation3 + $0x108] sm:$0xff] %v3374
      %3391 = vst [vmem:[#allocation3 + $0x110] sm:$0xff] %v3375
      %3392 = vst [vmem:[#allocation3 + $0x118] sm:$0xff] %v3376
      %3393 = vst [vmem:[#allocation3 + $0x120] sm:$0xff] %v3377
      %3394 = vst [vmem:[#allocation3 + $0x128] sm:$0xff] %v3378
      %3395 = vst [vmem:[#allocation3 + $0x130] sm:$0xff] %v3379
      %3396 = vst [vmem:[#allocation3 + $0x138] sm:$0xff] %v3380
      %v3397 = vld [vmem:[%s2] sm:$0xff]
      %v3398 = vld [vmem:[%s2 + $0x8] sm:$0xff]
      %v3399 = vld [vmem:[%s2 + $0x10] sm:$0xff]
      %v3400 = vld [vmem:[%s2 + $0x18] sm:$0xff]
      %v3401 = vld [vmem:[%s2 + $0x20] sm:$0xff]
      %v3402 = vld [vmem:[%s2 + $0x28] sm:$0xff]
      %v3403 = vld [vmem:[%s2 + $0x30] sm:$0xff]
      %v3404 = vld [vmem:[%s2 + $0x38] sm:$0xff]
      %v3405 = vld [vmem:[#allocation3] sm:$0xff]
      %v3406 = vld [vmem:[#allocation3 + $0x8] sm:$0xff]
      %v3407 = vld [vmem:[#allocation3 + $0x10] sm:$0xff]
      %v3408 = vld [vmem:[#allocation3 + $0x18] sm:$0xff]
      %v3409 = vld [vmem:[#allocation3 + $0x20] sm:$0xff]
      %v3410 = vld [vmem:[#allocation3 + $0x28] sm:$0xff]
      %v3411 = vld [vmem:[#allocation3 + $0x30] sm:$0xff]
      %v3412 = vld [vmem:[#allocation3 + $0x38] sm:$0xff]
      %v3413 = vld [vmem:[#allocation3 + $0x40] sm:$0xff]
      %v3414 = vld [vmem:[#allocation3 + $0x48] sm:$0xff]
      %v3415 = vld [vmem:[#allocation3 + $0x50] sm:$0xff]
      %v3416 = vld [vmem:[#allocation3 + $0x58] sm:$0xff]
      %v3417 = vld [vmem:[#allocation3 + $0x60] sm:$0xff]
      %v3418 = vld [vmem:[#allocation3 + $0x68] sm:$0xff]
      %v3419 = vld [vmem:[#allocation3 + $0x70] sm:$0xff]
      %v3420 = vld [vmem:[#allocation3 + $0x78] sm:$0xff]
      %v3421 = vld [vmem:[#allocation3 + $0x80] sm:$0xff]
      %v3422 = vld [vmem:[#allocation3 + $0x88] sm:$0xff]
      %v3423 = vld [vmem:[#allocation3 + $0x90] sm:$0xff]
      %v3424 = vld [vmem:[#allocation3 + $0x98] sm:$0xff]
      %v3425 = vld [vmem:[#allocation3 + $0xa0] sm:$0xff]
      %v3426 = vld [vmem:[#allocation3 + $0xa8] sm:$0xff]
      %v3427 = vld [vmem:[#allocation3 + $0xb0] sm:$0xff]
      %v3428 = vld [vmem:[#allocation3 + $0xb8] sm:$0xff]
      %v3429 = vld [vmem:[#allocation3 + $0xc0] sm:$0xff]
      %v3430 = vld [vmem:[#allocation3 + $0xc8] sm:$0xff]
      %v3431 = vld [vmem:[#allocation3 + $0xd0] sm:$0xff]
      %v3432 = vld [vmem:[#allocation3 + $0xd8] sm:$0xff]
      %v3433 = vld [vmem:[#allocation3 + $0xe0] sm:$0xff]
      %v3434 = vld [vmem:[#allocation3 + $0xe8] sm:$0xff]
      %v3435 = vld [vmem:[#allocation3 + $0xf0] sm:$0xff]
      %v3436 = vld [vmem:[#allocation3 + $0xf8] sm:$0xff]
      %v3437 = vld [vmem:[#allocation3 + $0x100] sm:$0xff]
      %v3438 = vld [vmem:[#allocation3 + $0x108] sm:$0xff]
      %v3439 = vld [vmem:[#allocation3 + $0x110] sm:$0xff]
      %v3440 = vld [vmem:[#allocation3 + $0x118] sm:$0xff]
      %v3441 = vld [vmem:[#allocation3 + $0x120] sm:$0xff]
      %v3442 = vld [vmem:[#allocation3 + $0x128] sm:$0xff]
      %v3443 = vld [vmem:[#allocation3 + $0x130] sm:$0xff]
      %v3444 = vld [vmem:[#allocation3 + $0x138] sm:$0xff]
      %v3446 = vsel %vm694, %v3398, 0
      %v3449 = vsel %vm694, %v3400, 0
      %v3452 = vsel %vm694, %v3402, 0
      %v3455 = vsel %vm694, %v3404, 0
      %3457 = vmatpush.msra.mxu0 %v3435
      %3458 = vmatpush.msra.mxu0 %v3433
      %3459 = vmatpush.msra.mxu0 %v3431
      %3460 = vmatpush.msra.mxu0 %v3429
      %3461 = vmatpush.msra.mxu0 %v3427
      %3462 = vmatpush.msra.mxu0 %v3425
      %3463 = vmatpush.msra.mxu0 %v3423
      %3464 = vmatpush.msra.mxu0 %v3421
      %3465 = vmatpush.msra.mxu0 %v3419
      %3466 = vmatpush.msra.mxu0 %v3417
      %3467 = vmatpush.msra.mxu0 %v3415
      %3468 = vmatpush.msra.mxu0 %v3413
      %3469 = vmatpush.msra.mxu0 %v3411
      %3470 = vmatpush.msra.mxu0 %v3409
      %3471 = vmatpush.msra.mxu0 %v3407
      %3472 = vmatpush.msra.mxu0 %v3405
      %3473 = vmatmul.f32.gmra.mxu0 %v3397
      %v3474 = vpop.f32.mrf.mxu0
      %v3475 = vadd.f32 0.0, %v3474
      %3476 = vmatmul.f32.gmra.mxu0 %v3399
      %v3477 = vpop.f32.mrf.mxu0
      %v3478 = vadd.f32 0.0, %v3477
      %3479 = vmatmul.f32.gmra.mxu0 %v3401
      %v3480 = vpop.f32.mrf.mxu0
      %v3481 = vadd.f32 0.0, %v3480
      %3482 = vmatmul.f32.gmra.mxu0 %v3403
      %v3483 = vpop.f32.mrf.mxu0
      %v3484 = vadd.f32 0.0, %v3483
      %3485 = vdwg.mxu0
      %3486 = vmatpush.msra.mxu0 0.0
      %3487 = vmatpush.msra.mxu0 0.0
      %3488 = vmatpush.msra.mxu0 0.0
      %3489 = vmatpush.msra.mxu0 0.0
      %3490 = vmatpush.msra.mxu0 0.0
      %3491 = vmatpush.msra.mxu0 0.0
      %3492 = vmatpush.msra.mxu0 0.0
      %3493 = vmatpush.msra.mxu0 0.0
      %3494 = vmatpush.msra.mxu0 0.0
      %3495 = vmatpush.msra.mxu0 0.0
      %3496 = vmatpush.msra.mxu0 0.0
      %3497 = vmatpush.msra.mxu0 0.0
      %3498 = vmatpush.msra.mxu0 %v3443
      %3499 = vmatpush.msra.mxu0 %v3441
      %3500 = vmatpush.msra.mxu0 %v3439
      %3501 = vmatpush.msra.mxu0 %v3437
      %3502 = vmatmul.f32.gmra.mxu0 %v3446
      %v3503 = vpop.f32.mrf.mxu0
      %v3504 = vadd.f32 %v3475, %v3503
      %3505 = vmatmul.f32.gmra.mxu0 %v3449
      %v3506 = vpop.f32.mrf.mxu0
      %v3507 = vadd.f32 %v3478, %v3506
      %3508 = vmatmul.f32.gmra.mxu0 %v3452
      %v3509 = vpop.f32.mrf.mxu0
      %v3510 = vadd.f32 %v3481, %v3509
      %3511 = vmatmul.f32.gmra.mxu0 %v3455
      %v3512 = vpop.f32.mrf.mxu0
      %v3513 = vadd.f32 %v3484, %v3512
      %3514 = vdwg.mxu0
      %3515 = vmatpush.msra.mxu0 %v3436
      %3516 = vmatpush.msra.mxu0 %v3434
      %3517 = vmatpush.msra.mxu0 %v3432
      %3518 = vmatpush.msra.mxu0 %v3430
      %3519 = vmatpush.msra.mxu0 %v3428
      %3520 = vmatpush.msra.mxu0 %v3426
      %3521 = vmatpush.msra.mxu0 %v3424
      %3522 = vmatpush.msra.mxu0 %v3422
      %3523 = vmatpush.msra.mxu0 %v3420
      %3524 = vmatpush.msra.mxu0 %v3418
      %3525 = vmatpush.msra.mxu0 %v3416
      %3526 = vmatpush.msra.mxu0 %v3414
      %3527 = vmatpush.msra.mxu0 %v3412
      %3528 = vmatpush.msra.mxu0 %v3410
      %3529 = vmatpush.msra.mxu0 %v3408
      %3530 = vmatpush.msra.mxu0 %v3406
      %3531 = vmatmul.f32.gmra.mxu0 %v3397
      %v3532 = vpop.f32.mrf.mxu0
      %v3533 = vadd.f32 0.0, %v3532
      %3534 = vmatmul.f32.gmra.mxu0 %v3399
      %v3535 = vpop.f32.mrf.mxu0
      %v3536 = vadd.f32 0.0, %v3535
      %3537 = vmatmul.f32.gmra.mxu0 %v3401
      %v3538 = vpop.f32.mrf.mxu0
      %v3539 = vadd.f32 0.0, %v3538
      %3540 = vmatmul.f32.gmra.mxu0 %v3403
      %v3541 = vpop.f32.mrf.mxu0
      %v3542 = vadd.f32 0.0, %v3541
      %3543 = vdwg.mxu0
      %3544 = vmatpush.msra.mxu0 0.0
      %3545 = vmatpush.msra.mxu0 0.0
      %3546 = vmatpush.msra.mxu0 0.0
      %3547 = vmatpush.msra.mxu0 0.0
      %3548 = vmatpush.msra.mxu0 0.0
      %3549 = vmatpush.msra.mxu0 0.0
      %3550 = vmatpush.msra.mxu0 0.0
      %3551 = vmatpush.msra.mxu0 0.0
      %3552 = vmatpush.msra.mxu0 0.0
      %3553 = vmatpush.msra.mxu0 0.0
      %3554 = vmatpush.msra.mxu0 0.0
      %3555 = vmatpush.msra.mxu0 0.0
      %3556 = vmatpush.msra.mxu0 %v3444
      %3557 = vmatpush.msra.mxu0 %v3442
      %3558 = vmatpush.msra.mxu0 %v3440
      %3559 = vmatpush.msra.mxu0 %v3438
      %3560 = vmatmul.f32.gmra.mxu0 %v3446
      %v3561 = vpop.f32.mrf.mxu0
      %v3562 = vadd.f32 %v3533, %v3561
      %3563 = vmatmul.f32.gmra.mxu0 %v3449
      %v3564 = vpop.f32.mrf.mxu0
      %v3565 = vadd.f32 %v3536, %v3564
      %3566 = vmatmul.f32.gmra.mxu0 %v3452
      %v3567 = vpop.f32.mrf.mxu0
      %v3568 = vadd.f32 %v3539, %v3567
      %3569 = vmatmul.f32.gmra.mxu0 %v3455
      %v3570 = vpop.f32.mrf.mxu0
      %v3571 = vadd.f32 %v3542, %v3570
      %3572 = vdwg.mxu0
      %v3573 = vsel %vm825, %v3504, 0.0
      %v3574 = vsel %vm826, %v3562, 0.0
      %v3575 = vsel %vm825, %v3507, 0.0
      %v3576 = vsel %vm826, %v3565, 0.0
      %v3577 = vsel %vm825, %v3510, 0.0
      %v3578 = vsel %vm826, %v3568, 0.0
      %v3579 = vsel %vm825, %v3513, 0.0
      %v3580 = vsel %vm826, %v3571, 0.0
      %v3581 = vadd.f32 %v3573, 0.0
      %v3582 = vadd.f32 %v3574, 0.0
      %v3583 = vadd.f32 %v3575, 0.0
      %v3584 = vadd.f32 %v3576, 0.0
      %v3585 = vadd.f32 %v3577, 0.0
      %v3586 = vadd.f32 %v3578, 0.0
      %v3587 = vadd.f32 %v3579, 0.0
      %v3588 = vadd.f32 %v3580, 0.0
      %v3589 = vld [vmem:[#allocation2] sm:$0xff]
      %v3590 = vld [vmem:[#allocation2 + $0x8] sm:$0xff]
      %v3591 = vld [vmem:[#allocation2 + $0x10] sm:$0xff]
      %v3592 = vld [vmem:[#allocation2 + $0x20] sm:$0xff]
      %v3593 = vld [vmem:[#allocation2 + $0x28] sm:$0xff]
      %v3594 = vld [vmem:[#allocation2 + $0x30] sm:$0xff]
      %v3595 = vld [vmem:[#allocation2 + $0x40] sm:$0xff]
      %v3596 = vld [vmem:[#allocation2 + $0x48] sm:$0xff]
      %v3597 = vld [vmem:[#allocation2 + $0x50] sm:$0xff]
      %v3598 = vld [vmem:[#allocation2 + $0x60] sm:$0xff]
      %v3599 = vld [vmem:[#allocation2 + $0x68] sm:$0xff]
      %v3600 = vld [vmem:[#allocation2 + $0x70] sm:$0xff]
      %3613 = vrot.lane.b32.xlu0 %v3589, 33
      %v3614 = vpop.permute.xlu0 %3613
      %3615 = vrot.lane.b32.xlu0 %v3590, 33
      %v3616 = vpop.permute.xlu0 %3615
      %3617 = vrot.lane.b32.xlu0 %v3591, 33
      %v3618 = vpop.permute.xlu0 %3617
      %3619 = vrot.lane.b32.xlu0 %v3592, 33
      %v3620 = vpop.permute.xlu0 %3619
      %3621 = vrot.lane.b32.xlu0 %v3593, 33
      %v3622 = vpop.permute.xlu0 %3621
      %3623 = vrot.lane.b32.xlu0 %v3594, 33
      %v3624 = vpop.permute.xlu0 %3623
      %3625 = vrot.lane.b32.xlu0 %v3595, 33
      %v3626 = vpop.permute.xlu0 %3625
      %3627 = vrot.lane.b32.xlu0 %v3596, 33
      %v3628 = vpop.permute.xlu0 %3627
      %3629 = vrot.lane.b32.xlu0 %v3597, 33
      %v3630 = vpop.permute.xlu0 %3629
      %3631 = vrot.lane.b32.xlu0 %v3598, 33
      %v3632 = vpop.permute.xlu0 %3631
      %3633 = vrot.lane.b32.xlu0 %v3599, 33
      %v3634 = vpop.permute.xlu0 %3633
      %3635 = vrot.lane.b32.xlu0 %v3600, 33
      %v3636 = vpop.permute.xlu0 %3635
      %v3637 = vsel %vm891, %v3614, %v3616
      %v3638 = vsel %vm891, %v3616, %v3618
      %v3639 = vsel %vm891, %v3620, %v3622
      %v3640 = vsel %vm891, %v3622, %v3624
      %v3641 = vsel %vm891, %v3626, %v3628
      %v3642 = vsel %vm891, %v3628, %v3630
      %v3643 = vsel %vm891, %v3632, %v3634
      %v3644 = vsel %vm891, %v3634, %v3636
      %3653 = vst [vmem:[#allocation3] sm:$0xff] %v3637
      %3654 = vst [vmem:[#allocation3 + $0x8] sm:$0xff] %v3638
      %3655 = vst [vmem:[#allocation3 + $0x10] sm:$0xff] %v3639
      %3656 = vst [vmem:[#allocation3 + $0x18] sm:$0xff] %v3640
      %3657 = vst [vmem:[#allocation3 + $0x20] sm:$0xff] %v3641
      %3658 = vst [vmem:[#allocation3 + $0x28] sm:$0xff] %v3642
      %3659 = vst [vmem:[#allocation3 + $0x30] sm:$0xff] %v3643
      %3660 = vst [vmem:[#allocation3 + $0x38] sm:$0xff] %v3644
      %v3661 = vld [vmem:[#allocation2] sm:$0xff]
      %v3662 = vld [vmem:[#allocation2 + $0x8] sm:$0xff]
      %v3663 = vld [vmem:[#allocation2 + $0x10] sm:$0xff]
      %v3664 = vld [vmem:[#allocation2 + $0x20] sm:$0xff]
      %v3665 = vld [vmem:[#allocation2 + $0x28] sm:$0xff]
      %v3666 = vld [vmem:[#allocation2 + $0x30] sm:$0xff]
      %v3667 = vld [vmem:[#allocation2 + $0x40] sm:$0xff]
      %v3668 = vld [vmem:[#allocation2 + $0x48] sm:$0xff]
      %v3669 = vld [vmem:[#allocation2 + $0x50] sm:$0xff]
      %v3670 = vld [vmem:[#allocation2 + $0x60] sm:$0xff]
      %v3671 = vld [vmem:[#allocation2 + $0x68] sm:$0xff]
      %v3672 = vld [vmem:[#allocation2 + $0x70] sm:$0xff]
      %3685 = vrot.lane.b32.xlu0 %v3661, 17
      %v3686 = vpop.permute.xlu0 %3685
      %3687 = vrot.lane.b32.xlu0 %v3662, 17
      %v3688 = vpop.permute.xlu0 %3687
      %3689 = vrot.lane.b32.xlu0 %v3663, 17
      %v3690 = vpop.permute.xlu0 %3689
      %3691 = vrot.lane.b32.xlu0 %v3664, 17
      %v3692 = vpop.permute.xlu0 %3691
      %3693 = vrot.lane.b32.xlu0 %v3665, 17
      %v3694 = vpop.permute.xlu0 %3693
      %3695 = vrot.lane.b32.xlu0 %v3666, 17
      %v3696 = vpop.permute.xlu0 %3695
      %3697 = vrot.lane.b32.xlu0 %v3667, 17
      %v3698 = vpop.permute.xlu0 %3697
      %3699 = vrot.lane.b32.xlu0 %v3668, 17
      %v3700 = vpop.permute.xlu0 %3699
      %3701 = vrot.lane.b32.xlu0 %v3669, 17
      %v3702 = vpop.permute.xlu0 %3701
      %3703 = vrot.lane.b32.xlu0 %v3670, 17
      %v3704 = vpop.permute.xlu0 %3703
      %3705 = vrot.lane.b32.xlu0 %v3671, 17
      %v3706 = vpop.permute.xlu0 %3705
      %3707 = vrot.lane.b32.xlu0 %v3672, 17
      %v3708 = vpop.permute.xlu0 %3707
      %v3709 = vsel %vm964, %v3686, %v3688
      %v3710 = vsel %vm964, %v3688, %v3690
      %v3711 = vsel %vm964, %v3692, %v3694
      %v3712 = vsel %vm964, %v3694, %v3696
      %v3713 = vsel %vm964, %v3698, %v3700
      %v3714 = vsel %vm964, %v3700, %v3702
      %v3715 = vsel %vm964, %v3704, %v3706
      %v3716 = vsel %vm964, %v3706, %v3708
      %3725 = vst [vmem:[#allocation3 + $0x40] sm:$0xff] %v3709
      %3726 = vst [vmem:[#allocation3 + $0x48] sm:$0xff] %v3710
      %3727 = vst [vmem:[#allocation3 + $0x50] sm:$0xff] %v3711
      %3728 = vst [vmem:[#allocation3 + $0x58] sm:$0xff] %v3712
      %3729 = vst [vmem:[#allocation3 + $0x60] sm:$0xff] %v3713
      %3730 = vst [vmem:[#allocation3 + $0x68] sm:$0xff] %v3714
      %3731 = vst [vmem:[#allocation3 + $0x70] sm:$0xff] %v3715
      %3732 = vst [vmem:[#allocation3 + $0x78] sm:$0xff] %v3716
      %v3733 = vld [vmem:[#allocation2] sm:$0xff]
      %v3734 = vld [vmem:[#allocation2 + $0x8] sm:$0xff]
      %v3735 = vld [vmem:[#allocation2 + $0x10] sm:$0xff]
      %v3736 = vld [vmem:[#allocation2 + $0x20] sm:$0xff]
      %v3737 = vld [vmem:[#allocation2 + $0x28] sm:$0xff]
      %v3738 = vld [vmem:[#allocation2 + $0x30] sm:$0xff]
      %v3739 = vld [vmem:[#allocation2 + $0x40] sm:$0xff]
      %v3740 = vld [vmem:[#allocation2 + $0x48] sm:$0xff]
      %v3741 = vld [vmem:[#allocation2 + $0x50] sm:$0xff]
      %v3742 = vld [vmem:[#allocation2 + $0x60] sm:$0xff]
      %v3743 = vld [vmem:[#allocation2 + $0x68] sm:$0xff]
      %v3744 = vld [vmem:[#allocation2 + $0x70] sm:$0xff]
      %3757 = vrot.lane.b32.xlu0 %v3733, 1
      %v3758 = vpop.permute.xlu0 %3757
      %3759 = vrot.lane.b32.xlu0 %v3734, 1
      %v3760 = vpop.permute.xlu0 %3759
      %3761 = vrot.lane.b32.xlu0 %v3735, 1
      %v3762 = vpop.permute.xlu0 %3761
      %3763 = vrot.lane.b32.xlu0 %v3736, 1
      %v3764 = vpop.permute.xlu0 %3763
      %3765 = vrot.lane.b32.xlu0 %v3737, 1
      %v3766 = vpop.permute.xlu0 %3765
      %3767 = vrot.lane.b32.xlu0 %v3738, 1
      %v3768 = vpop.permute.xlu0 %3767
      %3769 = vrot.lane.b32.xlu0 %v3739, 1
      %v3770 = vpop.permute.xlu0 %3769
      %3771 = vrot.lane.b32.xlu0 %v3740, 1
      %v3772 = vpop.permute.xlu0 %3771
      %3773 = vrot.lane.b32.xlu0 %v3741, 1
      %v3774 = vpop.permute.xlu0 %3773
      %3775 = vrot.lane.b32.xlu0 %v3742, 1
      %v3776 = vpop.permute.xlu0 %3775
      %3777 = vrot.lane.b32.xlu0 %v3743, 1
      %v3778 = vpop.permute.xlu0 %3777
      %3779 = vrot.lane.b32.xlu0 %v3744, 1
      %v3780 = vpop.permute.xlu0 %3779
      %v3781 = vsel %vm1037, %v3758, %v3760
      %v3782 = vsel %vm1037, %v3760, %v3762
      %v3783 = vsel %vm1037, %v3764, %v3766
      %v3784 = vsel %vm1037, %v3766, %v3768
      %v3785 = vsel %vm1037, %v3770, %v3772
      %v3786 = vsel %vm1037, %v3772, %v3774
      %v3787 = vsel %vm1037, %v3776, %v3778
      %v3788 = vsel %vm1037, %v3778, %v3780
      %3797 = vst [vmem:[#allocation3 + $0x80] sm:$0xff] %v3781
      %3798 = vst [vmem:[#allocation3 + $0x88] sm:$0xff] %v3782
      %3799 = vst [vmem:[#allocation3 + $0x90] sm:$0xff] %v3783
      %3800 = vst [vmem:[#allocation3 + $0x98] sm:$0xff] %v3784
      %3801 = vst [vmem:[#allocation3 + $0xa0] sm:$0xff] %v3785
      %3802 = vst [vmem:[#allocation3 + $0xa8] sm:$0xff] %v3786
      %3803 = vst [vmem:[#allocation3 + $0xb0] sm:$0xff] %v3787
      %3804 = vst [vmem:[#allocation3 + $0xb8] sm:$0xff] %v3788
      %v3805 = vld [vmem:[#allocation2 + $0x8] sm:$0xff]
      %v3806 = vld [vmem:[#allocation2 + $0x10] sm:$0xff]
      %v3807 = vld [vmem:[#allocation2 + $0x18] sm:$0xff]
      %v3808 = vld [vmem:[#allocation2 + $0x28] sm:$0xff]
      %v3809 = vld [vmem:[#allocation2 + $0x30] sm:$0xff]
      %v3810 = vld [vmem:[#allocation2 + $0x38] sm:$0xff]
      %v3811 = vld [vmem:[#allocation2 + $0x48] sm:$0xff]
      %v3812 = vld [vmem:[#allocation2 + $0x50] sm:$0xff]
      %v3813 = vld [vmem:[#allocation2 + $0x58] sm:$0xff]
      %v3814 = vld [vmem:[#allocation2 + $0x68] sm:$0xff]
      %v3815 = vld [vmem:[#allocation2 + $0x70] sm:$0xff]
      %v3816 = vld [vmem:[#allocation2 + $0x78] sm:$0xff]
      %3829 = vrot.lane.b32.xlu0 %v3805, 113
      %v3830 = vpop.permute.xlu0 %3829
      %3831 = vrot.lane.b32.xlu0 %v3806, 113
      %v3832 = vpop.permute.xlu0 %3831
      %3833 = vrot.lane.b32.xlu0 %v3807, 113
      %v3834 = vpop.permute.xlu0 %3833
      %3835 = vrot.lane.b32.xlu0 %v3808, 113
      %v3836 = vpop.permute.xlu0 %3835
      %3837 = vrot.lane.b32.xlu0 %v3809, 113
      %v3838 = vpop.permute.xlu0 %3837
      %3839 = vrot.lane.b32.xlu0 %v3810, 113
      %v3840 = vpop.permute.xlu0 %3839
      %3841 = vrot.lane.b32.xlu0 %v3811, 113
      %v3842 = vpop.permute.xlu0 %3841
      %3843 = vrot.lane.b32.xlu0 %v3812, 113
      %v3844 = vpop.permute.xlu0 %3843
      %3845 = vrot.lane.b32.xlu0 %v3813, 113
      %v3846 = vpop.permute.xlu0 %3845
      %3847 = vrot.lane.b32.xlu0 %v3814, 113
      %v3848 = vpop.permute.xlu0 %3847
      %3849 = vrot.lane.b32.xlu0 %v3815, 113
      %v3850 = vpop.permute.xlu0 %3849
      %3851 = vrot.lane.b32.xlu0 %v3816, 113
      %v3852 = vpop.permute.xlu0 %3851
      %v3853 = vsel %vm1110, %v3830, %v3832
      %v3854 = vsel %vm1110, %v3832, %v3834
      %v3855 = vsel %vm1110, %v3836, %v3838
      %v3856 = vsel %vm1110, %v3838, %v3840
      %v3857 = vsel %vm1110, %v3842, %v3844
      %v3858 = vsel %vm1110, %v3844, %v3846
      %v3859 = vsel %vm1110, %v3848, %v3850
      %v3860 = vsel %vm1110, %v3850, %v3852
      %3869 = vst [vmem:[#allocation3 + $0xc0] sm:$0xff] %v3853
      %3870 = vst [vmem:[#allocation3 + $0xc8] sm:$0xff] %v3854
      %3871 = vst [vmem:[#allocation3 + $0xd0] sm:$0xff] %v3855
      %3872 = vst [vmem:[#allocation3 + $0xd8] sm:$0xff] %v3856
      %3873 = vst [vmem:[#allocation3 + $0xe0] sm:$0xff] %v3857
      %3874 = vst [vmem:[#allocation3 + $0xe8] sm:$0xff] %v3858
      %3875 = vst [vmem:[#allocation3 + $0xf0] sm:$0xff] %v3859
      %3876 = vst [vmem:[#allocation3 + $0xf8] sm:$0xff] %v3860
      %v3877 = vld [vmem:[#allocation2 + $0x8] sm:$0xff]
      %v3878 = vld [vmem:[#allocation2 + $0x10] sm:$0xff]
      %v3879 = vld [vmem:[#allocation2 + $0x18] sm:$0xff]
      %v3880 = vld [vmem:[#allocation2 + $0x28] sm:$0xff]
      %v3881 = vld [vmem:[#allocation2 + $0x30] sm:$0xff]
      %v3882 = vld [vmem:[#allocation2 + $0x38] sm:$0xff]
      %v3883 = vld [vmem:[#allocation2 + $0x48] sm:$0xff]
      %v3884 = vld [vmem:[#allocation2 + $0x50] sm:$0xff]
      %v3885 = vld [vmem:[#allocation2 + $0x58] sm:$0xff]
      %v3886 = vld [vmem:[#allocation2 + $0x68] sm:$0xff]
      %v3887 = vld [vmem:[#allocation2 + $0x70] sm:$0xff]
      %v3888 = vld [vmem:[#allocation2 + $0x78] sm:$0xff]
      %3901 = vrot.lane.b32.xlu0 %v3877, 97
      %v3902 = vpop.permute.xlu0 %3901
      %3903 = vrot.lane.b32.xlu0 %v3878, 97
      %v3904 = vpop.permute.xlu0 %3903
      %3905 = vrot.lane.b32.xlu0 %v3879, 97
      %v3906 = vpop.permute.xlu0 %3905
      %3907 = vrot.lane.b32.xlu0 %v3880, 97
      %v3908 = vpop.permute.xlu0 %3907
      %3909 = vrot.lane.b32.xlu0 %v3881, 97
      %v3910 = vpop.permute.xlu0 %3909
      %3911 = vrot.lane.b32.xlu0 %v3882, 97
      %v3912 = vpop.permute.xlu0 %3911
      %3913 = vrot.lane.b32.xlu0 %v3883, 97
      %v3914 = vpop.permute.xlu0 %3913
      %3915 = vrot.lane.b32.xlu0 %v3884, 97
      %v3916 = vpop.permute.xlu0 %3915
      %3917 = vrot.lane.b32.xlu0 %v3885, 97
      %v3918 = vpop.permute.xlu0 %3917
      %3919 = vrot.lane.b32.xlu0 %v3886, 97
      %v3920 = vpop.permute.xlu0 %3919
      %3921 = vrot.lane.b32.xlu0 %v3887, 97
      %v3922 = vpop.permute.xlu0 %3921
      %3923 = vrot.lane.b32.xlu0 %v3888, 97
      %v3924 = vpop.permute.xlu0 %3923
      %v3925 = vsel %vm1183, %v3902, %v3904
      %v3926 = vsel %vm1183, %v3904, %v3906
      %v3927 = vsel %vm1183, %v3908, %v3910
      %v3928 = vsel %vm1183, %v3910, %v3912
      %v3929 = vsel %vm1183, %v3914, %v3916
      %v3930 = vsel %vm1183, %v3916, %v3918
      %v3931 = vsel %vm1183, %v3920, %v3922
      %v3932 = vsel %vm1183, %v3922, %v3924
      %3941 = vst [vmem:[#allocation3 + $0x100] sm:$0xff] %v3925
      %3942 = vst [vmem:[#allocation3 + $0x108] sm:$0xff] %v3926
      %3943 = vst [vmem:[#allocation3 + $0x110] sm:$0xff] %v3927
      %3944 = vst [vmem:[#allocation3 + $0x118] sm:$0xff] %v3928
      %3945 = vst [vmem:[#allocation3 + $0x120] sm:$0xff] %v3929
      %3946 = vst [vmem:[#allocation3 + $0x128] sm:$0xff] %v3930
      %3947 = vst [vmem:[#allocation3 + $0x130] sm:$0xff] %v3931
      %3948 = vst [vmem:[#allocation3 + $0x138] sm:$0xff] %v3932
      %s3949 = scalar_lea.vmem %s2, 64
      %v3950 = vld [vmem:[%s3949] sm:$0xff]
      %v3951 = vld [vmem:[%s3949 + $0x8] sm:$0xff]
      %v3952 = vld [vmem:[%s3949 + $0x10] sm:$0xff]
      %v3953 = vld [vmem:[%s3949 + $0x18] sm:$0xff]
      %v3954 = vld [vmem:[%s3949 + $0x20] sm:$0xff]
      %v3955 = vld [vmem:[%s3949 + $0x28] sm:$0xff]
      %v3956 = vld [vmem:[%s3949 + $0x30] sm:$0xff]
      %v3957 = vld [vmem:[%s3949 + $0x38] sm:$0xff]
      %v3958 = vld [vmem:[#allocation3] sm:$0xff]
      %v3959 = vld [vmem:[#allocation3 + $0x8] sm:$0xff]
      %v3960 = vld [vmem:[#allocation3 + $0x10] sm:$0xff]
      %v3961 = vld [vmem:[#allocation3 + $0x18] sm:$0xff]
      %v3962 = vld [vmem:[#allocation3 + $0x20] sm:$0xff]
      %v3963 = vld [vmem:[#allocation3 + $0x28] sm:$0xff]
      %v3964 = vld [vmem:[#allocation3 + $0x30] sm:$0xff]
      %v3965 = vld [vmem:[#allocation3 + $0x38] sm:$0xff]
      %v3966 = vld [vmem:[#allocation3 + $0x40] sm:$0xff]
      %v3967 = vld [vmem:[#allocation3 + $0x48] sm:$0xff]
      %v3968 = vld [vmem:[#allocation3 + $0x50] sm:$0xff]
      %v3969 = vld [vmem:[#allocation3 + $0x58] sm:$0xff]
      %v3970 = vld [vmem:[#allocation3 + $0x60] sm:$0xff]
      %v3971 = vld [vmem:[#allocation3 + $0x68] sm:$0xff]
      %v3972 = vld [vmem:[#allocation3 + $0x70] sm:$0xff]
      %v3973 = vld [vmem:[#allocation3 + $0x78] sm:$0xff]
      %v3974 = vld [vmem:[#allocation3 + $0x80] sm:$0xff]
      %v3975 = vld [vmem:[#allocation3 + $0x88] sm:$0xff]
      %v3976 = vld [vmem:[#allocation3 + $0x90] sm:$0xff]
      %v3977 = vld [vmem:[#allocation3 + $0x98] sm:$0xff]
      %v3978 = vld [vmem:[#allocation3 + $0xa0] sm:$0xff]
      %v3979 = vld [vmem:[#allocation3 + $0xa8] sm:$0xff]
      %v3980 = vld [vmem:[#allocation3 + $0xb0] sm:$0xff]
      %v3981 = vld [vmem:[#allocation3 + $0xb8] sm:$0xff]
      %v3982 = vld [vmem:[#allocation3 + $0xc0] sm:$0xff]
      %v3983 = vld [vmem:[#allocation3 + $0xc8] sm:$0xff]
      %v3984 = vld [vmem:[#allocation3 + $0xd0] sm:$0xff]
      %v3985 = vld [vmem:[#allocation3 + $0xd8] sm:$0xff]
      %v3986 = vld [vmem:[#allocation3 + $0xe0] sm:$0xff]
      %v3987 = vld [vmem:[#allocation3 + $0xe8] sm:$0xff]
      %v3988 = vld [vmem:[#allocation3 + $0xf0] sm:$0xff]
      %v3989 = vld [vmem:[#allocation3 + $0xf8] sm:$0xff]
      %v3990 = vld [vmem:[#allocation3 + $0x100] sm:$0xff]
      %v3991 = vld [vmem:[#allocation3 + $0x108] sm:$0xff]
      %v3992 = vld [vmem:[#allocation3 + $0x110] sm:$0xff]
      %v3993 = vld [vmem:[#allocation3 + $0x118] sm:$0xff]
      %v3994 = vld [vmem:[#allocation3 + $0x120] sm:$0xff]
      %v3995 = vld [vmem:[#allocation3 + $0x128] sm:$0xff]
      %v3996 = vld [vmem:[#allocation3 + $0x130] sm:$0xff]
      %v3997 = vld [vmem:[#allocation3 + $0x138] sm:$0xff]
      %v3999 = vsel %vm694, %v3951, 0
      %v4002 = vsel %vm694, %v3953, 0
      %v4005 = vsel %vm694, %v3955, 0
      %v4008 = vsel %vm694, %v3957, 0
      %4010 = vmatpush.msra.mxu0 %v3988
      %4011 = vmatpush.msra.mxu0 %v3986
      %4012 = vmatpush.msra.mxu0 %v3984
      %4013 = vmatpush.msra.mxu0 %v3982
      %4014 = vmatpush.msra.mxu0 %v3980
      %4015 = vmatpush.msra.mxu0 %v3978
      %4016 = vmatpush.msra.mxu0 %v3976
      %4017 = vmatpush.msra.mxu0 %v3974
      %4018 = vmatpush.msra.mxu0 %v3972
      %4019 = vmatpush.msra.mxu0 %v3970
      %4020 = vmatpush.msra.mxu0 %v3968
      %4021 = vmatpush.msra.mxu0 %v3966
      %4022 = vmatpush.msra.mxu0 %v3964
      %4023 = vmatpush.msra.mxu0 %v3962
      %4024 = vmatpush.msra.mxu0 %v3960
      %4025 = vmatpush.msra.mxu0 %v3958
      %4026 = vmatmul.f32.gmra.mxu0 %v3950
      %v4027 = vpop.f32.mrf.mxu0
      %v4028 = vadd.f32 0.0, %v4027
      %4029 = vmatmul.f32.gmra.mxu0 %v3952
      %v4030 = vpop.f32.mrf.mxu0
      %v4031 = vadd.f32 0.0, %v4030
      %4032 = vmatmul.f32.gmra.mxu0 %v3954
      %v4033 = vpop.f32.mrf.mxu0
      %v4034 = vadd.f32 0.0, %v4033
      %4035 = vmatmul.f32.gmra.mxu0 %v3956
      %v4036 = vpop.f32.mrf.mxu0
      %v4037 = vadd.f32 0.0, %v4036
      %4038 = vdwg.mxu0
      %4039 = vmatpush.msra.mxu0 0.0
      %4040 = vmatpush.msra.mxu0 0.0
      %4041 = vmatpush.msra.mxu0 0.0
      %4042 = vmatpush.msra.mxu0 0.0
      %4043 = vmatpush.msra.mxu0 0.0
      %4044 = vmatpush.msra.mxu0 0.0
      %4045 = vmatpush.msra.mxu0 0.0
      %4046 = vmatpush.msra.mxu0 0.0
      %4047 = vmatpush.msra.mxu0 0.0
      %4048 = vmatpush.msra.mxu0 0.0
      %4049 = vmatpush.msra.mxu0 0.0
      %4050 = vmatpush.msra.mxu0 0.0
      %4051 = vmatpush.msra.mxu0 %v3996
      %4052 = vmatpush.msra.mxu0 %v3994
      %4053 = vmatpush.msra.mxu0 %v3992
      %4054 = vmatpush.msra.mxu0 %v3990
      %4055 = vmatmul.f32.gmra.mxu0 %v3999
      %v4056 = vpop.f32.mrf.mxu0
      %v4057 = vadd.f32 %v4028, %v4056
      %4058 = vmatmul.f32.gmra.mxu0 %v4002
      %v4059 = vpop.f32.mrf.mxu0
      %v4060 = vadd.f32 %v4031, %v4059
      %4061 = vmatmul.f32.gmra.mxu0 %v4005
      %v4062 = vpop.f32.mrf.mxu0
      %v4063 = vadd.f32 %v4034, %v4062
      %4064 = vmatmul.f32.gmra.mxu0 %v4008
      %v4065 = vpop.f32.mrf.mxu0
      %v4066 = vadd.f32 %v4037, %v4065
      %4067 = vdwg.mxu0
      %4068 = vmatpush.msra.mxu0 %v3989
      %4069 = vmatpush.msra.mxu0 %v3987
      %4070 = vmatpush.msra.mxu0 %v3985
      %4071 = vmatpush.msra.mxu0 %v3983
      %4072 = vmatpush.msra.mxu0 %v3981
      %4073 = vmatpush.msra.mxu0 %v3979
      %4074 = vmatpush.msra.mxu0 %v3977
      %4075 = vmatpush.msra.mxu0 %v3975
      %4076 = vmatpush.msra.mxu0 %v3973
      %4077 = vmatpush.msra.mxu0 %v3971
      %4078 = vmatpush.msra.mxu0 %v3969
      %4079 = vmatpush.msra.mxu0 %v3967
      %4080 = vmatpush.msra.mxu0 %v3965
      %4081 = vmatpush.msra.mxu0 %v3963
      %4082 = vmatpush.msra.mxu0 %v3961
      %4083 = vmatpush.msra.mxu0 %v3959
      %4084 = vmatmul.f32.gmra.mxu0 %v3950
      %v4085 = vpop.f32.mrf.mxu0
      %v4086 = vadd.f32 0.0, %v4085
      %4087 = vmatmul.f32.gmra.mxu0 %v3952
      %v4088 = vpop.f32.mrf.mxu0
      %v4089 = vadd.f32 0.0, %v4088
      %4090 = vmatmul.f32.gmra.mxu0 %v3954
      %v4091 = vpop.f32.mrf.mxu0
      %v4092 = vadd.f32 0.0, %v4091
      %4093 = vmatmul.f32.gmra.mxu0 %v3956
      %v4094 = vpop.f32.mrf.mxu0
      %v4095 = vadd.f32 0.0, %v4094
      %4096 = vdwg.mxu0
      %4097 = vmatpush.msra.mxu0 0.0
      %4098 = vmatpush.msra.mxu0 0.0
      %4099 = vmatpush.msra.mxu0 0.0
      %4100 = vmatpush.msra.mxu0 0.0
      %4101 = vmatpush.msra.mxu0 0.0
      %4102 = vmatpush.msra.mxu0 0.0
      %4103 = vmatpush.msra.mxu0 0.0
      %4104 = vmatpush.msra.mxu0 0.0
      %4105 = vmatpush.msra.mxu0 0.0
      %4106 = vmatpush.msra.mxu0 0.0
      %4107 = vmatpush.msra.mxu0 0.0
      %4108 = vmatpush.msra.mxu0 0.0
      %4109 = vmatpush.msra.mxu0 %v3997
      %4110 = vmatpush.msra.mxu0 %v3995
      %4111 = vmatpush.msra.mxu0 %v3993
      %4112 = vmatpush.msra.mxu0 %v3991
      %4113 = vmatmul.f32.gmra.mxu0 %v3999
      %v4114 = vpop.f32.mrf.mxu0
      %v4115 = vadd.f32 %v4086, %v4114
      %4116 = vmatmul.f32.gmra.mxu0 %v4002
      %v4117 = vpop.f32.mrf.mxu0
      %v4118 = vadd.f32 %v4089, %v4117
      %4119 = vmatmul.f32.gmra.mxu0 %v4005
      %v4120 = vpop.f32.mrf.mxu0
      %v4121 = vadd.f32 %v4092, %v4120
      %4122 = vmatmul.f32.gmra.mxu0 %v4008
      %v4123 = vpop.f32.mrf.mxu0
      %v4124 = vadd.f32 %v4095, %v4123
      %4125 = vdwg.mxu0
      %v4126 = vsel %vm1387, %v4057, 0.0
      %v4127 = vsel %vm1388, %v4115, 0.0
      %v4128 = vsel %vm1387, %v4060, 0.0
      %v4129 = vsel %vm1388, %v4118, 0.0
      %v4130 = vsel %vm1387, %v4063, 0.0
      %v4131 = vsel %vm1388, %v4121, 0.0
      %v4132 = vsel %vm1387, %v4066, 0.0
      %v4133 = vsel %vm1388, %v4124, 0.0
      %v4134 = vadd.f32 %v3581, %v4126
      %v4135 = vadd.f32 %v3582, %v4127
      %v4136 = vadd.f32 %v3583, %v4128
      %v4137 = vadd.f32 %v3584, %v4129
      %v4138 = vadd.f32 %v3585, %v4130
      %v4139 = vadd.f32 %v3586, %v4131
      %v4140 = vadd.f32 %v3587, %v4132
      %v4141 = vadd.f32 %v3588, %v4133
      %v4142 = vld [vmem:[#allocation2] sm:$0xff]
      %v4143 = vld [vmem:[#allocation2 + $0x8] sm:$0xff]
      %v4144 = vld [vmem:[#allocation2 + $0x10] sm:$0xff]
      %v4145 = vld [vmem:[#allocation2 + $0x20] sm:$0xff]
      %v4146 = vld [vmem:[#allocation2 + $0x28] sm:$0xff]
      %v4147 = vld [vmem:[#allocation2 + $0x30] sm:$0xff]
      %v4148 = vld [vmem:[#allocation2 + $0x40] sm:$0xff]
      %v4149 = vld [vmem:[#allocation2 + $0x48] sm:$0xff]
      %v4150 = vld [vmem:[#allocation2 + $0x50] sm:$0xff]
      %v4151 = vld [vmem:[#allocation2 + $0x60] sm:$0xff]
      %v4152 = vld [vmem:[#allocation2 + $0x68] sm:$0xff]
      %v4153 = vld [vmem:[#allocation2 + $0x70] sm:$0xff]
      %4166 = vrot.lane.b32.xlu0 %v4142, 32
      %v4167 = vpop.permute.xlu0 %4166
      %4168 = vrot.lane.b32.xlu0 %v4143, 32
      %v4169 = vpop.permute.xlu0 %4168
      %4170 = vrot.lane.b32.xlu0 %v4144, 32
      %v4171 = vpop.permute.xlu0 %4170
      %4172 = vrot.lane.b32.xlu0 %v4145, 32
      %v4173 = vpop.permute.xlu0 %4172
      %4174 = vrot.lane.b32.xlu0 %v4146, 32
      %v4175 = vpop.permute.xlu0 %4174
      %4176 = vrot.lane.b32.xlu0 %v4147, 32
      %v4177 = vpop.permute.xlu0 %4176
      %4178 = vrot.lane.b32.xlu0 %v4148, 32
      %v4179 = vpop.permute.xlu0 %4178
      %4180 = vrot.lane.b32.xlu0 %v4149, 32
      %v4181 = vpop.permute.xlu0 %4180
      %4182 = vrot.lane.b32.xlu0 %v4150, 32
      %v4183 = vpop.permute.xlu0 %4182
      %4184 = vrot.lane.b32.xlu0 %v4151, 32
      %v4185 = vpop.permute.xlu0 %4184
      %4186 = vrot.lane.b32.xlu0 %v4152, 32
      %v4187 = vpop.permute.xlu0 %4186
      %4188 = vrot.lane.b32.xlu0 %v4153, 32
      %v4189 = vpop.permute.xlu0 %4188
      %v4190 = vsel %vm694, %v4167, %v4169
      %v4191 = vsel %vm694, %v4169, %v4171
      %v4192 = vsel %vm694, %v4173, %v4175
      %v4193 = vsel %vm694, %v4175, %v4177
      %v4194 = vsel %vm694, %v4179, %v4181
      %v4195 = vsel %vm694, %v4181, %v4183
      %v4196 = vsel %vm694, %v4185, %v4187
      %v4197 = vsel %vm694, %v4187, %v4189
      %4206 = vst [vmem:[#allocation3] sm:$0xff] %v4190
      %4207 = vst [vmem:[#allocation3 + $0x8] sm:$0xff] %v4191
      %4208 = vst [vmem:[#allocation3 + $0x10] sm:$0xff] %v4192
      %4209 = vst [vmem:[#allocation3 + $0x18] sm:$0xff] %v4193
      %4210 = vst [vmem:[#allocation3 + $0x20] sm:$0xff] %v4194
      %4211 = vst [vmem:[#allocation3 + $0x28] sm:$0xff] %v4195
      %4212 = vst [vmem:[#allocation3 + $0x30] sm:$0xff] %v4196
      %4213 = vst [vmem:[#allocation3 + $0x38] sm:$0xff] %v4197
      %v4214 = vld [vmem:[#allocation2] sm:$0xff]
      %v4215 = vld [vmem:[#allocation2 + $0x8] sm:$0xff]
      %v4216 = vld [vmem:[#allocation2 + $0x10] sm:$0xff]
      %v4217 = vld [vmem:[#allocation2 + $0x20] sm:$0xff]
      %v4218 = vld [vmem:[#allocation2 + $0x28] sm:$0xff]
      %v4219 = vld [vmem:[#allocation2 + $0x30] sm:$0xff]
      %v4220 = vld [vmem:[#allocation2 + $0x40] sm:$0xff]
      %v4221 = vld [vmem:[#allocation2 + $0x48] sm:$0xff]
      %v4222 = vld [vmem:[#allocation2 + $0x50] sm:$0xff]
      %v4223 = vld [vmem:[#allocation2 + $0x60] sm:$0xff]
      %v4224 = vld [vmem:[#allocation2 + $0x68] sm:$0xff]
      %v4225 = vld [vmem:[#allocation2 + $0x70] sm:$0xff]
      %4238 = vrot.lane.b32.xlu0 %v4214, 16
      %v4239 = vpop.permute.xlu0 %4238
      %4240 = vrot.lane.b32.xlu0 %v4215, 16
      %v4241 = vpop.permute.xlu0 %4240
      %4242 = vrot.lane.b32.xlu0 %v4216, 16
      %v4243 = vpop.permute.xlu0 %4242
      %4244 = vrot.lane.b32.xlu0 %v4217, 16
      %v4245 = vpop.permute.xlu0 %4244
      %4246 = vrot.lane.b32.xlu0 %v4218, 16
      %v4247 = vpop.permute.xlu0 %4246
      %4248 = vrot.lane.b32.xlu0 %v4219, 16
      %v4249 = vpop.permute.xlu0 %4248
      %4250 = vrot.lane.b32.xlu0 %v4220, 16
      %v4251 = vpop.permute.xlu0 %4250
      %4252 = vrot.lane.b32.xlu0 %v4221, 16
      %v4253 = vpop.permute.xlu0 %4252
      %4254 = vrot.lane.b32.xlu0 %v4222, 16
      %v4255 = vpop.permute.xlu0 %4254
      %4256 = vrot.lane.b32.xlu0 %v4223, 16
      %v4257 = vpop.permute.xlu0 %4256
      %4258 = vrot.lane.b32.xlu0 %v4224, 16
      %v4259 = vpop.permute.xlu0 %4258
      %4260 = vrot.lane.b32.xlu0 %v4225, 16
      %v4261 = vpop.permute.xlu0 %4260
      %v4262 = vsel %vm1525, %v4239, %v4241
      %v4263 = vsel %vm1525, %v4241, %v4243
      %v4264 = vsel %vm1525, %v4245, %v4247
      %v4265 = vsel %vm1525, %v4247, %v4249
      %v4266 = vsel %vm1525, %v4251, %v4253
      %v4267 = vsel %vm1525, %v4253, %v4255
      %v4268 = vsel %vm1525, %v4257, %v4259
      %v4269 = vsel %vm1525, %v4259, %v4261
      %4278 = vst [vmem:[#allocation3 + $0x40] sm:$0xff] %v4262
      %4279 = vst [vmem:[#allocation3 + $0x48] sm:$0xff] %v4263
      %4280 = vst [vmem:[#allocation3 + $0x50] sm:$0xff] %v4264
      %4281 = vst [vmem:[#allocation3 + $0x58] sm:$0xff] %v4265
      %4282 = vst [vmem:[#allocation3 + $0x60] sm:$0xff] %v4266
      %4283 = vst [vmem:[#allocation3 + $0x68] sm:$0xff] %v4267
      %4284 = vst [vmem:[#allocation3 + $0x70] sm:$0xff] %v4268
      %4285 = vst [vmem:[#allocation3 + $0x78] sm:$0xff] %v4269
      %v4286 = vld [vmem:[#allocation2 + $0x8] sm:$0xff]
      %v4287 = vld [vmem:[#allocation2 + $0x10] sm:$0xff]
      %v4288 = vld [vmem:[#allocation2 + $0x28] sm:$0xff]
      %v4289 = vld [vmem:[#allocation2 + $0x30] sm:$0xff]
      %v4290 = vld [vmem:[#allocation2 + $0x48] sm:$0xff]
      %v4291 = vld [vmem:[#allocation2 + $0x50] sm:$0xff]
      %v4292 = vld [vmem:[#allocation2 + $0x68] sm:$0xff]
      %v4293 = vld [vmem:[#allocation2 + $0x70] sm:$0xff]
      %4294 = vst [vmem:[#allocation3 + $0x80] sm:$0xff] %v4286
      %4295 = vst [vmem:[#allocation3 + $0x88] sm:$0xff] %v4287
      %4296 = vst [vmem:[#allocation3 + $0x90] sm:$0xff] %v4288
      %4297 = vst [vmem:[#allocation3 + $0x98] sm:$0xff] %v4289
      %4298 = vst [vmem:[#allocation3 + $0xa0] sm:$0xff] %v4290
      %4299 = vst [vmem:[#allocation3 + $0xa8] sm:$0xff] %v4291
      %4300 = vst [vmem:[#allocation3 + $0xb0] sm:$0xff] %v4292
      %4301 = vst [vmem:[#allocation3 + $0xb8] sm:$0xff] %v4293
      %v4302 = vld [vmem:[#allocation2 + $0x8] sm:$0xff]
      %v4303 = vld [vmem:[#allocation2 + $0x10] sm:$0xff]
      %v4304 = vld [vmem:[#allocation2 + $0x18] sm:$0xff]
      %v4305 = vld [vmem:[#allocation2 + $0x28] sm:$0xff]
      %v4306 = vld [vmem:[#allocation2 + $0x30] sm:$0xff]
      %v4307 = vld [vmem:[#allocation2 + $0x38] sm:$0xff]
      %v4308 = vld [vmem:[#allocation2 + $0x48] sm:$0xff]
      %v4309 = vld [vmem:[#allocation2 + $0x50] sm:$0xff]
      %v4310 = vld [vmem:[#allocation2 + $0x58] sm:$0xff]
      %v4311 = vld [vmem:[#allocation2 + $0x68] sm:$0xff]
      %v4312 = vld [vmem:[#allocation2 + $0x70] sm:$0xff]
      %v4313 = vld [vmem:[#allocation2 + $0x78] sm:$0xff]
      %4326 = vrot.lane.b32.xlu0 %v4302, 112
      %v4327 = vpop.permute.xlu0 %4326
      %4328 = vrot.lane.b32.xlu0 %v4303, 112
      %v4329 = vpop.permute.xlu0 %4328
      %4330 = vrot.lane.b32.xlu0 %v4304, 112
      %v4331 = vpop.permute.xlu0 %4330
      %4332 = vrot.lane.b32.xlu0 %v4305, 112
      %v4333 = vpop.permute.xlu0 %4332
      %4334 = vrot.lane.b32.xlu0 %v4306, 112
      %v4335 = vpop.permute.xlu0 %4334
      %4336 = vrot.lane.b32.xlu0 %v4307, 112
      %v4337 = vpop.permute.xlu0 %4336
      %4338 = vrot.lane.b32.xlu0 %v4308, 112
      %v4339 = vpop.permute.xlu0 %4338
      %4340 = vrot.lane.b32.xlu0 %v4309, 112
      %v4341 = vpop.permute.xlu0 %4340
      %4342 = vrot.lane.b32.xlu0 %v4310, 112
      %v4343 = vpop.permute.xlu0 %4342
      %4344 = vrot.lane.b32.xlu0 %v4311, 112
      %v4345 = vpop.permute.xlu0 %4344
      %4346 = vrot.lane.b32.xlu0 %v4312, 112
      %v4347 = vpop.permute.xlu0 %4346
      %4348 = vrot.lane.b32.xlu0 %v4313, 112
      %v4349 = vpop.permute.xlu0 %4348
      %v4350 = vsel %vm1614, %v4327, %v4329
      %v4351 = vsel %vm1614, %v4329, %v4331
      %v4352 = vsel %vm1614, %v4333, %v4335
      %v4353 = vsel %vm1614, %v4335, %v4337
      %v4354 = vsel %vm1614, %v4339, %v4341
      %v4355 = vsel %vm1614, %v4341, %v4343
      %v4356 = vsel %vm1614, %v4345, %v4347
      %v4357 = vsel %vm1614, %v4347, %v4349
      %4366 = vst [vmem:[#allocation3 + $0xc0] sm:$0xff] %v4350
      %4367 = vst [vmem:[#allocation3 + $0xc8] sm:$0xff] %v4351
      %4368 = vst [vmem:[#allocation3 + $0xd0] sm:$0xff] %v4352
      %4369 = vst [vmem:[#allocation3 + $0xd8] sm:$0xff] %v4353
      %4370 = vst [vmem:[#allocation3 + $0xe0] sm:$0xff] %v4354
      %4371 = vst [vmem:[#allocation3 + $0xe8] sm:$0xff] %v4355
      %4372 = vst [vmem:[#allocation3 + $0xf0] sm:$0xff] %v4356
      %4373 = vst [vmem:[#allocation3 + $0xf8] sm:$0xff] %v4357
      %v4374 = vld [vmem:[#allocation2 + $0x8] sm:$0xff]
      %v4375 = vld [vmem:[#allocation2 + $0x10] sm:$0xff]
      %v4376 = vld [vmem:[#allocation2 + $0x18] sm:$0xff]
      %v4377 = vld [vmem:[#allocation2 + $0x28] sm:$0xff]
      %v4378 = vld [vmem:[#allocation2 + $0x30] sm:$0xff]
      %v4379 = vld [vmem:[#allocation2 + $0x38] sm:$0xff]
      %v4380 = vld [vmem:[#allocation2 + $0x48] sm:$0xff]
      %v4381 = vld [vmem:[#allocation2 + $0x50] sm:$0xff]
      %v4382 = vld [vmem:[#allocation2 + $0x58] sm:$0xff]
      %v4383 = vld [vmem:[#allocation2 + $0x68] sm:$0xff]
      %v4384 = vld [vmem:[#allocation2 + $0x70] sm:$0xff]
      %v4385 = vld [vmem:[#allocation2 + $0x78] sm:$0xff]
      %4398 = vrot.lane.b32.xlu0 %v4374, 96
      %v4399 = vpop.permute.xlu0 %4398
      %4400 = vrot.lane.b32.xlu0 %v4375, 96
      %v4401 = vpop.permute.xlu0 %4400
      %4402 = vrot.lane.b32.xlu0 %v4376, 96
      %v4403 = vpop.permute.xlu0 %4402
      %4404 = vrot.lane.b32.xlu0 %v4377, 96
      %v4405 = vpop.permute.xlu0 %4404
      %4406 = vrot.lane.b32.xlu0 %v4378, 96
      %v4407 = vpop.permute.xlu0 %4406
      %4408 = vrot.lane.b32.xlu0 %v4379, 96
      %v4409 = vpop.permute.xlu0 %4408
      %4410 = vrot.lane.b32.xlu0 %v4380, 96
      %v4411 = vpop.permute.xlu0 %4410
      %4412 = vrot.lane.b32.xlu0 %v4381, 96
      %v4413 = vpop.permute.xlu0 %4412
      %4414 = vrot.lane.b32.xlu0 %v4382, 96
      %v4415 = vpop.permute.xlu0 %4414
      %4416 = vrot.lane.b32.xlu0 %v4383, 96
      %v4417 = vpop.permute.xlu0 %4416
      %4418 = vrot.lane.b32.xlu0 %v4384, 96
      %v4419 = vpop.permute.xlu0 %4418
      %4420 = vrot.lane.b32.xlu0 %v4385, 96
      %v4421 = vpop.permute.xlu0 %4420
      %v4422 = vsel %vm1687, %v4399, %v4401
      %v4423 = vsel %vm1687, %v4401, %v4403
      %v4424 = vsel %vm1687, %v4405, %v4407
      %v4425 = vsel %vm1687, %v4407, %v4409
      %v4426 = vsel %vm1687, %v4411, %v4413
      %v4427 = vsel %vm1687, %v4413, %v4415
      %v4428 = vsel %vm1687, %v4417, %v4419
      %v4429 = vsel %vm1687, %v4419, %v4421
      %4438 = vst [vmem:[#allocation3 + $0x100] sm:$0xff] %v4422
      %4439 = vst [vmem:[#allocation3 + $0x108] sm:$0xff] %v4423
      %4440 = vst [vmem:[#allocation3 + $0x110] sm:$0xff] %v4424
      %4441 = vst [vmem:[#allocation3 + $0x118] sm:$0xff] %v4425
      %4442 = vst [vmem:[#allocation3 + $0x120] sm:$0xff] %v4426
      %4443 = vst [vmem:[#allocation3 + $0x128] sm:$0xff] %v4427
      %4444 = vst [vmem:[#allocation3 + $0x130] sm:$0xff] %v4428
      %4445 = vst [vmem:[#allocation3 + $0x138] sm:$0xff] %v4429
      %s4446 = scalar_lea.vmem %s2, 128
      %v4447 = vld [vmem:[%s4446] sm:$0xff]
      %v4448 = vld [vmem:[%s4446 + $0x8] sm:$0xff]
      %v4449 = vld [vmem:[%s4446 + $0x10] sm:$0xff]
      %v4450 = vld [vmem:[%s4446 + $0x18] sm:$0xff]
      %v4451 = vld [vmem:[%s4446 + $0x20] sm:$0xff]
      %v4452 = vld [vmem:[%s4446 + $0x28] sm:$0xff]
      %v4453 = vld [vmem:[%s4446 + $0x30] sm:$0xff]
      %v4454 = vld [vmem:[%s4446 + $0x38] sm:$0xff]
      %v4455 = vld [vmem:[#allocation3] sm:$0xff]
      %v4456 = vld [vmem:[#allocation3 + $0x8] sm:$0xff]
      %v4457 = vld [vmem:[#allocation3 + $0x10] sm:$0xff]
      %v4458 = vld [vmem:[#allocation3 + $0x18] sm:$0xff]
      %v4459 = vld [vmem:[#allocation3 + $0x20] sm:$0xff]
      %v4460 = vld [vmem:[#allocation3 + $0x28] sm:$0xff]
      %v4461 = vld [vmem:[#allocation3 + $0x30] sm:$0xff]
      %v4462 = vld [vmem:[#allocation3 + $0x38] sm:$0xff]
      %v4463 = vld [vmem:[#allocation3 + $0x40] sm:$0xff]
      %v4464 = vld [vmem:[#allocation3 + $0x48] sm:$0xff]
      %v4465 = vld [vmem:[#allocation3 + $0x50] sm:$0xff]
      %v4466 = vld [vmem:[#allocation3 + $0x58] sm:$0xff]
      %v4467 = vld [vmem:[#allocation3 + $0x60] sm:$0xff]
      %v4468 = vld [vmem:[#allocation3 + $0x68] sm:$0xff]
      %v4469 = vld [vmem:[#allocation3 + $0x70] sm:$0xff]
      %v4470 = vld [vmem:[#allocation3 + $0x78] sm:$0xff]
      %v4471 = vld [vmem:[#allocation3 + $0x80] sm:$0xff]
      %v4472 = vld [vmem:[#allocation3 + $0x88] sm:$0xff]
      %v4473 = vld [vmem:[#allocation3 + $0x90] sm:$0xff]
      %v4474 = vld [vmem:[#allocation3 + $0x98] sm:$0xff]
      %v4475 = vld [vmem:[#allocation3 + $0xa0] sm:$0xff]
      %v4476 = vld [vmem:[#allocation3 + $0xa8] sm:$0xff]
      %v4477 = vld [vmem:[#allocation3 + $0xb0] sm:$0xff]
      %v4478 = vld [vmem:[#allocation3 + $0xb8] sm:$0xff]
      %v4479 = vld [vmem:[#allocation3 + $0xc0] sm:$0xff]
      %v4480 = vld [vmem:[#allocation3 + $0xc8] sm:$0xff]
      %v4481 = vld [vmem:[#allocation3 + $0xd0] sm:$0xff]
      %v4482 = vld [vmem:[#allocation3 + $0xd8] sm:$0xff]
      %v4483 = vld [vmem:[#allocation3 + $0xe0] sm:$0xff]
      %v4484 = vld [vmem:[#allocation3 + $0xe8] sm:$0xff]
      %v4485 = vld [vmem:[#allocation3 + $0xf0] sm:$0xff]
      %v4486 = vld [vmem:[#allocation3 + $0xf8] sm:$0xff]
      %v4487 = vld [vmem:[#allocation3 + $0x100] sm:$0xff]
      %v4488 = vld [vmem:[#allocation3 + $0x108] sm:$0xff]
      %v4489 = vld [vmem:[#allocation3 + $0x110] sm:$0xff]
      %v4490 = vld [vmem:[#allocation3 + $0x118] sm:$0xff]
      %v4491 = vld [vmem:[#allocation3 + $0x120] sm:$0xff]
      %v4492 = vld [vmem:[#allocation3 + $0x128] sm:$0xff]
      %v4493 = vld [vmem:[#allocation3 + $0x130] sm:$0xff]
      %v4494 = vld [vmem:[#allocation3 + $0x138] sm:$0xff]
      %v4496 = vsel %vm694, %v4448, 0
      %v4499 = vsel %vm694, %v4450, 0
      %v4502 = vsel %vm694, %v4452, 0
      %v4505 = vsel %vm694, %v4454, 0
      %4507 = vmatpush.msra.mxu0 %v4485
      %4508 = vmatpush.msra.mxu0 %v4483
      %4509 = vmatpush.msra.mxu0 %v4481
      %4510 = vmatpush.msra.mxu0 %v4479
      %4511 = vmatpush.msra.mxu0 %v4477
      %4512 = vmatpush.msra.mxu0 %v4475
      %4513 = vmatpush.msra.mxu0 %v4473
      %4514 = vmatpush.msra.mxu0 %v4471
      %4515 = vmatpush.msra.mxu0 %v4469
      %4516 = vmatpush.msra.mxu0 %v4467
      %4517 = vmatpush.msra.mxu0 %v4465
      %4518 = vmatpush.msra.mxu0 %v4463
      %4519 = vmatpush.msra.mxu0 %v4461
      %4520 = vmatpush.msra.mxu0 %v4459
      %4521 = vmatpush.msra.mxu0 %v4457
      %4522 = vmatpush.msra.mxu0 %v4455
      %4523 = vmatmul.f32.gmra.mxu0 %v4447
      %v4524 = vpop.f32.mrf.mxu0
      %v4525 = vadd.f32 0.0, %v4524
      %4526 = vmatmul.f32.gmra.mxu0 %v4449
      %v4527 = vpop.f32.mrf.mxu0
      %v4528 = vadd.f32 0.0, %v4527
      %4529 = vmatmul.f32.gmra.mxu0 %v4451
      %v4530 = vpop.f32.mrf.mxu0
      %v4531 = vadd.f32 0.0, %v4530
      %4532 = vmatmul.f32.gmra.mxu0 %v4453
      %v4533 = vpop.f32.mrf.mxu0
      %v4534 = vadd.f32 0.0, %v4533
      %4535 = vdwg.mxu0
      %4536 = vmatpush.msra.mxu0 0.0
      %4537 = vmatpush.msra.mxu0 0.0
      %4538 = vmatpush.msra.mxu0 0.0
      %4539 = vmatpush.msra.mxu0 0.0
      %4540 = vmatpush.msra.mxu0 0.0
      %4541 = vmatpush.msra.mxu0 0.0
      %4542 = vmatpush.msra.mxu0 0.0
      %4543 = vmatpush.msra.mxu0 0.0
      %4544 = vmatpush.msra.mxu0 0.0
      %4545 = vmatpush.msra.mxu0 0.0
      %4546 = vmatpush.msra.mxu0 0.0
      %4547 = vmatpush.msra.mxu0 0.0
      %4548 = vmatpush.msra.mxu0 %v4493
      %4549 = vmatpush.msra.mxu0 %v4491
      %4550 = vmatpush.msra.mxu0 %v4489
      %4551 = vmatpush.msra.mxu0 %v4487
      %4552 = vmatmul.f32.gmra.mxu0 %v4496
      %v4553 = vpop.f32.mrf.mxu0
      %v4554 = vadd.f32 %v4525, %v4553
      %4555 = vmatmul.f32.gmra.mxu0 %v4499
      %v4556 = vpop.f32.mrf.mxu0
      %v4557 = vadd.f32 %v4528, %v4556
      %4558 = vmatmul.f32.gmra.mxu0 %v4502
      %v4559 = vpop.f32.mrf.mxu0
      %v4560 = vadd.f32 %v4531, %v4559
      %4561 = vmatmul.f32.gmra.mxu0 %v4505
      %v4562 = vpop.f32.mrf.mxu0
      %v4563 = vadd.f32 %v4534, %v4562
      %4564 = vdwg.mxu0
      %4565 = vmatpush.msra.mxu0 %v4486
      %4566 = vmatpush.msra.mxu0 %v4484
      %4567 = vmatpush.msra.mxu0 %v4482
      %4568 = vmatpush.msra.mxu0 %v4480
      %4569 = vmatpush.msra.mxu0 %v4478
      %4570 = vmatpush.msra.mxu0 %v4476
      %4571 = vmatpush.msra.mxu0 %v4474
      %4572 = vmatpush.msra.mxu0 %v4472
      %4573 = vmatpush.msra.mxu0 %v4470
      %4574 = vmatpush.msra.mxu0 %v4468
      %4575 = vmatpush.msra.mxu0 %v4466
      %4576 = vmatpush.msra.mxu0 %v4464
      %4577 = vmatpush.msra.mxu0 %v4462
      %4578 = vmatpush.msra.mxu0 %v4460
      %4579 = vmatpush.msra.mxu0 %v4458
      %4580 = vmatpush.msra.mxu0 %v4456
      %4581 = vmatmul.f32.gmra.mxu0 %v4447
      %v4582 = vpop.f32.mrf.mxu0
      %v4583 = vadd.f32 0.0, %v4582
      %4584 = vmatmul.f32.gmra.mxu0 %v4449
      %v4585 = vpop.f32.mrf.mxu0
      %v4586 = vadd.f32 0.0, %v4585
      %4587 = vmatmul.f32.gmra.mxu0 %v4451
      %v4588 = vpop.f32.mrf.mxu0
      %v4589 = vadd.f32 0.0, %v4588
      %4590 = vmatmul.f32.gmra.mxu0 %v4453
      %v4591 = vpop.f32.mrf.mxu0
      %v4592 = vadd.f32 0.0, %v4591
      %4593 = vdwg.mxu0
      %4594 = vmatpush.msra.mxu0 0.0
      %4595 = vmatpush.msra.mxu0 0.0
      %4596 = vmatpush.msra.mxu0 0.0
      %4597 = vmatpush.msra.mxu0 0.0
      %4598 = vmatpush.msra.mxu0 0.0
      %4599 = vmatpush.msra.mxu0 0.0
      %4600 = vmatpush.msra.mxu0 0.0
      %4601 = vmatpush.msra.mxu0 0.0
      %4602 = vmatpush.msra.mxu0 0.0
      %4603 = vmatpush.msra.mxu0 0.0
      %4604 = vmatpush.msra.mxu0 0.0
      %4605 = vmatpush.msra.mxu0 0.0
      %4606 = vmatpush.msra.mxu0 %v4494
      %4607 = vmatpush.msra.mxu0 %v4492
      %4608 = vmatpush.msra.mxu0 %v4490
      %4609 = vmatpush.msra.mxu0 %v4488
      %4610 = vmatmul.f32.gmra.mxu0 %v4496
      %v4611 = vpop.f32.mrf.mxu0
      %v4612 = vadd.f32 %v4583, %v4611
      %4613 = vmatmul.f32.gmra.mxu0 %v4499
      %v4614 = vpop.f32.mrf.mxu0
      %v4615 = vadd.f32 %v4586, %v4614
      %4616 = vmatmul.f32.gmra.mxu0 %v4502
      %v4617 = vpop.f32.mrf.mxu0
      %v4618 = vadd.f32 %v4589, %v4617
      %4619 = vmatmul.f32.gmra.mxu0 %v4505
      %v4620 = vpop.f32.mrf.mxu0
      %v4621 = vadd.f32 %v4592, %v4620
      %4622 = vdwg.mxu0
      %v4623 = vadd.f32 %v4134, %v4554
      %v4624 = vadd.f32 %v4135, %v4612
      %v4625 = vadd.f32 %v4136, %v4557
      %v4626 = vadd.f32 %v4137, %v4615
      %v4627 = vadd.f32 %v4138, %v4560
      %v4628 = vadd.f32 %v4139, %v4618
      %v4629 = vadd.f32 %v4140, %v4563
      %v4630 = vadd.f32 %v4141, %v4621
      %v4631 = vld [vmem:[#allocation2] sm:$0xff]
      %v4632 = vld [vmem:[#allocation2 + $0x8] sm:$0xff]
      %v4633 = vld [vmem:[#allocation2 + $0x10] sm:$0xff]
      %v4634 = vld [vmem:[#allocation2 + $0x20] sm:$0xff]
      %v4635 = vld [vmem:[#allocation2 + $0x28] sm:$0xff]
      %v4636 = vld [vmem:[#allocation2 + $0x30] sm:$0xff]
      %v4637 = vld [vmem:[#allocation2 + $0x40] sm:$0xff]
      %v4638 = vld [vmem:[#allocation2 + $0x48] sm:$0xff]
      %v4639 = vld [vmem:[#allocation2 + $0x50] sm:$0xff]
      %v4640 = vld [vmem:[#allocation2 + $0x60] sm:$0xff]
      %v4641 = vld [vmem:[#allocation2 + $0x68] sm:$0xff]
      %v4642 = vld [vmem:[#allocation2 + $0x70] sm:$0xff]
      %4655 = vrot.lane.b32.xlu0 %v4631, 31
      %v4656 = vpop.permute.xlu0 %4655
      %4657 = vrot.lane.b32.xlu0 %v4632, 31
      %v4658 = vpop.permute.xlu0 %4657
      %4659 = vrot.lane.b32.xlu0 %v4633, 31
      %v4660 = vpop.permute.xlu0 %4659
      %4661 = vrot.lane.b32.xlu0 %v4634, 31
      %v4662 = vpop.permute.xlu0 %4661
      %4663 = vrot.lane.b32.xlu0 %v4635, 31
      %v4664 = vpop.permute.xlu0 %4663
      %4665 = vrot.lane.b32.xlu0 %v4636, 31
      %v4666 = vpop.permute.xlu0 %4665
      %4667 = vrot.lane.b32.xlu0 %v4637, 31
      %v4668 = vpop.permute.xlu0 %4667
      %4669 = vrot.lane.b32.xlu0 %v4638, 31
      %v4670 = vpop.permute.xlu0 %4669
      %4671 = vrot.lane.b32.xlu0 %v4639, 31
      %v4672 = vpop.permute.xlu0 %4671
      %4673 = vrot.lane.b32.xlu0 %v4640, 31
      %v4674 = vpop.permute.xlu0 %4673
      %4675 = vrot.lane.b32.xlu0 %v4641, 31
      %v4676 = vpop.permute.xlu0 %4675
      %4677 = vrot.lane.b32.xlu0 %v4642, 31
      %v4678 = vpop.permute.xlu0 %4677
      %v4679 = vsel %vm1945, %v4656, %v4658
      %v4680 = vsel %vm1945, %v4658, %v4660
      %v4681 = vsel %vm1945, %v4662, %v4664
      %v4682 = vsel %vm1945, %v4664, %v4666
      %v4683 = vsel %vm1945, %v4668, %v4670
      %v4684 = vsel %vm1945, %v4670, %v4672
      %v4685 = vsel %vm1945, %v4674, %v4676
      %v4686 = vsel %vm1945, %v4676, %v4678
      %4695 = vst [vmem:[#allocation3] sm:$0xff] %v4679
      %4696 = vst [vmem:[#allocation3 + $0x8] sm:$0xff] %v4680
      %4697 = vst [vmem:[#allocation3 + $0x10] sm:$0xff] %v4681
      %4698 = vst [vmem:[#allocation3 + $0x18] sm:$0xff] %v4682
      %4699 = vst [vmem:[#allocation3 + $0x20] sm:$0xff] %v4683
      %4700 = vst [vmem:[#allocation3 + $0x28] sm:$0xff] %v4684
      %4701 = vst [vmem:[#allocation3 + $0x30] sm:$0xff] %v4685
      %4702 = vst [vmem:[#allocation3 + $0x38] sm:$0xff] %v4686
      %v4703 = vld [vmem:[#allocation2] sm:$0xff]
      %v4704 = vld [vmem:[#allocation2 + $0x8] sm:$0xff]
      %v4705 = vld [vmem:[#allocation2 + $0x10] sm:$0xff]
      %v4706 = vld [vmem:[#allocation2 + $0x20] sm:$0xff]
      %v4707 = vld [vmem:[#allocation2 + $0x28] sm:$0xff]
      %v4708 = vld [vmem:[#allocation2 + $0x30] sm:$0xff]
      %v4709 = vld [vmem:[#allocation2 + $0x40] sm:$0xff]
      %v4710 = vld [vmem:[#allocation2 + $0x48] sm:$0xff]
      %v4711 = vld [vmem:[#allocation2 + $0x50] sm:$0xff]
      %v4712 = vld [vmem:[#allocation2 + $0x60] sm:$0xff]
      %v4713 = vld [vmem:[#allocation2 + $0x68] sm:$0xff]
      %v4714 = vld [vmem:[#allocation2 + $0x70] sm:$0xff]
      %4727 = vrot.lane.b32.xlu0 %v4703, 15
      %v4728 = vpop.permute.xlu0 %4727
      %4729 = vrot.lane.b32.xlu0 %v4704, 15
      %v4730 = vpop.permute.xlu0 %4729
      %4731 = vrot.lane.b32.xlu0 %v4705, 15
      %v4732 = vpop.permute.xlu0 %4731
      %4733 = vrot.lane.b32.xlu0 %v4706, 15
      %v4734 = vpop.permute.xlu0 %4733
      %4735 = vrot.lane.b32.xlu0 %v4707, 15
      %v4736 = vpop.permute.xlu0 %4735
      %4737 = vrot.lane.b32.xlu0 %v4708, 15
      %v4738 = vpop.permute.xlu0 %4737
      %4739 = vrot.lane.b32.xlu0 %v4709, 15
      %v4740 = vpop.permute.xlu0 %4739
      %4741 = vrot.lane.b32.xlu0 %v4710, 15
      %v4742 = vpop.permute.xlu0 %4741
      %4743 = vrot.lane.b32.xlu0 %v4711, 15
      %v4744 = vpop.permute.xlu0 %4743
      %4745 = vrot.lane.b32.xlu0 %v4712, 15
      %v4746 = vpop.permute.xlu0 %4745
      %4747 = vrot.lane.b32.xlu0 %v4713, 15
      %v4748 = vpop.permute.xlu0 %4747
      %4749 = vrot.lane.b32.xlu0 %v4714, 15
      %v4750 = vpop.permute.xlu0 %4749
      %v4751 = vsel %vm2018, %v4728, %v4730
      %v4752 = vsel %vm2018, %v4730, %v4732
      %v4753 = vsel %vm2018, %v4734, %v4736
      %v4754 = vsel %vm2018, %v4736, %v4738
      %v4755 = vsel %vm2018, %v4740, %v4742
      %v4756 = vsel %vm2018, %v4742, %v4744
      %v4757 = vsel %vm2018, %v4746, %v4748
      %v4758 = vsel %vm2018, %v4748, %v4750
      %4767 = vst [vmem:[#allocation3 + $0x40] sm:$0xff] %v4751
      %4768 = vst [vmem:[#allocation3 + $0x48] sm:$0xff] %v4752
      %4769 = vst [vmem:[#allocation3 + $0x50] sm:$0xff] %v4753
      %4770 = vst [vmem:[#allocation3 + $0x58] sm:$0xff] %v4754
      %4771 = vst [vmem:[#allocation3 + $0x60] sm:$0xff] %v4755
      %4772 = vst [vmem:[#allocation3 + $0x68] sm:$0xff] %v4756
      %4773 = vst [vmem:[#allocation3 + $0x70] sm:$0xff] %v4757
      %4774 = vst [vmem:[#allocation3 + $0x78] sm:$0xff] %v4758
      %v4775 = vld [vmem:[#allocation2 + $0x8] sm:$0xff]
      %v4776 = vld [vmem:[#allocation2 + $0x10] sm:$0xff]
      %v4777 = vld [vmem:[#allocation2 + $0x18] sm:$0xff]
      %v4778 = vld [vmem:[#allocation2 + $0x28] sm:$0xff]
      %v4779 = vld [vmem:[#allocation2 + $0x30] sm:$0xff]
      %v4780 = vld [vmem:[#allocation2 + $0x38] sm:$0xff]
      %v4781 = vld [vmem:[#allocation2 + $0x48] sm:$0xff]
      %v4782 = vld [vmem:[#allocation2 + $0x50] sm:$0xff]
      %v4783 = vld [vmem:[#allocation2 + $0x58] sm:$0xff]
      %v4784 = vld [vmem:[#allocation2 + $0x68] sm:$0xff]
      %v4785 = vld [vmem:[#allocation2 + $0x70] sm:$0xff]
      %v4786 = vld [vmem:[#allocation2 + $0x78] sm:$0xff]
      %4799 = vrot.lane.b32.xlu0 %v4775, 127
      %v4800 = vpop.permute.xlu0 %4799
      %4801 = vrot.lane.b32.xlu0 %v4776, 127
      %v4802 = vpop.permute.xlu0 %4801
      %4803 = vrot.lane.b32.xlu0 %v4777, 127
      %v4804 = vpop.permute.xlu0 %4803
      %4805 = vrot.lane.b32.xlu0 %v4778, 127
      %v4806 = vpop.permute.xlu0 %4805
      %4807 = vrot.lane.b32.xlu0 %v4779, 127
      %v4808 = vpop.permute.xlu0 %4807
      %4809 = vrot.lane.b32.xlu0 %v4780, 127
      %v4810 = vpop.permute.xlu0 %4809
      %4811 = vrot.lane.b32.xlu0 %v4781, 127
      %v4812 = vpop.permute.xlu0 %4811
      %4813 = vrot.lane.b32.xlu0 %v4782, 127
      %v4814 = vpop.permute.xlu0 %4813
      %4815 = vrot.lane.b32.xlu0 %v4783, 127
      %v4816 = vpop.permute.xlu0 %4815
      %4817 = vrot.lane.b32.xlu0 %v4784, 127
      %v4818 = vpop.permute.xlu0 %4817
      %4819 = vrot.lane.b32.xlu0 %v4785, 127
      %v4820 = vpop.permute.xlu0 %4819
      %4821 = vrot.lane.b32.xlu0 %v4786, 127
      %v4822 = vpop.permute.xlu0 %4821
      %v4823 = vsel %vm2091, %v4800, %v4802
      %v4824 = vsel %vm2091, %v4802, %v4804
      %v4825 = vsel %vm2091, %v4806, %v4808
      %v4826 = vsel %vm2091, %v4808, %v4810
      %v4827 = vsel %vm2091, %v4812, %v4814
      %v4828 = vsel %vm2091, %v4814, %v4816
      %v4829 = vsel %vm2091, %v4818, %v4820
      %v4830 = vsel %vm2091, %v4820, %v4822
      %4839 = vst [vmem:[#allocation3 + $0x80] sm:$0xff] %v4823
      %4840 = vst [vmem:[#allocation3 + $0x88] sm:$0xff] %v4824
      %4841 = vst [vmem:[#allocation3 + $0x90] sm:$0xff] %v4825
      %4842 = vst [vmem:[#allocation3 + $0x98] sm:$0xff] %v4826
      %4843 = vst [vmem:[#allocation3 + $0xa0] sm:$0xff] %v4827
      %4844 = vst [vmem:[#allocation3 + $0xa8] sm:$0xff] %v4828
      %4845 = vst [vmem:[#allocation3 + $0xb0] sm:$0xff] %v4829
      %4846 = vst [vmem:[#allocation3 + $0xb8] sm:$0xff] %v4830
      %v4847 = vld [vmem:[#allocation2 + $0x8] sm:$0xff]
      %v4848 = vld [vmem:[#allocation2 + $0x10] sm:$0xff]
      %v4849 = vld [vmem:[#allocation2 + $0x18] sm:$0xff]
      %v4850 = vld [vmem:[#allocation2 + $0x28] sm:$0xff]
      %v4851 = vld [vmem:[#allocation2 + $0x30] sm:$0xff]
      %v4852 = vld [vmem:[#allocation2 + $0x38] sm:$0xff]
      %v4853 = vld [vmem:[#allocation2 + $0x48] sm:$0xff]
      %v4854 = vld [vmem:[#allocation2 + $0x50] sm:$0xff]
      %v4855 = vld [vmem:[#allocation2 + $0x58] sm:$0xff]
      %v4856 = vld [vmem:[#allocation2 + $0x68] sm:$0xff]
      %v4857 = vld [vmem:[#allocation2 + $0x70] sm:$0xff]
      %v4858 = vld [vmem:[#allocation2 + $0x78] sm:$0xff]
      %4871 = vrot.lane.b32.xlu0 %v4847, 111
      %v4872 = vpop.permute.xlu0 %4871
      %4873 = vrot.lane.b32.xlu0 %v4848, 111
      %v4874 = vpop.permute.xlu0 %4873
      %4875 = vrot.lane.b32.xlu0 %v4849, 111
      %v4876 = vpop.permute.xlu0 %4875
      %4877 = vrot.lane.b32.xlu0 %v4850, 111
      %v4878 = vpop.permute.xlu0 %4877
      %4879 = vrot.lane.b32.xlu0 %v4851, 111
      %v4880 = vpop.permute.xlu0 %4879
      %4881 = vrot.lane.b32.xlu0 %v4852, 111
      %v4882 = vpop.permute.xlu0 %4881
      %4883 = vrot.lane.b32.xlu0 %v4853, 111
      %v4884 = vpop.permute.xlu0 %4883
      %4885 = vrot.lane.b32.xlu0 %v4854, 111
      %v4886 = vpop.permute.xlu0 %4885
      %4887 = vrot.lane.b32.xlu0 %v4855, 111
      %v4888 = vpop.permute.xlu0 %4887
      %4889 = vrot.lane.b32.xlu0 %v4856, 111
      %v4890 = vpop.permute.xlu0 %4889
      %4891 = vrot.lane.b32.xlu0 %v4857, 111
      %v4892 = vpop.permute.xlu0 %4891
      %4893 = vrot.lane.b32.xlu0 %v4858, 111
      %v4894 = vpop.permute.xlu0 %4893
      %v4895 = vsel %vm2164, %v4872, %v4874
      %v4896 = vsel %vm2164, %v4874, %v4876
      %v4897 = vsel %vm2164, %v4878, %v4880
      %v4898 = vsel %vm2164, %v4880, %v4882
      %v4899 = vsel %vm2164, %v4884, %v4886
      %v4900 = vsel %vm2164, %v4886, %v4888
      %v4901 = vsel %vm2164, %v4890, %v4892
      %v4902 = vsel %vm2164, %v4892, %v4894
      %4911 = vst [vmem:[#allocation3 + $0xc0] sm:$0xff] %v4895
      %4912 = vst [vmem:[#allocation3 + $0xc8] sm:$0xff] %v4896
      %4913 = vst [vmem:[#allocation3 + $0xd0] sm:$0xff] %v4897
      %4914 = vst [vmem:[#allocation3 + $0xd8] sm:$0xff] %v4898
      %4915 = vst [vmem:[#allocation3 + $0xe0] sm:$0xff] %v4899
      %4916 = vst [vmem:[#allocation3 + $0xe8] sm:$0xff] %v4900
      %4917 = vst [vmem:[#allocation3 + $0xf0] sm:$0xff] %v4901
      %4918 = vst [vmem:[#allocation3 + $0xf8] sm:$0xff] %v4902
      %v4919 = vld [vmem:[#allocation2 + $0x8] sm:$0xff]
      %v4920 = vld [vmem:[#allocation2 + $0x10] sm:$0xff]
      %v4921 = vld [vmem:[#allocation2 + $0x18] sm:$0xff]
      %v4922 = vld [vmem:[#allocation2 + $0x28] sm:$0xff]
      %v4923 = vld [vmem:[#allocation2 + $0x30] sm:$0xff]
      %v4924 = vld [vmem:[#allocation2 + $0x38] sm:$0xff]
      %v4925 = vld [vmem:[#allocation2 + $0x48] sm:$0xff]
      %v4926 = vld [vmem:[#allocation2 + $0x50] sm:$0xff]
      %v4927 = vld [vmem:[#allocation2 + $0x58] sm:$0xff]
      %v4928 = vld [vmem:[#allocation2 + $0x68] sm:$0xff]
      %v4929 = vld [vmem:[#allocation2 + $0x70] sm:$0xff]
      %v4930 = vld [vmem:[#allocation2 + $0x78] sm:$0xff]
      %4943 = vrot.lane.b32.xlu0 %v4919, 95
      %v4944 = vpop.permute.xlu0 %4943
      %4945 = vrot.lane.b32.xlu0 %v4920, 95
      %v4946 = vpop.permute.xlu0 %4945
      %4947 = vrot.lane.b32.xlu0 %v4921, 95
      %v4948 = vpop.permute.xlu0 %4947
      %4949 = vrot.lane.b32.xlu0 %v4922, 95
      %v4950 = vpop.permute.xlu0 %4949
      %4951 = vrot.lane.b32.xlu0 %v4923, 95
      %v4952 = vpop.permute.xlu0 %4951
      %4953 = vrot.lane.b32.xlu0 %v4924, 95
      %v4954 = vpop.permute.xlu0 %4953
      %4955 = vrot.lane.b32.xlu0 %v4925, 95
      %v4956 = vpop.permute.xlu0 %4955
      %4957 = vrot.lane.b32.xlu0 %v4926, 95
      %v4958 = vpop.permute.xlu0 %4957
      %4959 = vrot.lane.b32.xlu0 %v4927, 95
      %v4960 = vpop.permute.xlu0 %4959
      %4961 = vrot.lane.b32.xlu0 %v4928, 95
      %v4962 = vpop.permute.xlu0 %4961
      %4963 = vrot.lane.b32.xlu0 %v4929, 95
      %v4964 = vpop.permute.xlu0 %4963
      %4965 = vrot.lane.b32.xlu0 %v4930, 95
      %v4966 = vpop.permute.xlu0 %4965
      %v4967 = vsel %vm2237, %v4944, %v4946
      %v4968 = vsel %vm2237, %v4946, %v4948
      %v4969 = vsel %vm2237, %v4950, %v4952
      %v4970 = vsel %vm2237, %v4952, %v4954
      %v4971 = vsel %vm2237, %v4956, %v4958
      %v4972 = vsel %vm2237, %v4958, %v4960
      %v4973 = vsel %vm2237, %v4962, %v4964
      %v4974 = vsel %vm2237, %v4964, %v4966
      %4983 = vst [vmem:[#allocation3 + $0x100] sm:$0xff] %v4967
      %4984 = vst [vmem:[#allocation3 + $0x108] sm:$0xff] %v4968
      %4985 = vst [vmem:[#allocation3 + $0x110] sm:$0xff] %v4969
      %4986 = vst [vmem:[#allocation3 + $0x118] sm:$0xff] %v4970
      %4987 = vst [vmem:[#allocation3 + $0x120] sm:$0xff] %v4971
      %4988 = vst [vmem:[#allocation3 + $0x128] sm:$0xff] %v4972
      %4989 = vst [vmem:[#allocation3 + $0x130] sm:$0xff] %v4973
      %4990 = vst [vmem:[#allocation3 + $0x138] sm:$0xff] %v4974
      %s4991 = scalar_lea.vmem %s2, 192
      %v4992 = vld [vmem:[%s4991] sm:$0xff]
      %v4993 = vld [vmem:[%s4991 + $0x8] sm:$0xff]
      %v4994 = vld [vmem:[%s4991 + $0x10] sm:$0xff]
      %v4995 = vld [vmem:[%s4991 + $0x18] sm:$0xff]
      %v4996 = vld [vmem:[%s4991 + $0x20] sm:$0xff]
      %v4997 = vld [vmem:[%s4991 + $0x28] sm:$0xff]
      %v4998 = vld [vmem:[%s4991 + $0x30] sm:$0xff]
      %v4999 = vld [vmem:[%s4991 + $0x38] sm:$0xff]
      %v5000 = vld [vmem:[#allocation3] sm:$0xff]
      %v5001 = vld [vmem:[#allocation3 + $0x8] sm:$0xff]
      %v5002 = vld [vmem:[#allocation3 + $0x10] sm:$0xff]
      %v5003 = vld [vmem:[#allocation3 + $0x18] sm:$0xff]
      %v5004 = vld [vmem:[#allocation3 + $0x20] sm:$0xff]
      %v5005 = vld [vmem:[#allocation3 + $0x28] sm:$0xff]
      %v5006 = vld [vmem:[#allocation3 + $0x30] sm:$0xff]
      %v5007 = vld [vmem:[#allocation3 + $0x38] sm:$0xff]
      %v5008 = vld [vmem:[#allocation3 + $0x40] sm:$0xff]
      %v5009 = vld [vmem:[#allocation3 + $0x48] sm:$0xff]
      %v5010 = vld [vmem:[#allocation3 + $0x50] sm:$0xff]
      %v5011 = vld [vmem:[#allocation3 + $0x58] sm:$0xff]
      %v5012 = vld [vmem:[#allocation3 + $0x60] sm:$0xff]
      %v5013 = vld [vmem:[#allocation3 + $0x68] sm:$0xff]
      %v5014 = vld [vmem:[#allocation3 + $0x70] sm:$0xff]
      %v5015 = vld [vmem:[#allocation3 + $0x78] sm:$0xff]
      %v5016 = vld [vmem:[#allocation3 + $0x80] sm:$0xff]
      %v5017 = vld [vmem:[#allocation3 + $0x88] sm:$0xff]
      %v5018 = vld [vmem:[#allocation3 + $0x90] sm:$0xff]
      %v5019 = vld [vmem:[#allocation3 + $0x98] sm:$0xff]
      %v5020 = vld [vmem:[#allocation3 + $0xa0] sm:$0xff]
      %v5021 = vld [vmem:[#allocation3 + $0xa8] sm:$0xff]
      %v5022 = vld [vmem:[#allocation3 + $0xb0] sm:$0xff]
      %v5023 = vld [vmem:[#allocation3 + $0xb8] sm:$0xff]
      %v5024 = vld [vmem:[#allocation3 + $0xc0] sm:$0xff]
      %v5025 = vld [vmem:[#allocation3 + $0xc8] sm:$0xff]
      %v5026 = vld [vmem:[#allocation3 + $0xd0] sm:$0xff]
      %v5027 = vld [vmem:[#allocation3 + $0xd8] sm:$0xff]
      %v5028 = vld [vmem:[#allocation3 + $0xe0] sm:$0xff]
      %v5029 = vld [vmem:[#allocation3 + $0xe8] sm:$0xff]
      %v5030 = vld [vmem:[#allocation3 + $0xf0] sm:$0xff]
      %v5031 = vld [vmem:[#allocation3 + $0xf8] sm:$0xff]
      %v5032 = vld [vmem:[#allocation3 + $0x100] sm:$0xff]
      %v5033 = vld [vmem:[#allocation3 + $0x108] sm:$0xff]
      %v5034 = vld [vmem:[#allocation3 + $0x110] sm:$0xff]
      %v5035 = vld [vmem:[#allocation3 + $0x118] sm:$0xff]
      %v5036 = vld [vmem:[#allocation3 + $0x120] sm:$0xff]
      %v5037 = vld [vmem:[#allocation3 + $0x128] sm:$0xff]
      %v5038 = vld [vmem:[#allocation3 + $0x130] sm:$0xff]
      %v5039 = vld [vmem:[#allocation3 + $0x138] sm:$0xff]
      %v5041 = vsel %vm694, %v4993, 0
      %v5044 = vsel %vm694, %v4995, 0
      %v5047 = vsel %vm694, %v4997, 0
      %v5050 = vsel %vm694, %v4999, 0
      %5052 = vmatpush.msra.mxu0 %v5030
      %5053 = vmatpush.msra.mxu0 %v5028
      %5054 = vmatpush.msra.mxu0 %v5026
      %5055 = vmatpush.msra.mxu0 %v5024
      %5056 = vmatpush.msra.mxu0 %v5022
      %5057 = vmatpush.msra.mxu0 %v5020
      %5058 = vmatpush.msra.mxu0 %v5018
      %5059 = vmatpush.msra.mxu0 %v5016
      %5060 = vmatpush.msra.mxu0 %v5014
      %5061 = vmatpush.msra.mxu0 %v5012
      %5062 = vmatpush.msra.mxu0 %v5010
      %5063 = vmatpush.msra.mxu0 %v5008
      %5064 = vmatpush.msra.mxu0 %v5006
      %5065 = vmatpush.msra.mxu0 %v5004
      %5066 = vmatpush.msra.mxu0 %v5002
      %5067 = vmatpush.msra.mxu0 %v5000
      %5068 = vmatmul.f32.gmra.mxu0 %v4992
      %v5069 = vpop.f32.mrf.mxu0
      %v5070 = vadd.f32 0.0, %v5069
      %5071 = vmatmul.f32.gmra.mxu0 %v4994
      %v5072 = vpop.f32.mrf.mxu0
      %v5073 = vadd.f32 0.0, %v5072
      %5074 = vmatmul.f32.gmra.mxu0 %v4996
      %v5075 = vpop.f32.mrf.mxu0
      %v5076 = vadd.f32 0.0, %v5075
      %5077 = vmatmul.f32.gmra.mxu0 %v4998
      %v5078 = vpop.f32.mrf.mxu0
      %v5079 = vadd.f32 0.0, %v5078
      %5080 = vdwg.mxu0
      %5081 = vmatpush.msra.mxu0 0.0
      %5082 = vmatpush.msra.mxu0 0.0
      %5083 = vmatpush.msra.mxu0 0.0
      %5084 = vmatpush.msra.mxu0 0.0
      %5085 = vmatpush.msra.mxu0 0.0
      %5086 = vmatpush.msra.mxu0 0.0
      %5087 = vmatpush.msra.mxu0 0.0
      %5088 = vmatpush.msra.mxu0 0.0
      %5089 = vmatpush.msra.mxu0 0.0
      %5090 = vmatpush.msra.mxu0 0.0
      %5091 = vmatpush.msra.mxu0 0.0
      %5092 = vmatpush.msra.mxu0 0.0
      %5093 = vmatpush.msra.mxu0 %v5038
      %5094 = vmatpush.msra.mxu0 %v5036
      %5095 = vmatpush.msra.mxu0 %v5034
      %5096 = vmatpush.msra.mxu0 %v5032
      %5097 = vmatmul.f32.gmra.mxu0 %v5041
      %v5098 = vpop.f32.mrf.mxu0
      %v5099 = vadd.f32 %v5070, %v5098
      %5100 = vmatmul.f32.gmra.mxu0 %v5044
      %v5101 = vpop.f32.mrf.mxu0
      %v5102 = vadd.f32 %v5073, %v5101
      %5103 = vmatmul.f32.gmra.mxu0 %v5047
      %v5104 = vpop.f32.mrf.mxu0
      %v5105 = vadd.f32 %v5076, %v5104
      %5106 = vmatmul.f32.gmra.mxu0 %v5050
      %v5107 = vpop.f32.mrf.mxu0
      %v5108 = vadd.f32 %v5079, %v5107
      %5109 = vdwg.mxu0
      %5110 = vmatpush.msra.mxu0 %v5031
      %5111 = vmatpush.msra.mxu0 %v5029
      %5112 = vmatpush.msra.mxu0 %v5027
      %5113 = vmatpush.msra.mxu0 %v5025
      %5114 = vmatpush.msra.mxu0 %v5023
      %5115 = vmatpush.msra.mxu0 %v5021
      %5116 = vmatpush.msra.mxu0 %v5019
      %5117 = vmatpush.msra.mxu0 %v5017
      %5118 = vmatpush.msra.mxu0 %v5015
      %5119 = vmatpush.msra.mxu0 %v5013
      %5120 = vmatpush.msra.mxu0 %v5011
      %5121 = vmatpush.msra.mxu0 %v5009
      %5122 = vmatpush.msra.mxu0 %v5007
      %5123 = vmatpush.msra.mxu0 %v5005
      %5124 = vmatpush.msra.mxu0 %v5003
      %5125 = vmatpush.msra.mxu0 %v5001
      %5126 = vmatmul.f32.gmra.mxu0 %v4992
      %v5127 = vpop.f32.mrf.mxu0
      %v5128 = vadd.f32 0.0, %v5127
      %5129 = vmatmul.f32.gmra.mxu0 %v4994
      %v5130 = vpop.f32.mrf.mxu0
      %v5131 = vadd.f32 0.0, %v5130
      %5132 = vmatmul.f32.gmra.mxu0 %v4996
      %v5133 = vpop.f32.mrf.mxu0
      %v5134 = vadd.f32 0.0, %v5133
      %5135 = vmatmul.f32.gmra.mxu0 %v4998
      %v5136 = vpop.f32.mrf.mxu0
      %v5137 = vadd.f32 0.0, %v5136
      %5138 = vdwg.mxu0
      %5139 = vmatpush.msra.mxu0 0.0
      %5140 = vmatpush.msra.mxu0 0.0
      %5141 = vmatpush.msra.mxu0 0.0
      %5142 = vmatpush.msra.mxu0 0.0
      %5143 = vmatpush.msra.mxu0 0.0
      %5144 = vmatpush.msra.mxu0 0.0
      %5145 = vmatpush.msra.mxu0 0.0
      %5146 = vmatpush.msra.mxu0 0.0
      %5147 = vmatpush.msra.mxu0 0.0
      %5148 = vmatpush.msra.mxu0 0.0
      %5149 = vmatpush.msra.mxu0 0.0
      %5150 = vmatpush.msra.mxu0 0.0
      %5151 = vmatpush.msra.mxu0 %v5039
      %5152 = vmatpush.msra.mxu0 %v5037
      %5153 = vmatpush.msra.mxu0 %v5035
      %5154 = vmatpush.msra.mxu0 %v5033
      %5155 = vmatmul.f32.gmra.mxu0 %v5041
      %v5156 = vpop.f32.mrf.mxu0
      %v5157 = vadd.f32 %v5128, %v5156
      %5158 = vmatmul.f32.gmra.mxu0 %v5044
      %v5159 = vpop.f32.mrf.mxu0
      %v5160 = vadd.f32 %v5131, %v5159
      %5161 = vmatmul.f32.gmra.mxu0 %v5047
      %v5162 = vpop.f32.mrf.mxu0
      %v5163 = vadd.f32 %v5134, %v5162
      %5164 = vmatmul.f32.gmra.mxu0 %v5050
      %v5165 = vpop.f32.mrf.mxu0
      %v5166 = vadd.f32 %v5137, %v5165
      %5167 = vdwg.mxu0
      %v5168 = vsel %vm2441, %v5099, 0.0
      %v5169 = vsel %vm2442, %v5157, 0.0
      %v5170 = vsel %vm2441, %v5102, 0.0
      %v5171 = vsel %vm2442, %v5160, 0.0
      %v5172 = vsel %vm2441, %v5105, 0.0
      %v5173 = vsel %vm2442, %v5163, 0.0
      %v5174 = vsel %vm2441, %v5108, 0.0
      %v5175 = vsel %vm2442, %v5166, 0.0
      %v5176 = vadd.f32 %v4623, %v5168
      %v5177 = vadd.f32 %v4624, %v5169
      %v5178 = vadd.f32 %v4625, %v5170
      %v5179 = vadd.f32 %v4626, %v5171
      %v5180 = vadd.f32 %v4627, %v5172
      %v5181 = vadd.f32 %v4628, %v5173
      %v5182 = vadd.f32 %v4629, %v5174
      %v5183 = vadd.f32 %v4630, %v5175
      %v5184 = vld [vmem:[#allocation2] sm:$0xff]
      %v5185 = vld [vmem:[#allocation2 + $0x8] sm:$0xff]
      %v5186 = vld [vmem:[#allocation2 + $0x10] sm:$0xff]
      %v5187 = vld [vmem:[#allocation2 + $0x20] sm:$0xff]
      %v5188 = vld [vmem:[#allocation2 + $0x28] sm:$0xff]
      %v5189 = vld [vmem:[#allocation2 + $0x30] sm:$0xff]
      %v5190 = vld [vmem:[#allocation2 + $0x40] sm:$0xff]
      %v5191 = vld [vmem:[#allocation2 + $0x48] sm:$0xff]
      %v5192 = vld [vmem:[#allocation2 + $0x50] sm:$0xff]
      %v5193 = vld [vmem:[#allocation2 + $0x60] sm:$0xff]
      %v5194 = vld [vmem:[#allocation2 + $0x68] sm:$0xff]
      %v5195 = vld [vmem:[#allocation2 + $0x70] sm:$0xff]
      %5208 = vrot.lane.b32.xlu0 %v5184, 30
      %v5209 = vpop.permute.xlu0 %5208
      %5210 = vrot.lane.b32.xlu0 %v5185, 30
      %v5211 = vpop.permute.xlu0 %5210
      %5212 = vrot.lane.b32.xlu0 %v5186, 30
      %v5213 = vpop.permute.xlu0 %5212
      %5214 = vrot.lane.b32.xlu0 %v5187, 30
      %v5215 = vpop.permute.xlu0 %5214
      %5216 = vrot.lane.b32.xlu0 %v5188, 30
      %v5217 = vpop.permute.xlu0 %5216
      %5218 = vrot.lane.b32.xlu0 %v5189, 30
      %v5219 = vpop.permute.xlu0 %5218
      %5220 = vrot.lane.b32.xlu0 %v5190, 30
      %v5221 = vpop.permute.xlu0 %5220
      %5222 = vrot.lane.b32.xlu0 %v5191, 30
      %v5223 = vpop.permute.xlu0 %5222
      %5224 = vrot.lane.b32.xlu0 %v5192, 30
      %v5225 = vpop.permute.xlu0 %5224
      %5226 = vrot.lane.b32.xlu0 %v5193, 30
      %v5227 = vpop.permute.xlu0 %5226
      %5228 = vrot.lane.b32.xlu0 %v5194, 30
      %v5229 = vpop.permute.xlu0 %5228
      %5230 = vrot.lane.b32.xlu0 %v5195, 30
      %v5231 = vpop.permute.xlu0 %5230
      %v5232 = vsel %vm2507, %v5209, %v5211
      %v5233 = vsel %vm2507, %v5211, %v5213
      %v5234 = vsel %vm2507, %v5215, %v5217
      %v5235 = vsel %vm2507, %v5217, %v5219
      %v5236 = vsel %vm2507, %v5221, %v5223
      %v5237 = vsel %vm2507, %v5223, %v5225
      %v5238 = vsel %vm2507, %v5227, %v5229
      %v5239 = vsel %vm2507, %v5229, %v5231
      %5248 = vst [vmem:[#allocation3] sm:$0xff] %v5232
      %5249 = vst [vmem:[#allocation3 + $0x8] sm:$0xff] %v5233
      %5250 = vst [vmem:[#allocation3 + $0x10] sm:$0xff] %v5234
      %5251 = vst [vmem:[#allocation3 + $0x18] sm:$0xff] %v5235
      %5252 = vst [vmem:[#allocation3 + $0x20] sm:$0xff] %v5236
      %5253 = vst [vmem:[#allocation3 + $0x28] sm:$0xff] %v5237
      %5254 = vst [vmem:[#allocation3 + $0x30] sm:$0xff] %v5238
      %5255 = vst [vmem:[#allocation3 + $0x38] sm:$0xff] %v5239
      %v5256 = vld [vmem:[#allocation2] sm:$0xff]
      %v5257 = vld [vmem:[#allocation2 + $0x8] sm:$0xff]
      %v5258 = vld [vmem:[#allocation2 + $0x10] sm:$0xff]
      %v5259 = vld [vmem:[#allocation2 + $0x20] sm:$0xff]
      %v5260 = vld [vmem:[#allocation2 + $0x28] sm:$0xff]
      %v5261 = vld [vmem:[#allocation2 + $0x30] sm:$0xff]
      %v5262 = vld [vmem:[#allocation2 + $0x40] sm:$0xff]
      %v5263 = vld [vmem:[#allocation2 + $0x48] sm:$0xff]
      %v5264 = vld [vmem:[#allocation2 + $0x50] sm:$0xff]
      %v5265 = vld [vmem:[#allocation2 + $0x60] sm:$0xff]
      %v5266 = vld [vmem:[#allocation2 + $0x68] sm:$0xff]
      %v5267 = vld [vmem:[#allocation2 + $0x70] sm:$0xff]
      %5280 = vrot.lane.b32.xlu0 %v5256, 14
      %v5281 = vpop.permute.xlu0 %5280
      %5282 = vrot.lane.b32.xlu0 %v5257, 14
      %v5283 = vpop.permute.xlu0 %5282
      %5284 = vrot.lane.b32.xlu0 %v5258, 14
      %v5285 = vpop.permute.xlu0 %5284
      %5286 = vrot.lane.b32.xlu0 %v5259, 14
      %v5287 = vpop.permute.xlu0 %5286
      %5288 = vrot.lane.b32.xlu0 %v5260, 14
      %v5289 = vpop.permute.xlu0 %5288
      %5290 = vrot.lane.b32.xlu0 %v5261, 14
      %v5291 = vpop.permute.xlu0 %5290
      %5292 = vrot.lane.b32.xlu0 %v5262, 14
      %v5293 = vpop.permute.xlu0 %5292
      %5294 = vrot.lane.b32.xlu0 %v5263, 14
      %v5295 = vpop.permute.xlu0 %5294
      %5296 = vrot.lane.b32.xlu0 %v5264, 14
      %v5297 = vpop.permute.xlu0 %5296
      %5298 = vrot.lane.b32.xlu0 %v5265, 14
      %v5299 = vpop.permute.xlu0 %5298
      %5300 = vrot.lane.b32.xlu0 %v5266, 14
      %v5301 = vpop.permute.xlu0 %5300
      %5302 = vrot.lane.b32.xlu0 %v5267, 14
      %v5303 = vpop.permute.xlu0 %5302
      %v5304 = vsel %vm2580, %v5281, %v5283
      %v5305 = vsel %vm2580, %v5283, %v5285
      %v5306 = vsel %vm2580, %v5287, %v5289
      %v5307 = vsel %vm2580, %v5289, %v5291
      %v5308 = vsel %vm2580, %v5293, %v5295
      %v5309 = vsel %vm2580, %v5295, %v5297
      %v5310 = vsel %vm2580, %v5299, %v5301
      %v5311 = vsel %vm2580, %v5301, %v5303
      %5320 = vst [vmem:[#allocation3 + $0x40] sm:$0xff] %v5304
      %5321 = vst [vmem:[#allocation3 + $0x48] sm:$0xff] %v5305
      %5322 = vst [vmem:[#allocation3 + $0x50] sm:$0xff] %v5306
      %5323 = vst [vmem:[#allocation3 + $0x58] sm:$0xff] %v5307
      %5324 = vst [vmem:[#allocation3 + $0x60] sm:$0xff] %v5308
      %5325 = vst [vmem:[#allocation3 + $0x68] sm:$0xff] %v5309
      %5326 = vst [vmem:[#allocation3 + $0x70] sm:$0xff] %v5310
      %5327 = vst [vmem:[#allocation3 + $0x78] sm:$0xff] %v5311
      %v5328 = vld [vmem:[#allocation2 + $0x8] sm:$0xff]
      %v5329 = vld [vmem:[#allocation2 + $0x10] sm:$0xff]
      %v5330 = vld [vmem:[#allocation2 + $0x18] sm:$0xff]
      %v5331 = vld [vmem:[#allocation2 + $0x28] sm:$0xff]
      %v5332 = vld [vmem:[#allocation2 + $0x30] sm:$0xff]
      %v5333 = vld [vmem:[#allocation2 + $0x38] sm:$0xff]
      %v5334 = vld [vmem:[#allocation2 + $0x48] sm:$0xff]
      %v5335 = vld [vmem:[#allocation2 + $0x50] sm:$0xff]
      %v5336 = vld [vmem:[#allocation2 + $0x58] sm:$0xff]
      %v5337 = vld [vmem:[#allocation2 + $0x68] sm:$0xff]
      %v5338 = vld [vmem:[#allocation2 + $0x70] sm:$0xff]
      %v5339 = vld [vmem:[#allocation2 + $0x78] sm:$0xff]
      %5352 = vrot.lane.b32.xlu0 %v5328, 126
      %v5353 = vpop.permute.xlu0 %5352
      %5354 = vrot.lane.b32.xlu0 %v5329, 126
      %v5355 = vpop.permute.xlu0 %5354
      %5356 = vrot.lane.b32.xlu0 %v5330, 126
      %v5357 = vpop.permute.xlu0 %5356
      %5358 = vrot.lane.b32.xlu0 %v5331, 126
      %v5359 = vpop.permute.xlu0 %5358
      %5360 = vrot.lane.b32.xlu0 %v5332, 126
      %v5361 = vpop.permute.xlu0 %5360
      %5362 = vrot.lane.b32.xlu0 %v5333, 126
      %v5363 = vpop.permute.xlu0 %5362
      %5364 = vrot.lane.b32.xlu0 %v5334, 126
      %v5365 = vpop.permute.xlu0 %5364
      %5366 = vrot.lane.b32.xlu0 %v5335, 126
      %v5367 = vpop.permute.xlu0 %5366
      %5368 = vrot.lane.b32.xlu0 %v5336, 126
      %v5369 = vpop.permute.xlu0 %5368
      %5370 = vrot.lane.b32.xlu0 %v5337, 126
      %v5371 = vpop.permute.xlu0 %5370
      %5372 = vrot.lane.b32.xlu0 %v5338, 126
      %v5373 = vpop.permute.xlu0 %5372
      %5374 = vrot.lane.b32.xlu0 %v5339, 126
      %v5375 = vpop.permute.xlu0 %5374
      %v5376 = vsel %vm2653, %v5353, %v5355
      %v5377 = vsel %vm2653, %v5355, %v5357
      %v5378 = vsel %vm2653, %v5359, %v5361
      %v5379 = vsel %vm2653, %v5361, %v5363
      %v5380 = vsel %vm2653, %v5365, %v5367
      %v5381 = vsel %vm2653, %v5367, %v5369
      %v5382 = vsel %vm2653, %v5371, %v5373
      %v5383 = vsel %vm2653, %v5373, %v5375
      %5392 = vst [vmem:[#allocation3 + $0x80] sm:$0xff] %v5376
      %5393 = vst [vmem:[#allocation3 + $0x88] sm:$0xff] %v5377
      %5394 = vst [vmem:[#allocation3 + $0x90] sm:$0xff] %v5378
      %5395 = vst [vmem:[#allocation3 + $0x98] sm:$0xff] %v5379
      %5396 = vst [vmem:[#allocation3 + $0xa0] sm:$0xff] %v5380
      %5397 = vst [vmem:[#allocation3 + $0xa8] sm:$0xff] %v5381
      %5398 = vst [vmem:[#allocation3 + $0xb0] sm:$0xff] %v5382
      %5399 = vst [vmem:[#allocation3 + $0xb8] sm:$0xff] %v5383
      %v5400 = vld [vmem:[#allocation2 + $0x8] sm:$0xff]
      %v5401 = vld [vmem:[#allocation2 + $0x10] sm:$0xff]
      %v5402 = vld [vmem:[#allocation2 + $0x18] sm:$0xff]
      %v5403 = vld [vmem:[#allocation2 + $0x28] sm:$0xff]
      %v5404 = vld [vmem:[#allocation2 + $0x30] sm:$0xff]
      %v5405 = vld [vmem:[#allocation2 + $0x38] sm:$0xff]
      %v5406 = vld [vmem:[#allocation2 + $0x48] sm:$0xff]
      %v5407 = vld [vmem:[#allocation2 + $0x50] sm:$0xff]
      %v5408 = vld [vmem:[#allocation2 + $0x58] sm:$0xff]
      %v5409 = vld [vmem:[#allocation2 + $0x68] sm:$0xff]
      %v5410 = vld [vmem:[#allocation2 + $0x70] sm:$0xff]
      %v5411 = vld [vmem:[#allocation2 + $0x78] sm:$0xff]
      %5424 = vrot.lane.b32.xlu0 %v5400, 110
      %v5425 = vpop.permute.xlu0 %5424
      %5426 = vrot.lane.b32.xlu0 %v5401, 110
      %v5427 = vpop.permute.xlu0 %5426
      %5428 = vrot.lane.b32.xlu0 %v5402, 110
      %v5429 = vpop.permute.xlu0 %5428
      %5430 = vrot.lane.b32.xlu0 %v5403, 110
      %v5431 = vpop.permute.xlu0 %5430
      %5432 = vrot.lane.b32.xlu0 %v5404, 110
      %v5433 = vpop.permute.xlu0 %5432
      %5434 = vrot.lane.b32.xlu0 %v5405, 110
      %v5435 = vpop.permute.xlu0 %5434
      %5436 = vrot.lane.b32.xlu0 %v5406, 110
      %v5437 = vpop.permute.xlu0 %5436
      %5438 = vrot.lane.b32.xlu0 %v5407, 110
      %v5439 = vpop.permute.xlu0 %5438
      %5440 = vrot.lane.b32.xlu0 %v5408, 110
      %v5441 = vpop.permute.xlu0 %5440
      %5442 = vrot.lane.b32.xlu0 %v5409, 110
      %v5443 = vpop.permute.xlu0 %5442
      %5444 = vrot.lane.b32.xlu0 %v5410, 110
      %v5445 = vpop.permute.xlu0 %5444
      %5446 = vrot.lane.b32.xlu0 %v5411, 110
      %v5447 = vpop.permute.xlu0 %5446
      %v5448 = vsel %vm2726, %v5425, %v5427
      %v5449 = vsel %vm2726, %v5427, %v5429
      %v5450 = vsel %vm2726, %v5431, %v5433
      %v5451 = vsel %vm2726, %v5433, %v5435
      %v5452 = vsel %vm2726, %v5437, %v5439
      %v5453 = vsel %vm2726, %v5439, %v5441
      %v5454 = vsel %vm2726, %v5443, %v5445
      %v5455 = vsel %vm2726, %v5445, %v5447
      %5464 = vst [vmem:[#allocation3 + $0xc0] sm:$0xff] %v5448
      %5465 = vst [vmem:[#allocation3 + $0xc8] sm:$0xff] %v5449
      %5466 = vst [vmem:[#allocation3 + $0xd0] sm:$0xff] %v5450
      %5467 = vst [vmem:[#allocation3 + $0xd8] sm:$0xff] %v5451
      %5468 = vst [vmem:[#allocation3 + $0xe0] sm:$0xff] %v5452
      %5469 = vst [vmem:[#allocation3 + $0xe8] sm:$0xff] %v5453
      %5470 = vst [vmem:[#allocation3 + $0xf0] sm:$0xff] %v5454
      %5471 = vst [vmem:[#allocation3 + $0xf8] sm:$0xff] %v5455
      %v5472 = vld [vmem:[#allocation2 + $0x8] sm:$0xff]
      %v5473 = vld [vmem:[#allocation2 + $0x10] sm:$0xff]
      %v5474 = vld [vmem:[#allocation2 + $0x18] sm:$0xff]
      %v5475 = vld [vmem:[#allocation2 + $0x28] sm:$0xff]
      %v5476 = vld [vmem:[#allocation2 + $0x30] sm:$0xff]
      %v5477 = vld [vmem:[#allocation2 + $0x38] sm:$0xff]
      %v5478 = vld [vmem:[#allocation2 + $0x48] sm:$0xff]
      %v5479 = vld [vmem:[#allocation2 + $0x50] sm:$0xff]
      %v5480 = vld [vmem:[#allocation2 + $0x58] sm:$0xff]
      %v5481 = vld [vmem:[#allocation2 + $0x68] sm:$0xff]
      %v5482 = vld [vmem:[#allocation2 + $0x70] sm:$0xff]
      %v5483 = vld [vmem:[#allocation2 + $0x78] sm:$0xff]
      %5496 = vrot.lane.b32.xlu0 %v5472, 94
      %v5497 = vpop.permute.xlu0 %5496
      %5498 = vrot.lane.b32.xlu0 %v5473, 94
      %v5499 = vpop.permute.xlu0 %5498
      %5500 = vrot.lane.b32.xlu0 %v5474, 94
      %v5501 = vpop.permute.xlu0 %5500
      %5502 = vrot.lane.b32.xlu0 %v5475, 94
      %v5503 = vpop.permute.xlu0 %5502
      %5504 = vrot.lane.b32.xlu0 %v5476, 94
      %v5505 = vpop.permute.xlu0 %5504
      %5506 = vrot.lane.b32.xlu0 %v5477, 94
      %v5507 = vpop.permute.xlu0 %5506
      %5508 = vrot.lane.b32.xlu0 %v5478, 94
      %v5509 = vpop.permute.xlu0 %5508
      %5510 = vrot.lane.b32.xlu0 %v5479, 94
      %v5511 = vpop.permute.xlu0 %5510
      %5512 = vrot.lane.b32.xlu0 %v5480, 94
      %v5513 = vpop.permute.xlu0 %5512
      %5514 = vrot.lane.b32.xlu0 %v5481, 94
      %v5515 = vpop.permute.xlu0 %5514
      %5516 = vrot.lane.b32.xlu0 %v5482, 94
      %v5517 = vpop.permute.xlu0 %5516
      %5518 = vrot.lane.b32.xlu0 %v5483, 94
      %v5519 = vpop.permute.xlu0 %5518
      %v5520 = vsel %vm2799, %v5497, %v5499
      %v5521 = vsel %vm2799, %v5499, %v5501
      %v5522 = vsel %vm2799, %v5503, %v5505
      %v5523 = vsel %vm2799, %v5505, %v5507
      %v5524 = vsel %vm2799, %v5509, %v5511
      %v5525 = vsel %vm2799, %v5511, %v5513
      %v5526 = vsel %vm2799, %v5515, %v5517
      %v5527 = vsel %vm2799, %v5517, %v5519
      %5536 = vst [vmem:[#allocation3 + $0x100] sm:$0xff] %v5520
      %5537 = vst [vmem:[#allocation3 + $0x108] sm:$0xff] %v5521
      %5538 = vst [vmem:[#allocation3 + $0x110] sm:$0xff] %v5522
      %5539 = vst [vmem:[#allocation3 + $0x118] sm:$0xff] %v5523
      %5540 = vst [vmem:[#allocation3 + $0x120] sm:$0xff] %v5524
      %5541 = vst [vmem:[#allocation3 + $0x128] sm:$0xff] %v5525
      %5542 = vst [vmem:[#allocation3 + $0x130] sm:$0xff] %v5526
      %5543 = vst [vmem:[#allocation3 + $0x138] sm:$0xff] %v5527
      %s5544 = scalar_lea.vmem %s2, 256
      %v5545 = vld [vmem:[%s5544] sm:$0xff]
      %v5546 = vld [vmem:[%s5544 + $0x8] sm:$0xff]
      %v5547 = vld [vmem:[%s5544 + $0x10] sm:$0xff]
      %v5548 = vld [vmem:[%s5544 + $0x18] sm:$0xff]
      %v5549 = vld [vmem:[%s5544 + $0x20] sm:$0xff]
      %v5550 = vld [vmem:[%s5544 + $0x28] sm:$0xff]
      %v5551 = vld [vmem:[%s5544 + $0x30] sm:$0xff]
      %v5552 = vld [vmem:[%s5544 + $0x38] sm:$0xff]
      %v5553 = vld [vmem:[#allocation3] sm:$0xff]
      %v5554 = vld [vmem:[#allocation3 + $0x8] sm:$0xff]
      %v5555 = vld [vmem:[#allocation3 + $0x10] sm:$0xff]
      %v5556 = vld [vmem:[#allocation3 + $0x18] sm:$0xff]
      %v5557 = vld [vmem:[#allocation3 + $0x20] sm:$0xff]
      %v5558 = vld [vmem:[#allocation3 + $0x28] sm:$0xff]
      %v5559 = vld [vmem:[#allocation3 + $0x30] sm:$0xff]
      %v5560 = vld [vmem:[#allocation3 + $0x38] sm:$0xff]
      %v5561 = vld [vmem:[#allocation3 + $0x40] sm:$0xff]
      %v5562 = vld [vmem:[#allocation3 + $0x48] sm:$0xff]
      %v5563 = vld [vmem:[#allocation3 + $0x50] sm:$0xff]
      %v5564 = vld [vmem:[#allocation3 + $0x58] sm:$0xff]
      %v5565 = vld [vmem:[#allocation3 + $0x60] sm:$0xff]
      %v5566 = vld [vmem:[#allocation3 + $0x68] sm:$0xff]
      %v5567 = vld [vmem:[#allocation3 + $0x70] sm:$0xff]
      %v5568 = vld [vmem:[#allocation3 + $0x78] sm:$0xff]
      %v5569 = vld [vmem:[#allocation3 + $0x80] sm:$0xff]
      %v5570 = vld [vmem:[#allocation3 + $0x88] sm:$0xff]
      %v5571 = vld [vmem:[#allocation3 + $0x90] sm:$0xff]
      %v5572 = vld [vmem:[#allocation3 + $0x98] sm:$0xff]
      %v5573 = vld [vmem:[#allocation3 + $0xa0] sm:$0xff]
      %v5574 = vld [vmem:[#allocation3 + $0xa8] sm:$0xff]
      %v5575 = vld [vmem:[#allocation3 + $0xb0] sm:$0xff]
      %v5576 = vld [vmem:[#allocation3 + $0xb8] sm:$0xff]
      %v5577 = vld [vmem:[#allocation3 + $0xc0] sm:$0xff]
      %v5578 = vld [vmem:[#allocation3 + $0xc8] sm:$0xff]
      %v5579 = vld [vmem:[#allocation3 + $0xd0] sm:$0xff]
      %v5580 = vld [vmem:[#allocation3 + $0xd8] sm:$0xff]
      %v5581 = vld [vmem:[#allocation3 + $0xe0] sm:$0xff]
      %v5582 = vld [vmem:[#allocation3 + $0xe8] sm:$0xff]
      %v5583 = vld [vmem:[#allocation3 + $0xf0] sm:$0xff]
      %v5584 = vld [vmem:[#allocation3 + $0xf8] sm:$0xff]
      %v5585 = vld [vmem:[#allocation3 + $0x100] sm:$0xff]
      %v5586 = vld [vmem:[#allocation3 + $0x108] sm:$0xff]
      %v5587 = vld [vmem:[#allocation3 + $0x110] sm:$0xff]
      %v5588 = vld [vmem:[#allocation3 + $0x118] sm:$0xff]
      %v5589 = vld [vmem:[#allocation3 + $0x120] sm:$0xff]
      %v5590 = vld [vmem:[#allocation3 + $0x128] sm:$0xff]
      %v5591 = vld [vmem:[#allocation3 + $0x130] sm:$0xff]
      %v5592 = vld [vmem:[#allocation3 + $0x138] sm:$0xff]
      %v5594 = vsel %vm694, %v5546, 0
      %v5597 = vsel %vm694, %v5548, 0
      %v5600 = vsel %vm694, %v5550, 0
      %v5603 = vsel %vm694, %v5552, 0
      %5605 = vmatpush.msra.mxu0 %v5583
      %5606 = vmatpush.msra.mxu0 %v5581
      %5607 = vmatpush.msra.mxu0 %v5579
      %5608 = vmatpush.msra.mxu0 %v5577
      %5609 = vmatpush.msra.mxu0 %v5575
      %5610 = vmatpush.msra.mxu0 %v5573
      %5611 = vmatpush.msra.mxu0 %v5571
      %5612 = vmatpush.msra.mxu0 %v5569
      %5613 = vmatpush.msra.mxu0 %v5567
      %5614 = vmatpush.msra.mxu0 %v5565
      %5615 = vmatpush.msra.mxu0 %v5563
      %5616 = vmatpush.msra.mxu0 %v5561
      %5617 = vmatpush.msra.mxu0 %v5559
      %5618 = vmatpush.msra.mxu0 %v5557
      %5619 = vmatpush.msra.mxu0 %v5555
      %5620 = vmatpush.msra.mxu0 %v5553
      %5621 = vmatmul.f32.gmra.mxu0 %v5545
      %v5622 = vpop.f32.mrf.mxu0
      %v5623 = vadd.f32 0.0, %v5622
      %5624 = vmatmul.f32.gmra.mxu0 %v5547
      %v5625 = vpop.f32.mrf.mxu0
      %v5626 = vadd.f32 0.0, %v5625
      %5627 = vmatmul.f32.gmra.mxu0 %v5549
      %v5628 = vpop.f32.mrf.mxu0
      %v5629 = vadd.f32 0.0, %v5628
      %5630 = vmatmul.f32.gmra.mxu0 %v5551
      %v5631 = vpop.f32.mrf.mxu0
      %v5632 = vadd.f32 0.0, %v5631
      %5633 = vdwg.mxu0
      %5634 = vmatpush.msra.mxu0 0.0
      %5635 = vmatpush.msra.mxu0 0.0
      %5636 = vmatpush.msra.mxu0 0.0
      %5637 = vmatpush.msra.mxu0 0.0
      %5638 = vmatpush.msra.mxu0 0.0
      %5639 = vmatpush.msra.mxu0 0.0
      %5640 = vmatpush.msra.mxu0 0.0
      %5641 = vmatpush.msra.mxu0 0.0
      %5642 = vmatpush.msra.mxu0 0.0
      %5643 = vmatpush.msra.mxu0 0.0
      %5644 = vmatpush.msra.mxu0 0.0
      %5645 = vmatpush.msra.mxu0 0.0
      %5646 = vmatpush.msra.mxu0 %v5591
      %5647 = vmatpush.msra.mxu0 %v5589
      %5648 = vmatpush.msra.mxu0 %v5587
      %5649 = vmatpush.msra.mxu0 %v5585
      %5650 = vmatmul.f32.gmra.mxu0 %v5594
      %v5651 = vpop.f32.mrf.mxu0
      %v5652 = vadd.f32 %v5623, %v5651
      %5653 = vmatmul.f32.gmra.mxu0 %v5597
      %v5654 = vpop.f32.mrf.mxu0
      %v5655 = vadd.f32 %v5626, %v5654
      %5656 = vmatmul.f32.gmra.mxu0 %v5600
      %v5657 = vpop.f32.mrf.mxu0
      %v5658 = vadd.f32 %v5629, %v5657
      %5659 = vmatmul.f32.gmra.mxu0 %v5603
      %v5660 = vpop.f32.mrf.mxu0
      %v5661 = vadd.f32 %v5632, %v5660
      %5662 = vdwg.mxu0
      %5663 = vmatpush.msra.mxu0 %v5584
      %5664 = vmatpush.msra.mxu0 %v5582
      %5665 = vmatpush.msra.mxu0 %v5580
      %5666 = vmatpush.msra.mxu0 %v5578
      %5667 = vmatpush.msra.mxu0 %v5576
      %5668 = vmatpush.msra.mxu0 %v5574
      %5669 = vmatpush.msra.mxu0 %v5572
      %5670 = vmatpush.msra.mxu0 %v5570
      %5671 = vmatpush.msra.mxu0 %v5568
      %5672 = vmatpush.msra.mxu0 %v5566
      %5673 = vmatpush.msra.mxu0 %v5564
      %5674 = vmatpush.msra.mxu0 %v5562
      %5675 = vmatpush.msra.mxu0 %v5560
      %5676 = vmatpush.msra.mxu0 %v5558
      %5677 = vmatpush.msra.mxu0 %v5556
      %5678 = vmatpush.msra.mxu0 %v5554
      %5679 = vmatmul.f32.gmra.mxu0 %v5545
      %v5680 = vpop.f32.mrf.mxu0
      %v5681 = vadd.f32 0.0, %v5680
      %5682 = vmatmul.f32.gmra.mxu0 %v5547
      %v5683 = vpop.f32.mrf.mxu0
      %v5684 = vadd.f32 0.0, %v5683
      %5685 = vmatmul.f32.gmra.mxu0 %v5549
      %v5686 = vpop.f32.mrf.mxu0
      %v5687 = vadd.f32 0.0, %v5686
      %5688 = vmatmul.f32.gmra.mxu0 %v5551
      %v5689 = vpop.f32.mrf.mxu0
      %v5690 = vadd.f32 0.0, %v5689
      %5691 = vdwg.mxu0
      %5692 = vmatpush.msra.mxu0 0.0
      %5693 = vmatpush.msra.mxu0 0.0
      %5694 = vmatpush.msra.mxu0 0.0
      %5695 = vmatpush.msra.mxu0 0.0
      %5696 = vmatpush.msra.mxu0 0.0
      %5697 = vmatpush.msra.mxu0 0.0
      %5698 = vmatpush.msra.mxu0 0.0
      %5699 = vmatpush.msra.mxu0 0.0
      %5700 = vmatpush.msra.mxu0 0.0
      %5701 = vmatpush.msra.mxu0 0.0
      %5702 = vmatpush.msra.mxu0 0.0
      %5703 = vmatpush.msra.mxu0 0.0
      %5704 = vmatpush.msra.mxu0 %v5592
      %5705 = vmatpush.msra.mxu0 %v5590
      %5706 = vmatpush.msra.mxu0 %v5588
      %5707 = vmatpush.msra.mxu0 %v5586
      %5708 = vmatmul.f32.gmra.mxu0 %v5594
      %v5709 = vpop.f32.mrf.mxu0
      %v5710 = vadd.f32 %v5681, %v5709
      %5711 = vmatmul.f32.gmra.mxu0 %v5597
      %v5712 = vpop.f32.mrf.mxu0
      %v5713 = vadd.f32 %v5684, %v5712
      %5714 = vmatmul.f32.gmra.mxu0 %v5600
      %v5715 = vpop.f32.mrf.mxu0
      %v5716 = vadd.f32 %v5687, %v5715
      %5717 = vmatmul.f32.gmra.mxu0 %v5603
      %v5718 = vpop.f32.mrf.mxu0
      %v5719 = vadd.f32 %v5690, %v5718
      %5720 = vdwg.mxu0
      %v5721 = vsel %vm3003, %v5652, 0.0
      %v5722 = vsel %vm3004, %v5710, 0.0
      %v5723 = vsel %vm3003, %v5655, 0.0
      %v5724 = vsel %vm3004, %v5713, 0.0
      %v5725 = vsel %vm3003, %v5658, 0.0
      %v5726 = vsel %vm3004, %v5716, 0.0
      %v5727 = vsel %vm3003, %v5661, 0.0
      %v5728 = vsel %vm3004, %v5719, 0.0
      %v5729 = vadd.f32 %v5176, %v5721
      %v5730 = vadd.f32 %v5177, %v5722
      %v5731 = vadd.f32 %v5178, %v5723
      %v5732 = vadd.f32 %v5179, %v5724
      %v5733 = vadd.f32 %v5180, %v5725
      %v5734 = vadd.f32 %v5181, %v5726
      %v5735 = vadd.f32 %v5182, %v5727
      %v5736 = vadd.f32 %v5183, %v5728
      %v5737 = vmax.f32 %v5729, 0.0
      %v5738 = vmax.f32 %v5730, 0.0
      %v5739 = vmax.f32 %v5731, 0.0
      %v5740 = vmax.f32 %v5732, 0.0
      %v5741 = vmax.f32 %v5733, 0.0
      %v5742 = vmax.f32 %v5734, 0.0
      %v5743 = vmax.f32 %v5735, 0.0
      %v5744 = vmax.f32 %v5736, 0.0
      %5745 = vst [vmem:[#allocation2 + $0x8] sm:$0xff] %v5737
      %5746 = vst [vmem:[#allocation2 + $0x10] sm:$0xff] %v5738
      %5747 = vst [vmem:[#allocation2 + $0x28] sm:$0xff] %v5739
      %5748 = vst [vmem:[#allocation2 + $0x30] sm:$0xff] %v5740
      %5749 = vst [vmem:[#allocation2 + $0x48] sm:$0xff] %v5741
      %5750 = vst [vmem:[#allocation2 + $0x50] sm:$0xff] %v5742
      %5751 = vst [vmem:[#allocation2 + $0x68] sm:$0xff] %v5743
      %5752 = vst [vmem:[#allocation2 + $0x70] sm:$0xff] %v5744
      %v5753 = vld [vmem:[#allocation2] sm:$0xff]
      %v5754 = vld [vmem:[#allocation2 + $0x8] sm:$0xff]
      %v5755 = vld [vmem:[#allocation2 + $0x10] sm:$0xff]
      %v5756 = vld [vmem:[#allocation2 + $0x20] sm:$0xff]
      %v5757 = vld [vmem:[#allocation2 + $0x28] sm:$0xff]
      %v5758 = vld [vmem:[#allocation2 + $0x30] sm:$0xff]
      %v5759 = vld [vmem:[#allocation2 + $0x40] sm:$0xff]
      %v5760 = vld [vmem:[#allocation2 + $0x48] sm:$0xff]
      %v5761 = vld [vmem:[#allocation2 + $0x50] sm:$0xff]
      %v5762 = vld [vmem:[#allocation2 + $0x60] sm:$0xff]
      %v5763 = vld [vmem:[#allocation2 + $0x68] sm:$0xff]
      %v5764 = vld [vmem:[#allocation2 + $0x70] sm:$0xff]
      %5777 = vrot.lane.b32.xlu0 %v5753, 34
      %v5778 = vpop.permute.xlu0 %5777
      %5779 = vrot.lane.b32.xlu0 %v5754, 34
      %v5780 = vpop.permute.xlu0 %5779
      %5781 = vrot.lane.b32.xlu0 %v5755, 34
      %v5782 = vpop.permute.xlu0 %5781
      %5783 = vrot.lane.b32.xlu0 %v5756, 34
      %v5784 = vpop.permute.xlu0 %5783
      %5785 = vrot.lane.b32.xlu0 %v5757, 34
      %v5786 = vpop.permute.xlu0 %5785
      %5787 = vrot.lane.b32.xlu0 %v5758, 34
      %v5788 = vpop.permute.xlu0 %5787
      %5789 = vrot.lane.b32.xlu0 %v5759, 34
      %v5790 = vpop.permute.xlu0 %5789
      %5791 = vrot.lane.b32.xlu0 %v5760, 34
      %v5792 = vpop.permute.xlu0 %5791
      %5793 = vrot.lane.b32.xlu0 %v5761, 34
      %v5794 = vpop.permute.xlu0 %5793
      %5795 = vrot.lane.b32.xlu0 %v5762, 34
      %v5796 = vpop.permute.xlu0 %5795
      %5797 = vrot.lane.b32.xlu0 %v5763, 34
      %v5798 = vpop.permute.xlu0 %5797
      %5799 = vrot.lane.b32.xlu0 %v5764, 34
      %v5800 = vpop.permute.xlu0 %5799
      %v5801 = vsel %vm329, %v5778, %v5780
      %v5802 = vsel %vm329, %v5780, %v5782
      %v5803 = vsel %vm329, %v5784, %v5786
      %v5804 = vsel %vm329, %v5786, %v5788
      %v5805 = vsel %vm329, %v5790, %v5792
      %v5806 = vsel %vm329, %v5792, %v5794
      %v5807 = vsel %vm329, %v5796, %v5798
      %v5808 = vsel %vm329, %v5798, %v5800
      %5817 = vst [vmem:[#allocation3] sm:$0xff] %v5801
      %5818 = vst [vmem:[#allocation3 + $0x8] sm:$0xff] %v5802
      %5819 = vst [vmem:[#allocation3 + $0x10] sm:$0xff] %v5803
      %5820 = vst [vmem:[#allocation3 + $0x18] sm:$0xff] %v5804
      %5821 = vst [vmem:[#allocation3 + $0x20] sm:$0xff] %v5805
      %5822 = vst [vmem:[#allocation3 + $0x28] sm:$0xff] %v5806
      %5823 = vst [vmem:[#allocation3 + $0x30] sm:$0xff] %v5807
      %5824 = vst [vmem:[#allocation3 + $0x38] sm:$0xff] %v5808
      %v5825 = vld [vmem:[#allocation2] sm:$0xff]
      %v5826 = vld [vmem:[#allocation2 + $0x8] sm:$0xff]
      %v5827 = vld [vmem:[#allocation2 + $0x10] sm:$0xff]
      %v5828 = vld [vmem:[#allocation2 + $0x20] sm:$0xff]
      %v5829 = vld [vmem:[#allocation2 + $0x28] sm:$0xff]
      %v5830 = vld [vmem:[#allocation2 + $0x30] sm:$0xff]
      %v5831 = vld [vmem:[#allocation2 + $0x40] sm:$0xff]
      %v5832 = vld [vmem:[#allocation2 + $0x48] sm:$0xff]
      %v5833 = vld [vmem:[#allocation2 + $0x50] sm:$0xff]
      %v5834 = vld [vmem:[#allocation2 + $0x60] sm:$0xff]
      %v5835 = vld [vmem:[#allocation2 + $0x68] sm:$0xff]
      %v5836 = vld [vmem:[#allocation2 + $0x70] sm:$0xff]
      %5849 = vrot.lane.b32.xlu0 %v5825, 18
      %v5850 = vpop.permute.xlu0 %5849
      %5851 = vrot.lane.b32.xlu0 %v5826, 18
      %v5852 = vpop.permute.xlu0 %5851
      %5853 = vrot.lane.b32.xlu0 %v5827, 18
      %v5854 = vpop.permute.xlu0 %5853
      %5855 = vrot.lane.b32.xlu0 %v5828, 18
      %v5856 = vpop.permute.xlu0 %5855
      %5857 = vrot.lane.b32.xlu0 %v5829, 18
      %v5858 = vpop.permute.xlu0 %5857
      %5859 = vrot.lane.b32.xlu0 %v5830, 18
      %v5860 = vpop.permute.xlu0 %5859
      %5861 = vrot.lane.b32.xlu0 %v5831, 18
      %v5862 = vpop.permute.xlu0 %5861
      %5863 = vrot.lane.b32.xlu0 %v5832, 18
      %v5864 = vpop.permute.xlu0 %5863
      %5865 = vrot.lane.b32.xlu0 %v5833, 18
      %v5866 = vpop.permute.xlu0 %5865
      %5867 = vrot.lane.b32.xlu0 %v5834, 18
      %v5868 = vpop.permute.xlu0 %5867
      %5869 = vrot.lane.b32.xlu0 %v5835, 18
      %v5870 = vpop.permute.xlu0 %5869
      %5871 = vrot.lane.b32.xlu0 %v5836, 18
      %v5872 = vpop.permute.xlu0 %5871
      %v5873 = vsel %vm402, %v5850, %v5852
      %v5874 = vsel %vm402, %v5852, %v5854
      %v5875 = vsel %vm402, %v5856, %v5858
      %v5876 = vsel %vm402, %v5858, %v5860
      %v5877 = vsel %vm402, %v5862, %v5864
      %v5878 = vsel %vm402, %v5864, %v5866
      %v5879 = vsel %vm402, %v5868, %v5870
      %v5880 = vsel %vm402, %v5870, %v5872
      %5889 = vst [vmem:[#allocation3 + $0x40] sm:$0xff] %v5873
      %5890 = vst [vmem:[#allocation3 + $0x48] sm:$0xff] %v5874
      %5891 = vst [vmem:[#allocation3 + $0x50] sm:$0xff] %v5875
      %5892 = vst [vmem:[#allocation3 + $0x58] sm:$0xff] %v5876
      %5893 = vst [vmem:[#allocation3 + $0x60] sm:$0xff] %v5877
      %5894 = vst [vmem:[#allocation3 + $0x68] sm:$0xff] %v5878
      %5895 = vst [vmem:[#allocation3 + $0x70] sm:$0xff] %v5879
      %5896 = vst [vmem:[#allocation3 + $0x78] sm:$0xff] %v5880
      %v5897 = vld [vmem:[#allocation2] sm:$0xff]
      %v5898 = vld [vmem:[#allocation2 + $0x8] sm:$0xff]
      %v5899 = vld [vmem:[#allocation2 + $0x10] sm:$0xff]
      %v5900 = vld [vmem:[#allocation2 + $0x20] sm:$0xff]
      %v5901 = vld [vmem:[#allocation2 + $0x28] sm:$0xff]
      %v5902 = vld [vmem:[#allocation2 + $0x30] sm:$0xff]
      %v5903 = vld [vmem:[#allocation2 + $0x40] sm:$0xff]
      %v5904 = vld [vmem:[#allocation2 + $0x48] sm:$0xff]
      %v5905 = vld [vmem:[#allocation2 + $0x50] sm:$0xff]
      %v5906 = vld [vmem:[#allocation2 + $0x60] sm:$0xff]
      %v5907 = vld [vmem:[#allocation2 + $0x68] sm:$0xff]
      %v5908 = vld [vmem:[#allocation2 + $0x70] sm:$0xff]
      %5921 = vrot.lane.b32.xlu0 %v5897, 2
      %v5922 = vpop.permute.xlu0 %5921
      %5923 = vrot.lane.b32.xlu0 %v5898, 2
      %v5924 = vpop.permute.xlu0 %5923
      %5925 = vrot.lane.b32.xlu0 %v5899, 2
      %v5926 = vpop.permute.xlu0 %5925
      %5927 = vrot.lane.b32.xlu0 %v5900, 2
      %v5928 = vpop.permute.xlu0 %5927
      %5929 = vrot.lane.b32.xlu0 %v5901, 2
      %v5930 = vpop.permute.xlu0 %5929
      %5931 = vrot.lane.b32.xlu0 %v5902, 2
      %v5932 = vpop.permute.xlu0 %5931
      %5933 = vrot.lane.b32.xlu0 %v5903, 2
      %v5934 = vpop.permute.xlu0 %5933
      %5935 = vrot.lane.b32.xlu0 %v5904, 2
      %v5936 = vpop.permute.xlu0 %5935
      %5937 = vrot.lane.b32.xlu0 %v5905, 2
      %v5938 = vpop.permute.xlu0 %5937
      %5939 = vrot.lane.b32.xlu0 %v5906, 2
      %v5940 = vpop.permute.xlu0 %5939
      %5941 = vrot.lane.b32.xlu0 %v5907, 2
      %v5942 = vpop.permute.xlu0 %5941
      %5943 = vrot.lane.b32.xlu0 %v5908, 2
      %v5944 = vpop.permute.xlu0 %5943
      %v5945 = vsel %vm475, %v5922, %v5924
      %v5946 = vsel %vm475, %v5924, %v5926
      %v5947 = vsel %vm475, %v5928, %v5930
      %v5948 = vsel %vm475, %v5930, %v5932
      %v5949 = vsel %vm475, %v5934, %v5936
      %v5950 = vsel %vm475, %v5936, %v5938
      %v5951 = vsel %vm475, %v5940, %v5942
      %v5952 = vsel %vm475, %v5942, %v5944
      %5961 = vst [vmem:[#allocation3 + $0x80] sm:$0xff] %v5945
      %5962 = vst [vmem:[#allocation3 + $0x88] sm:$0xff] %v5946
      %5963 = vst [vmem:[#allocation3 + $0x90] sm:$0xff] %v5947
      %5964 = vst [vmem:[#allocation3 + $0x98] sm:$0xff] %v5948
      %5965 = vst [vmem:[#allocation3 + $0xa0] sm:$0xff] %v5949
      %5966 = vst [vmem:[#allocation3 + $0xa8] sm:$0xff] %v5950
      %5967 = vst [vmem:[#allocation3 + $0xb0] sm:$0xff] %v5951
      %5968 = vst [vmem:[#allocation3 + $0xb8] sm:$0xff] %v5952
      %v5969 = vld [vmem:[#allocation2 + $0x8] sm:$0xff]
      %v5970 = vld [vmem:[#allocation2 + $0x10] sm:$0xff]
      %v5971 = vld [vmem:[#allocation2 + $0x18] sm:$0xff]
      %v5972 = vld [vmem:[#allocation2 + $0x28] sm:$0xff]
      %v5973 = vld [vmem:[#allocation2 + $0x30] sm:$0xff]
      %v5974 = vld [vmem:[#allocation2 + $0x38] sm:$0xff]
      %v5975 = vld [vmem:[#allocation2 + $0x48] sm:$0xff]
      %v5976 = vld [vmem:[#allocation2 + $0x50] sm:$0xff]
      %v5977 = vld [vmem:[#allocation2 + $0x58] sm:$0xff]
      %v5978 = vld [vmem:[#allocation2 + $0x68] sm:$0xff]
      %v5979 = vld [vmem:[#allocation2 + $0x70] sm:$0xff]
      %v5980 = vld [vmem:[#allocation2 + $0x78] sm:$0xff]
      %5993 = vrot.lane.b32.xlu0 %v5969, 114
      %v5994 = vpop.permute.xlu0 %5993
      %5995 = vrot.lane.b32.xlu0 %v5970, 114
      %v5996 = vpop.permute.xlu0 %5995
      %5997 = vrot.lane.b32.xlu0 %v5971, 114
      %v5998 = vpop.permute.xlu0 %5997
      %5999 = vrot.lane.b32.xlu0 %v5972, 114
      %v6000 = vpop.permute.xlu0 %5999
      %6001 = vrot.lane.b32.xlu0 %v5973, 114
      %v6002 = vpop.permute.xlu0 %6001
      %6003 = vrot.lane.b32.xlu0 %v5974, 114
      %v6004 = vpop.permute.xlu0 %6003
      %6005 = vrot.lane.b32.xlu0 %v5975, 114
      %v6006 = vpop.permute.xlu0 %6005
      %6007 = vrot.lane.b32.xlu0 %v5976, 114
      %v6008 = vpop.permute.xlu0 %6007
      %6009 = vrot.lane.b32.xlu0 %v5977, 114
      %v6010 = vpop.permute.xlu0 %6009
      %6011 = vrot.lane.b32.xlu0 %v5978, 114
      %v6012 = vpop.permute.xlu0 %6011
      %6013 = vrot.lane.b32.xlu0 %v5979, 114
      %v6014 = vpop.permute.xlu0 %6013
      %6015 = vrot.lane.b32.xlu0 %v5980, 114
      %v6016 = vpop.permute.xlu0 %6015
      %v6017 = vsel %vm548, %v5994, %v5996
      %v6018 = vsel %vm548, %v5996, %v5998
      %v6019 = vsel %vm548, %v6000, %v6002
      %v6020 = vsel %vm548, %v6002, %v6004
      %v6021 = vsel %vm548, %v6006, %v6008
      %v6022 = vsel %vm548, %v6008, %v6010
      %v6023 = vsel %vm548, %v6012, %v6014
      %v6024 = vsel %vm548, %v6014, %v6016
      %6033 = vst [vmem:[#allocation3 + $0xc0] sm:$0xff] %v6017
      %6034 = vst [vmem:[#allocation3 + $0xc8] sm:$0xff] %v6018
      %6035 = vst [vmem:[#allocation3 + $0xd0] sm:$0xff] %v6019
      %6036 = vst [vmem:[#allocation3 + $0xd8] sm:$0xff] %v6020
      %6037 = vst [vmem:[#allocation3 + $0xe0] sm:$0xff] %v6021
      %6038 = vst [vmem:[#allocation3 + $0xe8] sm:$0xff] %v6022
      %6039 = vst [vmem:[#allocation3 + $0xf0] sm:$0xff] %v6023
      %6040 = vst [vmem:[#allocation3 + $0xf8] sm:$0xff] %v6024
      %v6041 = vld [vmem:[#allocation2 + $0x8] sm:$0xff]
      %v6042 = vld [vmem:[#allocation2 + $0x10] sm:$0xff]
      %v6043 = vld [vmem:[#allocation2 + $0x18] sm:$0xff]
      %v6044 = vld [vmem:[#allocation2 + $0x28] sm:$0xff]
      %v6045 = vld [vmem:[#allocation2 + $0x30] sm:$0xff]
      %v6046 = vld [vmem:[#allocation2 + $0x38] sm:$0xff]
      %v6047 = vld [vmem:[#allocation2 + $0x48] sm:$0xff]
      %v6048 = vld [vmem:[#allocation2 + $0x50] sm:$0xff]
      %v6049 = vld [vmem:[#allocation2 + $0x58] sm:$0xff]
      %v6050 = vld [vmem:[#allocation2 + $0x68] sm:$0xff]
      %v6051 = vld [vmem:[#allocation2 + $0x70] sm:$0xff]
      %v6052 = vld [vmem:[#allocation2 + $0x78] sm:$0xff]
      %6065 = vrot.lane.b32.xlu0 %v6041, 98
      %v6066 = vpop.permute.xlu0 %6065
      %6067 = vrot.lane.b32.xlu0 %v6042, 98
      %v6068 = vpop.permute.xlu0 %6067
      %6069 = vrot.lane.b32.xlu0 %v6043, 98
      %v6070 = vpop.permute.xlu0 %6069
      %6071 = vrot.lane.b32.xlu0 %v6044, 98
      %v6072 = vpop.permute.xlu0 %6071
      %6073 = vrot.lane.b32.xlu0 %v6045, 98
      %v6074 = vpop.permute.xlu0 %6073
      %6075 = vrot.lane.b32.xlu0 %v6046, 98
      %v6076 = vpop.permute.xlu0 %6075
      %6077 = vrot.lane.b32.xlu0 %v6047, 98
      %v6078 = vpop.permute.xlu0 %6077
      %6079 = vrot.lane.b32.xlu0 %v6048, 98
      %v6080 = vpop.permute.xlu0 %6079
      %6081 = vrot.lane.b32.xlu0 %v6049, 98
      %v6082 = vpop.permute.xlu0 %6081
      %6083 = vrot.lane.b32.xlu0 %v6050, 98
      %v6084 = vpop.permute.xlu0 %6083
      %6085 = vrot.lane.b32.xlu0 %v6051, 98
      %v6086 = vpop.permute.xlu0 %6085
      %6087 = vrot.lane.b32.xlu0 %v6052, 98
      %v6088 = vpop.permute.xlu0 %6087
      %v6089 = vsel %vm621, %v6066, %v6068
      %v6090 = vsel %vm621, %v6068, %v6070
      %v6091 = vsel %vm621, %v6072, %v6074
      %v6092 = vsel %vm621, %v6074, %v6076
      %v6093 = vsel %vm621, %v6078, %v6080
      %v6094 = vsel %vm621, %v6080, %v6082
      %v6095 = vsel %vm621, %v6084, %v6086
      %v6096 = vsel %vm621, %v6086, %v6088
      %6105 = vst [vmem:[#allocation3 + $0x100] sm:$0xff] %v6089
      %6106 = vst [vmem:[#allocation3 + $0x108] sm:$0xff] %v6090
      %6107 = vst [vmem:[#allocation3 + $0x110] sm:$0xff] %v6091
      %6108 = vst [vmem:[#allocation3 + $0x118] sm:$0xff] %v6092
      %6109 = vst [vmem:[#allocation3 + $0x120] sm:$0xff] %v6093
      %6110 = vst [vmem:[#allocation3 + $0x128] sm:$0xff] %v6094
      %6111 = vst [vmem:[#allocation3 + $0x130] sm:$0xff] %v6095
      %6112 = vst [vmem:[#allocation3 + $0x138] sm:$0xff] %v6096
      %v6113 = vld [vmem:[%s3] sm:$0xff]
      %v6114 = vld [vmem:[%s3 + $0x8] sm:$0xff]
      %v6115 = vld [vmem:[%s3 + $0x10] sm:$0xff]
      %v6116 = vld [vmem:[%s3 + $0x18] sm:$0xff]
      %v6117 = vld [vmem:[%s3 + $0x20] sm:$0xff]
      %v6118 = vld [vmem:[%s3 + $0x28] sm:$0xff]
      %v6119 = vld [vmem:[%s3 + $0x30] sm:$0xff]
      %v6120 = vld [vmem:[%s3 + $0x38] sm:$0xff]
      %v6121 = vld [vmem:[#allocation3] sm:$0xff]
      %v6122 = vld [vmem:[#allocation3 + $0x8] sm:$0xff]
      %v6123 = vld [vmem:[#allocation3 + $0x10] sm:$0xff]
      %v6124 = vld [vmem:[#allocation3 + $0x18] sm:$0xff]
      %v6125 = vld [vmem:[#allocation3 + $0x20] sm:$0xff]
      %v6126 = vld [vmem:[#allocation3 + $0x28] sm:$0xff]
      %v6127 = vld [vmem:[#allocation3 + $0x30] sm:$0xff]
      %v6128 = vld [vmem:[#allocation3 + $0x38] sm:$0xff]
      %v6129 = vld [vmem:[#allocation3 + $0x40] sm:$0xff]
      %v6130 = vld [vmem:[#allocation3 + $0x48] sm:$0xff]
      %v6131 = vld [vmem:[#allocation3 + $0x50] sm:$0xff]
      %v6132 = vld [vmem:[#allocation3 + $0x58] sm:$0xff]
      %v6133 = vld [vmem:[#allocation3 + $0x60] sm:$0xff]
      %v6134 = vld [vmem:[#allocation3 + $0x68] sm:$0xff]
      %v6135 = vld [vmem:[#allocation3 + $0x70] sm:$0xff]
      %v6136 = vld [vmem:[#allocation3 + $0x78] sm:$0xff]
      %v6137 = vld [vmem:[#allocation3 + $0x80] sm:$0xff]
      %v6138 = vld [vmem:[#allocation3 + $0x88] sm:$0xff]
      %v6139 = vld [vmem:[#allocation3 + $0x90] sm:$0xff]
      %v6140 = vld [vmem:[#allocation3 + $0x98] sm:$0xff]
      %v6141 = vld [vmem:[#allocation3 + $0xa0] sm:$0xff]
      %v6142 = vld [vmem:[#allocation3 + $0xa8] sm:$0xff]
      %v6143 = vld [vmem:[#allocation3 + $0xb0] sm:$0xff]
      %v6144 = vld [vmem:[#allocation3 + $0xb8] sm:$0xff]
      %v6145 = vld [vmem:[#allocation3 + $0xc0] sm:$0xff]
      %v6146 = vld [vmem:[#allocation3 + $0xc8] sm:$0xff]
      %v6147 = vld [vmem:[#allocation3 + $0xd0] sm:$0xff]
      %v6148 = vld [vmem:[#allocation3 + $0xd8] sm:$0xff]
      %v6149 = vld [vmem:[#allocation3 + $0xe0] sm:$0xff]
      %v6150 = vld [vmem:[#allocation3 + $0xe8] sm:$0xff]
      %v6151 = vld [vmem:[#allocation3 + $0xf0] sm:$0xff]
      %v6152 = vld [vmem:[#allocation3 + $0xf8] sm:$0xff]
      %v6153 = vld [vmem:[#allocation3 + $0x100] sm:$0xff]
      %v6154 = vld [vmem:[#allocation3 + $0x108] sm:$0xff]
      %v6155 = vld [vmem:[#allocation3 + $0x110] sm:$0xff]
      %v6156 = vld [vmem:[#allocation3 + $0x118] sm:$0xff]
      %v6157 = vld [vmem:[#allocation3 + $0x120] sm:$0xff]
      %v6158 = vld [vmem:[#allocation3 + $0x128] sm:$0xff]
      %v6159 = vld [vmem:[#allocation3 + $0x130] sm:$0xff]
      %v6160 = vld [vmem:[#allocation3 + $0x138] sm:$0xff]
      %v6162 = vsel %vm694, %v6114, 0
      %v6165 = vsel %vm694, %v6116, 0
      %v6168 = vsel %vm694, %v6118, 0
      %v6171 = vsel %vm694, %v6120, 0
      %6173 = vmatpush.msra.mxu0 %v6151
      %6174 = vmatpush.msra.mxu0 %v6149
      %6175 = vmatpush.msra.mxu0 %v6147
      %6176 = vmatpush.msra.mxu0 %v6145
      %6177 = vmatpush.msra.mxu0 %v6143
      %6178 = vmatpush.msra.mxu0 %v6141
      %6179 = vmatpush.msra.mxu0 %v6139
      %6180 = vmatpush.msra.mxu0 %v6137
      %6181 = vmatpush.msra.mxu0 %v6135
      %6182 = vmatpush.msra.mxu0 %v6133
      %6183 = vmatpush.msra.mxu0 %v6131
      %6184 = vmatpush.msra.mxu0 %v6129
      %6185 = vmatpush.msra.mxu0 %v6127
      %6186 = vmatpush.msra.mxu0 %v6125
      %6187 = vmatpush.msra.mxu0 %v6123
      %6188 = vmatpush.msra.mxu0 %v6121
      %6189 = vmatmul.f32.gmra.mxu0 %v6113
      %v6190 = vpop.f32.mrf.mxu0
      %v6191 = vadd.f32 0.0, %v6190
      %6192 = vmatmul.f32.gmra.mxu0 %v6115
      %v6193 = vpop.f32.mrf.mxu0
      %v6194 = vadd.f32 0.0, %v6193
      %6195 = vmatmul.f32.gmra.mxu0 %v6117
      %v6196 = vpop.f32.mrf.mxu0
      %v6197 = vadd.f32 0.0, %v6196
      %6198 = vmatmul.f32.gmra.mxu0 %v6119
      %v6199 = vpop.f32.mrf.mxu0
      %v6200 = vadd.f32 0.0, %v6199
      %6201 = vdwg.mxu0
      %6202 = vmatpush.msra.mxu0 0.0
      %6203 = vmatpush.msra.mxu0 0.0
      %6204 = vmatpush.msra.mxu0 0.0
      %6205 = vmatpush.msra.mxu0 0.0
      %6206 = vmatpush.msra.mxu0 0.0
      %6207 = vmatpush.msra.mxu0 0.0
      %6208 = vmatpush.msra.mxu0 0.0
      %6209 = vmatpush.msra.mxu0 0.0
      %6210 = vmatpush.msra.mxu0 0.0
      %6211 = vmatpush.msra.mxu0 0.0
      %6212 = vmatpush.msra.mxu0 0.0
      %6213 = vmatpush.msra.mxu0 0.0
      %6214 = vmatpush.msra.mxu0 %v6159
      %6215 = vmatpush.msra.mxu0 %v6157
      %6216 = vmatpush.msra.mxu0 %v6155
      %6217 = vmatpush.msra.mxu0 %v6153
      %6218 = vmatmul.f32.gmra.mxu0 %v6162
      %v6219 = vpop.f32.mrf.mxu0
      %v6220 = vadd.f32 %v6191, %v6219
      %6221 = vmatmul.f32.gmra.mxu0 %v6165
      %v6222 = vpop.f32.mrf.mxu0
      %v6223 = vadd.f32 %v6194, %v6222
      %6224 = vmatmul.f32.gmra.mxu0 %v6168
      %v6225 = vpop.f32.mrf.mxu0
      %v6226 = vadd.f32 %v6197, %v6225
      %6227 = vmatmul.f32.gmra.mxu0 %v6171
      %v6228 = vpop.f32.mrf.mxu0
      %v6229 = vadd.f32 %v6200, %v6228
      %6230 = vdwg.mxu0
      %6231 = vmatpush.msra.mxu0 %v6152
      %6232 = vmatpush.msra.mxu0 %v6150
      %6233 = vmatpush.msra.mxu0 %v6148
      %6234 = vmatpush.msra.mxu0 %v6146
      %6235 = vmatpush.msra.mxu0 %v6144
      %6236 = vmatpush.msra.mxu0 %v6142
      %6237 = vmatpush.msra.mxu0 %v6140
      %6238 = vmatpush.msra.mxu0 %v6138
      %6239 = vmatpush.msra.mxu0 %v6136
      %6240 = vmatpush.msra.mxu0 %v6134
      %6241 = vmatpush.msra.mxu0 %v6132
      %6242 = vmatpush.msra.mxu0 %v6130
      %6243 = vmatpush.msra.mxu0 %v6128
      %6244 = vmatpush.msra.mxu0 %v6126
      %6245 = vmatpush.msra.mxu0 %v6124
      %6246 = vmatpush.msra.mxu0 %v6122
      %6247 = vmatmul.f32.gmra.mxu0 %v6113
      %v6248 = vpop.f32.mrf.mxu0
      %v6249 = vadd.f32 0.0, %v6248
      %6250 = vmatmul.f32.gmra.mxu0 %v6115
      %v6251 = vpop.f32.mrf.mxu0
      %v6252 = vadd.f32 0.0, %v6251
      %6253 = vmatmul.f32.gmra.mxu0 %v6117
      %v6254 = vpop.f32.mrf.mxu0
      %v6255 = vadd.f32 0.0, %v6254
      %6256 = vmatmul.f32.gmra.mxu0 %v6119
      %v6257 = vpop.f32.mrf.mxu0
      %v6258 = vadd.f32 0.0, %v6257
      %6259 = vdwg.mxu0
      %6260 = vmatpush.msra.mxu0 0.0
      %6261 = vmatpush.msra.mxu0 0.0
      %6262 = vmatpush.msra.mxu0 0.0
      %6263 = vmatpush.msra.mxu0 0.0
      %6264 = vmatpush.msra.mxu0 0.0
      %6265 = vmatpush.msra.mxu0 0.0
      %6266 = vmatpush.msra.mxu0 0.0
      %6267 = vmatpush.msra.mxu0 0.0
      %6268 = vmatpush.msra.mxu0 0.0
      %6269 = vmatpush.msra.mxu0 0.0
      %6270 = vmatpush.msra.mxu0 0.0
      %6271 = vmatpush.msra.mxu0 0.0
      %6272 = vmatpush.msra.mxu0 %v6160
      %6273 = vmatpush.msra.mxu0 %v6158
      %6274 = vmatpush.msra.mxu0 %v6156
      %6275 = vmatpush.msra.mxu0 %v6154
      %6276 = vmatmul.f32.gmra.mxu0 %v6162
      %v6277 = vpop.f32.mrf.mxu0
      %v6278 = vadd.f32 %v6249, %v6277
      %6279 = vmatmul.f32.gmra.mxu0 %v6165
      %v6280 = vpop.f32.mrf.mxu0
      %v6281 = vadd.f32 %v6252, %v6280
      %6282 = vmatmul.f32.gmra.mxu0 %v6168
      %v6283 = vpop.f32.mrf.mxu0
      %v6284 = vadd.f32 %v6255, %v6283
      %6285 = vmatmul.f32.gmra.mxu0 %v6171
      %v6286 = vpop.f32.mrf.mxu0
      %v6287 = vadd.f32 %v6258, %v6286
      %6288 = vdwg.mxu0
      %v6289 = vsel %vm825, %v6220, 0.0
      %v6290 = vsel %vm826, %v6278, 0.0
      %v6291 = vsel %vm825, %v6223, 0.0
      %v6292 = vsel %vm826, %v6281, 0.0
      %v6293 = vsel %vm825, %v6226, 0.0
      %v6294 = vsel %vm826, %v6284, 0.0
      %v6295 = vsel %vm825, %v6229, 0.0
      %v6296 = vsel %vm826, %v6287, 0.0
      %v6297 = vadd.f32 %v6289, 0.0
      %v6298 = vadd.f32 %v6290, 0.0
      %v6299 = vadd.f32 %v6291, 0.0
      %v6300 = vadd.f32 %v6292, 0.0
      %v6301 = vadd.f32 %v6293, 0.0
      %v6302 = vadd.f32 %v6294, 0.0
      %v6303 = vadd.f32 %v6295, 0.0
      %v6304 = vadd.f32 %v6296, 0.0
      %v6305 = vld [vmem:[#allocation2] sm:$0xff]
      %v6306 = vld [vmem:[#allocation2 + $0x8] sm:$0xff]
      %v6307 = vld [vmem:[#allocation2 + $0x10] sm:$0xff]
      %v6308 = vld [vmem:[#allocation2 + $0x20] sm:$0xff]
      %v6309 = vld [vmem:[#allocation2 + $0x28] sm:$0xff]
      %v6310 = vld [vmem:[#allocation2 + $0x30] sm:$0xff]
      %v6311 = vld [vmem:[#allocation2 + $0x40] sm:$0xff]
      %v6312 = vld [vmem:[#allocation2 + $0x48] sm:$0xff]
      %v6313 = vld [vmem:[#allocation2 + $0x50] sm:$0xff]
      %v6314 = vld [vmem:[#allocation2 + $0x60] sm:$0xff]
      %v6315 = vld [vmem:[#allocation2 + $0x68] sm:$0xff]
      %v6316 = vld [vmem:[#allocation2 + $0x70] sm:$0xff]
      %6329 = vrot.lane.b32.xlu0 %v6305, 33
      %v6330 = vpop.permute.xlu0 %6329
      %6331 = vrot.lane.b32.xlu0 %v6306, 33
      %v6332 = vpop.permute.xlu0 %6331
      %6333 = vrot.lane.b32.xlu0 %v6307, 33
      %v6334 = vpop.permute.xlu0 %6333
      %6335 = vrot.lane.b32.xlu0 %v6308, 33
      %v6336 = vpop.permute.xlu0 %6335
      %6337 = vrot.lane.b32.xlu0 %v6309, 33
      %v6338 = vpop.permute.xlu0 %6337
      %6339 = vrot.lane.b32.xlu0 %v6310, 33
      %v6340 = vpop.permute.xlu0 %6339
      %6341 = vrot.lane.b32.xlu0 %v6311, 33
      %v6342 = vpop.permute.xlu0 %6341
      %6343 = vrot.lane.b32.xlu0 %v6312, 33
      %v6344 = vpop.permute.xlu0 %6343
      %6345 = vrot.lane.b32.xlu0 %v6313, 33
      %v6346 = vpop.permute.xlu0 %6345
      %6347 = vrot.lane.b32.xlu0 %v6314, 33
      %v6348 = vpop.permute.xlu0 %6347
      %6349 = vrot.lane.b32.xlu0 %v6315, 33
      %v6350 = vpop.permute.xlu0 %6349
      %6351 = vrot.lane.b32.xlu0 %v6316, 33
      %v6352 = vpop.permute.xlu0 %6351
      %v6353 = vsel %vm891, %v6330, %v6332
      %v6354 = vsel %vm891, %v6332, %v6334
      %v6355 = vsel %vm891, %v6336, %v6338
      %v6356 = vsel %vm891, %v6338, %v6340
      %v6357 = vsel %vm891, %v6342, %v6344
      %v6358 = vsel %vm891, %v6344, %v6346
      %v6359 = vsel %vm891, %v6348, %v6350
      %v6360 = vsel %vm891, %v6350, %v6352
      %6369 = vst [vmem:[#allocation3] sm:$0xff] %v6353
      %6370 = vst [vmem:[#allocation3 + $0x8] sm:$0xff] %v6354
      %6371 = vst [vmem:[#allocation3 + $0x10] sm:$0xff] %v6355
      %6372 = vst [vmem:[#allocation3 + $0x18] sm:$0xff] %v6356
      %6373 = vst [vmem:[#allocation3 + $0x20] sm:$0xff] %v6357
      %6374 = vst [vmem:[#allocation3 + $0x28] sm:$0xff] %v6358
      %6375 = vst [vmem:[#allocation3 + $0x30] sm:$0xff] %v6359
      %6376 = vst [vmem:[#allocation3 + $0x38] sm:$0xff] %v6360
      %v6377 = vld [vmem:[#allocation2] sm:$0xff]
      %v6378 = vld [vmem:[#allocation2 + $0x8] sm:$0xff]
      %v6379 = vld [vmem:[#allocation2 + $0x10] sm:$0xff]
      %v6380 = vld [vmem:[#allocation2 + $0x20] sm:$0xff]
      %v6381 = vld [vmem:[#allocation2 + $0x28] sm:$0xff]
      %v6382 = vld [vmem:[#allocation2 + $0x30] sm:$0xff]
      %v6383 = vld [vmem:[#allocation2 + $0x40] sm:$0xff]
      %v6384 = vld [vmem:[#allocation2 + $0x48] sm:$0xff]
      %v6385 = vld [vmem:[#allocation2 + $0x50] sm:$0xff]
      %v6386 = vld [vmem:[#allocation2 + $0x60] sm:$0xff]
      %v6387 = vld [vmem:[#allocation2 + $0x68] sm:$0xff]
      %v6388 = vld [vmem:[#allocation2 + $0x70] sm:$0xff]
      %6401 = vrot.lane.b32.xlu0 %v6377, 17
      %v6402 = vpop.permute.xlu0 %6401
      %6403 = vrot.lane.b32.xlu0 %v6378, 17
      %v6404 = vpop.permute.xlu0 %6403
      %6405 = vrot.lane.b32.xlu0 %v6379, 17
      %v6406 = vpop.permute.xlu0 %6405
      %6407 = vrot.lane.b32.xlu0 %v6380, 17
      %v6408 = vpop.permute.xlu0 %6407
      %6409 = vrot.lane.b32.xlu0 %v6381, 17
      %v6410 = vpop.permute.xlu0 %6409
      %6411 = vrot.lane.b32.xlu0 %v6382, 17
      %v6412 = vpop.permute.xlu0 %6411
      %6413 = vrot.lane.b32.xlu0 %v6383, 17
      %v6414 = vpop.permute.xlu0 %6413
      %6415 = vrot.lane.b32.xlu0 %v6384, 17
      %v6416 = vpop.permute.xlu0 %6415
      %6417 = vrot.lane.b32.xlu0 %v6385, 17
      %v6418 = vpop.permute.xlu0 %6417
      %6419 = vrot.lane.b32.xlu0 %v6386, 17
      %v6420 = vpop.permute.xlu0 %6419
      %6421 = vrot.lane.b32.xlu0 %v6387, 17
      %v6422 = vpop.permute.xlu0 %6421
      %6423 = vrot.lane.b32.xlu0 %v6388, 17
      %v6424 = vpop.permute.xlu0 %6423
      %v6425 = vsel %vm964, %v6402, %v6404
      %v6426 = vsel %vm964, %v6404, %v6406
      %v6427 = vsel %vm964, %v6408, %v6410
      %v6428 = vsel %vm964, %v6410, %v6412
      %v6429 = vsel %vm964, %v6414, %v6416
      %v6430 = vsel %vm964, %v6416, %v6418
      %v6431 = vsel %vm964, %v6420, %v6422
      %v6432 = vsel %vm964, %v6422, %v6424
      %6441 = vst [vmem:[#allocation3 + $0x40] sm:$0xff] %v6425
      %6442 = vst [vmem:[#allocation3 + $0x48] sm:$0xff] %v6426
      %6443 = vst [vmem:[#allocation3 + $0x50] sm:$0xff] %v6427
      %6444 = vst [vmem:[#allocation3 + $0x58] sm:$0xff] %v6428
      %6445 = vst [vmem:[#allocation3 + $0x60] sm:$0xff] %v6429
      %6446 = vst [vmem:[#allocation3 + $0x68] sm:$0xff] %v6430
      %6447 = vst [vmem:[#allocation3 + $0x70] sm:$0xff] %v6431
      %6448 = vst [vmem:[#allocation3 + $0x78] sm:$0xff] %v6432
      %v6449 = vld [vmem:[#allocation2] sm:$0xff]
      %v6450 = vld [vmem:[#allocation2 + $0x8] sm:$0xff]
      %v6451 = vld [vmem:[#allocation2 + $0x10] sm:$0xff]
      %v6452 = vld [vmem:[#allocation2 + $0x20] sm:$0xff]
      %v6453 = vld [vmem:[#allocation2 + $0x28] sm:$0xff]
      %v6454 = vld [vmem:[#allocation2 + $0x30] sm:$0xff]
      %v6455 = vld [vmem:[#allocation2 + $0x40] sm:$0xff]
      %v6456 = vld [vmem:[#allocation2 + $0x48] sm:$0xff]
      %v6457 = vld [vmem:[#allocation2 + $0x50] sm:$0xff]
      %v6458 = vld [vmem:[#allocation2 + $0x60] sm:$0xff]
      %v6459 = vld [vmem:[#allocation2 + $0x68] sm:$0xff]
      %v6460 = vld [vmem:[#allocation2 + $0x70] sm:$0xff]
      %6473 = vrot.lane.b32.xlu0 %v6449, 1
      %v6474 = vpop.permute.xlu0 %6473
      %6475 = vrot.lane.b32.xlu0 %v6450, 1
      %v6476 = vpop.permute.xlu0 %6475
      %6477 = vrot.lane.b32.xlu0 %v6451, 1
      %v6478 = vpop.permute.xlu0 %6477
      %6479 = vrot.lane.b32.xlu0 %v6452, 1
      %v6480 = vpop.permute.xlu0 %6479
      %6481 = vrot.lane.b32.xlu0 %v6453, 1
      %v6482 = vpop.permute.xlu0 %6481
      %6483 = vrot.lane.b32.xlu0 %v6454, 1
      %v6484 = vpop.permute.xlu0 %6483
      %6485 = vrot.lane.b32.xlu0 %v6455, 1
      %v6486 = vpop.permute.xlu0 %6485
      %6487 = vrot.lane.b32.xlu0 %v6456, 1
      %v6488 = vpop.permute.xlu0 %6487
      %6489 = vrot.lane.b32.xlu0 %v6457, 1
      %v6490 = vpop.permute.xlu0 %6489
      %6491 = vrot.lane.b32.xlu0 %v6458, 1
      %v6492 = vpop.permute.xlu0 %6491
      %6493 = vrot.lane.b32.xlu0 %v6459, 1
      %v6494 = vpop.permute.xlu0 %6493
      %6495 = vrot.lane.b32.xlu0 %v6460, 1
      %v6496 = vpop.permute.xlu0 %6495
      %v6497 = vsel %vm1037, %v6474, %v6476
      %v6498 = vsel %vm1037, %v6476, %v6478
      %v6499 = vsel %vm1037, %v6480, %v6482
      %v6500 = vsel %vm1037, %v6482, %v6484
      %v6501 = vsel %vm1037, %v6486, %v6488
      %v6502 = vsel %vm1037, %v6488, %v6490
      %v6503 = vsel %vm1037, %v6492, %v6494
      %v6504 = vsel %vm1037, %v6494, %v6496
      %6513 = vst [vmem:[#allocation3 + $0x80] sm:$0xff] %v6497
      %6514 = vst [vmem:[#allocation3 + $0x88] sm:$0xff] %v6498
      %6515 = vst [vmem:[#allocation3 + $0x90] sm:$0xff] %v6499
      %6516 = vst [vmem:[#allocation3 + $0x98] sm:$0xff] %v6500
      %6517 = vst [vmem:[#allocation3 + $0xa0] sm:$0xff] %v6501
      %6518 = vst [vmem:[#allocation3 + $0xa8] sm:$0xff] %v6502
      %6519 = vst [vmem:[#allocation3 + $0xb0] sm:$0xff] %v6503
      %6520 = vst [vmem:[#allocation3 + $0xb8] sm:$0xff] %v6504
      %v6521 = vld [vmem:[#allocation2 + $0x8] sm:$0xff]
      %v6522 = vld [vmem:[#allocation2 + $0x10] sm:$0xff]
      %v6523 = vld [vmem:[#allocation2 + $0x18] sm:$0xff]
      %v6524 = vld [vmem:[#allocation2 + $0x28] sm:$0xff]
      %v6525 = vld [vmem:[#allocation2 + $0x30] sm:$0xff]
      %v6526 = vld [vmem:[#allocation2 + $0x38] sm:$0xff]
      %v6527 = vld [vmem:[#allocation2 + $0x48] sm:$0xff]
      %v6528 = vld [vmem:[#allocation2 + $0x50] sm:$0xff]
      %v6529 = vld [vmem:[#allocation2 + $0x58] sm:$0xff]
      %v6530 = vld [vmem:[#allocation2 + $0x68] sm:$0xff]
      %v6531 = vld [vmem:[#allocation2 + $0x70] sm:$0xff]
      %v6532 = vld [vmem:[#allocation2 + $0x78] sm:$0xff]
      %6545 = vrot.lane.b32.xlu0 %v6521, 113
      %v6546 = vpop.permute.xlu0 %6545
      %6547 = vrot.lane.b32.xlu0 %v6522, 113
      %v6548 = vpop.permute.xlu0 %6547
      %6549 = vrot.lane.b32.xlu0 %v6523, 113
      %v6550 = vpop.permute.xlu0 %6549
      %6551 = vrot.lane.b32.xlu0 %v6524, 113
      %v6552 = vpop.permute.xlu0 %6551
      %6553 = vrot.lane.b32.xlu0 %v6525, 113
      %v6554 = vpop.permute.xlu0 %6553
      %6555 = vrot.lane.b32.xlu0 %v6526, 113
      %v6556 = vpop.permute.xlu0 %6555
      %6557 = vrot.lane.b32.xlu0 %v6527, 113
      %v6558 = vpop.permute.xlu0 %6557
      %6559 = vrot.lane.b32.xlu0 %v6528, 113
      %v6560 = vpop.permute.xlu0 %6559
      %6561 = vrot.lane.b32.xlu0 %v6529, 113
      %v6562 = vpop.permute.xlu0 %6561
      %6563 = vrot.lane.b32.xlu0 %v6530, 113
      %v6564 = vpop.permute.xlu0 %6563
      %6565 = vrot.lane.b32.xlu0 %v6531, 113
      %v6566 = vpop.permute.xlu0 %6565
      %6567 = vrot.lane.b32.xlu0 %v6532, 113
      %v6568 = vpop.permute.xlu0 %6567
      %v6569 = vsel %vm1110, %v6546, %v6548
      %v6570 = vsel %vm1110, %v6548, %v6550
      %v6571 = vsel %vm1110, %v6552, %v6554
      %v6572 = vsel %vm1110, %v6554, %v6556
      %v6573 = vsel %vm1110, %v6558, %v6560
      %v6574 = vsel %vm1110, %v6560, %v6562
      %v6575 = vsel %vm1110, %v6564, %v6566
      %v6576 = vsel %vm1110, %v6566, %v6568
      %6585 = vst [vmem:[#allocation3 + $0xc0] sm:$0xff] %v6569
      %6586 = vst [vmem:[#allocation3 + $0xc8] sm:$0xff] %v6570
      %6587 = vst [vmem:[#allocation3 + $0xd0] sm:$0xff] %v6571
      %6588 = vst [vmem:[#allocation3 + $0xd8] sm:$0xff] %v6572
      %6589 = vst [vmem:[#allocation3 + $0xe0] sm:$0xff] %v6573
      %6590 = vst [vmem:[#allocation3 + $0xe8] sm:$0xff] %v6574
      %6591 = vst [vmem:[#allocation3 + $0xf0] sm:$0xff] %v6575
      %6592 = vst [vmem:[#allocation3 + $0xf8] sm:$0xff] %v6576
      %v6593 = vld [vmem:[#allocation2 + $0x8] sm:$0xff]
      %v6594 = vld [vmem:[#allocation2 + $0x10] sm:$0xff]
      %v6595 = vld [vmem:[#allocation2 + $0x18] sm:$0xff]
      %v6596 = vld [vmem:[#allocation2 + $0x28] sm:$0xff]
      %v6597 = vld [vmem:[#allocation2 + $0x30] sm:$0xff]
      %v6598 = vld [vmem:[#allocation2 + $0x38] sm:$0xff]
      %v6599 = vld [vmem:[#allocation2 + $0x48] sm:$0xff]
      %v6600 = vld [vmem:[#allocation2 + $0x50] sm:$0xff]
      %v6601 = vld [vmem:[#allocation2 + $0x58] sm:$0xff]
      %v6602 = vld [vmem:[#allocation2 + $0x68] sm:$0xff]
      %v6603 = vld [vmem:[#allocation2 + $0x70] sm:$0xff]
      %v6604 = vld [vmem:[#allocation2 + $0x78] sm:$0xff]
      %6617 = vrot.lane.b32.xlu0 %v6593, 97
      %v6618 = vpop.permute.xlu0 %6617
      %6619 = vrot.lane.b32.xlu0 %v6594, 97
      %v6620 = vpop.permute.xlu0 %6619
      %6621 = vrot.lane.b32.xlu0 %v6595, 97
      %v6622 = vpop.permute.xlu0 %6621
      %6623 = vrot.lane.b32.xlu0 %v6596, 97
      %v6624 = vpop.permute.xlu0 %6623
      %6625 = vrot.lane.b32.xlu0 %v6597, 97
      %v6626 = vpop.permute.xlu0 %6625
      %6627 = vrot.lane.b32.xlu0 %v6598, 97
      %v6628 = vpop.permute.xlu0 %6627
      %6629 = vrot.lane.b32.xlu0 %v6599, 97
      %v6630 = vpop.permute.xlu0 %6629
      %6631 = vrot.lane.b32.xlu0 %v6600, 97
      %v6632 = vpop.permute.xlu0 %6631
      %6633 = vrot.lane.b32.xlu0 %v6601, 97
      %v6634 = vpop.permute.xlu0 %6633
      %6635 = vrot.lane.b32.xlu0 %v6602, 97
      %v6636 = vpop.permute.xlu0 %6635
      %6637 = vrot.lane.b32.xlu0 %v6603, 97
      %v6638 = vpop.permute.xlu0 %6637
      %6639 = vrot.lane.b32.xlu0 %v6604, 97
      %v6640 = vpop.permute.xlu0 %6639
      %v6641 = vsel %vm1183, %v6618, %v6620
      %v6642 = vsel %vm1183, %v6620, %v6622
      %v6643 = vsel %vm1183, %v6624, %v6626
      %v6644 = vsel %vm1183, %v6626, %v6628
      %v6645 = vsel %vm1183, %v6630, %v6632
      %v6646 = vsel %vm1183, %v6632, %v6634
      %v6647 = vsel %vm1183, %v6636, %v6638
      %v6648 = vsel %vm1183, %v6638, %v6640
      %6657 = vst [vmem:[#allocation3 + $0x100] sm:$0xff] %v6641
      %6658 = vst [vmem:[#allocation3 + $0x108] sm:$0xff] %v6642
      %6659 = vst [vmem:[#allocation3 + $0x110] sm:$0xff] %v6643
      %6660 = vst [vmem:[#allocation3 + $0x118] sm:$0xff] %v6644
      %6661 = vst [vmem:[#allocation3 + $0x120] sm:$0xff] %v6645
      %6662 = vst [vmem:[#allocation3 + $0x128] sm:$0xff] %v6646
      %6663 = vst [vmem:[#allocation3 + $0x130] sm:$0xff] %v6647
      %6664 = vst [vmem:[#allocation3 + $0x138] sm:$0xff] %v6648
      %s6665 = scalar_lea.vmem %s3, 64
      %v6666 = vld [vmem:[%s6665] sm:$0xff]
      %v6667 = vld [vmem:[%s6665 + $0x8] sm:$0xff]
      %v6668 = vld [vmem:[%s6665 + $0x10] sm:$0xff]
      %v6669 = vld [vmem:[%s6665 + $0x18] sm:$0xff]
      %v6670 = vld [vmem:[%s6665 + $0x20] sm:$0xff]
      %v6671 = vld [vmem:[%s6665 + $0x28] sm:$0xff]
      %v6672 = vld [vmem:[%s6665 + $0x30] sm:$0xff]
      %v6673 = vld [vmem:[%s6665 + $0x38] sm:$0xff]
      %v6674 = vld [vmem:[#allocation3] sm:$0xff]
      %v6675 = vld [vmem:[#allocation3 + $0x8] sm:$0xff]
      %v6676 = vld [vmem:[#allocation3 + $0x10] sm:$0xff]
      %v6677 = vld [vmem:[#allocation3 + $0x18] sm:$0xff]
      %v6678 = vld [vmem:[#allocation3 + $0x20] sm:$0xff]
      %v6679 = vld [vmem:[#allocation3 + $0x28] sm:$0xff]
      %v6680 = vld [vmem:[#allocation3 + $0x30] sm:$0xff]
      %v6681 = vld [vmem:[#allocation3 + $0x38] sm:$0xff]
      %v6682 = vld [vmem:[#allocation3 + $0x40] sm:$0xff]
      %v6683 = vld [vmem:[#allocation3 + $0x48] sm:$0xff]
      %v6684 = vld [vmem:[#allocation3 + $0x50] sm:$0xff]
      %v6685 = vld [vmem:[#allocation3 + $0x58] sm:$0xff]
      %v6686 = vld [vmem:[#allocation3 + $0x60] sm:$0xff]
      %v6687 = vld [vmem:[#allocation3 + $0x68] sm:$0xff]
      %v6688 = vld [vmem:[#allocation3 + $0x70] sm:$0xff]
      %v6689 = vld [vmem:[#allocation3 + $0x78] sm:$0xff]
      %v6690 = vld [vmem:[#allocation3 + $0x80] sm:$0xff]
      %v6691 = vld [vmem:[#allocation3 + $0x88] sm:$0xff]
      %v6692 = vld [vmem:[#allocation3 + $0x90] sm:$0xff]
      %v6693 = vld [vmem:[#allocation3 + $0x98] sm:$0xff]
      %v6694 = vld [vmem:[#allocation3 + $0xa0] sm:$0xff]
      %v6695 = vld [vmem:[#allocation3 + $0xa8] sm:$0xff]
      %v6696 = vld [vmem:[#allocation3 + $0xb0] sm:$0xff]
      %v6697 = vld [vmem:[#allocation3 + $0xb8] sm:$0xff]
      %v6698 = vld [vmem:[#allocation3 + $0xc0] sm:$0xff]
      %v6699 = vld [vmem:[#allocation3 + $0xc8] sm:$0xff]
      %v6700 = vld [vmem:[#allocation3 + $0xd0] sm:$0xff]
      %v6701 = vld [vmem:[#allocation3 + $0xd8] sm:$0xff]
      %v6702 = vld [vmem:[#allocation3 + $0xe0] sm:$0xff]
      %v6703 = vld [vmem:[#allocation3 + $0xe8] sm:$0xff]
      %v6704 = vld [vmem:[#allocation3 + $0xf0] sm:$0xff]
      %v6705 = vld [vmem:[#allocation3 + $0xf8] sm:$0xff]
      %v6706 = vld [vmem:[#allocation3 + $0x100] sm:$0xff]
      %v6707 = vld [vmem:[#allocation3 + $0x108] sm:$0xff]
      %v6708 = vld [vmem:[#allocation3 + $0x110] sm:$0xff]
      %v6709 = vld [vmem:[#allocation3 + $0x118] sm:$0xff]
      %v6710 = vld [vmem:[#allocation3 + $0x120] sm:$0xff]
      %v6711 = vld [vmem:[#allocation3 + $0x128] sm:$0xff]
      %v6712 = vld [vmem:[#allocation3 + $0x130] sm:$0xff]
      %v6713 = vld [vmem:[#allocation3 + $0x138] sm:$0xff]
      %v6715 = vsel %vm694, %v6667, 0
      %v6718 = vsel %vm694, %v6669, 0
      %v6721 = vsel %vm694, %v6671, 0
      %v6724 = vsel %vm694, %v6673, 0
      %6726 = vmatpush.msra.mxu0 %v6704
      %6727 = vmatpush.msra.mxu0 %v6702
      %6728 = vmatpush.msra.mxu0 %v6700
      %6729 = vmatpush.msra.mxu0 %v6698
      %6730 = vmatpush.msra.mxu0 %v6696
      %6731 = vmatpush.msra.mxu0 %v6694
      %6732 = vmatpush.msra.mxu0 %v6692
      %6733 = vmatpush.msra.mxu0 %v6690
      %6734 = vmatpush.msra.mxu0 %v6688
      %6735 = vmatpush.msra.mxu0 %v6686
      %6736 = vmatpush.msra.mxu0 %v6684
      %6737 = vmatpush.msra.mxu0 %v6682
      %6738 = vmatpush.msra.mxu0 %v6680
      %6739 = vmatpush.msra.mxu0 %v6678
      %6740 = vmatpush.msra.mxu0 %v6676
      %6741 = vmatpush.msra.mxu0 %v6674
      %6742 = vmatmul.f32.gmra.mxu0 %v6666
      %v6743 = vpop.f32.mrf.mxu0
      %v6744 = vadd.f32 0.0, %v6743
      %6745 = vmatmul.f32.gmra.mxu0 %v6668
      %v6746 = vpop.f32.mrf.mxu0
      %v6747 = vadd.f32 0.0, %v6746
      %6748 = vmatmul.f32.gmra.mxu0 %v6670
      %v6749 = vpop.f32.mrf.mxu0
      %v6750 = vadd.f32 0.0, %v6749
      %6751 = vmatmul.f32.gmra.mxu0 %v6672
      %v6752 = vpop.f32.mrf.mxu0
      %v6753 = vadd.f32 0.0, %v6752
      %6754 = vdwg.mxu0
      %6755 = vmatpush.msra.mxu0 0.0
      %6756 = vmatpush.msra.mxu0 0.0
      %6757 = vmatpush.msra.mxu0 0.0
      %6758 = vmatpush.msra.mxu0 0.0
      %6759 = vmatpush.msra.mxu0 0.0
      %6760 = vmatpush.msra.mxu0 0.0
      %6761 = vmatpush.msra.mxu0 0.0
      %6762 = vmatpush.msra.mxu0 0.0
      %6763 = vmatpush.msra.mxu0 0.0
      %6764 = vmatpush.msra.mxu0 0.0
      %6765 = vmatpush.msra.mxu0 0.0
      %6766 = vmatpush.msra.mxu0 0.0
      %6767 = vmatpush.msra.mxu0 %v6712
      %6768 = vmatpush.msra.mxu0 %v6710
      %6769 = vmatpush.msra.mxu0 %v6708
      %6770 = vmatpush.msra.mxu0 %v6706
      %6771 = vmatmul.f32.gmra.mxu0 %v6715
      %v6772 = vpop.f32.mrf.mxu0
      %v6773 = vadd.f32 %v6744, %v6772
      %6774 = vmatmul.f32.gmra.mxu0 %v6718
      %v6775 = vpop.f32.mrf.mxu0
      %v6776 = vadd.f32 %v6747, %v6775
      %6777 = vmatmul.f32.gmra.mxu0 %v6721
      %v6778 = vpop.f32.mrf.mxu0
      %v6779 = vadd.f32 %v6750, %v6778
      %6780 = vmatmul.f32.gmra.mxu0 %v6724
      %v6781 = vpop.f32.mrf.mxu0
      %v6782 = vadd.f32 %v6753, %v6781
      %6783 = vdwg.mxu0
      %6784 = vmatpush.msra.mxu0 %v6705
      %6785 = vmatpush.msra.mxu0 %v6703
      %6786 = vmatpush.msra.mxu0 %v6701
      %6787 = vmatpush.msra.mxu0 %v6699
      %6788 = vmatpush.msra.mxu0 %v6697
      %6789 = vmatpush.msra.mxu0 %v6695
      %6790 = vmatpush.msra.mxu0 %v6693
      %6791 = vmatpush.msra.mxu0 %v6691
      %6792 = vmatpush.msra.mxu0 %v6689
      %6793 = vmatpush.msra.mxu0 %v6687
      %6794 = vmatpush.msra.mxu0 %v6685
      %6795 = vmatpush.msra.mxu0 %v6683
      %6796 = vmatpush.msra.mxu0 %v6681
      %6797 = vmatpush.msra.mxu0 %v6679
      %6798 = vmatpush.msra.mxu0 %v6677
      %6799 = vmatpush.msra.mxu0 %v6675
      %6800 = vmatmul.f32.gmra.mxu0 %v6666
      %v6801 = vpop.f32.mrf.mxu0
      %v6802 = vadd.f32 0.0, %v6801
      %6803 = vmatmul.f32.gmra.mxu0 %v6668
      %v6804 = vpop.f32.mrf.mxu0
      %v6805 = vadd.f32 0.0, %v6804
      %6806 = vmatmul.f32.gmra.mxu0 %v6670
      %v6807 = vpop.f32.mrf.mxu0
      %v6808 = vadd.f32 0.0, %v6807
      %6809 = vmatmul.f32.gmra.mxu0 %v6672
      %v6810 = vpop.f32.mrf.mxu0
      %v6811 = vadd.f32 0.0, %v6810
      %6812 = vdwg.mxu0
      %6813 = vmatpush.msra.mxu0 0.0
      %6814 = vmatpush.msra.mxu0 0.0
      %6815 = vmatpush.msra.mxu0 0.0
      %6816 = vmatpush.msra.mxu0 0.0
      %6817 = vmatpush.msra.mxu0 0.0
      %6818 = vmatpush.msra.mxu0 0.0
      %6819 = vmatpush.msra.mxu0 0.0
      %6820 = vmatpush.msra.mxu0 0.0
      %6821 = vmatpush.msra.mxu0 0.0
      %6822 = vmatpush.msra.mxu0 0.0
      %6823 = vmatpush.msra.mxu0 0.0
      %6824 = vmatpush.msra.mxu0 0.0
      %6825 = vmatpush.msra.mxu0 %v6713
      %6826 = vmatpush.msra.mxu0 %v6711
      %6827 = vmatpush.msra.mxu0 %v6709
      %6828 = vmatpush.msra.mxu0 %v6707
      %6829 = vmatmul.f32.gmra.mxu0 %v6715
      %v6830 = vpop.f32.mrf.mxu0
      %v6831 = vadd.f32 %v6802, %v6830
      %6832 = vmatmul.f32.gmra.mxu0 %v6718
      %v6833 = vpop.f32.mrf.mxu0
      %v6834 = vadd.f32 %v6805, %v6833
      %6835 = vmatmul.f32.gmra.mxu0 %v6721
      %v6836 = vpop.f32.mrf.mxu0
      %v6837 = vadd.f32 %v6808, %v6836
      %6838 = vmatmul.f32.gmra.mxu0 %v6724
      %v6839 = vpop.f32.mrf.mxu0
      %v6840 = vadd.f32 %v6811, %v6839
      %6841 = vdwg.mxu0
      %v6842 = vsel %vm1387, %v6773, 0.0
      %v6843 = vsel %vm1388, %v6831, 0.0
      %v6844 = vsel %vm1387, %v6776, 0.0
      %v6845 = vsel %vm1388, %v6834, 0.0
      %v6846 = vsel %vm1387, %v6779, 0.0
      %v6847 = vsel %vm1388, %v6837, 0.0
      %v6848 = vsel %vm1387, %v6782, 0.0
      %v6849 = vsel %vm1388, %v6840, 0.0
      %v6850 = vadd.f32 %v6297, %v6842
      %v6851 = vadd.f32 %v6298, %v6843
      %v6852 = vadd.f32 %v6299, %v6844
      %v6853 = vadd.f32 %v6300, %v6845
      %v6854 = vadd.f32 %v6301, %v6846
      %v6855 = vadd.f32 %v6302, %v6847
      %v6856 = vadd.f32 %v6303, %v6848
      %v6857 = vadd.f32 %v6304, %v6849
      %v6858 = vld [vmem:[#allocation2] sm:$0xff]
      %v6859 = vld [vmem:[#allocation2 + $0x8] sm:$0xff]
      %v6860 = vld [vmem:[#allocation2 + $0x10] sm:$0xff]
      %v6861 = vld [vmem:[#allocation2 + $0x20] sm:$0xff]
      %v6862 = vld [vmem:[#allocation2 + $0x28] sm:$0xff]
      %v6863 = vld [vmem:[#allocation2 + $0x30] sm:$0xff]
      %v6864 = vld [vmem:[#allocation2 + $0x40] sm:$0xff]
      %v6865 = vld [vmem:[#allocation2 + $0x48] sm:$0xff]
      %v6866 = vld [vmem:[#allocation2 + $0x50] sm:$0xff]
      %v6867 = vld [vmem:[#allocation2 + $0x60] sm:$0xff]
      %v6868 = vld [vmem:[#allocation2 + $0x68] sm:$0xff]
      %v6869 = vld [vmem:[#allocation2 + $0x70] sm:$0xff]
      %6882 = vrot.lane.b32.xlu0 %v6858, 32
      %v6883 = vpop.permute.xlu0 %6882
      %6884 = vrot.lane.b32.xlu0 %v6859, 32
      %v6885 = vpop.permute.xlu0 %6884
      %6886 = vrot.lane.b32.xlu0 %v6860, 32
      %v6887 = vpop.permute.xlu0 %6886
      %6888 = vrot.lane.b32.xlu0 %v6861, 32
      %v6889 = vpop.permute.xlu0 %6888
      %6890 = vrot.lane.b32.xlu0 %v6862, 32
      %v6891 = vpop.permute.xlu0 %6890
      %6892 = vrot.lane.b32.xlu0 %v6863, 32
      %v6893 = vpop.permute.xlu0 %6892
      %6894 = vrot.lane.b32.xlu0 %v6864, 32
      %v6895 = vpop.permute.xlu0 %6894
      %6896 = vrot.lane.b32.xlu0 %v6865, 32
      %v6897 = vpop.permute.xlu0 %6896
      %6898 = vrot.lane.b32.xlu0 %v6866, 32
      %v6899 = vpop.permute.xlu0 %6898
      %6900 = vrot.lane.b32.xlu0 %v6867, 32
      %v6901 = vpop.permute.xlu0 %6900
      %6902 = vrot.lane.b32.xlu0 %v6868, 32
      %v6903 = vpop.permute.xlu0 %6902
      %6904 = vrot.lane.b32.xlu0 %v6869, 32
      %v6905 = vpop.permute.xlu0 %6904
      %v6906 = vsel %vm694, %v6883, %v6885
      %v6907 = vsel %vm694, %v6885, %v6887
      %v6908 = vsel %vm694, %v6889, %v6891
      %v6909 = vsel %vm694, %v6891, %v6893
      %v6910 = vsel %vm694, %v6895, %v6897
      %v6911 = vsel %vm694, %v6897, %v6899
      %v6912 = vsel %vm694, %v6901, %v6903
      %v6913 = vsel %vm694, %v6903, %v6905
      %6922 = vst [vmem:[#allocation3] sm:$0xff] %v6906
      %6923 = vst [vmem:[#allocation3 + $0x8] sm:$0xff] %v6907
      %6924 = vst [vmem:[#allocation3 + $0x10] sm:$0xff] %v6908
      %6925 = vst [vmem:[#allocation3 + $0x18] sm:$0xff] %v6909
      %6926 = vst [vmem:[#allocation3 + $0x20] sm:$0xff] %v6910
      %6927 = vst [vmem:[#allocation3 + $0x28] sm:$0xff] %v6911
      %6928 = vst [vmem:[#allocation3 + $0x30] sm:$0xff] %v6912
      %6929 = vst [vmem:[#allocation3 + $0x38] sm:$0xff] %v6913
      %v6930 = vld [vmem:[#allocation2] sm:$0xff]
      %v6931 = vld [vmem:[#allocation2 + $0x8] sm:$0xff]
      %v6932 = vld [vmem:[#allocation2 + $0x10] sm:$0xff]
      %v6933 = vld [vmem:[#allocation2 + $0x20] sm:$0xff]
      %v6934 = vld [vmem:[#allocation2 + $0x28] sm:$0xff]
      %v6935 = vld [vmem:[#allocation2 + $0x30] sm:$0xff]
      %v6936 = vld [vmem:[#allocation2 + $0x40] sm:$0xff]
      %v6937 = vld [vmem:[#allocation2 + $0x48] sm:$0xff]
      %v6938 = vld [vmem:[#allocation2 + $0x50] sm:$0xff]
      %v6939 = vld [vmem:[#allocation2 + $0x60] sm:$0xff]
      %v6940 = vld [vmem:[#allocation2 + $0x68] sm:$0xff]
      %v6941 = vld [vmem:[#allocation2 + $0x70] sm:$0xff]
      %6954 = vrot.lane.b32.xlu0 %v6930, 16
      %v6955 = vpop.permute.xlu0 %6954
      %6956 = vrot.lane.b32.xlu0 %v6931, 16
      %v6957 = vpop.permute.xlu0 %6956
      %6958 = vrot.lane.b32.xlu0 %v6932, 16
      %v6959 = vpop.permute.xlu0 %6958
      %6960 = vrot.lane.b32.xlu0 %v6933, 16
      %v6961 = vpop.permute.xlu0 %6960
      %6962 = vrot.lane.b32.xlu0 %v6934, 16
      %v6963 = vpop.permute.xlu0 %6962
      %6964 = vrot.lane.b32.xlu0 %v6935, 16
      %v6965 = vpop.permute.xlu0 %6964
      %6966 = vrot.lane.b32.xlu0 %v6936, 16
      %v6967 = vpop.permute.xlu0 %6966
      %6968 = vrot.lane.b32.xlu0 %v6937, 16
      %v6969 = vpop.permute.xlu0 %6968
      %6970 = vrot.lane.b32.xlu0 %v6938, 16
      %v6971 = vpop.permute.xlu0 %6970
      %6972 = vrot.lane.b32.xlu0 %v6939, 16
      %v6973 = vpop.permute.xlu0 %6972
      %6974 = vrot.lane.b32.xlu0 %v6940, 16
      %v6975 = vpop.permute.xlu0 %6974
      %6976 = vrot.lane.b32.xlu0 %v6941, 16
      %v6977 = vpop.permute.xlu0 %6976
      %v6978 = vsel %vm1525, %v6955, %v6957
      %v6979 = vsel %vm1525, %v6957, %v6959
      %v6980 = vsel %vm1525, %v6961, %v6963
      %v6981 = vsel %vm1525, %v6963, %v6965
      %v6982 = vsel %vm1525, %v6967, %v6969
      %v6983 = vsel %vm1525, %v6969, %v6971
      %v6984 = vsel %vm1525, %v6973, %v6975
      %v6985 = vsel %vm1525, %v6975, %v6977
      %6994 = vst [vmem:[#allocation3 + $0x40] sm:$0xff] %v6978
      %6995 = vst [vmem:[#allocation3 + $0x48] sm:$0xff] %v6979
      %6996 = vst [vmem:[#allocation3 + $0x50] sm:$0xff] %v6980
      %6997 = vst [vmem:[#allocation3 + $0x58] sm:$0xff] %v6981
      %6998 = vst [vmem:[#allocation3 + $0x60] sm:$0xff] %v6982
      %6999 = vst [vmem:[#allocation3 + $0x68] sm:$0xff] %v6983
      %7000 = vst [vmem:[#allocation3 + $0x70] sm:$0xff] %v6984
      %7001 = vst [vmem:[#allocation3 + $0x78] sm:$0xff] %v6985
      %v7002 = vld [vmem:[#allocation2 + $0x8] sm:$0xff]
      %v7003 = vld [vmem:[#allocation2 + $0x10] sm:$0xff]
      %v7004 = vld [vmem:[#allocation2 + $0x28] sm:$0xff]
      %v7005 = vld [vmem:[#allocation2 + $0x30] sm:$0xff]
      %v7006 = vld [vmem:[#allocation2 + $0x48] sm:$0xff]
      %v7007 = vld [vmem:[#allocation2 + $0x50] sm:$0xff]
      %v7008 = vld [vmem:[#allocation2 + $0x68] sm:$0xff]
      %v7009 = vld [vmem:[#allocation2 + $0x70] sm:$0xff]
      %7010 = vst [vmem:[#allocation3 + $0x80] sm:$0xff] %v7002
      %7011 = vst [vmem:[#allocation3 + $0x88] sm:$0xff] %v7003
      %7012 = vst [vmem:[#allocation3 + $0x90] sm:$0xff] %v7004
      %7013 = vst [vmem:[#allocation3 + $0x98] sm:$0xff] %v7005
      %7014 = vst [vmem:[#allocation3 + $0xa0] sm:$0xff] %v7006
      %7015 = vst [vmem:[#allocation3 + $0xa8] sm:$0xff] %v7007
      %7016 = vst [vmem:[#allocation3 + $0xb0] sm:$0xff] %v7008
      %7017 = vst [vmem:[#allocation3 + $0xb8] sm:$0xff] %v7009
      %v7018 = vld [vmem:[#allocation2 + $0x8] sm:$0xff]
      %v7019 = vld [vmem:[#allocation2 + $0x10] sm:$0xff]
      %v7020 = vld [vmem:[#allocation2 + $0x18] sm:$0xff]
      %v7021 = vld [vmem:[#allocation2 + $0x28] sm:$0xff]
      %v7022 = vld [vmem:[#allocation2 + $0x30] sm:$0xff]
      %v7023 = vld [vmem:[#allocation2 + $0x38] sm:$0xff]
      %v7024 = vld [vmem:[#allocation2 + $0x48] sm:$0xff]
      %v7025 = vld [vmem:[#allocation2 + $0x50] sm:$0xff]
      %v7026 = vld [vmem:[#allocation2 + $0x58] sm:$0xff]
      %v7027 = vld [vmem:[#allocation2 + $0x68] sm:$0xff]
      %v7028 = vld [vmem:[#allocation2 + $0x70] sm:$0xff]
      %v7029 = vld [vmem:[#allocation2 + $0x78] sm:$0xff]
      %7042 = vrot.lane.b32.xlu0 %v7018, 112
      %v7043 = vpop.permute.xlu0 %7042
      %7044 = vrot.lane.b32.xlu0 %v7019, 112
      %v7045 = vpop.permute.xlu0 %7044
      %7046 = vrot.lane.b32.xlu0 %v7020, 112
      %v7047 = vpop.permute.xlu0 %7046
      %7048 = vrot.lane.b32.xlu0 %v7021, 112
      %v7049 = vpop.permute.xlu0 %7048
      %7050 = vrot.lane.b32.xlu0 %v7022, 112
      %v7051 = vpop.permute.xlu0 %7050
      %7052 = vrot.lane.b32.xlu0 %v7023, 112
      %v7053 = vpop.permute.xlu0 %7052
      %7054 = vrot.lane.b32.xlu0 %v7024, 112
      %v7055 = vpop.permute.xlu0 %7054
      %7056 = vrot.lane.b32.xlu0 %v7025, 112
      %v7057 = vpop.permute.xlu0 %7056
      %7058 = vrot.lane.b32.xlu0 %v7026, 112
      %v7059 = vpop.permute.xlu0 %7058
      %7060 = vrot.lane.b32.xlu0 %v7027, 112
      %v7061 = vpop.permute.xlu0 %7060
      %7062 = vrot.lane.b32.xlu0 %v7028, 112
      %v7063 = vpop.permute.xlu0 %7062
      %7064 = vrot.lane.b32.xlu0 %v7029, 112
      %v7065 = vpop.permute.xlu0 %7064
      %v7066 = vsel %vm1614, %v7043, %v7045
      %v7067 = vsel %vm1614, %v7045, %v7047
      %v7068 = vsel %vm1614, %v7049, %v7051
      %v7069 = vsel %vm1614, %v7051, %v7053
      %v7070 = vsel %vm1614, %v7055, %v7057
      %v7071 = vsel %vm1614, %v7057, %v7059
      %v7072 = vsel %vm1614, %v7061, %v7063
      %v7073 = vsel %vm1614, %v7063, %v7065
      %7082 = vst [vmem:[#allocation3 + $0xc0] sm:$0xff] %v7066
      %7083 = vst [vmem:[#allocation3 + $0xc8] sm:$0xff] %v7067
      %7084 = vst [vmem:[#allocation3 + $0xd0] sm:$0xff] %v7068
      %7085 = vst [vmem:[#allocation3 + $0xd8] sm:$0xff] %v7069
      %7086 = vst [vmem:[#allocation3 + $0xe0] sm:$0xff] %v7070
      %7087 = vst [vmem:[#allocation3 + $0xe8] sm:$0xff] %v7071
      %7088 = vst [vmem:[#allocation3 + $0xf0] sm:$0xff] %v7072
      %7089 = vst [vmem:[#allocation3 + $0xf8] sm:$0xff] %v7073
      %v7090 = vld [vmem:[#allocation2 + $0x8] sm:$0xff]
      %v7091 = vld [vmem:[#allocation2 + $0x10] sm:$0xff]
      %v7092 = vld [vmem:[#allocation2 + $0x18] sm:$0xff]
      %v7093 = vld [vmem:[#allocation2 + $0x28] sm:$0xff]
      %v7094 = vld [vmem:[#allocation2 + $0x30] sm:$0xff]
      %v7095 = vld [vmem:[#allocation2 + $0x38] sm:$0xff]
      %v7096 = vld [vmem:[#allocation2 + $0x48] sm:$0xff]
      %v7097 = vld [vmem:[#allocation2 + $0x50] sm:$0xff]
      %v7098 = vld [vmem:[#allocation2 + $0x58] sm:$0xff]
      %v7099 = vld [vmem:[#allocation2 + $0x68] sm:$0xff]
      %v7100 = vld [vmem:[#allocation2 + $0x70] sm:$0xff]
      %v7101 = vld [vmem:[#allocation2 + $0x78] sm:$0xff]
      %7114 = vrot.lane.b32.xlu0 %v7090, 96
      %v7115 = vpop.permute.xlu0 %7114
      %7116 = vrot.lane.b32.xlu0 %v7091, 96
      %v7117 = vpop.permute.xlu0 %7116
      %7118 = vrot.lane.b32.xlu0 %v7092, 96
      %v7119 = vpop.permute.xlu0 %7118
      %7120 = vrot.lane.b32.xlu0 %v7093, 96
      %v7121 = vpop.permute.xlu0 %7120
      %7122 = vrot.lane.b32.xlu0 %v7094, 96
      %v7123 = vpop.permute.xlu0 %7122
      %7124 = vrot.lane.b32.xlu0 %v7095, 96
      %v7125 = vpop.permute.xlu0 %7124
      %7126 = vrot.lane.b32.xlu0 %v7096, 96
      %v7127 = vpop.permute.xlu0 %7126
      %7128 = vrot.lane.b32.xlu0 %v7097, 96
      %v7129 = vpop.permute.xlu0 %7128
      %7130 = vrot.lane.b32.xlu0 %v7098, 96
      %v7131 = vpop.permute.xlu0 %7130
      %7132 = vrot.lane.b32.xlu0 %v7099, 96
      %v7133 = vpop.permute.xlu0 %7132
      %7134 = vrot.lane.b32.xlu0 %v7100, 96
      %v7135 = vpop.permute.xlu0 %7134
      %7136 = vrot.lane.b32.xlu0 %v7101, 96
      %v7137 = vpop.permute.xlu0 %7136
      %v7138 = vsel %vm1687, %v7115, %v7117
      %v7139 = vsel %vm1687, %v7117, %v7119
      %v7140 = vsel %vm1687, %v7121, %v7123
      %v7141 = vsel %vm1687, %v7123, %v7125
      %v7142 = vsel %vm1687, %v7127, %v7129
      %v7143 = vsel %vm1687, %v7129, %v7131
      %v7144 = vsel %vm1687, %v7133, %v7135
      %v7145 = vsel %vm1687, %v7135, %v7137
      %7154 = vst [vmem:[#allocation3 + $0x100] sm:$0xff] %v7138
      %7155 = vst [vmem:[#allocation3 + $0x108] sm:$0xff] %v7139
      %7156 = vst [vmem:[#allocation3 + $0x110] sm:$0xff] %v7140
      %7157 = vst [vmem:[#allocation3 + $0x118] sm:$0xff] %v7141
      %7158 = vst [vmem:[#allocation3 + $0x120] sm:$0xff] %v7142
      %7159 = vst [vmem:[#allocation3 + $0x128] sm:$0xff] %v7143
      %7160 = vst [vmem:[#allocation3 + $0x130] sm:$0xff] %v7144
      %7161 = vst [vmem:[#allocation3 + $0x138] sm:$0xff] %v7145
      %s7162 = scalar_lea.vmem %s3, 128
      %v7163 = vld [vmem:[%s7162] sm:$0xff]
      %v7164 = vld [vmem:[%s7162 + $0x8] sm:$0xff]
      %v7165 = vld [vmem:[%s7162 + $0x10] sm:$0xff]
      %v7166 = vld [vmem:[%s7162 + $0x18] sm:$0xff]
      %v7167 = vld [vmem:[%s7162 + $0x20] sm:$0xff]
      %v7168 = vld [vmem:[%s7162 + $0x28] sm:$0xff]
      %v7169 = vld [vmem:[%s7162 + $0x30] sm:$0xff]
      %v7170 = vld [vmem:[%s7162 + $0x38] sm:$0xff]
      %v7171 = vld [vmem:[#allocation3] sm:$0xff]
      %v7172 = vld [vmem:[#allocation3 + $0x8] sm:$0xff]
      %v7173 = vld [vmem:[#allocation3 + $0x10] sm:$0xff]
      %v7174 = vld [vmem:[#allocation3 + $0x18] sm:$0xff]
      %v7175 = vld [vmem:[#allocation3 + $0x20] sm:$0xff]
      %v7176 = vld [vmem:[#allocation3 + $0x28] sm:$0xff]
      %v7177 = vld [vmem:[#allocation3 + $0x30] sm:$0xff]
      %v7178 = vld [vmem:[#allocation3 + $0x38] sm:$0xff]
      %v7179 = vld [vmem:[#allocation3 + $0x40] sm:$0xff]
      %v7180 = vld [vmem:[#allocation3 + $0x48] sm:$0xff]
      %v7181 = vld [vmem:[#allocation3 + $0x50] sm:$0xff]
      %v7182 = vld [vmem:[#allocation3 + $0x58] sm:$0xff]
      %v7183 = vld [vmem:[#allocation3 + $0x60] sm:$0xff]
      %v7184 = vld [vmem:[#allocation3 + $0x68] sm:$0xff]
      %v7185 = vld [vmem:[#allocation3 + $0x70] sm:$0xff]
      %v7186 = vld [vmem:[#allocation3 + $0x78] sm:$0xff]
      %v7187 = vld [vmem:[#allocation3 + $0x80] sm:$0xff]
      %v7188 = vld [vmem:[#allocation3 + $0x88] sm:$0xff]
      %v7189 = vld [vmem:[#allocation3 + $0x90] sm:$0xff]
      %v7190 = vld [vmem:[#allocation3 + $0x98] sm:$0xff]
      %v7191 = vld [vmem:[#allocation3 + $0xa0] sm:$0xff]
      %v7192 = vld [vmem:[#allocation3 + $0xa8] sm:$0xff]
      %v7193 = vld [vmem:[#allocation3 + $0xb0] sm:$0xff]
      %v7194 = vld [vmem:[#allocation3 + $0xb8] sm:$0xff]
      %v7195 = vld [vmem:[#allocation3 + $0xc0] sm:$0xff]
      %v7196 = vld [vmem:[#allocation3 + $0xc8] sm:$0xff]
      %v7197 = vld [vmem:[#allocation3 + $0xd0] sm:$0xff]
      %v7198 = vld [vmem:[#allocation3 + $0xd8] sm:$0xff]
      %v7199 = vld [vmem:[#allocation3 + $0xe0] sm:$0xff]
      %v7200 = vld [vmem:[#allocation3 + $0xe8] sm:$0xff]
      %v7201 = vld [vmem:[#allocation3 + $0xf0] sm:$0xff]
      %v7202 = vld [vmem:[#allocation3 + $0xf8] sm:$0xff]
      %v7203 = vld [vmem:[#allocation3 + $0x100] sm:$0xff]
      %v7204 = vld [vmem:[#allocation3 + $0x108] sm:$0xff]
      %v7205 = vld [vmem:[#allocation3 + $0x110] sm:$0xff]
      %v7206 = vld [vmem:[#allocation3 + $0x118] sm:$0xff]
      %v7207 = vld [vmem:[#allocation3 + $0x120] sm:$0xff]
      %v7208 = vld [vmem:[#allocation3 + $0x128] sm:$0xff]
      %v7209 = vld [vmem:[#allocation3 + $0x130] sm:$0xff]
      %v7210 = vld [vmem:[#allocation3 + $0x138] sm:$0xff]
      %v7212 = vsel %vm694, %v7164, 0
      %v7215 = vsel %vm694, %v7166, 0
      %v7218 = vsel %vm694, %v7168, 0
      %v7221 = vsel %vm694, %v7170, 0
      %7223 = vmatpush.msra.mxu0 %v7201
      %7224 = vmatpush.msra.mxu0 %v7199
      %7225 = vmatpush.msra.mxu0 %v7197
      %7226 = vmatpush.msra.mxu0 %v7195
      %7227 = vmatpush.msra.mxu0 %v7193
      %7228 = vmatpush.msra.mxu0 %v7191
      %7229 = vmatpush.msra.mxu0 %v7189
      %7230 = vmatpush.msra.mxu0 %v7187
      %7231 = vmatpush.msra.mxu0 %v7185
      %7232 = vmatpush.msra.mxu0 %v7183
      %7233 = vmatpush.msra.mxu0 %v7181
      %7234 = vmatpush.msra.mxu0 %v7179
      %7235 = vmatpush.msra.mxu0 %v7177
      %7236 = vmatpush.msra.mxu0 %v7175
      %7237 = vmatpush.msra.mxu0 %v7173
      %7238 = vmatpush.msra.mxu0 %v7171
      %7239 = vmatmul.f32.gmra.mxu0 %v7163
      %v7240 = vpop.f32.mrf.mxu0
      %v7241 = vadd.f32 0.0, %v7240
      %7242 = vmatmul.f32.gmra.mxu0 %v7165
      %v7243 = vpop.f32.mrf.mxu0
      %v7244 = vadd.f32 0.0, %v7243
      %7245 = vmatmul.f32.gmra.mxu0 %v7167
      %v7246 = vpop.f32.mrf.mxu0
      %v7247 = vadd.f32 0.0, %v7246
      %7248 = vmatmul.f32.gmra.mxu0 %v7169
      %v7249 = vpop.f32.mrf.mxu0
      %v7250 = vadd.f32 0.0, %v7249
      %7251 = vdwg.mxu0
      %7252 = vmatpush.msra.mxu0 0.0
      %7253 = vmatpush.msra.mxu0 0.0
      %7254 = vmatpush.msra.mxu0 0.0
      %7255 = vmatpush.msra.mxu0 0.0
      %7256 = vmatpush.msra.mxu0 0.0
      %7257 = vmatpush.msra.mxu0 0.0
      %7258 = vmatpush.msra.mxu0 0.0
      %7259 = vmatpush.msra.mxu0 0.0
      %7260 = vmatpush.msra.mxu0 0.0
      %7261 = vmatpush.msra.mxu0 0.0
      %7262 = vmatpush.msra.mxu0 0.0
      %7263 = vmatpush.msra.mxu0 0.0
      %7264 = vmatpush.msra.mxu0 %v7209
      %7265 = vmatpush.msra.mxu0 %v7207
      %7266 = vmatpush.msra.mxu0 %v7205
      %7267 = vmatpush.msra.mxu0 %v7203
      %7268 = vmatmul.f32.gmra.mxu0 %v7212
      %v7269 = vpop.f32.mrf.mxu0
      %v7270 = vadd.f32 %v7241, %v7269
      %7271 = vmatmul.f32.gmra.mxu0 %v7215
      %v7272 = vpop.f32.mrf.mxu0
      %v7273 = vadd.f32 %v7244, %v7272
      %7274 = vmatmul.f32.gmra.mxu0 %v7218
      %v7275 = vpop.f32.mrf.mxu0
      %v7276 = vadd.f32 %v7247, %v7275
      %7277 = vmatmul.f32.gmra.mxu0 %v7221
      %v7278 = vpop.f32.mrf.mxu0
      %v7279 = vadd.f32 %v7250, %v7278
      %7280 = vdwg.mxu0
      %7281 = vmatpush.msra.mxu0 %v7202
      %7282 = vmatpush.msra.mxu0 %v7200
      %7283 = vmatpush.msra.mxu0 %v7198
      %7284 = vmatpush.msra.mxu0 %v7196
      %7285 = vmatpush.msra.mxu0 %v7194
      %7286 = vmatpush.msra.mxu0 %v7192
      %7287 = vmatpush.msra.mxu0 %v7190
      %7288 = vmatpush.msra.mxu0 %v7188
      %7289 = vmatpush.msra.mxu0 %v7186
      %7290 = vmatpush.msra.mxu0 %v7184
      %7291 = vmatpush.msra.mxu0 %v7182
      %7292 = vmatpush.msra.mxu0 %v7180
      %7293 = vmatpush.msra.mxu0 %v7178
      %7294 = vmatpush.msra.mxu0 %v7176
      %7295 = vmatpush.msra.mxu0 %v7174
      %7296 = vmatpush.msra.mxu0 %v7172
      %7297 = vmatmul.f32.gmra.mxu0 %v7163
      %v7298 = vpop.f32.mrf.mxu0
      %v7299 = vadd.f32 0.0, %v7298
      %7300 = vmatmul.f32.gmra.mxu0 %v7165
      %v7301 = vpop.f32.mrf.mxu0
      %v7302 = vadd.f32 0.0, %v7301
      %7303 = vmatmul.f32.gmra.mxu0 %v7167
      %v7304 = vpop.f32.mrf.mxu0
      %v7305 = vadd.f32 0.0, %v7304
      %7306 = vmatmul.f32.gmra.mxu0 %v7169
      %v7307 = vpop.f32.mrf.mxu0
      %v7308 = vadd.f32 0.0, %v7307
      %7309 = vdwg.mxu0
      %7310 = vmatpush.msra.mxu0 0.0
      %7311 = vmatpush.msra.mxu0 0.0
      %7312 = vmatpush.msra.mxu0 0.0
      %7313 = vmatpush.msra.mxu0 0.0
      %7314 = vmatpush.msra.mxu0 0.0
      %7315 = vmatpush.msra.mxu0 0.0
      %7316 = vmatpush.msra.mxu0 0.0
      %7317 = vmatpush.msra.mxu0 0.0
      %7318 = vmatpush.msra.mxu0 0.0
      %7319 = vmatpush.msra.mxu0 0.0
      %7320 = vmatpush.msra.mxu0 0.0
      %7321 = vmatpush.msra.mxu0 0.0
      %7322 = vmatpush.msra.mxu0 %v7210
      %7323 = vmatpush.msra.mxu0 %v7208
      %7324 = vmatpush.msra.mxu0 %v7206
      %7325 = vmatpush.msra.mxu0 %v7204
      %7326 = vmatmul.f32.gmra.mxu0 %v7212
      %v7327 = vpop.f32.mrf.mxu0
      %v7328 = vadd.f32 %v7299, %v7327
      %7329 = vmatmul.f32.gmra.mxu0 %v7215
      %v7330 = vpop.f32.mrf.mxu0
      %v7331 = vadd.f32 %v7302, %v7330
      %7332 = vmatmul.f32.gmra.mxu0 %v7218
      %v7333 = vpop.f32.mrf.mxu0
      %v7334 = vadd.f32 %v7305, %v7333
      %7335 = vmatmul.f32.gmra.mxu0 %v7221
      %v7336 = vpop.f32.mrf.mxu0
      %v7337 = vadd.f32 %v7308, %v7336
      %7338 = vdwg.mxu0
      %v7339 = vadd.f32 %v6850, %v7270
      %v7340 = vadd.f32 %v6851, %v7328
      %v7341 = vadd.f32 %v6852, %v7273
      %v7342 = vadd.f32 %v6853, %v7331
      %v7343 = vadd.f32 %v6854, %v7276
      %v7344 = vadd.f32 %v6855, %v7334
      %v7345 = vadd.f32 %v6856, %v7279
      %v7346 = vadd.f32 %v6857, %v7337
      %v7347 = vld [vmem:[#allocation2] sm:$0xff]
      %v7348 = vld [vmem:[#allocation2 + $0x8] sm:$0xff]
      %v7349 = vld [vmem:[#allocation2 + $0x10] sm:$0xff]
      %v7350 = vld [vmem:[#allocation2 + $0x20] sm:$0xff]
      %v7351 = vld [vmem:[#allocation2 + $0x28] sm:$0xff]
      %v7352 = vld [vmem:[#allocation2 + $0x30] sm:$0xff]
      %v7353 = vld [vmem:[#allocation2 + $0x40] sm:$0xff]
      %v7354 = vld [vmem:[#allocation2 + $0x48] sm:$0xff]
      %v7355 = vld [vmem:[#allocation2 + $0x50] sm:$0xff]
      %v7356 = vld [vmem:[#allocation2 + $0x60] sm:$0xff]
      %v7357 = vld [vmem:[#allocation2 + $0x68] sm:$0xff]
      %v7358 = vld [vmem:[#allocation2 + $0x70] sm:$0xff]
      %7371 = vrot.lane.b32.xlu0 %v7347, 31
      %v7372 = vpop.permute.xlu0 %7371
      %7373 = vrot.lane.b32.xlu0 %v7348, 31
      %v7374 = vpop.permute.xlu0 %7373
      %7375 = vrot.lane.b32.xlu0 %v7349, 31
      %v7376 = vpop.permute.xlu0 %7375
      %7377 = vrot.lane.b32.xlu0 %v7350, 31
      %v7378 = vpop.permute.xlu0 %7377
      %7379 = vrot.lane.b32.xlu0 %v7351, 31
      %v7380 = vpop.permute.xlu0 %7379
      %7381 = vrot.lane.b32.xlu0 %v7352, 31
      %v7382 = vpop.permute.xlu0 %7381
      %7383 = vrot.lane.b32.xlu0 %v7353, 31
      %v7384 = vpop.permute.xlu0 %7383
      %7385 = vrot.lane.b32.xlu0 %v7354, 31
      %v7386 = vpop.permute.xlu0 %7385
      %7387 = vrot.lane.b32.xlu0 %v7355, 31
      %v7388 = vpop.permute.xlu0 %7387
      %7389 = vrot.lane.b32.xlu0 %v7356, 31
      %v7390 = vpop.permute.xlu0 %7389
      %7391 = vrot.lane.b32.xlu0 %v7357, 31
      %v7392 = vpop.permute.xlu0 %7391
      %7393 = vrot.lane.b32.xlu0 %v7358, 31
      %v7394 = vpop.permute.xlu0 %7393
      %v7395 = vsel %vm1945, %v7372, %v7374
      %v7396 = vsel %vm1945, %v7374, %v7376
      %v7397 = vsel %vm1945, %v7378, %v7380
      %v7398 = vsel %vm1945, %v7380, %v7382
      %v7399 = vsel %vm1945, %v7384, %v7386
      %v7400 = vsel %vm1945, %v7386, %v7388
      %v7401 = vsel %vm1945, %v7390, %v7392
      %v7402 = vsel %vm1945, %v7392, %v7394
      %7411 = vst [vmem:[#allocation3] sm:$0xff] %v7395
      %7412 = vst [vmem:[#allocation3 + $0x8] sm:$0xff] %v7396
      %7413 = vst [vmem:[#allocation3 + $0x10] sm:$0xff] %v7397
      %7414 = vst [vmem:[#allocation3 + $0x18] sm:$0xff] %v7398
      %7415 = vst [vmem:[#allocation3 + $0x20] sm:$0xff] %v7399
      %7416 = vst [vmem:[#allocation3 + $0x28] sm:$0xff] %v7400
      %7417 = vst [vmem:[#allocation3 + $0x30] sm:$0xff] %v7401
      %7418 = vst [vmem:[#allocation3 + $0x38] sm:$0xff] %v7402
      %v7419 = vld [vmem:[#allocation2] sm:$0xff]
      %v7420 = vld [vmem:[#allocation2 + $0x8] sm:$0xff]
      %v7421 = vld [vmem:[#allocation2 + $0x10] sm:$0xff]
      %v7422 = vld [vmem:[#allocation2 + $0x20] sm:$0xff]
      %v7423 = vld [vmem:[#allocation2 + $0x28] sm:$0xff]
      %v7424 = vld [vmem:[#allocation2 + $0x30] sm:$0xff]
      %v7425 = vld [vmem:[#allocation2 + $0x40] sm:$0xff]
      %v7426 = vld [vmem:[#allocation2 + $0x48] sm:$0xff]
      %v7427 = vld [vmem:[#allocation2 + $0x50] sm:$0xff]
      %v7428 = vld [vmem:[#allocation2 + $0x60] sm:$0xff]
      %v7429 = vld [vmem:[#allocation2 + $0x68] sm:$0xff]
      %v7430 = vld [vmem:[#allocation2 + $0x70] sm:$0xff]
      %7443 = vrot.lane.b32.xlu0 %v7419, 15
      %v7444 = vpop.permute.xlu0 %7443
      %7445 = vrot.lane.b32.xlu0 %v7420, 15
      %v7446 = vpop.permute.xlu0 %7445
      %7447 = vrot.lane.b32.xlu0 %v7421, 15
      %v7448 = vpop.permute.xlu0 %7447
      %7449 = vrot.lane.b32.xlu0 %v7422, 15
      %v7450 = vpop.permute.xlu0 %7449
      %7451 = vrot.lane.b32.xlu0 %v7423, 15
      %v7452 = vpop.permute.xlu0 %7451
      %7453 = vrot.lane.b32.xlu0 %v7424, 15
      %v7454 = vpop.permute.xlu0 %7453
      %7455 = vrot.lane.b32.xlu0 %v7425, 15
      %v7456 = vpop.permute.xlu0 %7455
      %7457 = vrot.lane.b32.xlu0 %v7426, 15
      %v7458 = vpop.permute.xlu0 %7457
      %7459 = vrot.lane.b32.xlu0 %v7427, 15
      %v7460 = vpop.permute.xlu0 %7459
      %7461 = vrot.lane.b32.xlu0 %v7428, 15
      %v7462 = vpop.permute.xlu0 %7461
      %7463 = vrot.lane.b32.xlu0 %v7429, 15
      %v7464 = vpop.permute.xlu0 %7463
      %7465 = vrot.lane.b32.xlu0 %v7430, 15
      %v7466 = vpop.permute.xlu0 %7465
      %v7467 = vsel %vm2018, %v7444, %v7446
      %v7468 = vsel %vm2018, %v7446, %v7448
      %v7469 = vsel %vm2018, %v7450, %v7452
      %v7470 = vsel %vm2018, %v7452, %v7454
      %v7471 = vsel %vm2018, %v7456, %v7458
      %v7472 = vsel %vm2018, %v7458, %v7460
      %v7473 = vsel %vm2018, %v7462, %v7464
      %v7474 = vsel %vm2018, %v7464, %v7466
      %7483 = vst [vmem:[#allocation3 + $0x40] sm:$0xff] %v7467
      %7484 = vst [vmem:[#allocation3 + $0x48] sm:$0xff] %v7468
      %7485 = vst [vmem:[#allocation3 + $0x50] sm:$0xff] %v7469
      %7486 = vst [vmem:[#allocation3 + $0x58] sm:$0xff] %v7470
      %7487 = vst [vmem:[#allocation3 + $0x60] sm:$0xff] %v7471
      %7488 = vst [vmem:[#allocation3 + $0x68] sm:$0xff] %v7472
      %7489 = vst [vmem:[#allocation3 + $0x70] sm:$0xff] %v7473
      %7490 = vst [vmem:[#allocation3 + $0x78] sm:$0xff] %v7474
      %v7491 = vld [vmem:[#allocation2 + $0x8] sm:$0xff]
      %v7492 = vld [vmem:[#allocation2 + $0x10] sm:$0xff]
      %v7493 = vld [vmem:[#allocation2 + $0x18] sm:$0xff]
      %v7494 = vld [vmem:[#allocation2 + $0x28] sm:$0xff]
      %v7495 = vld [vmem:[#allocation2 + $0x30] sm:$0xff]
      %v7496 = vld [vmem:[#allocation2 + $0x38] sm:$0xff]
      %v7497 = vld [vmem:[#allocation2 + $0x48] sm:$0xff]
      %v7498 = vld [vmem:[#allocation2 + $0x50] sm:$0xff]
      %v7499 = vld [vmem:[#allocation2 + $0x58] sm:$0xff]
      %v7500 = vld [vmem:[#allocation2 + $0x68] sm:$0xff]
      %v7501 = vld [vmem:[#allocation2 + $0x70] sm:$0xff]
      %v7502 = vld [vmem:[#allocation2 + $0x78] sm:$0xff]
      %7515 = vrot.lane.b32.xlu0 %v7491, 127
      %v7516 = vpop.permute.xlu0 %7515
      %7517 = vrot.lane.b32.xlu0 %v7492, 127
      %v7518 = vpop.permute.xlu0 %7517
      %7519 = vrot.lane.b32.xlu0 %v7493, 127
      %v7520 = vpop.permute.xlu0 %7519
      %7521 = vrot.lane.b32.xlu0 %v7494, 127
      %v7522 = vpop.permute.xlu0 %7521
      %7523 = vrot.lane.b32.xlu0 %v7495, 127
      %v7524 = vpop.permute.xlu0 %7523
      %7525 = vrot.lane.b32.xlu0 %v7496, 127
      %v7526 = vpop.permute.xlu0 %7525
      %7527 = vrot.lane.b32.xlu0 %v7497, 127
      %v7528 = vpop.permute.xlu0 %7527
      %7529 = vrot.lane.b32.xlu0 %v7498, 127
      %v7530 = vpop.permute.xlu0 %7529
      %7531 = vrot.lane.b32.xlu0 %v7499, 127
      %v7532 = vpop.permute.xlu0 %7531
      %7533 = vrot.lane.b32.xlu0 %v7500, 127
      %v7534 = vpop.permute.xlu0 %7533
      %7535 = vrot.lane.b32.xlu0 %v7501, 127
      %v7536 = vpop.permute.xlu0 %7535
      %7537 = vrot.lane.b32.xlu0 %v7502, 127
      %v7538 = vpop.permute.xlu0 %7537
      %v7539 = vsel %vm2091, %v7516, %v7518
      %v7540 = vsel %vm2091, %v7518, %v7520
      %v7541 = vsel %vm2091, %v7522, %v7524
      %v7542 = vsel %vm2091, %v7524, %v7526
      %v7543 = vsel %vm2091, %v7528, %v7530
      %v7544 = vsel %vm2091, %v7530, %v7532
      %v7545 = vsel %vm2091, %v7534, %v7536
      %v7546 = vsel %vm2091, %v7536, %v7538
      %7555 = vst [vmem:[#allocation3 + $0x80] sm:$0xff] %v7539
      %7556 = vst [vmem:[#allocation3 + $0x88] sm:$0xff] %v7540
      %7557 = vst [vmem:[#allocation3 + $0x90] sm:$0xff] %v7541
      %7558 = vst [vmem:[#allocation3 + $0x98] sm:$0xff] %v7542
      %7559 = vst [vmem:[#allocation3 + $0xa0] sm:$0xff] %v7543
      %7560 = vst [vmem:[#allocation3 + $0xa8] sm:$0xff] %v7544
      %7561 = vst [vmem:[#allocation3 + $0xb0] sm:$0xff] %v7545
      %7562 = vst [vmem:[#allocation3 + $0xb8] sm:$0xff] %v7546
      %v7563 = vld [vmem:[#allocation2 + $0x8] sm:$0xff]
      %v7564 = vld [vmem:[#allocation2 + $0x10] sm:$0xff]
      %v7565 = vld [vmem:[#allocation2 + $0x18] sm:$0xff]
      %v7566 = vld [vmem:[#allocation2 + $0x28] sm:$0xff]
      %v7567 = vld [vmem:[#allocation2 + $0x30] sm:$0xff]
      %v7568 = vld [vmem:[#allocation2 + $0x38] sm:$0xff]
      %v7569 = vld [vmem:[#allocation2 + $0x48] sm:$0xff]
      %v7570 = vld [vmem:[#allocation2 + $0x50] sm:$0xff]
      %v7571 = vld [vmem:[#allocation2 + $0x58] sm:$0xff]
      %v7572 = vld [vmem:[#allocation2 + $0x68] sm:$0xff]
      %v7573 = vld [vmem:[#allocation2 + $0x70] sm:$0xff]
      %v7574 = vld [vmem:[#allocation2 + $0x78] sm:$0xff]
      %7587 = vrot.lane.b32.xlu0 %v7563, 111
      %v7588 = vpop.permute.xlu0 %7587
      %7589 = vrot.lane.b32.xlu0 %v7564, 111
      %v7590 = vpop.permute.xlu0 %7589
      %7591 = vrot.lane.b32.xlu0 %v7565, 111
      %v7592 = vpop.permute.xlu0 %7591
      %7593 = vrot.lane.b32.xlu0 %v7566, 111
      %v7594 = vpop.permute.xlu0 %7593
      %7595 = vrot.lane.b32.xlu0 %v7567, 111
      %v7596 = vpop.permute.xlu0 %7595
      %7597 = vrot.lane.b32.xlu0 %v7568, 111
      %v7598 = vpop.permute.xlu0 %7597
      %7599 = vrot.lane.b32.xlu0 %v7569, 111
      %v7600 = vpop.permute.xlu0 %7599
      %7601 = vrot.lane.b32.xlu0 %v7570, 111
      %v7602 = vpop.permute.xlu0 %7601
      %7603 = vrot.lane.b32.xlu0 %v7571, 111
      %v7604 = vpop.permute.xlu0 %7603
      %7605 = vrot.lane.b32.xlu0 %v7572, 111
      %v7606 = vpop.permute.xlu0 %7605
      %7607 = vrot.lane.b32.xlu0 %v7573, 111
      %v7608 = vpop.permute.xlu0 %7607
      %7609 = vrot.lane.b32.xlu0 %v7574, 111
      %v7610 = vpop.permute.xlu0 %7609
      %v7611 = vsel %vm2164, %v7588, %v7590
      %v7612 = vsel %vm2164, %v7590, %v7592
      %v7613 = vsel %vm2164, %v7594, %v7596
      %v7614 = vsel %vm2164, %v7596, %v7598
      %v7615 = vsel %vm2164, %v7600, %v7602
      %v7616 = vsel %vm2164, %v7602, %v7604
      %v7617 = vsel %vm2164, %v7606, %v7608
      %v7618 = vsel %vm2164, %v7608, %v7610
      %7627 = vst [vmem:[#allocation3 + $0xc0] sm:$0xff] %v7611
      %7628 = vst [vmem:[#allocation3 + $0xc8] sm:$0xff] %v7612
      %7629 = vst [vmem:[#allocation3 + $0xd0] sm:$0xff] %v7613
      %7630 = vst [vmem:[#allocation3 + $0xd8] sm:$0xff] %v7614
      %7631 = vst [vmem:[#allocation3 + $0xe0] sm:$0xff] %v7615
      %7632 = vst [vmem:[#allocation3 + $0xe8] sm:$0xff] %v7616
      %7633 = vst [vmem:[#allocation3 + $0xf0] sm:$0xff] %v7617
      %7634 = vst [vmem:[#allocation3 + $0xf8] sm:$0xff] %v7618
      %v7635 = vld [vmem:[#allocation2 + $0x8] sm:$0xff]
      %v7636 = vld [vmem:[#allocation2 + $0x10] sm:$0xff]
      %v7637 = vld [vmem:[#allocation2 + $0x18] sm:$0xff]
      %v7638 = vld [vmem:[#allocation2 + $0x28] sm:$0xff]
      %v7639 = vld [vmem:[#allocation2 + $0x30] sm:$0xff]
      %v7640 = vld [vmem:[#allocation2 + $0x38] sm:$0xff]
      %v7641 = vld [vmem:[#allocation2 + $0x48] sm:$0xff]
      %v7642 = vld [vmem:[#allocation2 + $0x50] sm:$0xff]
      %v7643 = vld [vmem:[#allocation2 + $0x58] sm:$0xff]
      %v7644 = vld [vmem:[#allocation2 + $0x68] sm:$0xff]
      %v7645 = vld [vmem:[#allocation2 + $0x70] sm:$0xff]
      %v7646 = vld [vmem:[#allocation2 + $0x78] sm:$0xff]
      %7659 = vrot.lane.b32.xlu0 %v7635, 95
      %v7660 = vpop.permute.xlu0 %7659
      %7661 = vrot.lane.b32.xlu0 %v7636, 95
      %v7662 = vpop.permute.xlu0 %7661
      %7663 = vrot.lane.b32.xlu0 %v7637, 95
      %v7664 = vpop.permute.xlu0 %7663
      %7665 = vrot.lane.b32.xlu0 %v7638, 95
      %v7666 = vpop.permute.xlu0 %7665
      %7667 = vrot.lane.b32.xlu0 %v7639, 95
      %v7668 = vpop.permute.xlu0 %7667
      %7669 = vrot.lane.b32.xlu0 %v7640, 95
      %v7670 = vpop.permute.xlu0 %7669
      %7671 = vrot.lane.b32.xlu0 %v7641, 95
      %v7672 = vpop.permute.xlu0 %7671
      %7673 = vrot.lane.b32.xlu0 %v7642, 95
      %v7674 = vpop.permute.xlu0 %7673
      %7675 = vrot.lane.b32.xlu0 %v7643, 95
      %v7676 = vpop.permute.xlu0 %7675
      %7677 = vrot.lane.b32.xlu0 %v7644, 95
      %v7678 = vpop.permute.xlu0 %7677
      %7679 = vrot.lane.b32.xlu0 %v7645, 95
      %v7680 = vpop.permute.xlu0 %7679
      %7681 = vrot.lane.b32.xlu0 %v7646, 95
      %v7682 = vpop.permute.xlu0 %7681
      %v7683 = vsel %vm2237, %v7660, %v7662
      %v7684 = vsel %vm2237, %v7662, %v7664
      %v7685 = vsel %vm2237, %v7666, %v7668
      %v7686 = vsel %vm2237, %v7668, %v7670
      %v7687 = vsel %vm2237, %v7672, %v7674
      %v7688 = vsel %vm2237, %v7674, %v7676
      %v7689 = vsel %vm2237, %v7678, %v7680
      %v7690 = vsel %vm2237, %v7680, %v7682
      %7699 = vst [vmem:[#allocation3 + $0x100] sm:$0xff] %v7683
      %7700 = vst [vmem:[#allocation3 + $0x108] sm:$0xff] %v7684
      %7701 = vst [vmem:[#allocation3 + $0x110] sm:$0xff] %v7685
      %7702 = vst [vmem:[#allocation3 + $0x118] sm:$0xff] %v7686
      %7703 = vst [vmem:[#allocation3 + $0x120] sm:$0xff] %v7687
      %7704 = vst [vmem:[#allocation3 + $0x128] sm:$0xff] %v7688
      %7705 = vst [vmem:[#allocation3 + $0x130] sm:$0xff] %v7689
      %7706 = vst [vmem:[#allocation3 + $0x138] sm:$0xff] %v7690
      %s7707 = scalar_lea.vmem %s3, 192
      %v7708 = vld [vmem:[%s7707] sm:$0xff]
      %v7709 = vld [vmem:[%s7707 + $0x8] sm:$0xff]
      %v7710 = vld [vmem:[%s7707 + $0x10] sm:$0xff]
      %v7711 = vld [vmem:[%s7707 + $0x18] sm:$0xff]
      %v7712 = vld [vmem:[%s7707 + $0x20] sm:$0xff]
      %v7713 = vld [vmem:[%s7707 + $0x28] sm:$0xff]
      %v7714 = vld [vmem:[%s7707 + $0x30] sm:$0xff]
      %v7715 = vld [vmem:[%s7707 + $0x38] sm:$0xff]
      %v7716 = vld [vmem:[#allocation3] sm:$0xff]
      %v7717 = vld [vmem:[#allocation3 + $0x8] sm:$0xff]
      %v7718 = vld [vmem:[#allocation3 + $0x10] sm:$0xff]
      %v7719 = vld [vmem:[#allocation3 + $0x18] sm:$0xff]
      %v7720 = vld [vmem:[#allocation3 + $0x20] sm:$0xff]
      %v7721 = vld [vmem:[#allocation3 + $0x28] sm:$0xff]
      %v7722 = vld [vmem:[#allocation3 + $0x30] sm:$0xff]
      %v7723 = vld [vmem:[#allocation3 + $0x38] sm:$0xff]
      %v7724 = vld [vmem:[#allocation3 + $0x40] sm:$0xff]
      %v7725 = vld [vmem:[#allocation3 + $0x48] sm:$0xff]
      %v7726 = vld [vmem:[#allocation3 + $0x50] sm:$0xff]
      %v7727 = vld [vmem:[#allocation3 + $0x58] sm:$0xff]
      %v7728 = vld [vmem:[#allocation3 + $0x60] sm:$0xff]
      %v7729 = vld [vmem:[#allocation3 + $0x68] sm:$0xff]
      %v7730 = vld [vmem:[#allocation3 + $0x70] sm:$0xff]
      %v7731 = vld [vmem:[#allocation3 + $0x78] sm:$0xff]
      %v7732 = vld [vmem:[#allocation3 + $0x80] sm:$0xff]
      %v7733 = vld [vmem:[#allocation3 + $0x88] sm:$0xff]
      %v7734 = vld [vmem:[#allocation3 + $0x90] sm:$0xff]
      %v7735 = vld [vmem:[#allocation3 + $0x98] sm:$0xff]
      %v7736 = vld [vmem:[#allocation3 + $0xa0] sm:$0xff]
      %v7737 = vld [vmem:[#allocation3 + $0xa8] sm:$0xff]
      %v7738 = vld [vmem:[#allocation3 + $0xb0] sm:$0xff]
      %v7739 = vld [vmem:[#allocation3 + $0xb8] sm:$0xff]
      %v7740 = vld [vmem:[#allocation3 + $0xc0] sm:$0xff]
      %v7741 = vld [vmem:[#allocation3 + $0xc8] sm:$0xff]
      %v7742 = vld [vmem:[#allocation3 + $0xd0] sm:$0xff]
      %v7743 = vld [vmem:[#allocation3 + $0xd8] sm:$0xff]
      %v7744 = vld [vmem:[#allocation3 + $0xe0] sm:$0xff]
      %v7745 = vld [vmem:[#allocation3 + $0xe8] sm:$0xff]
      %v7746 = vld [vmem:[#allocation3 + $0xf0] sm:$0xff]
      %v7747 = vld [vmem:[#allocation3 + $0xf8] sm:$0xff]
      %v7748 = vld [vmem:[#allocation3 + $0x100] sm:$0xff]
      %v7749 = vld [vmem:[#allocation3 + $0x108] sm:$0xff]
      %v7750 = vld [vmem:[#allocation3 + $0x110] sm:$0xff]
      %v7751 = vld [vmem:[#allocation3 + $0x118] sm:$0xff]
      %v7752 = vld [vmem:[#allocation3 + $0x120] sm:$0xff]
      %v7753 = vld [vmem:[#allocation3 + $0x128] sm:$0xff]
      %v7754 = vld [vmem:[#allocation3 + $0x130] sm:$0xff]
      %v7755 = vld [vmem:[#allocation3 + $0x138] sm:$0xff]
      %v7757 = vsel %vm694, %v7709, 0
      %v7760 = vsel %vm694, %v7711, 0
      %v7763 = vsel %vm694, %v7713, 0
      %v7766 = vsel %vm694, %v7715, 0
      %7768 = vmatpush.msra.mxu0 %v7746
      %7769 = vmatpush.msra.mxu0 %v7744
      %7770 = vmatpush.msra.mxu0 %v7742
      %7771 = vmatpush.msra.mxu0 %v7740
      %7772 = vmatpush.msra.mxu0 %v7738
      %7773 = vmatpush.msra.mxu0 %v7736
      %7774 = vmatpush.msra.mxu0 %v7734
      %7775 = vmatpush.msra.mxu0 %v7732
      %7776 = vmatpush.msra.mxu0 %v7730
      %7777 = vmatpush.msra.mxu0 %v7728
      %7778 = vmatpush.msra.mxu0 %v7726
      %7779 = vmatpush.msra.mxu0 %v7724
      %7780 = vmatpush.msra.mxu0 %v7722
      %7781 = vmatpush.msra.mxu0 %v7720
      %7782 = vmatpush.msra.mxu0 %v7718
      %7783 = vmatpush.msra.mxu0 %v7716
      %7784 = vmatmul.f32.gmra.mxu0 %v7708
      %v7785 = vpop.f32.mrf.mxu0
      %v7786 = vadd.f32 0.0, %v7785
      %7787 = vmatmul.f32.gmra.mxu0 %v7710
      %v7788 = vpop.f32.mrf.mxu0
      %v7789 = vadd.f32 0.0, %v7788
      %7790 = vmatmul.f32.gmra.mxu0 %v7712
      %v7791 = vpop.f32.mrf.mxu0
      %v7792 = vadd.f32 0.0, %v7791
      %7793 = vmatmul.f32.gmra.mxu0 %v7714
      %v7794 = vpop.f32.mrf.mxu0
      %v7795 = vadd.f32 0.0, %v7794
      %7796 = vdwg.mxu0
      %7797 = vmatpush.msra.mxu0 0.0
      %7798 = vmatpush.msra.mxu0 0.0
      %7799 = vmatpush.msra.mxu0 0.0
      %7800 = vmatpush.msra.mxu0 0.0
      %7801 = vmatpush.msra.mxu0 0.0
      %7802 = vmatpush.msra.mxu0 0.0
      %7803 = vmatpush.msra.mxu0 0.0
      %7804 = vmatpush.msra.mxu0 0.0
      %7805 = vmatpush.msra.mxu0 0.0
      %7806 = vmatpush.msra.mxu0 0.0
      %7807 = vmatpush.msra.mxu0 0.0
      %7808 = vmatpush.msra.mxu0 0.0
      %7809 = vmatpush.msra.mxu0 %v7754
      %7810 = vmatpush.msra.mxu0 %v7752
      %7811 = vmatpush.msra.mxu0 %v7750
      %7812 = vmatpush.msra.mxu0 %v7748
      %7813 = vmatmul.f32.gmra.mxu0 %v7757
      %v7814 = vpop.f32.mrf.mxu0
      %v7815 = vadd.f32 %v7786, %v7814
      %7816 = vmatmul.f32.gmra.mxu0 %v7760
      %v7817 = vpop.f32.mrf.mxu0
      %v7818 = vadd.f32 %v7789, %v7817
      %7819 = vmatmul.f32.gmra.mxu0 %v7763
      %v7820 = vpop.f32.mrf.mxu0
      %v7821 = vadd.f32 %v7792, %v7820
      %7822 = vmatmul.f32.gmra.mxu0 %v7766
      %v7823 = vpop.f32.mrf.mxu0
      %v7824 = vadd.f32 %v7795, %v7823
      %7825 = vdwg.mxu0
      %7826 = vmatpush.msra.mxu0 %v7747
      %7827 = vmatpush.msra.mxu0 %v7745
      %7828 = vmatpush.msra.mxu0 %v7743
      %7829 = vmatpush.msra.mxu0 %v7741
      %7830 = vmatpush.msra.mxu0 %v7739
      %7831 = vmatpush.msra.mxu0 %v7737
      %7832 = vmatpush.msra.mxu0 %v7735
      %7833 = vmatpush.msra.mxu0 %v7733
      %7834 = vmatpush.msra.mxu0 %v7731
      %7835 = vmatpush.msra.mxu0 %v7729
      %7836 = vmatpush.msra.mxu0 %v7727
      %7837 = vmatpush.msra.mxu0 %v7725
      %7838 = vmatpush.msra.mxu0 %v7723
      %7839 = vmatpush.msra.mxu0 %v7721
      %7840 = vmatpush.msra.mxu0 %v7719
      %7841 = vmatpush.msra.mxu0 %v7717
      %7842 = vmatmul.f32.gmra.mxu0 %v7708
      %v7843 = vpop.f32.mrf.mxu0
      %v7844 = vadd.f32 0.0, %v7843
      %7845 = vmatmul.f32.gmra.mxu0 %v7710
      %v7846 = vpop.f32.mrf.mxu0
      %v7847 = vadd.f32 0.0, %v7846
      %7848 = vmatmul.f32.gmra.mxu0 %v7712
      %v7849 = vpop.f32.mrf.mxu0
      %v7850 = vadd.f32 0.0, %v7849
      %7851 = vmatmul.f32.gmra.mxu0 %v7714
      %v7852 = vpop.f32.mrf.mxu0
      %v7853 = vadd.f32 0.0, %v7852
      %7854 = vdwg.mxu0
      %7855 = vmatpush.msra.mxu0 0.0
      %7856 = vmatpush.msra.mxu0 0.0
      %7857 = vmatpush.msra.mxu0 0.0
      %7858 = vmatpush.msra.mxu0 0.0
      %7859 = vmatpush.msra.mxu0 0.0
      %7860 = vmatpush.msra.mxu0 0.0
      %7861 = vmatpush.msra.mxu0 0.0
      %7862 = vmatpush.msra.mxu0 0.0
      %7863 = vmatpush.msra.mxu0 0.0
      %7864 = vmatpush.msra.mxu0 0.0
      %7865 = vmatpush.msra.mxu0 0.0
      %7866 = vmatpush.msra.mxu0 0.0
      %7867 = vmatpush.msra.mxu0 %v7755
      %7868 = vmatpush.msra.mxu0 %v7753
      %7869 = vmatpush.msra.mxu0 %v7751
      %7870 = vmatpush.msra.mxu0 %v7749
      %7871 = vmatmul.f32.gmra.mxu0 %v7757
      %v7872 = vpop.f32.mrf.mxu0
      %v7873 = vadd.f32 %v7844, %v7872
      %7874 = vmatmul.f32.gmra.mxu0 %v7760
      %v7875 = vpop.f32.mrf.mxu0
      %v7876 = vadd.f32 %v7847, %v7875
      %7877 = vmatmul.f32.gmra.mxu0 %v7763
      %v7878 = vpop.f32.mrf.mxu0
      %v7879 = vadd.f32 %v7850, %v7878
      %7880 = vmatmul.f32.gmra.mxu0 %v7766
      %v7881 = vpop.f32.mrf.mxu0
      %v7882 = vadd.f32 %v7853, %v7881
      %7883 = vdwg.mxu0
      %v7884 = vsel %vm2441, %v7815, 0.0
      %v7885 = vsel %vm2442, %v7873, 0.0
      %v7886 = vsel %vm2441, %v7818, 0.0
      %v7887 = vsel %vm2442, %v7876, 0.0
      %v7888 = vsel %vm2441, %v7821, 0.0
      %v7889 = vsel %vm2442, %v7879, 0.0
      %v7890 = vsel %vm2441, %v7824, 0.0
      %v7891 = vsel %vm2442, %v7882, 0.0
      %v7892 = vadd.f32 %v7339, %v7884
      %v7893 = vadd.f32 %v7340, %v7885
      %v7894 = vadd.f32 %v7341, %v7886
      %v7895 = vadd.f32 %v7342, %v7887
      %v7896 = vadd.f32 %v7343, %v7888
      %v7897 = vadd.f32 %v7344, %v7889
      %v7898 = vadd.f32 %v7345, %v7890
      %v7899 = vadd.f32 %v7346, %v7891
      %v7900 = vld [vmem:[#allocation2] sm:$0xff]
      %v7901 = vld [vmem:[#allocation2 + $0x8] sm:$0xff]
      %v7902 = vld [vmem:[#allocation2 + $0x10] sm:$0xff]
      %v7903 = vld [vmem:[#allocation2 + $0x20] sm:$0xff]
      %v7904 = vld [vmem:[#allocation2 + $0x28] sm:$0xff]
      %v7905 = vld [vmem:[#allocation2 + $0x30] sm:$0xff]
      %v7906 = vld [vmem:[#allocation2 + $0x40] sm:$0xff]
      %v7907 = vld [vmem:[#allocation2 + $0x48] sm:$0xff]
      %v7908 = vld [vmem:[#allocation2 + $0x50] sm:$0xff]
      %v7909 = vld [vmem:[#allocation2 + $0x60] sm:$0xff]
      %v7910 = vld [vmem:[#allocation2 + $0x68] sm:$0xff]
      %v7911 = vld [vmem:[#allocation2 + $0x70] sm:$0xff]
      %7924 = vrot.lane.b32.xlu0 %v7900, 30
      %v7925 = vpop.permute.xlu0 %7924
      %7926 = vrot.lane.b32.xlu0 %v7901, 30
      %v7927 = vpop.permute.xlu0 %7926
      %7928 = vrot.lane.b32.xlu0 %v7902, 30
      %v7929 = vpop.permute.xlu0 %7928
      %7930 = vrot.lane.b32.xlu0 %v7903, 30
      %v7931 = vpop.permute.xlu0 %7930
      %7932 = vrot.lane.b32.xlu0 %v7904, 30
      %v7933 = vpop.permute.xlu0 %7932
      %7934 = vrot.lane.b32.xlu0 %v7905, 30
      %v7935 = vpop.permute.xlu0 %7934
      %7936 = vrot.lane.b32.xlu0 %v7906, 30
      %v7937 = vpop.permute.xlu0 %7936
      %7938 = vrot.lane.b32.xlu0 %v7907, 30
      %v7939 = vpop.permute.xlu0 %7938
      %7940 = vrot.lane.b32.xlu0 %v7908, 30
      %v7941 = vpop.permute.xlu0 %7940
      %7942 = vrot.lane.b32.xlu0 %v7909, 30
      %v7943 = vpop.permute.xlu0 %7942
      %7944 = vrot.lane.b32.xlu0 %v7910, 30
      %v7945 = vpop.permute.xlu0 %7944
      %7946 = vrot.lane.b32.xlu0 %v7911, 30
      %v7947 = vpop.permute.xlu0 %7946
      %v7948 = vsel %vm2507, %v7925, %v7927
      %v7949 = vsel %vm2507, %v7927, %v7929
      %v7950 = vsel %vm2507, %v7931, %v7933
      %v7951 = vsel %vm2507, %v7933, %v7935
      %v7952 = vsel %vm2507, %v7937, %v7939
      %v7953 = vsel %vm2507, %v7939, %v7941
      %v7954 = vsel %vm2507, %v7943, %v7945
      %v7955 = vsel %vm2507, %v7945, %v7947
      %7964 = vst [vmem:[#allocation3] sm:$0xff] %v7948
      %7965 = vst [vmem:[#allocation3 + $0x8] sm:$0xff] %v7949
      %7966 = vst [vmem:[#allocation3 + $0x10] sm:$0xff] %v7950
      %7967 = vst [vmem:[#allocation3 + $0x18] sm:$0xff] %v7951
      %7968 = vst [vmem:[#allocation3 + $0x20] sm:$0xff] %v7952
      %7969 = vst [vmem:[#allocation3 + $0x28] sm:$0xff] %v7953
      %7970 = vst [vmem:[#allocation3 + $0x30] sm:$0xff] %v7954
      %7971 = vst [vmem:[#allocation3 + $0x38] sm:$0xff] %v7955
      %v7972 = vld [vmem:[#allocation2] sm:$0xff]
      %v7973 = vld [vmem:[#allocation2 + $0x8] sm:$0xff]
      %v7974 = vld [vmem:[#allocation2 + $0x10] sm:$0xff]
      %v7975 = vld [vmem:[#allocation2 + $0x20] sm:$0xff]
      %v7976 = vld [vmem:[#allocation2 + $0x28] sm:$0xff]
      %v7977 = vld [vmem:[#allocation2 + $0x30] sm:$0xff]
      %v7978 = vld [vmem:[#allocation2 + $0x40] sm:$0xff]
      %v7979 = vld [vmem:[#allocation2 + $0x48] sm:$0xff]
      %v7980 = vld [vmem:[#allocation2 + $0x50] sm:$0xff]
      %v7981 = vld [vmem:[#allocation2 + $0x60] sm:$0xff]
      %v7982 = vld [vmem:[#allocation2 + $0x68] sm:$0xff]
      %v7983 = vld [vmem:[#allocation2 + $0x70] sm:$0xff]
      %7996 = vrot.lane.b32.xlu0 %v7972, 14
      %v7997 = vpop.permute.xlu0 %7996
      %7998 = vrot.lane.b32.xlu0 %v7973, 14
      %v7999 = vpop.permute.xlu0 %7998
      %8000 = vrot.lane.b32.xlu0 %v7974, 14
      %v8001 = vpop.permute.xlu0 %8000
      %8002 = vrot.lane.b32.xlu0 %v7975, 14
      %v8003 = vpop.permute.xlu0 %8002
      %8004 = vrot.lane.b32.xlu0 %v7976, 14
      %v8005 = vpop.permute.xlu0 %8004
      %8006 = vrot.lane.b32.xlu0 %v7977, 14
      %v8007 = vpop.permute.xlu0 %8006
      %8008 = vrot.lane.b32.xlu0 %v7978, 14
      %v8009 = vpop.permute.xlu0 %8008
      %8010 = vrot.lane.b32.xlu0 %v7979, 14
      %v8011 = vpop.permute.xlu0 %8010
      %8012 = vrot.lane.b32.xlu0 %v7980, 14
      %v8013 = vpop.permute.xlu0 %8012
      %8014 = vrot.lane.b32.xlu0 %v7981, 14
      %v8015 = vpop.permute.xlu0 %8014
      %8016 = vrot.lane.b32.xlu0 %v7982, 14
      %v8017 = vpop.permute.xlu0 %8016
      %8018 = vrot.lane.b32.xlu0 %v7983, 14
      %v8019 = vpop.permute.xlu0 %8018
      %v8020 = vsel %vm2580, %v7997, %v7999
      %v8021 = vsel %vm2580, %v7999, %v8001
      %v8022 = vsel %vm2580, %v8003, %v8005
      %v8023 = vsel %vm2580, %v8005, %v8007
      %v8024 = vsel %vm2580, %v8009, %v8011
      %v8025 = vsel %vm2580, %v8011, %v8013
      %v8026 = vsel %vm2580, %v8015, %v8017
      %v8027 = vsel %vm2580, %v8017, %v8019
      %8036 = vst [vmem:[#allocation3 + $0x40] sm:$0xff] %v8020
      %8037 = vst [vmem:[#allocation3 + $0x48] sm:$0xff] %v8021
      %8038 = vst [vmem:[#allocation3 + $0x50] sm:$0xff] %v8022
      %8039 = vst [vmem:[#allocation3 + $0x58] sm:$0xff] %v8023
      %8040 = vst [vmem:[#allocation3 + $0x60] sm:$0xff] %v8024
      %8041 = vst [vmem:[#allocation3 + $0x68] sm:$0xff] %v8025
      %8042 = vst [vmem:[#allocation3 + $0x70] sm:$0xff] %v8026
      %8043 = vst [vmem:[#allocation3 + $0x78] sm:$0xff] %v8027
      %v8044 = vld [vmem:[#allocation2 + $0x8] sm:$0xff]
      %v8045 = vld [vmem:[#allocation2 + $0x10] sm:$0xff]
      %v8046 = vld [vmem:[#allocation2 + $0x18] sm:$0xff]
      %v8047 = vld [vmem:[#allocation2 + $0x28] sm:$0xff]
      %v8048 = vld [vmem:[#allocation2 + $0x30] sm:$0xff]
      %v8049 = vld [vmem:[#allocation2 + $0x38] sm:$0xff]
      %v8050 = vld [vmem:[#allocation2 + $0x48] sm:$0xff]
      %v8051 = vld [vmem:[#allocation2 + $0x50] sm:$0xff]
      %v8052 = vld [vmem:[#allocation2 + $0x58] sm:$0xff]
      %v8053 = vld [vmem:[#allocation2 + $0x68] sm:$0xff]
      %v8054 = vld [vmem:[#allocation2 + $0x70] sm:$0xff]
      %v8055 = vld [vmem:[#allocation2 + $0x78] sm:$0xff]
      %8068 = vrot.lane.b32.xlu0 %v8044, 126
      %v8069 = vpop.permute.xlu0 %8068
      %8070 = vrot.lane.b32.xlu0 %v8045, 126
      %v8071 = vpop.permute.xlu0 %8070
      %8072 = vrot.lane.b32.xlu0 %v8046, 126
      %v8073 = vpop.permute.xlu0 %8072
      %8074 = vrot.lane.b32.xlu0 %v8047, 126
      %v8075 = vpop.permute.xlu0 %8074
      %8076 = vrot.lane.b32.xlu0 %v8048, 126
      %v8077 = vpop.permute.xlu0 %8076
      %8078 = vrot.lane.b32.xlu0 %v8049, 126
      %v8079 = vpop.permute.xlu0 %8078
      %8080 = vrot.lane.b32.xlu0 %v8050, 126
      %v8081 = vpop.permute.xlu0 %8080
      %8082 = vrot.lane.b32.xlu0 %v8051, 126
      %v8083 = vpop.permute.xlu0 %8082
      %8084 = vrot.lane.b32.xlu0 %v8052, 126
      %v8085 = vpop.permute.xlu0 %8084
      %8086 = vrot.lane.b32.xlu0 %v8053, 126
      %v8087 = vpop.permute.xlu0 %8086
      %8088 = vrot.lane.b32.xlu0 %v8054, 126
      %v8089 = vpop.permute.xlu0 %8088
      %8090 = vrot.lane.b32.xlu0 %v8055, 126
      %v8091 = vpop.permute.xlu0 %8090
      %v8092 = vsel %vm2653, %v8069, %v8071
      %v8093 = vsel %vm2653, %v8071, %v8073
      %v8094 = vsel %vm2653, %v8075, %v8077
      %v8095 = vsel %vm2653, %v8077, %v8079
      %v8096 = vsel %vm2653, %v8081, %v8083
      %v8097 = vsel %vm2653, %v8083, %v8085
      %v8098 = vsel %vm2653, %v8087, %v8089
      %v8099 = vsel %vm2653, %v8089, %v8091
      %8108 = vst [vmem:[#allocation3 + $0x80] sm:$0xff] %v8092
      %8109 = vst [vmem:[#allocation3 + $0x88] sm:$0xff] %v8093
      %8110 = vst [vmem:[#allocation3 + $0x90] sm:$0xff] %v8094
      %8111 = vst [vmem:[#allocation3 + $0x98] sm:$0xff] %v8095
      %8112 = vst [vmem:[#allocation3 + $0xa0] sm:$0xff] %v8096
      %8113 = vst [vmem:[#allocation3 + $0xa8] sm:$0xff] %v8097
      %8114 = vst [vmem:[#allocation3 + $0xb0] sm:$0xff] %v8098
      %8115 = vst [vmem:[#allocation3 + $0xb8] sm:$0xff] %v8099
      %v8116 = vld [vmem:[#allocation2 + $0x8] sm:$0xff]
      %v8117 = vld [vmem:[#allocation2 + $0x10] sm:$0xff]
      %v8118 = vld [vmem:[#allocation2 + $0x18] sm:$0xff]
      %v8119 = vld [vmem:[#allocation2 + $0x28] sm:$0xff]
      %v8120 = vld [vmem:[#allocation2 + $0x30] sm:$0xff]
      %v8121 = vld [vmem:[#allocation2 + $0x38] sm:$0xff]
      %v8122 = vld [vmem:[#allocation2 + $0x48] sm:$0xff]
      %v8123 = vld [vmem:[#allocation2 + $0x50] sm:$0xff]
      %v8124 = vld [vmem:[#allocation2 + $0x58] sm:$0xff]
      %v8125 = vld [vmem:[#allocation2 + $0x68] sm:$0xff]
      %v8126 = vld [vmem:[#allocation2 + $0x70] sm:$0xff]
      %v8127 = vld [vmem:[#allocation2 + $0x78] sm:$0xff]
      %8140 = vrot.lane.b32.xlu0 %v8116, 110
      %v8141 = vpop.permute.xlu0 %8140
      %8142 = vrot.lane.b32.xlu0 %v8117, 110
      %v8143 = vpop.permute.xlu0 %8142
      %8144 = vrot.lane.b32.xlu0 %v8118, 110
      %v8145 = vpop.permute.xlu0 %8144
      %8146 = vrot.lane.b32.xlu0 %v8119, 110
      %v8147 = vpop.permute.xlu0 %8146
      %8148 = vrot.lane.b32.xlu0 %v8120, 110
      %v8149 = vpop.permute.xlu0 %8148
      %8150 = vrot.lane.b32.xlu0 %v8121, 110
      %v8151 = vpop.permute.xlu0 %8150
      %8152 = vrot.lane.b32.xlu0 %v8122, 110
      %v8153 = vpop.permute.xlu0 %8152
      %8154 = vrot.lane.b32.xlu0 %v8123, 110
      %v8155 = vpop.permute.xlu0 %8154
      %8156 = vrot.lane.b32.xlu0 %v8124, 110
      %v8157 = vpop.permute.xlu0 %8156
      %8158 = vrot.lane.b32.xlu0 %v8125, 110
      %v8159 = vpop.permute.xlu0 %8158
      %8160 = vrot.lane.b32.xlu0 %v8126, 110
      %v8161 = vpop.permute.xlu0 %8160
      %8162 = vrot.lane.b32.xlu0 %v8127, 110
      %v8163 = vpop.permute.xlu0 %8162
      %v8164 = vsel %vm2726, %v8141, %v8143
      %v8165 = vsel %vm2726, %v8143, %v8145
      %v8166 = vsel %vm2726, %v8147, %v8149
      %v8167 = vsel %vm2726, %v8149, %v8151
      %v8168 = vsel %vm2726, %v8153, %v8155
      %v8169 = vsel %vm2726, %v8155, %v8157
      %v8170 = vsel %vm2726, %v8159, %v8161
      %v8171 = vsel %vm2726, %v8161, %v8163
      %8180 = vst [vmem:[#allocation3 + $0xc0] sm:$0xff] %v8164
      %8181 = vst [vmem:[#allocation3 + $0xc8] sm:$0xff] %v8165
      %8182 = vst [vmem:[#allocation3 + $0xd0] sm:$0xff] %v8166
      %8183 = vst [vmem:[#allocation3 + $0xd8] sm:$0xff] %v8167
      %8184 = vst [vmem:[#allocation3 + $0xe0] sm:$0xff] %v8168
      %8185 = vst [vmem:[#allocation3 + $0xe8] sm:$0xff] %v8169
      %8186 = vst [vmem:[#allocation3 + $0xf0] sm:$0xff] %v8170
      %8187 = vst [vmem:[#allocation3 + $0xf8] sm:$0xff] %v8171
      %v8188 = vld [vmem:[#allocation2 + $0x8] sm:$0xff]
      %v8189 = vld [vmem:[#allocation2 + $0x10] sm:$0xff]
      %v8190 = vld [vmem:[#allocation2 + $0x18] sm:$0xff]
      %v8191 = vld [vmem:[#allocation2 + $0x28] sm:$0xff]
      %v8192 = vld [vmem:[#allocation2 + $0x30] sm:$0xff]
      %v8193 = vld [vmem:[#allocation2 + $0x38] sm:$0xff]
      %v8194 = vld [vmem:[#allocation2 + $0x48] sm:$0xff]
      %v8195 = vld [vmem:[#allocation2 + $0x50] sm:$0xff]
      %v8196 = vld [vmem:[#allocation2 + $0x58] sm:$0xff]
      %v8197 = vld [vmem:[#allocation2 + $0x68] sm:$0xff]
      %v8198 = vld [vmem:[#allocation2 + $0x70] sm:$0xff]
      %v8199 = vld [vmem:[#allocation2 + $0x78] sm:$0xff]
      %8212 = vrot.lane.b32.xlu0 %v8188, 94
      %v8213 = vpop.permute.xlu0 %8212
      %8214 = vrot.lane.b32.xlu0 %v8189, 94
      %v8215 = vpop.permute.xlu0 %8214
      %8216 = vrot.lane.b32.xlu0 %v8190, 94
      %v8217 = vpop.permute.xlu0 %8216
      %8218 = vrot.lane.b32.xlu0 %v8191, 94
      %v8219 = vpop.permute.xlu0 %8218
      %8220 = vrot.lane.b32.xlu0 %v8192, 94
      %v8221 = vpop.permute.xlu0 %8220
      %8222 = vrot.lane.b32.xlu0 %v8193, 94
      %v8223 = vpop.permute.xlu0 %8222
      %8224 = vrot.lane.b32.xlu0 %v8194, 94
      %v8225 = vpop.permute.xlu0 %8224
      %8226 = vrot.lane.b32.xlu0 %v8195, 94
      %v8227 = vpop.permute.xlu0 %8226
      %8228 = vrot.lane.b32.xlu0 %v8196, 94
      %v8229 = vpop.permute.xlu0 %8228
      %8230 = vrot.lane.b32.xlu0 %v8197, 94
      %v8231 = vpop.permute.xlu0 %8230
      %8232 = vrot.lane.b32.xlu0 %v8198, 94
      %v8233 = vpop.permute.xlu0 %8232
      %8234 = vrot.lane.b32.xlu0 %v8199, 94
      %v8235 = vpop.permute.xlu0 %8234
      %v8236 = vsel %vm2799, %v8213, %v8215
      %v8237 = vsel %vm2799, %v8215, %v8217
      %v8238 = vsel %vm2799, %v8219, %v8221
      %v8239 = vsel %vm2799, %v8221, %v8223
      %v8240 = vsel %vm2799, %v8225, %v8227
      %v8241 = vsel %vm2799, %v8227, %v8229
      %v8242 = vsel %vm2799, %v8231, %v8233
      %v8243 = vsel %vm2799, %v8233, %v8235
      %8252 = vst [vmem:[#allocation3 + $0x100] sm:$0xff] %v8236
      %8253 = vst [vmem:[#allocation3 + $0x108] sm:$0xff] %v8237
      %8254 = vst [vmem:[#allocation3 + $0x110] sm:$0xff] %v8238
      %8255 = vst [vmem:[#allocation3 + $0x118] sm:$0xff] %v8239
      %8256 = vst [vmem:[#allocation3 + $0x120] sm:$0xff] %v8240
      %8257 = vst [vmem:[#allocation3 + $0x128] sm:$0xff] %v8241
      %8258 = vst [vmem:[#allocation3 + $0x130] sm:$0xff] %v8242
      %8259 = vst [vmem:[#allocation3 + $0x138] sm:$0xff] %v8243
      %s8260 = scalar_lea.vmem %s3, 256
      %v8261 = vld [vmem:[%s8260] sm:$0xff]
      %v8262 = vld [vmem:[%s8260 + $0x8] sm:$0xff]
      %v8263 = vld [vmem:[%s8260 + $0x10] sm:$0xff]
      %v8264 = vld [vmem:[%s8260 + $0x18] sm:$0xff]
      %v8265 = vld [vmem:[%s8260 + $0x20] sm:$0xff]
      %v8266 = vld [vmem:[%s8260 + $0x28] sm:$0xff]
      %v8267 = vld [vmem:[%s8260 + $0x30] sm:$0xff]
      %v8268 = vld [vmem:[%s8260 + $0x38] sm:$0xff]
      %v8269 = vld [vmem:[#allocation3] sm:$0xff]
      %v8270 = vld [vmem:[#allocation3 + $0x8] sm:$0xff]
      %v8271 = vld [vmem:[#allocation3 + $0x10] sm:$0xff]
      %v8272 = vld [vmem:[#allocation3 + $0x18] sm:$0xff]
      %v8273 = vld [vmem:[#allocation3 + $0x20] sm:$0xff]
      %v8274 = vld [vmem:[#allocation3 + $0x28] sm:$0xff]
      %v8275 = vld [vmem:[#allocation3 + $0x30] sm:$0xff]
      %v8276 = vld [vmem:[#allocation3 + $0x38] sm:$0xff]
      %v8277 = vld [vmem:[#allocation3 + $0x40] sm:$0xff]
      %v8278 = vld [vmem:[#allocation3 + $0x48] sm:$0xff]
      %v8279 = vld [vmem:[#allocation3 + $0x50] sm:$0xff]
      %v8280 = vld [vmem:[#allocation3 + $0x58] sm:$0xff]
      %v8281 = vld [vmem:[#allocation3 + $0x60] sm:$0xff]
      %v8282 = vld [vmem:[#allocation3 + $0x68] sm:$0xff]
      %v8283 = vld [vmem:[#allocation3 + $0x70] sm:$0xff]
      %v8284 = vld [vmem:[#allocation3 + $0x78] sm:$0xff]
      %v8285 = vld [vmem:[#allocation3 + $0x80] sm:$0xff]
      %v8286 = vld [vmem:[#allocation3 + $0x88] sm:$0xff]
      %v8287 = vld [vmem:[#allocation3 + $0x90] sm:$0xff]
      %v8288 = vld [vmem:[#allocation3 + $0x98] sm:$0xff]
      %v8289 = vld [vmem:[#allocation3 + $0xa0] sm:$0xff]
      %v8290 = vld [vmem:[#allocation3 + $0xa8] sm:$0xff]
      %v8291 = vld [vmem:[#allocation3 + $0xb0] sm:$0xff]
      %v8292 = vld [vmem:[#allocation3 + $0xb8] sm:$0xff]
      %v8293 = vld [vmem:[#allocation3 + $0xc0] sm:$0xff]
      %v8294 = vld [vmem:[#allocation3 + $0xc8] sm:$0xff]
      %v8295 = vld [vmem:[#allocation3 + $0xd0] sm:$0xff]
      %v8296 = vld [vmem:[#allocation3 + $0xd8] sm:$0xff]
      %v8297 = vld [vmem:[#allocation3 + $0xe0] sm:$0xff]
      %v8298 = vld [vmem:[#allocation3 + $0xe8] sm:$0xff]
      %v8299 = vld [vmem:[#allocation3 + $0xf0] sm:$0xff]
      %v8300 = vld [vmem:[#allocation3 + $0xf8] sm:$0xff]
      %v8301 = vld [vmem:[#allocation3 + $0x100] sm:$0xff]
      %v8302 = vld [vmem:[#allocation3 + $0x108] sm:$0xff]
      %v8303 = vld [vmem:[#allocation3 + $0x110] sm:$0xff]
      %v8304 = vld [vmem:[#allocation3 + $0x118] sm:$0xff]
      %v8305 = vld [vmem:[#allocation3 + $0x120] sm:$0xff]
      %v8306 = vld [vmem:[#allocation3 + $0x128] sm:$0xff]
      %v8307 = vld [vmem:[#allocation3 + $0x130] sm:$0xff]
      %v8308 = vld [vmem:[#allocation3 + $0x138] sm:$0xff]
      %v8310 = vsel %vm694, %v8262, 0
      %v8313 = vsel %vm694, %v8264, 0
      %v8316 = vsel %vm694, %v8266, 0
      %v8319 = vsel %vm694, %v8268, 0
      %8321 = vmatpush.msra.mxu0 %v8299
      %8322 = vmatpush.msra.mxu0 %v8297
      %8323 = vmatpush.msra.mxu0 %v8295
      %8324 = vmatpush.msra.mxu0 %v8293
      %8325 = vmatpush.msra.mxu0 %v8291
      %8326 = vmatpush.msra.mxu0 %v8289
      %8327 = vmatpush.msra.mxu0 %v8287
      %8328 = vmatpush.msra.mxu0 %v8285
      %8329 = vmatpush.msra.mxu0 %v8283
      %8330 = vmatpush.msra.mxu0 %v8281
      %8331 = vmatpush.msra.mxu0 %v8279
      %8332 = vmatpush.msra.mxu0 %v8277
      %8333 = vmatpush.msra.mxu0 %v8275
      %8334 = vmatpush.msra.mxu0 %v8273
      %8335 = vmatpush.msra.mxu0 %v8271
      %8336 = vmatpush.msra.mxu0 %v8269
      %8337 = vmatmul.f32.gmra.mxu0 %v8261
      %v8338 = vpop.f32.mrf.mxu0
      %v8339 = vadd.f32 0.0, %v8338
      %8340 = vmatmul.f32.gmra.mxu0 %v8263
      %v8341 = vpop.f32.mrf.mxu0
      %v8342 = vadd.f32 0.0, %v8341
      %8343 = vmatmul.f32.gmra.mxu0 %v8265
      %v8344 = vpop.f32.mrf.mxu0
      %v8345 = vadd.f32 0.0, %v8344
      %8346 = vmatmul.f32.gmra.mxu0 %v8267
      %v8347 = vpop.f32.mrf.mxu0
      %v8348 = vadd.f32 0.0, %v8347
      %8349 = vdwg.mxu0
      %8350 = vmatpush.msra.mxu0 0.0
      %8351 = vmatpush.msra.mxu0 0.0
      %8352 = vmatpush.msra.mxu0 0.0
      %8353 = vmatpush.msra.mxu0 0.0
      %8354 = vmatpush.msra.mxu0 0.0
      %8355 = vmatpush.msra.mxu0 0.0
      %8356 = vmatpush.msra.mxu0 0.0
      %8357 = vmatpush.msra.mxu0 0.0
      %8358 = vmatpush.msra.mxu0 0.0
      %8359 = vmatpush.msra.mxu0 0.0
      %8360 = vmatpush.msra.mxu0 0.0
      %8361 = vmatpush.msra.mxu0 0.0
      %8362 = vmatpush.msra.mxu0 %v8307
      %8363 = vmatpush.msra.mxu0 %v8305
      %8364 = vmatpush.msra.mxu0 %v8303
      %8365 = vmatpush.msra.mxu0 %v8301
      %8366 = vmatmul.f32.gmra.mxu0 %v8310
      %v8367 = vpop.f32.mrf.mxu0
      %v8368 = vadd.f32 %v8339, %v8367
      %8369 = vmatmul.f32.gmra.mxu0 %v8313
      %v8370 = vpop.f32.mrf.mxu0
      %v8371 = vadd.f32 %v8342, %v8370
      %8372 = vmatmul.f32.gmra.mxu0 %v8316
      %v8373 = vpop.f32.mrf.mxu0
      %v8374 = vadd.f32 %v8345, %v8373
      %8375 = vmatmul.f32.gmra.mxu0 %v8319
      %v8376 = vpop.f32.mrf.mxu0
      %v8377 = vadd.f32 %v8348, %v8376
      %8378 = vdwg.mxu0
      %8379 = vmatpush.msra.mxu0 %v8300
      %8380 = vmatpush.msra.mxu0 %v8298
      %8381 = vmatpush.msra.mxu0 %v8296
      %8382 = vmatpush.msra.mxu0 %v8294
      %8383 = vmatpush.msra.mxu0 %v8292
      %8384 = vmatpush.msra.mxu0 %v8290
      %8385 = vmatpush.msra.mxu0 %v8288
      %8386 = vmatpush.msra.mxu0 %v8286
      %8387 = vmatpush.msra.mxu0 %v8284
      %8388 = vmatpush.msra.mxu0 %v8282
      %8389 = vmatpush.msra.mxu0 %v8280
      %8390 = vmatpush.msra.mxu0 %v8278
      %8391 = vmatpush.msra.mxu0 %v8276
      %8392 = vmatpush.msra.mxu0 %v8274
      %8393 = vmatpush.msra.mxu0 %v8272
      %8394 = vmatpush.msra.mxu0 %v8270
      %8395 = vmatmul.f32.gmra.mxu0 %v8261
      %v8396 = vpop.f32.mrf.mxu0
      %v8397 = vadd.f32 0.0, %v8396
      %8398 = vmatmul.f32.gmra.mxu0 %v8263
      %v8399 = vpop.f32.mrf.mxu0
      %v8400 = vadd.f32 0.0, %v8399
      %8401 = vmatmul.f32.gmra.mxu0 %v8265
      %v8402 = vpop.f32.mrf.mxu0
      %v8403 = vadd.f32 0.0, %v8402
      %8404 = vmatmul.f32.gmra.mxu0 %v8267
      %v8405 = vpop.f32.mrf.mxu0
      %v8406 = vadd.f32 0.0, %v8405
      %8407 = vdwg.mxu0
      %8408 = vmatpush.msra.mxu0 0.0
      %8409 = vmatpush.msra.mxu0 0.0
      %8410 = vmatpush.msra.mxu0 0.0
      %8411 = vmatpush.msra.mxu0 0.0
      %8412 = vmatpush.msra.mxu0 0.0
      %8413 = vmatpush.msra.mxu0 0.0
      %8414 = vmatpush.msra.mxu0 0.0
      %8415 = vmatpush.msra.mxu0 0.0
      %8416 = vmatpush.msra.mxu0 0.0
      %8417 = vmatpush.msra.mxu0 0.0
      %8418 = vmatpush.msra.mxu0 0.0
      %8419 = vmatpush.msra.mxu0 0.0
      %8420 = vmatpush.msra.mxu0 %v8308
      %8421 = vmatpush.msra.mxu0 %v8306
      %8422 = vmatpush.msra.mxu0 %v8304
      %8423 = vmatpush.msra.mxu0 %v8302
      %8424 = vmatmul.f32.gmra.mxu0 %v8310
      %v8425 = vpop.f32.mrf.mxu0
      %v8426 = vadd.f32 %v8397, %v8425
      %8427 = vmatmul.f32.gmra.mxu0 %v8313
      %v8428 = vpop.f32.mrf.mxu0
      %v8429 = vadd.f32 %v8400, %v8428
      %8430 = vmatmul.f32.gmra.mxu0 %v8316
      %v8431 = vpop.f32.mrf.mxu0
      %v8432 = vadd.f32 %v8403, %v8431
      %8433 = vmatmul.f32.gmra.mxu0 %v8319
      %v8434 = vpop.f32.mrf.mxu0
      %v8435 = vadd.f32 %v8406, %v8434
      %8436 = vdwg.mxu0
      %v8437 = vsel %vm3003, %v8368, 0.0
      %v8438 = vsel %vm3004, %v8426, 0.0
      %v8439 = vsel %vm3003, %v8371, 0.0
      %v8440 = vsel %vm3004, %v8429, 0.0
      %v8441 = vsel %vm3003, %v8374, 0.0
      %v8442 = vsel %vm3004, %v8432, 0.0
      %v8443 = vsel %vm3003, %v8377, 0.0
      %v8444 = vsel %vm3004, %v8435, 0.0
      %v8445 = vadd.f32 %v7892, %v8437
      %v8446 = vadd.f32 %v7893, %v8438
      %v8447 = vadd.f32 %v7894, %v8439
      %v8448 = vadd.f32 %v7895, %v8440
      %v8449 = vadd.f32 %v7896, %v8441
      %v8450 = vadd.f32 %v7897, %v8442
      %v8451 = vadd.f32 %v7898, %v8443
      %v8452 = vadd.f32 %v7899, %v8444
      %v8453 = vmax.f32 %v8445, 0.0
      %v8454 = vmax.f32 %v8446, 0.0
      %v8455 = vmax.f32 %v8447, 0.0
      %v8456 = vmax.f32 %v8448, 0.0
      %v8457 = vmax.f32 %v8449, 0.0
      %v8458 = vmax.f32 %v8450, 0.0
      %v8459 = vmax.f32 %v8451, 0.0
      %v8460 = vmax.f32 %v8452, 0.0
      %v8461 = vld [vmem:[%s192] sm:$0xff]
      %v8462 = vld [vmem:[%s192 + $0x8] sm:$0xff]
      %v8463 = vld [vmem:[%s192 + $0x10] sm:$0xff]
      %v8464 = vld [vmem:[%s192 + $0x18] sm:$0xff]
      %v8465 = vld [vmem:[%s192 + $0x20] sm:$0xff]
      %v8466 = vld [vmem:[%s192 + $0x28] sm:$0xff]
      %v8467 = vld [vmem:[%s192 + $0x30] sm:$0xff]
      %v8468 = vld [vmem:[%s192 + $0x38] sm:$0xff]
      %v8469 = vadd.f32 %v8453, %v8461
      %v8470 = vadd.f32 %v8454, %v8462
      %v8471 = vadd.f32 %v8455, %v8463
      %v8472 = vadd.f32 %v8456, %v8464
      %v8473 = vadd.f32 %v8457, %v8465
      %v8474 = vadd.f32 %v8458, %v8466
      %v8475 = vadd.f32 %v8459, %v8467
      %v8476 = vadd.f32 %v8460, %v8468
      %8477 = vst [vmem:[%s197] sm:$0xff] %v8469
      %8478 = vst [vmem:[%s197 + $0x8] sm:$0xff] %v8470
      %8479 = vst [vmem:[%s197 + $0x10] sm:$0xff] %v8471
      %8480 = vst [vmem:[%s197 + $0x18] sm:$0xff] %v8472
      %8481 = vst [vmem:[%s197 + $0x20] sm:$0xff] %v8473
      %8482 = vst [vmem:[%s197 + $0x28] sm:$0xff] %v8474
      %8483 = vst [vmem:[%s197 + $0x30] sm:$0xff] %v8475
      %8484 = vst [vmem:[%s197 + $0x38] sm:$0xff] %v8476
      %p8485 = scmp.lt.s32.totalorder %s15, 1
      %s8486 = scalar_select %p8485, %s15, 1
      %s8487 = smul.addr %s8486, 8
      %s8488 = smul.addr %s8487, 8
      %s8489 = scalar_lea.vmem %s4, %s8488
      // Predicated region
      $region37: #{block_forward_pallas.1} parent=35 // pred_check
        %p8490 = pneg %p122
      $region38: #{block_forward_pallas.1} parent=35 // pred_check_branch
        %8492 = sbr.rel (%p8490) target = $region40
      $region39: #{block_forward_pallas.1} parent=35 // pred_region
        _
      $region40: #{block_forward_pallas.1} parent=35 // pred_fallthru
        _
    $region36: #{block_forward_pallas.1} parent=5 // pred_fallthru
      _
    %p8493 = scmp.le.s32.totalorder 2, %s10
    // Predicated region
    $region41: #{block_forward_pallas.1} parent=5 // pred_check
      %p8494 = pneg %p8493
    $region42: #{block_forward_pallas.1} parent=5 // pred_check_branch
      %8496 = sbr.rel (%p8494) target = $region44
    $region43: #{block_forward_pallas.1} parent=5 // pred_region
      %s8497 = ssub.s32 %s10, 2
      // Predicated region
      $region45: #{block_forward_pallas.1} parent=43 // pred_check
        %p8498 = pneg %p128
      $region46: #{block_forward_pallas.1} parent=43 // pred_check_branch
        %8500 = sbr.rel (%p8498) target = $region48
      $region47: #{block_forward_pallas.1} parent=43 // pred_region
        %p8501 = scmp.lt.s32.totalorder %s16, 1
        %s8502 = scalar_select %p8501, %s16, 1
        %s8503 = smul.addr %s8502, 8
        %s8504 = smul.addr %s8503, 8
        %s8505 = scalar_lea.vmem %s4, %s8504
      $region48: #{block_forward_pallas.1} parent=43 // pred_fallthru
        _
    $region44: #{block_forward_pallas.1} parent=5 // pred_fallthru
      _
  $region6: #{block_forward_pallas.1} parent=0 // loop_footer
    %s14 = sadd.s32 1, %s10
  $region7: #{block_forward_pallas.1} parent=0 // loop_footer_branch
    %9 = sbr.rel target = $region3
  $region8: #{block_forward_pallas.1} parent=0 // loop_exit
    _

</llo_original>
